<compile_context>
chip_gen: v6e
topology: v6e:2x2x1
jax: 0.10.0
libtpu: 0.0.40
codegen_flags: <defaults>
</compile_context>

<pallas_src>
import functools

import jax
import jax.numpy as jnp
from jax.experimental import pallas as pl
from jax.experimental.pallas import tpu as pltpu

RGB_FEAT = 512  # mobilevitv2_100(num_classes=0, global_pool='avg') -> 512-d features
FC1_TK = 512    # contraction tile for the big head matmul


def _round_up(x, m):
    return (x + m - 1) // m * m


def _pick_tile(total, cap):
    """Largest power-of-two tile <= cap that divides `total` (else full dim)."""
    for t in (2048, 1024, 512, 256, 128, 64, 32, 16, 8):
        if t <= cap and total % t == 0:
            return t
    return total


# --------------------------------------------------------------------------
# Pallas kernels
# --------------------------------------------------------------------------
def _matmul_bias_act_kernel(x_ref, w_ref, b_ref, o_ref, *, apply_relu):
    # One row-tile of y = act(x @ w + b); weight block resident across grid.
    y = jnp.dot(x_ref[...], w_ref[...], preferred_element_type=jnp.float32)
    y = y + b_ref[...]
    if apply_relu:
        y = jnp.maximum(y, 0.0)
    o_ref[...] = y.astype(o_ref.dtype)


def _matmul_ktiled_kernel(x_ref, w_ref, b_ref, o_ref, acc_ref, *, apply_relu):
    # K-gridded matmul with a VMEM accumulator (init at k==0, finalize at last k).
    k = pl.program_id(0)

    @pl.when(k == 0)
    def _():
        acc_ref[...] = jnp.zeros_like(acc_ref)

    acc_ref[...] += jnp.dot(x_ref[...], w_ref[...],
                            preferred_element_type=jnp.float32)

    @pl.when(k == pl.num_programs(0) - 1)
    def _():
        y = acc_ref[...] + b_ref[...]
        if apply_relu:
            y = jnp.maximum(y, 0.0)
        o_ref[...] = y.astype(o_ref.dtype)


def _rgb_feat_kernel(x_ref, w_ref, b_ref, o_ref, acc_ref, *, inv_hw):
    # Fused per-pixel (relu(x @ w + b)) + global average pool over pixels.
    # grid = (B, HW // TILE_P); pixel axis is the reduction (last, "arbitrary").
    p = pl.program_id(1)

    @pl.when(p == 0)
    def _():
        acc_ref[...] = jnp.zeros_like(acc_ref)

    y = jnp.dot(x_ref[...], w_ref[...], preferred_element_type=jnp.float32)
    y = jnp.maximum(y + b_ref[...], 0.0)
    acc_ref[...] += jnp.sum(y, axis=0, keepdims=True)

    @pl.when(p == pl.num_programs(1) - 1)
    def _():
        o_ref[...] = (acc_ref[...] * inv_hw).astype(o_ref.dtype)


def _max4_kernel(a_ref, b_ref, c_ref, d_ref, o_ref):
    # elementwise max of the four 2x2-window corners (MaxPool2d(2) hot path)
    o_ref[...] = jnp.maximum(jnp.maximum(a_ref[...], b_ref[...]),
                             jnp.maximum(c_ref[...], d_ref[...]))


# --------------------------------------------------------------------------
# pallas_call wrappers
# --------------------------------------------------------------------------
def matmul_bias_relu_rows(x, w, b, *, relu, row_cap=1024):
    """y = act(x @ w + b), gridded ("parallel") over rows of x.

    Weight is small enough to sit in one resident VMEM block (conv weights).
    x: (M, K), w: (K, N), b: (N,).
    """
    M, K = x.shape
    N = w.shape[1]
    tm = _pick_tile(M, row_cap)
    return pl.pallas_call(
        functools.partial(_matmul_bias_act_kernel, apply_relu=relu),
        out_shape=jax.ShapeDtypeStruct((M, N), jnp.float32),
        grid=(M // tm,),
        in_specs=[pl.BlockSpec((tm, K), lambda i: (i, 0)),
                  pl.BlockSpec((K, N), lambda i: (0, 0)),
                  pl.BlockSpec((1, N), lambda i: (0, 0))],
        out_specs=pl.BlockSpec((tm, N), lambda i: (i, 0)),
        compiler_params=pltpu.CompilerParams(
            dimension_semantics=("parallel",)),
    )(x, w, b.reshape(1, N))


def linear_ktiled(x, w, b, *, relu, tk=FC1_TK):
    """y = act(x @ w + b) with the contraction dim gridded ("arbitrary").

    Used for the head / trait MLP where M (= batch) is tiny but K can be huge
    (fc1 weight is ~512 MiB at the module's reference input size).  The weight
    may be pre-padded along K with zero rows; x is zero-padded to match (benign).
    """
    M, K = x.shape
    Kw, N = w.shape
    if Kw != K:                          # weight pre-padded at init (fc1)
        x = jnp.pad(x, ((0, 0), (0, Kw - K)))
        K = Kw
    tkk = tk if (K > tk and K % tk == 0) else K
    nk = K // tkk
    return pl.pallas_call(
        functools.partial(_matmul_ktiled_kernel, apply_relu=relu),
        out_shape=jax.ShapeDtypeStruct((M, N), jnp.float32),
        grid=(nk,),
        in_specs=[pl.BlockSpec((M, tkk), lambda k: (0, k)),
                  pl.BlockSpec((tkk, N), lambda k: (k, 0)),
                  pl.BlockSpec((1, N), lambda k: (0, 0))],
        out_specs=pl.BlockSpec((M, N), lambda k: (0, 0)),
        scratch_shapes=[pltpu.VMEM((M, N), jnp.float32)],
        compiler_params=pltpu.CompilerParams(
            dimension_semantics=("arbitrary",)),
    )(x, w, b.reshape(1, N))


def rgb_feature(rgb_pixels, w, b, *, pix_cap=512):
    """Fused rgb-surrogate matmul + global average pool.

    rgb_pixels: (B, HW, 3) -> (B, F).  The (B*HW, F) activation never touches HBM.
    """
    B, HW, Cin = rgb_pixels.shape
    F = w.shape[1]
    tp = _pick_tile(HW, pix_cap)
    out = pl.pallas_call(
        functools.partial(_rgb_feat_kernel, inv_hw=1.0 / HW),
        out_shape=jax.ShapeDtypeStruct((B, 1, F), jnp.float32),
        grid=(B, HW // tp),
        in_specs=[pl.BlockSpec((None, tp, Cin), lambda bb, p: (bb, p, 0)),
                  pl.BlockSpec((Cin, F), lambda bb, p: (0, 0)),
                  pl.BlockSpec((1, F), lambda bb, p: (0, 0))],
        out_specs=pl.BlockSpec((None, 1, F), lambda bb, p: (bb, 0, 0)),
        scratch_shapes=[pltpu.VMEM((1, F), jnp.float32)],
        compiler_params=pltpu.CompilerParams(
            dimension_semantics=("parallel", "arbitrary")),
    )(rgb_pixels, w, b.reshape(1, F))
    return out.reshape(B, F)


def maxpool2x2(x):
    """x: (B, H, W, C) -> (B, H//2, W//2, C), 2x2 max pool, stride 2.

    Operands are presented lane-dense as (B*Ho, Wo*C) rows so stores use full
    128-lane vregs, gridded over rows with ~1 MiB per input block.
    """
    B, H, W, C = x.shape
    Ho, Wo = H // 2, W // 2
    L = Wo * C
    parts = [x[:, dy::2, dx::2, :].reshape(B * Ho, L)
             for dy in (0, 1) for dx in (0, 1)]
    R = B * Ho
    row_cap = max(8, (1 << 20) // (L * 4))
    tr = _pick_tile(R, row_cap)
    spec = pl.BlockSpec((tr, L), lambda i: (i, 0))
    out = pl.pallas_call(
        _max4_kernel,
        out_shape=jax.ShapeDtypeStruct((R, L), x.dtype),
        grid=(R // tr,),
        in_specs=[spec] * 4,
        out_specs=spec,
        compiler_params=pltpu.CompilerParams(
            dimension_semantics=("parallel",)),
    )(*parts)
    return out.reshape(B, Ho, Wo, C)


def conv3x3_relu(x, w, b):
    """3x3 'same' conv + ReLU.  x: (B,H,W,Cin), w: (3,3,Cin,Cout), b: (Cout,).

    im2col (XLA glue) + row-tiled fused matmul+bias+ReLU Pallas kernel.
    # TODO(synk): stream the conv directly from the padded activation (halo row
    # tiles with in-kernel dx/dy shifts) to avoid materializing the 9x patch
    # tensor in HBM; at these channel counts the patch tensor is modest.
    """
    B, H, W, Cin = x.shape
    Cout = w.shape[-1]
    xp = jnp.pad(x, ((0, 0), (1, 1), (1, 1), (0, 0)))
    patches = jnp.stack(
        [xp[:, dy:dy + H, dx:dx + W, :] for dy in range(3) for dx in range(3)],
        axis=3).reshape(B * H * W, 9 * Cin)
    y = matmul_bias_relu_rows(patches, w.reshape(9 * Cin, Cout), b, relu=True)
    return y.reshape(B, H, W, Cout)


# --------------------------------------------------------------------------
# Parameters (deterministic synthetic init — shapes match the nn.Module)
# --------------------------------------------------------------------------
def init_params(key, H, W):
    dsm_flat = 32 * (H // 4) * (W // 4)
    feature_size = RGB_FEAT + dsm_flat + 32
    fs_pad = _round_up(feature_size, FC1_TK)   # pre-pad fc1 rows for K tiling
    ks = jax.random.split(key, 8)

    def dense(k, shape, fan_in):
        return jax.random.normal(k, shape, jnp.float32) / jnp.sqrt(float(fan_in))

    fc1_w = dense(ks[4], (feature_size, 512), feature_size)
    fc1_w = jnp.pad(fc1_w, ((0, fs_pad - feature_size), (0, 0)))

    return {
        # rgb backbone surrogate (see TODO in forward)
        "rgb_w": dense(ks[0], (3, RGB_FEAT), 3),
        "rgb_b": jnp.zeros((RGB_FEAT,), jnp.float32),
        # dsm_conv: Conv2d(1,16,3,p=1) / Conv2d(16,32,3,p=1), weights (kh,kw,cin,cout)
        "c1_w": dense(ks[1], (3, 3, 1, 16), 9),
        "c1_b": jnp.zeros((16,), jnp.float32),
        "c2_w": dense(ks[2], (3, 3, 16, 32), 9 * 16),
        "c2_b": jnp.zeros((32,), jnp.float32),
        # trait_fc: Linear(2, 32)
        "t_w": dense(ks[3], (2, 32), 2),
        "t_b": jnp.zeros((32,), jnp.float32),
        # head: Linear(feature_size,512) -> Linear(512,256) -> Linear(256,2)
        "fc1_w": fc1_w,                       # (round_up(feature_size,512), 512)
        "fc1_b": jnp.zeros((512,), jnp.float32),
        "fc2_w": dense(ks[5], (512, 256), 512),
        "fc2_b": jnp.zeros((256,), jnp.float32),
        "fc3_w": dense(ks[6], (256, 2), 256),
        "fc3_b": jnp.zeros((2,), jnp.float32),
    }


# --------------------------------------------------------------------------
# Forward pass (mirrors MobileViTV2ConfidenceAddtwoextrainput.forward)
# --------------------------------------------------------------------------
def forward(params, rgb, dsm, extra_input):
    # rgb: (B, 3, H, W) NCHW ; dsm: (B, 1, H, W) NCHW ; extra_input: (B, 2)
    B, _, H, W = rgb.shape
    assert H % 4 == 0 and W % 4 == 0

    # ---- rgb_model(rgb) ----
    # TODO(synk): the pretrained timm MobileViTV2-1.0 backbone is not
    # reproduced; a shape-compatible surrogate (1x1 conv -> ReLU -> global
    # average pool, fused into one Pallas kernel) produces the (B, 512) vector.
    rgb_pix = jnp.transpose(rgb, (0, 2, 3, 1)).reshape(B, H * W, 3)
    rgb_feat = rgb_feature(rgb_pix, params["rgb_w"], params["rgb_b"])  # (B, 512)

    # ---- dsm_conv(dsm) ----
    x = jnp.transpose(dsm, (0, 2, 3, 1))                               # (B,H,W,1)
    x = conv3x3_relu(x, params["c1_w"], params["c1_b"])                # (B,H,W,16)
    x = maxpool2x2(x)                                                  # (B,H/2,W/2,16)
    x = conv3x3_relu(x, params["c2_w"], params["c2_b"])                # (B,H/2,W/2,32)
    x = maxpool2x2(x)                                                  # (B,H/4,W/4,32)
    # torch.flatten operates on NCHW, so flatten in (C, H, W) order
    dsm_feat = jnp.transpose(x, (0, 3, 1, 2)).reshape(B, -1)           # (B, 32*H/4*W/4)

    # ---- trait_fc(extra_input.view(-1, 2)) ----
    extra_feat = linear_ktiled(extra_input.reshape(-1, 2),
                               params["t_w"], params["t_b"], relu=True)  # (B, 32)

    # ---- concat + head (Dropout is identity at inference) ----
    combined = jnp.concatenate([rgb_feat, dsm_feat, extra_feat], axis=1)
    h = linear_ktiled(combined, params["fc1_w"], params["fc1_b"], relu=True)
    h = linear_ktiled(h, params["fc2_w"], params["fc2_b"], relu=True)
    out = linear_ktiled(h, params["fc3_w"], params["fc3_b"], relu=False)  # (B, 2)
    return out


# --------------------------------------------------------------------------
if __name__ == "__main__":
    B, H, W = 2, 32, 32     # small shapes (module's reference size is 256x512)
    key = jax.random.PRNGKey(0)
    k_rgb, k_dsm, k_extra = jax.random.split(key, 3)
    rgb = jax.random.normal(k_rgb, (B, 3, H, W), jnp.float32)
    dsm = jax.random.normal(k_dsm, (B, 1, H, W), jnp.float32)
    extra = jax.random.normal(k_extra, (B, 2), jnp.float32)

    params = init_params(jax.random.PRNGKey(42), H, W)

    out = jax.jit(forward)(params, rgb, dsm, extra)
    out = jax.block_until_ready(out)
    assert out.shape == (B, 2) and out.dtype == jnp.float32
    assert bool(jnp.all(jnp.isfinite(out)))
    print("KERNEL_OK")
</pallas_src>

<mosaic_0001>
module attributes {stable_mosaic.version = 11 : i64} {
  func.func @_matmul_bias_act_kernel(%arg0: i32, %arg1: memref<1024x9xf32, #tpu.memory_space<vmem>>, %arg2: memref<9x16xf32, #tpu.memory_space<vmem>>, %arg3: memref<1x16xf32, #tpu.memory_space<vmem>>, %arg4: memref<1024x16xf32, #tpu.memory_space<vmem>>) attributes {dimension_semantics = [#tpu.dimension_semantics<parallel>], iteration_bounds = array<i64: 2>, scalar_prefetch = 0 : i64, scratch_operands = 0 : i64, tpu.core_type = #tpu.core_type<tc>, window_params = [{transform_indices = @transform_0, window_bounds = array<i64: 1024, 9>}, {pipeline_mode = #tpu.pipeline_mode<synchronous>, transform_indices = @transform_1, window_bounds = array<i64: 9, 16>}, {pipeline_mode = #tpu.pipeline_mode<synchronous>, transform_indices = @transform_2, window_bounds = array<i64: 1, 16>}, {transform_indices = @transform_3, window_bounds = array<i64: 1024, 16>}]} {
    %c0 = arith.constant 0 : index
    %c0_0 = arith.constant 0 : index
    %0 = vector.load %arg1[%c0, %c0_0] : memref<1024x9xf32, #tpu.memory_space<vmem>>, vector<1024x9xf32>
    %c0_1 = arith.constant 0 : index
    %c0_2 = arith.constant 0 : index
    %1 = vector.load %arg2[%c0_1, %c0_2] : memref<9x16xf32, #tpu.memory_space<vmem>>, vector<9x16xf32>
    %cst = arith.constant dense<0.000000e+00> : vector<1024x16xf32>
    %2 = tpu.matmul %0, %1, %cst {dimension_numbers = #tpu.dot_dimension_numbers<[1], [0], [0], [1], [0, 0, 1, 1], [], []>} : vector<1024x9xf32>, vector<9x16xf32>, vector<1024x16xf32> -> vector<1024x16xf32>
    %c0_3 = arith.constant 0 : index
    %c0_4 = arith.constant 0 : index
    %3 = vector.load %arg3[%c0_3, %c0_4] : memref<1x16xf32, #tpu.memory_space<vmem>>, vector<1x16xf32>
    %4 = vector.broadcast %3 : vector<1x16xf32> to vector<1024x16xf32>
    %5 = arith.addf %2, %4 : vector<1024x16xf32>
    %cst_5 = arith.constant 0.000000e+00 : f32
    %6 = vector.broadcast %cst_5 : f32 to vector<1024x16xf32>
    %7 = arith.maximumf %5, %6 : vector<1024x16xf32>
    %c0_6 = arith.constant 0 : index
    %c0_7 = arith.constant 0 : index
    %8 = vector.load %arg4[%c0_6, %c0_7] : memref<1024x16xf32, #tpu.memory_space<vmem>>, vector<1024x16xf32>
    tpu.vector_store %arg4[%c0_6, %c0_7], %7 {strides = array<i32>} : memref<1024x16xf32, #tpu.memory_space<vmem>>, vector<1024x16xf32>,
    return
  }
  func.func @transform_0(%arg0: i32) -> (i32, i32) {
    %c0_i32 = arith.constant 0 : i32
    %c0_i32_0 = arith.constant 0 : i32
    return %arg0, %c0_i32 : i32, i32
  }
  func.func @transform_1(%arg0: i32) -> (i32, i32) {
    %c0_i32 = arith.constant 0 : i32
    %c0_i32_0 = arith.constant 0 : i32
    %c0_i32_1 = arith.constant 0 : i32
    return %c0_i32, %c0_i32_0 : i32, i32
  }
  func.func @transform_2(%arg0: i32) -> (i32, i32) {
    %c0_i32 = arith.constant 0 : i32
    %c0_i32_0 = arith.constant 0 : i32
    %c0_i32_1 = arith.constant 0 : i32
    return %c0_i32, %c0_i32_0 : i32, i32
  }
  func.func @transform_3(%arg0: i32) -> (i32, i32) {
    %c0_i32 = arith.constant 0 : i32
    %c0_i32_0 = arith.constant 0 : i32
    return %arg0, %c0_i32 : i32, i32
  }
}

module attributes {stable_mosaic.version = 11 : i64} {
  func.func @_max4_kernel(%arg0: i32, %arg1: memref<32x256xf32, #tpu.memory_space<vmem>>, %arg2: memref<32x256xf32, #tpu.memory_space<vmem>>, %arg3: memref<32x256xf32, #tpu.memory_space<vmem>>, %arg4: memref<32x256xf32, #tpu.memory_space<vmem>>, %arg5: memref<32x256xf32, #tpu.memory_space<vmem>>) attributes {dimension_semantics = [#tpu.dimension_semantics<parallel>], iteration_bounds = array<i64: 1>, scalar_prefetch = 0 : i64, scratch_operands = 0 : i64, tpu.core_type = #tpu.core_type<tc>, window_params = [{transform_indices = @transform_0, window_bounds = array<i64: 32, 256>}, {transform_indices = @transform_1, window_bounds = array<i64: 32, 256>}, {transform_indices = @transform_2, window_bounds = array<i64: 32, 256>}, {transform_indices = @transform_3, window_bounds = array<i64: 32, 256>}, {transform_indices = @transform_4, window_bounds = array<i64: 32, 256>}]} {
    %c0 = arith.constant 0 : index
    %c0_0 = arith.constant 0 : index
    %0 = vector.load %arg1[%c0, %c0_0] : memref<32x256xf32, #tpu.memory_space<vmem>>, vector<32x256xf32>
    %c0_1 = arith.constant 0 : index
    %c0_2 = arith.constant 0 : index
    %1 = vector.load %arg2[%c0_1, %c0_2] : memref<32x256xf32, #tpu.memory_space<vmem>>, vector<32x256xf32>
    %2 = arith.maximumf %0, %1 : vector<32x256xf32>
    %c0_3 = arith.constant 0 : index
    %c0_4 = arith.constant 0 : index
    %3 = vector.load %arg3[%c0_3, %c0_4] : memref<32x256xf32, #tpu.memory_space<vmem>>, vector<32x256xf32>
    %c0_5 = arith.constant 0 : index
    %c0_6 = arith.constant 0 : index
    %4 = vector.load %arg4[%c0_5, %c0_6] : memref<32x256xf32, #tpu.memory_space<vmem>>, vector<32x256xf32>
    %5 = arith.maximumf %3, %4 : vector<32x256xf32>
    %6 = arith.maximumf %2, %5 : vector<32x256xf32>
    %c0_7 = arith.constant 0 : index
    %c0_8 = arith.constant 0 : index
    %7 = vector.load %arg5[%c0_7, %c0_8] : memref<32x256xf32, #tpu.memory_space<vmem>>, vector<32x256xf32>
    tpu.vector_store %arg5[%c0_7, %c0_8], %6 {strides = array<i32>} : memref<32x256xf32, #tpu.memory_space<vmem>>, vector<32x256xf32>,
    return
  }
  func.func @transform_0(%arg0: i32) -> (i32, i32) {
    %c0_i32 = arith.constant 0 : i32
    %c0_i32_0 = arith.constant 0 : i32
    return %arg0, %c0_i32 : i32, i32
  }
  func.func @transform_1(%arg0: i32) -> (i32, i32) {
    %c0_i32 = arith.constant 0 : i32
    %c0_i32_0 = arith.constant 0 : i32
    return %arg0, %c0_i32 : i32, i32
  }
  func.func @transform_2(%arg0: i32) -> (i32, i32) {
    %c0_i32 = arith.constant 0 : i32
    %c0_i32_0 = arith.constant 0 : i32
    return %arg0, %c0_i32 : i32, i32
  }
  func.func @transform_3(%arg0: i32) -> (i32, i32) {
    %c0_i32 = arith.constant 0 : i32
    %c0_i32_0 = arith.constant 0 : i32
    return %arg0, %c0_i32 : i32, i32
  }
  func.func @transform_4(%arg0: i32) -> (i32, i32) {
    %c0_i32 = arith.constant 0 : i32
    %c0_i32_0 = arith.constant 0 : i32
    return %arg0, %c0_i32 : i32, i32
  }
}

module attributes {stable_mosaic.version = 11 : i64} {
  func.func @_matmul_bias_act_kernel(%arg0: i32, %arg1: memref<512x144xf32, #tpu.memory_space<vmem>>, %arg2: memref<144x32xf32, #tpu.memory_space<vmem>>, %arg3: memref<1x32xf32, #tpu.memory_space<vmem>>, %arg4: memref<512x32xf32, #tpu.memory_space<vmem>>) attributes {dimension_semantics = [#tpu.dimension_semantics<parallel>], iteration_bounds = array<i64: 1>, scalar_prefetch = 0 : i64, scratch_operands = 0 : i64, tpu.core_type = #tpu.core_type<tc>, window_params = [{transform_indices = @transform_0, window_bounds = array<i64: 512, 144>}, {pipeline_mode = #tpu.pipeline_mode<synchronous>, transform_indices = @transform_1, window_bounds = array<i64: 144, 32>}, {pipeline_mode = #tpu.pipeline_mode<synchronous>, transform_indices = @transform_2, window_bounds = array<i64: 1, 32>}, {transform_indices = @transform_3, window_bounds = array<i64: 512, 32>}]} {
    %c0 = arith.constant 0 : index
    %c0_0 = arith.constant 0 : index
    %0 = vector.load %arg1[%c0, %c0_0] : memref<512x144xf32, #tpu.memory_space<vmem>>, vector<512x144xf32>
    %c0_1 = arith.constant 0 : index
    %c0_2 = arith.constant 0 : index
    %1 = vector.load %arg2[%c0_1, %c0_2] : memref<144x32xf32, #tpu.memory_space<vmem>>, vector<144x32xf32>
    %cst = arith.constant dense<0.000000e+00> : vector<512x32xf32>
    %2 = tpu.matmul %0, %1, %cst {dimension_numbers = #tpu.dot_dimension_numbers<[1], [0], [0], [1], [0, 0, 1, 1], [], []>} : vector<512x144xf32>, vector<144x32xf32>, vector<512x32xf32> -> vector<512x32xf32>
    %c0_3 = arith.constant 0 : index
    %c0_4 = arith.constant 0 : index
    %3 = vector.load %arg3[%c0_3, %c0_4] : memref<1x32xf32, #tpu.memory_space<vmem>>, vector<1x32xf32>
    %4 = vector.broadcast %3 : vector<1x32xf32> to vector<512x32xf32>
    %5 = arith.addf %2, %4 : vector<512x32xf32>
    %cst_5 = arith.constant 0.000000e+00 : f32
    %6 = vector.broadcast %cst_5 : f32 to vector<512x32xf32>
    %7 = arith.maximumf %5, %6 : vector<512x32xf32>
    %c0_6 = arith.constant 0 : index
    %c0_7 = arith.constant 0 : index
    %8 = vector.load %arg4[%c0_6, %c0_7] : memref<512x32xf32, #tpu.memory_space<vmem>>, vector<512x32xf32>
    tpu.vector_store %arg4[%c0_6, %c0_7], %7 {strides = array<i32>} : memref<512x32xf32, #tpu.memory_space<vmem>>, vector<512x32xf32>,
    return
  }
  func.func @transform_0(%arg0: i32) -> (i32, i32) {
    %c0_i32 = arith.constant 0 : i32
    %c0_i32_0 = arith.constant 0 : i32
    return %arg0, %c0_i32 : i32, i32
  }
  func.func @transform_1(%arg0: i32) -> (i32, i32) {
    %c0_i32 = arith.constant 0 : i32
    %c0_i32_0 = arith.constant 0 : i32
    %c0_i32_1 = arith.constant 0 : i32
    return %c0_i32, %c0_i32_0 : i32, i32
  }
  func.func @transform_2(%arg0: i32) -> (i32, i32) {
    %c0_i32 = arith.constant 0 : i32
    %c0_i32_0 = arith.constant 0 : i32
    %c0_i32_1 = arith.constant 0 : i32
    return %c0_i32, %c0_i32_0 : i32, i32
  }
  func.func @transform_3(%arg0: i32) -> (i32, i32) {
    %c0_i32 = arith.constant 0 : i32
    %c0_i32_0 = arith.constant 0 : i32
    return %arg0, %c0_i32 : i32, i32
  }
}

module attributes {stable_mosaic.version = 11 : i64} {
  func.func @_max4_kernel(%arg0: i32, %arg1: memref<16x256xf32, #tpu.memory_space<vmem>>, %arg2: memref<16x256xf32, #tpu.memory_space<vmem>>, %arg3: memref<16x256xf32, #tpu.memory_space<vmem>>, %arg4: memref<16x256xf32, #tpu.memory_space<vmem>>, %arg5: memref<16x256xf32, #tpu.memory_space<vmem>>) attributes {dimension_semantics = [#tpu.dimension_semantics<parallel>], iteration_bounds = array<i64: 1>, scalar_prefetch = 0 : i64, scratch_operands = 0 : i64, tpu.core_type = #tpu.core_type<tc>, window_params = [{transform_indices = @transform_0, window_bounds = array<i64: 16, 256>}, {transform_indices = @transform_1, window_bounds = array<i64: 16, 256>}, {transform_indices = @transform_2, window_bounds = array<i64: 16, 256>}, {transform_indices = @transform_3, window_bounds = array<i64: 16, 256>}, {transform_indices = @transform_4, window_bounds = array<i64: 16, 256>}]} {
    %c0 = arith.constant 0 : index
    %c0_0 = arith.constant 0 : index
    %0 = vector.load %arg1[%c0, %c0_0] : memref<16x256xf32, #tpu.memory_space<vmem>>, vector<16x256xf32>
    %c0_1 = arith.constant 0 : index
    %c0_2 = arith.constant 0 : index
    %1 = vector.load %arg2[%c0_1, %c0_2] : memref<16x256xf32, #tpu.memory_space<vmem>>, vector<16x256xf32>
    %2 = arith.maximumf %0, %1 : vector<16x256xf32>
    %c0_3 = arith.constant 0 : index
    %c0_4 = arith.constant 0 : index
    %3 = vector.load %arg3[%c0_3, %c0_4] : memref<16x256xf32, #tpu.memory_space<vmem>>, vector<16x256xf32>
    %c0_5 = arith.constant 0 : index
    %c0_6 = arith.constant 0 : index
    %4 = vector.load %arg4[%c0_5, %c0_6] : memref<16x256xf32, #tpu.memory_space<vmem>>, vector<16x256xf32>
    %5 = arith.maximumf %3, %4 : vector<16x256xf32>
    %6 = arith.maximumf %2, %5 : vector<16x256xf32>
    %c0_7 = arith.constant 0 : index
    %c0_8 = arith.constant 0 : index
    %7 = vector.load %arg5[%c0_7, %c0_8] : memref<16x256xf32, #tpu.memory_space<vmem>>, vector<16x256xf32>
    tpu.vector_store %arg5[%c0_7, %c0_8], %6 {strides = array<i32>} : memref<16x256xf32, #tpu.memory_space<vmem>>, vector<16x256xf32>,
    return
  }
  func.func @transform_0(%arg0: i32) -> (i32, i32) {
    %c0_i32 = arith.constant 0 : i32
    %c0_i32_0 = arith.constant 0 : i32
    return %arg0, %c0_i32 : i32, i32
  }
  func.func @transform_1(%arg0: i32) -> (i32, i32) {
    %c0_i32 = arith.constant 0 : i32
    %c0_i32_0 = arith.constant 0 : i32
    return %arg0, %c0_i32 : i32, i32
  }
  func.func @transform_2(%arg0: i32) -> (i32, i32) {
    %c0_i32 = arith.constant 0 : i32
    %c0_i32_0 = arith.constant 0 : i32
    return %arg0, %c0_i32 : i32, i32
  }
  func.func @transform_3(%arg0: i32) -> (i32, i32) {
    %c0_i32 = arith.constant 0 : i32
    %c0_i32_0 = arith.constant 0 : i32
    return %arg0, %c0_i32 : i32, i32
  }
  func.func @transform_4(%arg0: i32) -> (i32, i32) {
    %c0_i32 = arith.constant 0 : i32
    %c0_i32_0 = arith.constant 0 : i32
    return %arg0, %c0_i32 : i32, i32
  }
}

module attributes {stable_mosaic.version = 11 : i64} {
  func.func @_rgb_feat_kernel(%arg0: i32, %arg1: i32, %arg2: memref<1x512x3xf32, #tpu.memory_space<vmem>>, %arg3: memref<3x512xf32, #tpu.memory_space<vmem>>, %arg4: memref<1x512xf32, #tpu.memory_space<vmem>>, %arg5: memref<1x1x512xf32, #tpu.memory_space<vmem>>, %arg6: memref<1x512xf32, #tpu.memory_space<vmem>>) attributes {dimension_semantics = [#tpu.dimension_semantics<parallel>, #tpu.dimension_semantics<arbitrary>], iteration_bounds = array<i64: 2, 2>, scalar_prefetch = 0 : i64, scratch_operands = 1 : i64, tpu.core_type = #tpu.core_type<tc>, window_params = [{transform_indices = @transform_0, window_bounds = array<i64: 1, 512, 3>}, {pipeline_mode = #tpu.pipeline_mode<synchronous>, transform_indices = @transform_1, window_bounds = array<i64: 3, 512>}, {pipeline_mode = #tpu.pipeline_mode<synchronous>, transform_indices = @transform_2, window_bounds = array<i64: 1, 512>}, {transform_indices = @transform_3, window_bounds = array<i64: 1, 1, 512>}]} {
    %c0_i32 = arith.constant 0 : i32
    %0 = arith.cmpi eq, %arg1, %c0_i32 : i32
    %1 = arith.extui %0 : i1 to i32
    %c0_i32_0 = arith.constant 0 : i32
    %2 = arith.cmpi ne, %1, %c0_i32_0 : i32
    scf.if %2 {
      %cst_14 = arith.constant 0.000000e+00 : f32
      %20 = vector.broadcast %cst_14 : f32 to vector<1x512xf32>
      %c0_15 = arith.constant 0 : index
      %c0_16 = arith.constant 0 : index
      %21 = vector.load %arg6[%c0_15, %c0_16] : memref<1x512xf32, #tpu.memory_space<vmem>>, vector<1x512xf32>
      tpu.vector_store %arg6[%c0_15, %c0_16], %20 {strides = array<i32>} : memref<1x512xf32, #tpu.memory_space<vmem>>, vector<1x512xf32>,
    } else {
    }
    %c0 = arith.constant 0 : index
    %c0_1 = arith.constant 0 : index
    %c0_2 = arith.constant 0 : index
    %3 = vector.load %arg2[%c0, %c0_1, %c0_2] : memref<1x512x3xf32, #tpu.memory_space<vmem>>, vector<1x512x3xf32>
    %4 = vector.shape_cast %3 : vector<1x512x3xf32> to vector<512x3xf32>
    %c0_3 = arith.constant 0 : index
    %c0_4 = arith.constant 0 : index
    %5 = vector.load %arg3[%c0_3, %c0_4] : memref<3x512xf32, #tpu.memory_space<vmem>>, vector<3x512xf32>
    %cst = arith.constant dense<0.000000e+00> : vector<512x512xf32>
    %6 = tpu.matmul %4, %5, %cst {dimension_numbers = #tpu.dot_dimension_numbers<[1], [0], [0], [1], [0, 0, 1, 1], [], []>} : vector<512x3xf32>, vector<3x512xf32>, vector<512x512xf32> -> vector<512x512xf32>
    %c0_5 = arith.constant 0 : index
    %c0_6 = arith.constant 0 : index
    %7 = vector.load %arg4[%c0_5, %c0_6] : memref<1x512xf32, #tpu.memory_space<vmem>>, vector<1x512xf32>
    %8 = vector.broadcast %7 : vector<1x512xf32> to vector<512x512xf32>
    %9 = arith.addf %6, %8 : vector<512x512xf32>
    %cst_7 = arith.constant 0.000000e+00 : f32
    %10 = vector.broadcast %cst_7 : f32 to vector<512x512xf32>
    %11 = arith.maximumf %9, %10 : vector<512x512xf32>
    %c0_8 = arith.constant 0 : index
    %c0_9 = arith.constant 0 : index
    %12 = vector.load %arg6[%c0_8, %c0_9] : memref<1x512xf32, #tpu.memory_space<vmem>>, vector<1x512xf32>
    %cst_10 = arith.constant dense<0.000000e+00> : vector<512xf32>
    %13 = vector.multi_reduction <add>, %11, %cst_10 [0] : vector<512x512xf32> to vector<512xf32>
    %14 = vector.shape_cast %13 : vector<512xf32> to vector<1x512xf32>
    %15 = arith.addf %12, %14 : vector<1x512xf32>
    %c0_11 = arith.constant 0 : index
    %c0_12 = arith.constant 0 : index
    %16 = vector.load %arg6[%c0_11, %c0_12] : memref<1x512xf32, #tpu.memory_space<vmem>>, vector<1x512xf32>
    tpu.vector_store %arg6[%c0_11, %c0_12], %15 {strides = array<i32>} : memref<1x512xf32, #tpu.memory_space<vmem>>, vector<1x512xf32>,
    %c1_i32 = arith.constant 1 : i32
    %17 = arith.cmpi eq, %arg1, %c1_i32 : i32
    %18 = arith.extui %17 : i1 to i32
    %c0_i32_13 = arith.constant 0 : i32
    %19 = arith.cmpi ne, %18, %c0_i32_13 : i32
    scf.if %19 {
      %c0_14 = arith.constant 0 : index
      %c0_15 = arith.constant 0 : index
      %20 = vector.load %arg6[%c0_14, %c0_15] : memref<1x512xf32, #tpu.memory_space<vmem>>, vector<1x512xf32>
      %cst_16 = arith.constant 9.765625E-4 : f32
      %21 = vector.broadcast %cst_16 : f32 to vector<1x512xf32>
      %22 = arith.mulf %20, %21 : vector<1x512xf32>
      %c0_17 = arith.constant 0 : index
      %c0_18 = arith.constant 0 : index
      %c0_19 = arith.constant 0 : index
      %23 = vector.load %arg5[%c0_17, %c0_18, %c0_19] : memref<1x1x512xf32, #tpu.memory_space<vmem>>, vector<1x1x512xf32>
      %24 = vector.shape_cast %23 : vector<1x1x512xf32> to vector<1x512xf32>
      %25 = vector.shape_cast %22 : vector<1x512xf32> to vector<1x1x512xf32>
      tpu.vector_store %arg5[%c0_17, %c0_18, %c0_19], %25 {strides = array<i32>} : memref<1x1x512xf32, #tpu.memory_space<vmem>>, vector<1x1x512xf32>,
    } else {
    }
    return
  }
  func.func @transform_0(%arg0: i32, %arg1: i32) -> (i32, i32, i32) {
    %c0_i32 = arith.constant 0 : i32
    %c0_i32_0 = arith.constant 0 : i32
    return %arg0, %arg1, %c0_i32 : i32, i32, i32
  }
  func.func @transform_1(%arg0: i32, %arg1: i32) -> (i32, i32) {
    %c0_i32 = arith.constant 0 : i32
    %c0_i32_0 = arith.constant 0 : i32
    %c0_i32_1 = arith.constant 0 : i32
    return %c0_i32, %c0_i32_0 : i32, i32
  }
  func.func @transform_2(%arg0: i32, %arg1: i32) -> (i32, i32) {
    %c0_i32 = arith.constant 0 : i32
    %c0_i32_0 = arith.constant 0 : i32
    %c0_i32_1 = arith.constant 0 : i32
    return %c0_i32, %c0_i32_0 : i32, i32
  }
  func.func @transform_3(%arg0: i32, %arg1: i32) -> (i32, i32, i32) {
    %c0_i32 = arith.constant 0 : i32
    %c0_i32_0 = arith.constant 0 : i32
    %c0_i32_1 = arith.constant 0 : i32
    return %arg0, %c0_i32, %c0_i32_0 : i32, i32, i32
  }
}

module attributes {stable_mosaic.version = 11 : i64} {
  func.func @_matmul_ktiled_kernel(%arg0: i32, %arg1: memref<2x2xf32, #tpu.memory_space<vmem>>, %arg2: memref<2x32xf32, #tpu.memory_space<vmem>>, %arg3: memref<1x32xf32, #tpu.memory_space<vmem>>, %arg4: memref<2x32xf32, #tpu.memory_space<vmem>>, %arg5: memref<2x32xf32, #tpu.memory_space<vmem>>) attributes {dimension_semantics = [#tpu.dimension_semantics<arbitrary>], iteration_bounds = array<i64: 1>, scalar_prefetch = 0 : i64, scratch_operands = 1 : i64, tpu.core_type = #tpu.core_type<tc>, window_params = [{transform_indices = @transform_0, window_bounds = array<i64: 2, 2>}, {transform_indices = @transform_1, window_bounds = array<i64: 2, 32>}, {pipeline_mode = #tpu.pipeline_mode<synchronous>, transform_indices = @transform_2, window_bounds = array<i64: 1, 32>}, {pipeline_mode = #tpu.pipeline_mode<synchronous>, transform_indices = @transform_3, window_bounds = array<i64: 2, 32>}]} {
    %c0_i32 = arith.constant 0 : i32
    %0 = arith.cmpi eq, %arg0, %c0_i32 : i32
    %1 = arith.extui %0 : i1 to i32
    %c0_i32_0 = arith.constant 0 : i32
    %2 = arith.cmpi ne, %1, %c0_i32_0 : i32
    scf.if %2 {
      %cst_10 = arith.constant 0.000000e+00 : f32
      %12 = vector.broadcast %cst_10 : f32 to vector<2x32xf32>
      %c0_11 = arith.constant 0 : index
      %c0_12 = arith.constant 0 : index
      %13 = vector.load %arg5[%c0_11, %c0_12] : memref<2x32xf32, #tpu.memory_space<vmem>>, vector<2x32xf32>
      tpu.vector_store %arg5[%c0_11, %c0_12], %12 {strides = array<i32>} : memref<2x32xf32, #tpu.memory_space<vmem>>, vector<2x32xf32>,
    } else {
    }
    %c0 = arith.constant 0 : index
    %c0_1 = arith.constant 0 : index
    %3 = vector.load %arg5[%c0, %c0_1] : memref<2x32xf32, #tpu.memory_space<vmem>>, vector<2x32xf32>
    %c0_2 = arith.constant 0 : index
    %c0_3 = arith.constant 0 : index
    %4 = vector.load %arg1[%c0_2, %c0_3] : memref<2x2xf32, #tpu.memory_space<vmem>>, vector<2x2xf32>
    %c0_4 = arith.constant 0 : index
    %c0_5 = arith.constant 0 : index
    %5 = vector.load %arg2[%c0_4, %c0_5] : memref<2x32xf32, #tpu.memory_space<vmem>>, vector<2x32xf32>
    %cst = arith.constant dense<0.000000e+00> : vector<2x32xf32>
    %6 = tpu.matmul %4, %5, %cst {dimension_numbers = #tpu.dot_dimension_numbers<[1], [0], [0], [1], [0, 0, 1, 1], [], []>} : vector<2x2xf32>, vector<2x32xf32>, vector<2x32xf32> -> vector<2x32xf32>
    %7 = arith.addf %3, %6 : vector<2x32xf32>
    %c0_6 = arith.constant 0 : index
    %c0_7 = arith.constant 0 : index
    %8 = vector.load %arg5[%c0_6, %c0_7] : memref<2x32xf32, #tpu.memory_space<vmem>>, vector<2x32xf32>
    tpu.vector_store %arg5[%c0_6, %c0_7], %7 {strides = array<i32>} : memref<2x32xf32, #tpu.memory_space<vmem>>, vector<2x32xf32>,
    %c0_i32_8 = arith.constant 0 : i32
    %9 = arith.cmpi eq, %arg0, %c0_i32_8 : i32
    %10 = arith.extui %9 : i1 to i32
    %c0_i32_9 = arith.constant 0 : i32
    %11 = arith.cmpi ne, %10, %c0_i32_9 : i32
    scf.if %11 {
      %c0_10 = arith.constant 0 : index
      %c0_11 = arith.constant 0 : index
      %12 = vector.load %arg5[%c0_10, %c0_11] : memref<2x32xf32, #tpu.memory_space<vmem>>, vector<2x32xf32>
      %c0_12 = arith.constant 0 : index
      %c0_13 = arith.constant 0 : index
      %13 = vector.load %arg3[%c0_12, %c0_13] : memref<1x32xf32, #tpu.memory_space<vmem>>, vector<1x32xf32>
      %14 = vector.broadcast %13 : vector<1x32xf32> to vector<2x32xf32>
      %15 = arith.addf %12, %14 : vector<2x32xf32>
      %cst_14 = arith.constant 0.000000e+00 : f32
      %16 = vector.broadcast %cst_14 : f32 to vector<2x32xf32>
      %17 = arith.maximumf %15, %16 : vector<2x32xf32>
      %c0_15 = arith.constant 0 : index
      %c0_16 = arith.constant 0 : index
      %18 = vector.load %arg4[%c0_15, %c0_16] : memref<2x32xf32, #tpu.memory_space<vmem>>, vector<2x32xf32>
      tpu.vector_store %arg4[%c0_15, %c0_16], %17 {strides = array<i32>} : memref<2x32xf32, #tpu.memory_space<vmem>>, vector<2x32xf32>,
    } else {
    }
    return
  }
  func.func @transform_0(%arg0: i32) -> (i32, i32) {
    %c0_i32 = arith.constant 0 : i32
    %c0_i32_0 = arith.constant 0 : i32
    return %c0_i32, %arg0 : i32, i32
  }
  func.func @transform_1(%arg0: i32) -> (i32, i32) {
    %c0_i32 = arith.constant 0 : i32
    %c0_i32_0 = arith.constant 0 : i32
    return %arg0, %c0_i32 : i32, i32
  }
  func.func @transform_2(%arg0: i32) -> (i32, i32) {
    %c0_i32 = arith.constant 0 : i32
    %c0_i32_0 = arith.constant 0 : i32
    %c0_i32_1 = arith.constant 0 : i32
    return %c0_i32, %c0_i32_0 : i32, i32
  }
  func.func @transform_3(%arg0: i32) -> (i32, i32) {
    %c0_i32 = arith.constant 0 : i32
    %c0_i32_0 = arith.constant 0 : i32
    %c0_i32_1 = arith.constant 0 : i32
    return %c0_i32, %c0_i32_0 : i32, i32
  }
}

module attributes {stable_mosaic.version = 11 : i64} {
  func.func @_matmul_ktiled_kernel(%arg0: i32, %arg1: memref<2x512xf32, #tpu.memory_space<vmem>>, %arg2: memref<512x512xf32, #tpu.memory_space<vmem>>, %arg3: memref<1x512xf32, #tpu.memory_space<vmem>>, %arg4: memref<2x512xf32, #tpu.memory_space<vmem>>, %arg5: memref<2x512xf32, #tpu.memory_space<vmem>>) attributes {dimension_semantics = [#tpu.dimension_semantics<arbitrary>], iteration_bounds = array<i64: 6>, scalar_prefetch = 0 : i64, scratch_operands = 1 : i64, tpu.core_type = #tpu.core_type<tc>, window_params = [{transform_indices = @transform_0, window_bounds = array<i64: 2, 512>}, {transform_indices = @transform_1, window_bounds = array<i64: 512, 512>}, {pipeline_mode = #tpu.pipeline_mode<synchronous>, transform_indices = @transform_2, window_bounds = array<i64: 1, 512>}, {pipeline_mode = #tpu.pipeline_mode<synchronous>, transform_indices = @transform_3, window_bounds = array<i64: 2, 512>}]} {
    %c0_i32 = arith.constant 0 : i32
    %0 = arith.cmpi eq, %arg0, %c0_i32 : i32
    %1 = arith.extui %0 : i1 to i32
    %c0_i32_0 = arith.constant 0 : i32
    %2 = arith.cmpi ne, %1, %c0_i32_0 : i32
    scf.if %2 {
      %cst_9 = arith.constant 0.000000e+00 : f32
      %12 = vector.broadcast %cst_9 : f32 to vector<2x512xf32>
      %c0_10 = arith.constant 0 : index
      %c0_11 = arith.constant 0 : index
      %13 = vector.load %arg5[%c0_10, %c0_11] : memref<2x512xf32, #tpu.memory_space<vmem>>, vector<2x512xf32>
      tpu.vector_store %arg5[%c0_10, %c0_11], %12 {strides = array<i32>} : memref<2x512xf32, #tpu.memory_space<vmem>>, vector<2x512xf32>,
    } else {
    }
    %c0 = arith.constant 0 : index
    %c0_1 = arith.constant 0 : index
    %3 = vector.load %arg5[%c0, %c0_1] : memref<2x512xf32, #tpu.memory_space<vmem>>, vector<2x512xf32>
    %c0_2 = arith.constant 0 : index
    %c0_3 = arith.constant 0 : index
    %4 = vector.load %arg1[%c0_2, %c0_3] : memref<2x512xf32, #tpu.memory_space<vmem>>, vector<2x512xf32>
    %c0_4 = arith.constant 0 : index
    %c0_5 = arith.constant 0 : index
    %5 = vector.load %arg2[%c0_4, %c0_5] : memref<512x512xf32, #tpu.memory_space<vmem>>, vector<512x512xf32>
    %cst = arith.constant dense<0.000000e+00> : vector<2x512xf32>
    %6 = tpu.matmul %4, %5, %cst {dimension_numbers = #tpu.dot_dimension_numbers<[1], [0], [0], [1], [0, 0, 1, 1], [], []>} : vector<2x512xf32>, vector<512x512xf32>, vector<2x512xf32> -> vector<2x512xf32>
    %7 = arith.addf %3, %6 : vector<2x512xf32>
    %c0_6 = arith.constant 0 : index
    %c0_7 = arith.constant 0 : index
    %8 = vector.load %arg5[%c0_6, %c0_7] : memref<2x512xf32, #tpu.memory_space<vmem>>, vector<2x512xf32>
    tpu.vector_store %arg5[%c0_6, %c0_7], %7 {strides = array<i32>} : memref<2x512xf32, #tpu.memory_space<vmem>>, vector<2x512xf32>,
    %c5_i32 = arith.constant 5 : i32
    %9 = arith.cmpi eq, %arg0, %c5_i32 : i32
    %10 = arith.extui %9 : i1 to i32
    %c0_i32_8 = arith.constant 0 : i32
    %11 = arith.cmpi ne, %10, %c0_i32_8 : i32
    scf.if %11 {
      %c0_9 = arith.constant 0 : index
      %c0_10 = arith.constant 0 : index
      %12 = vector.load %arg5[%c0_9, %c0_10] : memref<2x512xf32, #tpu.memory_space<vmem>>, vector<2x512xf32>
      %c0_11 = arith.constant 0 : index
      %c0_12 = arith.constant 0 : index
      %13 = vector.load %arg3[%c0_11, %c0_12] : memref<1x512xf32, #tpu.memory_space<vmem>>, vector<1x512xf32>
      %14 = vector.broadcast %13 : vector<1x512xf32> to vector<2x512xf32>
      %15 = arith.addf %12, %14 : vector<2x512xf32>
      %cst_13 = arith.constant 0.000000e+00 : f32
      %16 = vector.broadcast %cst_13 : f32 to vector<2x512xf32>
      %17 = arith.maximumf %15, %16 : vector<2x512xf32>
      %c0_14 = arith.constant 0 : index
      %c0_15 = arith.constant 0 : index
      %18 = vector.load %arg4[%c0_14, %c0_15] : memref<2x512xf32, #tpu.memory_space<vmem>>, vector<2x512xf32>
      tpu.vector_store %arg4[%c0_14, %c0_15], %17 {strides = array<i32>} : memref<2x512xf32, #tpu.memory_space<vmem>>, vector<2x512xf32>,
    } else {
    }
    return
  }
  func.func @transform_0(%arg0: i32) -> (i32, i32) {
    %c0_i32 = arith.constant 0 : i32
    %c0_i32_0 = arith.constant 0 : i32
    return %c0_i32, %arg0 : i32, i32
  }
  func.func @transform_1(%arg0: i32) -> (i32, i32) {
    %c0_i32 = arith.constant 0 : i32
    %c0_i32_0 = arith.constant 0 : i32
    return %arg0, %c0_i32 : i32, i32
  }
  func.func @transform_2(%arg0: i32) -> (i32, i32) {
    %c0_i32 = arith.constant 0 : i32
    %c0_i32_0 = arith.constant 0 : i32
    %c0_i32_1 = arith.constant 0 : i32
    return %c0_i32, %c0_i32_0 : i32, i32
  }
  func.func @transform_3(%arg0: i32) -> (i32, i32) {
    %c0_i32 = arith.constant 0 : i32
    %c0_i32_0 = arith.constant 0 : i32
    %c0_i32_1 = arith.constant 0 : i32
    return %c0_i32, %c0_i32_0 : i32, i32
  }
}

module attributes {stable_mosaic.version = 11 : i64} {
  func.func @_matmul_ktiled_kernel(%arg0: i32, %arg1: memref<2x512xf32, #tpu.memory_space<vmem>>, %arg2: memref<512x256xf32, #tpu.memory_space<vmem>>, %arg3: memref<1x256xf32, #tpu.memory_space<vmem>>, %arg4: memref<2x256xf32, #tpu.memory_space<vmem>>, %arg5: memref<2x256xf32, #tpu.memory_space<vmem>>) attributes {dimension_semantics = [#tpu.dimension_semantics<arbitrary>], iteration_bounds = array<i64: 1>, scalar_prefetch = 0 : i64, scratch_operands = 1 : i64, tpu.core_type = #tpu.core_type<tc>, window_params = [{transform_indices = @transform_0, window_bounds = array<i64: 2, 512>}, {transform_indices = @transform_1, window_bounds = array<i64: 512, 256>}, {pipeline_mode = #tpu.pipeline_mode<synchronous>, transform_indices = @transform_2, window_bounds = array<i64: 1, 256>}, {pipeline_mode = #tpu.pipeline_mode<synchronous>, transform_indices = @transform_3, window_bounds = array<i64: 2, 256>}]} {
    %c0_i32 = arith.constant 0 : i32
    %0 = arith.cmpi eq, %arg0, %c0_i32 : i32
    %1 = arith.extui %0 : i1 to i32
    %c0_i32_0 = arith.constant 0 : i32
    %2 = arith.cmpi ne, %1, %c0_i32_0 : i32
    scf.if %2 {
      %cst_10 = arith.constant 0.000000e+00 : f32
      %12 = vector.broadcast %cst_10 : f32 to vector<2x256xf32>
      %c0_11 = arith.constant 0 : index
      %c0_12 = arith.constant 0 : index
      %13 = vector.load %arg5[%c0_11, %c0_12] : memref<2x256xf32, #tpu.memory_space<vmem>>, vector<2x256xf32>
      tpu.vector_store %arg5[%c0_11, %c0_12], %12 {strides = array<i32>} : memref<2x256xf32, #tpu.memory_space<vmem>>, vector<2x256xf32>,
    } else {
    }
    %c0 = arith.constant 0 : index
    %c0_1 = arith.constant 0 : index
    %3 = vector.load %arg5[%c0, %c0_1] : memref<2x256xf32, #tpu.memory_space<vmem>>, vector<2x256xf32>
    %c0_2 = arith.constant 0 : index
    %c0_3 = arith.constant 0 : index
    %4 = vector.load %arg1[%c0_2, %c0_3] : memref<2x512xf32, #tpu.memory_space<vmem>>, vector<2x512xf32>
    %c0_4 = arith.constant 0 : index
    %c0_5 = arith.constant 0 : index
    %5 = vector.load %arg2[%c0_4, %c0_5] : memref<512x256xf32, #tpu.memory_space<vmem>>, vector<512x256xf32>
    %cst = arith.constant dense<0.000000e+00> : vector<2x256xf32>
    %6 = tpu.matmul %4, %5, %cst {dimension_numbers = #tpu.dot_dimension_numbers<[1], [0], [0], [1], [0, 0, 1, 1], [], []>} : vector<2x512xf32>, vector<512x256xf32>, vector<2x256xf32> -> vector<2x256xf32>
    %7 = arith.addf %3, %6 : vector<2x256xf32>
    %c0_6 = arith.constant 0 : index
    %c0_7 = arith.constant 0 : index
    %8 = vector.load %arg5[%c0_6, %c0_7] : memref<2x256xf32, #tpu.memory_space<vmem>>, vector<2x256xf32>
    tpu.vector_store %arg5[%c0_6, %c0_7], %7 {strides = array<i32>} : memref<2x256xf32, #tpu.memory_space<vmem>>, vector<2x256xf32>,
    %c0_i32_8 = arith.constant 0 : i32
    %9 = arith.cmpi eq, %arg0, %c0_i32_8 : i32
    %10 = arith.extui %9 : i1 to i32
    %c0_i32_9 = arith.constant 0 : i32
    %11 = arith.cmpi ne, %10, %c0_i32_9 : i32
    scf.if %11 {
      %c0_10 = arith.constant 0 : index
      %c0_11 = arith.constant 0 : index
      %12 = vector.load %arg5[%c0_10, %c0_11] : memref<2x256xf32, #tpu.memory_space<vmem>>, vector<2x256xf32>
      %c0_12 = arith.constant 0 : index
      %c0_13 = arith.constant 0 : index
      %13 = vector.load %arg3[%c0_12, %c0_13] : memref<1x256xf32, #tpu.memory_space<vmem>>, vector<1x256xf32>
      %14 = vector.broadcast %13 : vector<1x256xf32> to vector<2x256xf32>
      %15 = arith.addf %12, %14 : vector<2x256xf32>
      %cst_14 = arith.constant 0.000000e+00 : f32
      %16 = vector.broadcast %cst_14 : f32 to vector<2x256xf32>
      %17 = arith.maximumf %15, %16 : vector<2x256xf32>
      %c0_15 = arith.constant 0 : index
      %c0_16 = arith.constant 0 : index
      %18 = vector.load %arg4[%c0_15, %c0_16] : memref<2x256xf32, #tpu.memory_space<vmem>>, vector<2x256xf32>
      tpu.vector_store %arg4[%c0_15, %c0_16], %17 {strides = array<i32>} : memref<2x256xf32, #tpu.memory_space<vmem>>, vector<2x256xf32>,
    } else {
    }
    return
  }
  func.func @transform_0(%arg0: i32) -> (i32, i32) {
    %c0_i32 = arith.constant 0 : i32
    %c0_i32_0 = arith.constant 0 : i32
    return %c0_i32, %arg0 : i32, i32
  }
  func.func @transform_1(%arg0: i32) -> (i32, i32) {
    %c0_i32 = arith.constant 0 : i32
    %c0_i32_0 = arith.constant 0 : i32
    return %arg0, %c0_i32 : i32, i32
  }
  func.func @transform_2(%arg0: i32) -> (i32, i32) {
    %c0_i32 = arith.constant 0 : i32
    %c0_i32_0 = arith.constant 0 : i32
    %c0_i32_1 = arith.constant 0 : i32
    return %c0_i32, %c0_i32_0 : i32, i32
  }
  func.func @transform_3(%arg0: i32) -> (i32, i32) {
    %c0_i32 = arith.constant 0 : i32
    %c0_i32_0 = arith.constant 0 : i32
    %c0_i32_1 = arith.constant 0 : i32
    return %c0_i32, %c0_i32_0 : i32, i32
  }
}

module attributes {stable_mosaic.version = 11 : i64} {
  func.func @_matmul_ktiled_kernel(%arg0: i32, %arg1: memref<2x256xf32, #tpu.memory_space<vmem>>, %arg2: memref<256x2xf32, #tpu.memory_space<vmem>>, %arg3: memref<1x2xf32, #tpu.memory_space<vmem>>, %arg4: memref<2x2xf32, #tpu.memory_space<vmem>>, %arg5: memref<2x2xf32, #tpu.memory_space<vmem>>) attributes {dimension_semantics = [#tpu.dimension_semantics<arbitrary>], iteration_bounds = array<i64: 1>, scalar_prefetch = 0 : i64, scratch_operands = 1 : i64, tpu.core_type = #tpu.core_type<tc>, window_params = [{transform_indices = @transform_0, window_bounds = array<i64: 2, 256>}, {transform_indices = @transform_1, window_bounds = array<i64: 256, 2>}, {pipeline_mode = #tpu.pipeline_mode<synchronous>, transform_indices = @transform_2, window_bounds = array<i64: 1, 2>}, {pipeline_mode = #tpu.pipeline_mode<synchronous>, transform_indices = @transform_3, window_bounds = array<i64: 2, 2>}]} {
    %c0_i32 = arith.constant 0 : i32
    %0 = arith.cmpi eq, %arg0, %c0_i32 : i32
    %1 = arith.extui %0 : i1 to i32
    %c0_i32_0 = arith.constant 0 : i32
    %2 = arith.cmpi ne, %1, %c0_i32_0 : i32
    scf.if %2 {
      %cst_10 = arith.constant 0.000000e+00 : f32
      %12 = vector.broadcast %cst_10 : f32 to vector<2x2xf32>
      %c0_11 = arith.constant 0 : index
      %c0_12 = arith.constant 0 : index
      %13 = vector.load %arg5[%c0_11, %c0_12] : memref<2x2xf32, #tpu.memory_space<vmem>>, vector<2x2xf32>
      tpu.vector_store %arg5[%c0_11, %c0_12], %12 {strides = array<i32>} : memref<2x2xf32, #tpu.memory_space<vmem>>, vector<2x2xf32>,
    } else {
    }
    %c0 = arith.constant 0 : index
    %c0_1 = arith.constant 0 : index
    %3 = vector.load %arg5[%c0, %c0_1] : memref<2x2xf32, #tpu.memory_space<vmem>>, vector<2x2xf32>
    %c0_2 = arith.constant 0 : index
    %c0_3 = arith.constant 0 : index
    %4 = vector.load %arg1[%c0_2, %c0_3] : memref<2x256xf32, #tpu.memory_space<vmem>>, vector<2x256xf32>
    %c0_4 = arith.constant 0 : index
    %c0_5 = arith.constant 0 : index
    %5 = vector.load %arg2[%c0_4, %c0_5] : memref<256x2xf32, #tpu.memory_space<vmem>>, vector<256x2xf32>
    %cst = arith.constant dense<0.000000e+00> : vector<2x2xf32>
    %6 = tpu.matmul %4, %5, %cst {dimension_numbers = #tpu.dot_dimension_numbers<[1], [0], [0], [1], [0, 0, 1, 1], [], []>} : vector<2x256xf32>, vector<256x2xf32>, vector<2x2xf32> -> vector<2x2xf32>
    %7 = arith.addf %3, %6 : vector<2x2xf32>
    %c0_6 = arith.constant 0 : index
    %c0_7 = arith.constant 0 : index
    %8 = vector.load %arg5[%c0_6, %c0_7] : memref<2x2xf32, #tpu.memory_space<vmem>>, vector<2x2xf32>
    tpu.vector_store %arg5[%c0_6, %c0_7], %7 {strides = array<i32>} : memref<2x2xf32, #tpu.memory_space<vmem>>, vector<2x2xf32>,
    %c0_i32_8 = arith.constant 0 : i32
    %9 = arith.cmpi eq, %arg0, %c0_i32_8 : i32
    %10 = arith.extui %9 : i1 to i32
    %c0_i32_9 = arith.constant 0 : i32
    %11 = arith.cmpi ne, %10, %c0_i32_9 : i32
    scf.if %11 {
      %c0_10 = arith.constant 0 : index
      %c0_11 = arith.constant 0 : index
      %12 = vector.load %arg5[%c0_10, %c0_11] : memref<2x2xf32, #tpu.memory_space<vmem>>, vector<2x2xf32>
      %c0_12 = arith.constant 0 : index
      %c0_13 = arith.constant 0 : index
      %13 = vector.load %arg3[%c0_12, %c0_13] : memref<1x2xf32, #tpu.memory_space<vmem>>, vector<1x2xf32>
      %14 = vector.broadcast %13 : vector<1x2xf32> to vector<2x2xf32>
      %15 = arith.addf %12, %14 : vector<2x2xf32>
      %c0_14 = arith.constant 0 : index
      %c0_15 = arith.constant 0 : index
      %16 = vector.load %arg4[%c0_14, %c0_15] : memref<2x2xf32, #tpu.memory_space<vmem>>, vector<2x2xf32>
      tpu.vector_store %arg4[%c0_14, %c0_15], %15 {strides = array<i32>} : memref<2x2xf32, #tpu.memory_space<vmem>>, vector<2x2xf32>,
    } else {
    }
    return
  }
  func.func @transform_0(%arg0: i32) -> (i32, i32) {
    %c0_i32 = arith.constant 0 : i32
    %c0_i32_0 = arith.constant 0 : i32
    return %c0_i32, %arg0 : i32, i32
  }
  func.func @transform_1(%arg0: i32) -> (i32, i32) {
    %c0_i32 = arith.constant 0 : i32
    %c0_i32_0 = arith.constant 0 : i32
    return %arg0, %c0_i32 : i32, i32
  }
  func.func @transform_2(%arg0: i32) -> (i32, i32) {
    %c0_i32 = arith.constant 0 : i32
    %c0_i32_0 = arith.constant 0 : i32
    %c0_i32_1 = arith.constant 0 : i32
    return %c0_i32, %c0_i32_0 : i32, i32
  }
  func.func @transform_3(%arg0: i32) -> (i32, i32) {
    %c0_i32 = arith.constant 0 : i32
    %c0_i32_0 = arith.constant 0 : i32
    %c0_i32_1 = arith.constant 0 : i32
    return %c0_i32, %c0_i32_0 : i32, i32
  }
}

</mosaic_0001>

<llo_original>
// kernel: forward.11
$region0: #{forward.11}
  #allocation0 [shape = 'u32[]', space=smem, size = 0x4, offset = 0x4, fixed_abs, tag = 'smem constant byte address 0x4 - core index']
  #allocation1 [shape = 'u32[144,128]{1,0:T(1,128)}', space=vmem, size = 0x12000, scoped, tag = 'internal scratch']
  %s0 = inlined_call_operand.vmem [shape: f32[32,256], index: 0, kind: input, shape index: {}]
  %s1 = inlined_call_operand.vmem [shape: f32[32,256], index: 1, kind: input, shape index: {}]
  %s2 = inlined_call_operand.vmem [shape: f32[32,256], index: 2, kind: input, shape index: {}]
  %s3 = inlined_call_operand.vmem [shape: f32[32,256], index: 3, kind: input, shape index: {}]
  %s4 = inlined_call_operand.vmem [shape: f32[32,256], index: 4, kind: output, shape index: {}]
  %s5 = sld [smem:[#allocation0]]
  $region26: #{forward.11} parent=0
    _
  %s7 = ssub.s32 1, %s5
  %s8 = scalar_select 0, %s7, %s5
  // Predicated region
  $region2: #{forward.11} parent=0 // pred_check
    _
  $region3: #{forward.11} parent=0 // pred_check_branch
    %10 = sbr.rel (0) target = $region5
  $region4: #{forward.11} parent=0 // pred_region
    _
  $region5: #{forward.11} parent=0 // pred_fallthru
    _
  // Predicated region
  $region6: #{forward.11} parent=0 // pred_check
    _
  $region7: #{forward.11} parent=0 // pred_check_branch
    %12 = sbr.rel (0) target = $region9
  $region8: #{forward.11} parent=0 // pred_region
    _
  $region9: #{forward.11} parent=0 // pred_fallthru
    _
  // Predicated region
  $region10: #{forward.11} parent=0 // pred_check
    _
  $region11: #{forward.11} parent=0 // pred_check_branch
    %14 = sbr.rel (0) target = $region13
  $region12: #{forward.11} parent=0 // pred_region
    _
  $region13: #{forward.11} parent=0 // pred_fallthru
    _
  // Predicated region
  $region14: #{forward.11} parent=0 // pred_check
    _
  $region15: #{forward.11} parent=0 // pred_check_branch
    %16 = sbr.rel (0) target = $region17
  $region16: #{forward.11} parent=0 // pred_region
    _
  $region17: #{forward.11} parent=0 // pred_fallthru
    _
  %v17 = vld [vmem:[%s0] sm:$0xff]
  %v18 = vld [vmem:[%s0 + $0x8] sm:$0xff]
  %v19 = vld [vmem:[%s0 + $0x10] sm:$0xff]
  %v20 = vld [vmem:[%s0 + $0x18] sm:$0xff]
  %v21 = vld [vmem:[%s0 + $0x20] sm:$0xff]
  %v22 = vld [vmem:[%s0 + $0x28] sm:$0xff]
  %v23 = vld [vmem:[%s0 + $0x30] sm:$0xff]
  %v24 = vld [vmem:[%s0 + $0x38] sm:$0xff]
  %v25 = vld [vmem:[%s1] sm:$0xff]
  %v26 = vld [vmem:[%s1 + $0x8] sm:$0xff]
  %v27 = vld [vmem:[%s1 + $0x10] sm:$0xff]
  %v28 = vld [vmem:[%s1 + $0x18] sm:$0xff]
  %v29 = vld [vmem:[%s1 + $0x20] sm:$0xff]
  %v30 = vld [vmem:[%s1 + $0x28] sm:$0xff]
  %v31 = vld [vmem:[%s1 + $0x30] sm:$0xff]
  %v32 = vld [vmem:[%s1 + $0x38] sm:$0xff]
  %v33 = vmax.f32 %v17, %v25
  %v34 = vmax.f32 %v18, %v26
  %v35 = vmax.f32 %v19, %v27
  %v36 = vmax.f32 %v20, %v28
  %v37 = vmax.f32 %v21, %v29
  %v38 = vmax.f32 %v22, %v30
  %v39 = vmax.f32 %v23, %v31
  %v40 = vmax.f32 %v24, %v32
  %v41 = vld [vmem:[%s2] sm:$0xff]
  %v42 = vld [vmem:[%s2 + $0x8] sm:$0xff]
  %v43 = vld [vmem:[%s2 + $0x10] sm:$0xff]
  %v44 = vld [vmem:[%s2 + $0x18] sm:$0xff]
  %v45 = vld [vmem:[%s2 + $0x20] sm:$0xff]
  %v46 = vld [vmem:[%s2 + $0x28] sm:$0xff]
  %v47 = vld [vmem:[%s2 + $0x30] sm:$0xff]
  %v48 = vld [vmem:[%s2 + $0x38] sm:$0xff]
  %v49 = vld [vmem:[%s3] sm:$0xff]
  %v50 = vld [vmem:[%s3 + $0x8] sm:$0xff]
  %v51 = vld [vmem:[%s3 + $0x10] sm:$0xff]
  %v52 = vld [vmem:[%s3 + $0x18] sm:$0xff]
  %v53 = vld [vmem:[%s3 + $0x20] sm:$0xff]
  %v54 = vld [vmem:[%s3 + $0x28] sm:$0xff]
  %v55 = vld [vmem:[%s3 + $0x30] sm:$0xff]
  %v56 = vld [vmem:[%s3 + $0x38] sm:$0xff]
  %v57 = vmax.f32 %v41, %v49
  %v58 = vmax.f32 %v42, %v50
  %v59 = vmax.f32 %v43, %v51
  %v60 = vmax.f32 %v44, %v52
  %v61 = vmax.f32 %v45, %v53
  %v62 = vmax.f32 %v46, %v54
  %v63 = vmax.f32 %v47, %v55
  %v64 = vmax.f32 %v48, %v56
  %v65 = vmax.f32 %v33, %v57
  %v66 = vmax.f32 %v34, %v58
  %v67 = vmax.f32 %v35, %v59
  %v68 = vmax.f32 %v36, %v60
  %v69 = vmax.f32 %v37, %v61
  %v70 = vmax.f32 %v38, %v62
  %v71 = vmax.f32 %v39, %v63
  %v72 = vmax.f32 %v40, %v64
  %73 = vst [vmem:[%s4] sm:$0xff] %v65
  %74 = vst [vmem:[%s4 + $0x8] sm:$0xff] %v66
  %75 = vst [vmem:[%s4 + $0x10] sm:$0xff] %v67
  %76 = vst [vmem:[%s4 + $0x18] sm:$0xff] %v68
  %77 = vst [vmem:[%s4 + $0x20] sm:$0xff] %v69
  %78 = vst [vmem:[%s4 + $0x28] sm:$0xff] %v70
  %79 = vst [vmem:[%s4 + $0x30] sm:$0xff] %v71
  %80 = vst [vmem:[%s4 + $0x38] sm:$0xff] %v72
  // Predicated region
  $region18: #{forward.11} parent=0 // pred_check
    _
  $region19: #{forward.11} parent=0 // pred_check_branch
    %82 = sbr.rel (0) target = $region21
  $region20: #{forward.11} parent=0 // pred_region
    _
  $region21: #{forward.11} parent=0 // pred_fallthru
    _
  // Predicated region
  $region22: #{forward.11} parent=0 // pred_check
    _
  $region23: #{forward.11} parent=0 // pred_check_branch
    %84 = sbr.rel (0) target = $region25
  $region24: #{forward.11} parent=0 // pred_region
    _
  $region25: #{forward.11} parent=0 // pred_fallthru
    _

// kernel: forward.10
$region0: #{forward.10}
  #allocation0 [shape = 'u32[]', space=smem, size = 0x4, offset = 0x4, fixed_abs, tag = 'smem constant byte address 0x4 - core index']
  #allocation1 [shape = 'u32[144,128]{1,0:T(1,128)}', space=vmem, size = 0x12000, scoped, tag = 'internal scratch']
  %s0 = inlined_call_operand.vmem [shape: f32[2048,9], index: 0, kind: input, shape index: {}]
  %s1 = inlined_call_operand.vmem [shape: f32[9,16], index: 1, kind: input, shape index: {}]
  %s2 = inlined_call_operand.hbm [shape: f32[1,16], index: 2, kind: input, shape index: {}]
  %s3 = inlined_call_operand.vmem [shape: f32[2048,16], index: 3, kind: output, shape index: {}]
  %s4 = sld [smem:[#allocation0]]
  $region49: #{forward.10} parent=0
    _
  %s6 = ssub.s32 1, %s4
  %s7 = scalar_select 0, %s6, %s4
  $region1: #{forward.10} parent=0
    #allocation2 [shape = 'u8[512]{0}', space=vmem, size = 0x400, scoped, tag = 'input window, operand 2, single buffered']
    #allocation3 [shape = 's32[2]{0}', space=sflag, size = 0x8, scoped, tag = 'scoped memory for forward.10']
    %8 = vsyncpa [#allocation3], 0
    loop: start=0, step=1, limit=4
    $region2: #{forward.10} parent=1 // loop_pre_header
      _
    $region3: #{forward.10} parent=1 // loop_header
      %s10 = sphi 0, %s14
      %p11 = scmp.ge.s32.totalorder %s10, 4
      %s20 = sphi 0, %s22
      %s23 = sphi 0, %s20
      %s24 = sphi 0, %s23
      %s40 = sphi 0, %s24
      %s44 = sphi 0, %s44
      %s46 = sphi 0, %s44
      %s47 = sphi 0, %s46
      %s61 = sphi 0, %s47
      %s65 = sphi 0, %s65
      %s67 = sphi 0, %s65
      %s68 = sphi 0, %s67
      %s82 = sphi 0, %s68
      %s88 = sphi 0, %s90
      %s91 = sphi 0, %s88
      %s92 = sphi 0, %s91
      %s108 = sphi 0, %s92
    $region4: #{forward.10} parent=1 // loop_header_branch
      %13 = sbr.rel (%p11) target = $region8
    $region5: #{forward.10} parent=1 // loop_body
      %s15 = ssub.s32 %s10, 1
      %s16 = ssub.s32 %s10, 2
      %s17 = sadd.s32 %s10, 1
      %s18 = ssub.s32 %s10, %s17
      %p19 = scmp.eq.s32.totalorder %s18, 0
      %s21 = sadd.s32 %s20, 1
      %s22 = scalar_select %p19, %s20, %s21
      %p25 = pneg %p19
      %p26 = scmp.eq.s32.totalorder %s10, 1
      %p27 = por %p25, %p26
      %p28 = scmp.ne.s32.totalorder %s20, %s23
      %p29 = scmp.eq.s32.totalorder %s10, 0
      %p30 = por %p28, %p29
      %p31 = scmp.ne.s32.totalorder %s20, %s23
      %p32 = scmp.eq.s32.totalorder %s15, 1
      %p33 = por %p31, %p32
      %p34 = scmp.ne.s32.totalorder %s23, %s24
      %p35 = scmp.eq.s32.totalorder %s15, 0
      %p36 = por %p34, %p35
      %p37 = scmp.ne.s32.totalorder %s23, %s24
      %p38 = scmp.eq.s32.totalorder %s16, 1
      %p39 = por %p37, %p38
      %p41 = scmp.ne.s32.totalorder %s24, %s40
      %p42 = scmp.eq.s32.totalorder %s16, 0
      %p43 = por %p41, %p42
      %s45 = sadd.s32 %s44, 1
      %p48 = scmp.eq.s32.totalorder %s10, 1
      %p49 = scmp.ne.s32.totalorder %s44, %s46
      %p50 = scmp.eq.s32.totalorder %s10, 0
      %p51 = por %p49, %p50
      %p52 = scmp.ne.s32.totalorder %s44, %s46
      %p53 = scmp.eq.s32.totalorder %s15, 1
      %p54 = por %p52, %p53
      %p55 = scmp.ne.s32.totalorder %s46, %s47
      %p56 = scmp.eq.s32.totalorder %s15, 0
      %p57 = por %p55, %p56
      %p58 = scmp.ne.s32.totalorder %s46, %s47
      %p59 = scmp.eq.s32.totalorder %s16, 1
      %p60 = por %p58, %p59
      %p62 = scmp.ne.s32.totalorder %s47, %s61
      %p63 = scmp.eq.s32.totalorder %s16, 0
      %p64 = por %p62, %p63
      %s66 = sadd.s32 %s65, 1
      %p69 = scmp.eq.s32.totalorder %s10, 1
      %p70 = scmp.ne.s32.totalorder %s65, %s67
      %p71 = scmp.eq.s32.totalorder %s10, 0
      %p72 = por %p70, %p71
      %p73 = scmp.ne.s32.totalorder %s65, %s67
      %p74 = scmp.eq.s32.totalorder %s15, 1
      %p75 = por %p73, %p74
      %p76 = scmp.ne.s32.totalorder %s67, %s68
      %p77 = scmp.eq.s32.totalorder %s15, 0
      %p78 = por %p76, %p77
      %p79 = scmp.ne.s32.totalorder %s67, %s68
      %p80 = scmp.eq.s32.totalorder %s16, 1
      %p81 = por %p79, %p80
      %p83 = scmp.ne.s32.totalorder %s68, %s82
      %p84 = scmp.eq.s32.totalorder %s16, 0
      %p85 = por %p83, %p84
      %s86 = ssub.s32 %s10, %s17
      %p87 = scmp.eq.s32.totalorder %s86, 0
      %s89 = sadd.s32 %s88, 1
      %s90 = scalar_select %p87, %s88, %s89
      %p93 = pneg %p87
      %p94 = scmp.eq.s32.totalorder %s10, 1
      %p95 = por %p93, %p94
      %p96 = scmp.ne.s32.totalorder %s88, %s91
      %p97 = scmp.eq.s32.totalorder %s10, 0
      %p98 = por %p96, %p97
      %p99 = scmp.ne.s32.totalorder %s88, %s91
      %p100 = scmp.eq.s32.totalorder %s15, 1
      %p101 = por %p99, %p100
      %p102 = scmp.ne.s32.totalorder %s91, %s92
      %p103 = scmp.eq.s32.totalorder %s15, 0
      %p104 = por %p102, %p103
      %p105 = scmp.ne.s32.totalorder %s91, %s92
      %p106 = scmp.eq.s32.totalorder %s16, 1
      %p107 = por %p105, %p106
      %p109 = scmp.ne.s32.totalorder %s92, %s108
      %p110 = scmp.eq.s32.totalorder %s16, 0
      %p111 = por %p109, %p110
      %p112 = scmp.le.s32.totalorder 1, %s10
      %p113 = scmp.lt.s32.totalorder %s10, 3
      %p114 = pnand %p112, %p113
      %p115 = pneg %p114
      // Predicated region
      $region9: #{forward.10} parent=5 // pred_check
        _
      $region10: #{forward.10} parent=5 // pred_check_branch
        %117 = sbr.rel (%p114) target = $region12
      $region11: #{forward.10} parent=5 // pred_region
        %s118 = ssub.s32 %s10, 1
        // Predicated region
        $region13: #{forward.10} parent=11 // pred_check
          %p119 = pneg %p57
        $region14: #{forward.10} parent=11 // pred_check_branch
          %121 = sbr.rel (%p119) target = $region16
        $region15: #{forward.10} parent=11 // pred_region
          _
        $region16: #{forward.10} parent=11 // pred_fallthru
          _
        // Predicated region
        $region17: #{forward.10} parent=11 // pred_check
          %p122 = pneg %p78
        $region18: #{forward.10} parent=11 // pred_check_branch
          %124 = sbr.rel (%p122) target = $region20
        $region19: #{forward.10} parent=11 // pred_region
          %s126 = ssub.s32 16, 16
          %127 = vsyncadd [#allocation3], %s126
          %s129 = sshll.u32 [#allocation2], 4
          %s130 = int_to_ptr.vmem [resolvable:$true] %s129
          %132 = dma.hbm_to_vmem [thread:$0]  %s2, 16, %s130, [#allocation3]
        $region20: #{forward.10} parent=11 // pred_fallthru
          _
      $region12: #{forward.10} parent=5 // pred_fallthru
        _
      %p133 = scmp.lt.s32.totalorder %s10, 2
      // Predicated region
      $region21: #{forward.10} parent=5 // pred_check
        %p134 = pneg %p133
      $region22: #{forward.10} parent=5 // pred_check_branch
        %136 = sbr.rel (%p134) target = $region24
      $region23: #{forward.10} parent=5 // pred_region
        // Predicated region
        $region25: #{forward.10} parent=23 // pred_check
          %p137 = pneg %p30
        $region26: #{forward.10} parent=23 // pred_check_branch
          %139 = sbr.rel (%p137) target = $region28
        $region27: #{forward.10} parent=23 // pred_region
          %s140 = smul.u32 128, %s10
          %p141 = scmp.lt.s32.totalorder %s140, 255
          %s142 = scalar_select %p141, %s140, 255
          %s143 = smul.addr %s142, 8
          %s144 = scalar_lea.vmem %s0, %s143
          %s145 = smul.u32 128, %s10
        $region28: #{forward.10} parent=23 // pred_fallthru
          _
      $region24: #{forward.10} parent=5 // pred_fallthru
        _
      %p146 = scmp.le.s32.totalorder 1, %s10
      %p147 = scmp.lt.s32.totalorder %s10, 3
      %p148 = pnand %p146, %p147
      %p149 = pneg %p148
      // Predicated region
      $region29: #{forward.10} parent=5 // pred_check
        _
      $region30: #{forward.10} parent=5 // pred_check_branch
        %151 = sbr.rel (%p148) target = $region32
      $region31: #{forward.10} parent=5 // pred_region
        %s152 = ssub.s32 %s10, 1
        // Predicated region
        $region33: #{forward.10} parent=31 // pred_check
          %p153 = pneg %p78
        $region34: #{forward.10} parent=31 // pred_check_branch
          %155 = sbr.rel (%p153) target = $region36
        $region35: #{forward.10} parent=31 // pred_region
          %156 = dma.done [#allocation3], 16
        $region36: #{forward.10} parent=31 // pred_fallthru
          _
        %s157 = smul.u32 128, %s15
        %p158 = scmp.lt.s32.totalorder %s157, 255
        %s159 = scalar_select %p158, %s157, 255
        %s160 = smul.addr %s159, 8
        %s161 = scalar_lea.vmem %s0, %s160
        %p162 = pneg %p36
        %p163 = pneg %p33
        %p164 = pneg %p57
        %p165 = pneg %p54
        %p166 = pneg %p78
        %p167 = pneg %p75
        %p168 = pneg %p104
        %p169 = pneg %p101
        %s170 = smul.u32 128, %s15
        %p171 = scmp.lt.s32.totalorder %s170, 255
        %s172 = scalar_select %p171, %s170, 255
        %s173 = smul.addr %s172, 8
        %s174 = scalar_lea.vmem %s3, %s173
        %s175 = smul.u32 128, %s15
        %p176 = scmp.lt.s32.totalorder %s175, 255
        %s177 = scalar_select %p176, %s175, 255
        %s178 = smul.addr %s177, 8
        %s179 = scalar_lea.vmem %s0, %s178
        %s180 = smul.u32 128, %s15
        %s181 = smul.u32 128, %s15
        %p182 = scmp.lt.s32.totalorder %s181, 255
        %s183 = scalar_select %p182, %s181, 255
        %s184 = smul.addr %s183, 8
        %s185 = scalar_lea.vmem %s3, %s184
        %s186 = smul.u32 128, %s15
        %v187 = vld [vmem:[%s179] sm:$0xff]
        %v188 = vld [vmem:[%s179 + $0x8] sm:$0xff]
        %v189 = vld [vmem:[%s179 + $0x10] sm:$0xff]
        %v190 = vld [vmem:[%s179 + $0x18] sm:$0xff]
        %v191 = vld [vmem:[%s179 + $0x20] sm:$0xff]
        %v192 = vld [vmem:[%s179 + $0x28] sm:$0xff]
        %v193 = vld [vmem:[%s179 + $0x30] sm:$0xff]
        %v194 = vld [vmem:[%s179 + $0x38] sm:$0xff]
        %v195 = vld [vmem:[%s179 + $0x40] sm:$0xff]
        %v196 = vld [vmem:[%s179 + $0x48] sm:$0xff]
        %v197 = vld [vmem:[%s179 + $0x50] sm:$0xff]
        %v198 = vld [vmem:[%s179 + $0x58] sm:$0xff]
        %v199 = vld [vmem:[%s179 + $0x60] sm:$0xff]
        %v200 = vld [vmem:[%s179 + $0x68] sm:$0xff]
        %v201 = vld [vmem:[%s179 + $0x70] sm:$0xff]
        %v202 = vld [vmem:[%s179 + $0x78] sm:$0xff]
        %v203 = vld [vmem:[%s179 + $0x80] sm:$0xff]
        %v204 = vld [vmem:[%s179 + $0x88] sm:$0xff]
        %v205 = vld [vmem:[%s179 + $0x90] sm:$0xff]
        %v206 = vld [vmem:[%s179 + $0x98] sm:$0xff]
        %v207 = vld [vmem:[%s179 + $0xa0] sm:$0xff]
        %v208 = vld [vmem:[%s179 + $0xa8] sm:$0xff]
        %v209 = vld [vmem:[%s179 + $0xb0] sm:$0xff]
        %v210 = vld [vmem:[%s179 + $0xb8] sm:$0xff]
        %v211 = vld [vmem:[%s179 + $0xc0] sm:$0xff]
        %v212 = vld [vmem:[%s179 + $0xc8] sm:$0xff]
        %v213 = vld [vmem:[%s179 + $0xd0] sm:$0xff]
        %v214 = vld [vmem:[%s179 + $0xd8] sm:$0xff]
        %v215 = vld [vmem:[%s179 + $0xe0] sm:$0xff]
        %v216 = vld [vmem:[%s179 + $0xe8] sm:$0xff]
        %v217 = vld [vmem:[%s179 + $0xf0] sm:$0xff]
        %v218 = vld [vmem:[%s179 + $0xf8] sm:$0xff]
        %v219 = vld [vmem:[%s179 + $0x100] sm:$0xff]
        %v220 = vld [vmem:[%s179 + $0x108] sm:$0xff]
        %v221 = vld [vmem:[%s179 + $0x110] sm:$0xff]
        %v222 = vld [vmem:[%s179 + $0x118] sm:$0xff]
        %v223 = vld [vmem:[%s179 + $0x120] sm:$0xff]
        %v224 = vld [vmem:[%s179 + $0x128] sm:$0xff]
        %v225 = vld [vmem:[%s179 + $0x130] sm:$0xff]
        %v226 = vld [vmem:[%s179 + $0x138] sm:$0xff]
        %v227 = vld [vmem:[%s179 + $0x140] sm:$0xff]
        %v228 = vld [vmem:[%s179 + $0x148] sm:$0xff]
        %v229 = vld [vmem:[%s179 + $0x150] sm:$0xff]
        %v230 = vld [vmem:[%s179 + $0x158] sm:$0xff]
        %v231 = vld [vmem:[%s179 + $0x160] sm:$0xff]
        %v232 = vld [vmem:[%s179 + $0x168] sm:$0xff]
        %v233 = vld [vmem:[%s179 + $0x170] sm:$0xff]
        %v234 = vld [vmem:[%s179 + $0x178] sm:$0xff]
        %v235 = vld [vmem:[%s179 + $0x180] sm:$0xff]
        %v236 = vld [vmem:[%s179 + $0x188] sm:$0xff]
        %v237 = vld [vmem:[%s179 + $0x190] sm:$0xff]
        %v238 = vld [vmem:[%s179 + $0x198] sm:$0xff]
        %v239 = vld [vmem:[%s179 + $0x1a0] sm:$0xff]
        %v240 = vld [vmem:[%s179 + $0x1a8] sm:$0xff]
        %v241 = vld [vmem:[%s179 + $0x1b0] sm:$0xff]
        %v242 = vld [vmem:[%s179 + $0x1b8] sm:$0xff]
        %v243 = vld [vmem:[%s179 + $0x1c0] sm:$0xff]
        %v244 = vld [vmem:[%s179 + $0x1c8] sm:$0xff]
        %v245 = vld [vmem:[%s179 + $0x1d0] sm:$0xff]
        %v246 = vld [vmem:[%s179 + $0x1d8] sm:$0xff]
        %v247 = vld [vmem:[%s179 + $0x1e0] sm:$0xff]
        %v248 = vld [vmem:[%s179 + $0x1e8] sm:$0xff]
        %v249 = vld [vmem:[%s179 + $0x1f0] sm:$0xff]
        %v250 = vld [vmem:[%s179 + $0x1f8] sm:$0xff]
        %v251 = vld [vmem:[%s179 + $0x200] sm:$0xff]
        %v252 = vld [vmem:[%s179 + $0x208] sm:$0xff]
        %v253 = vld [vmem:[%s179 + $0x210] sm:$0xff]
        %v254 = vld [vmem:[%s179 + $0x218] sm:$0xff]
        %v255 = vld [vmem:[%s179 + $0x220] sm:$0xff]
        %v256 = vld [vmem:[%s179 + $0x228] sm:$0xff]
        %v257 = vld [vmem:[%s179 + $0x230] sm:$0xff]
        %v258 = vld [vmem:[%s179 + $0x238] sm:$0xff]
        %v259 = vld [vmem:[%s179 + $0x240] sm:$0xff]
        %v260 = vld [vmem:[%s179 + $0x248] sm:$0xff]
        %v261 = vld [vmem:[%s179 + $0x250] sm:$0xff]
        %v262 = vld [vmem:[%s179 + $0x258] sm:$0xff]
        %v263 = vld [vmem:[%s179 + $0x260] sm:$0xff]
        %v264 = vld [vmem:[%s179 + $0x268] sm:$0xff]
        %v265 = vld [vmem:[%s179 + $0x270] sm:$0xff]
        %v266 = vld [vmem:[%s179 + $0x278] sm:$0xff]
        %v267 = vld [vmem:[%s179 + $0x280] sm:$0xff]
        %v268 = vld [vmem:[%s179 + $0x288] sm:$0xff]
        %v269 = vld [vmem:[%s179 + $0x290] sm:$0xff]
        %v270 = vld [vmem:[%s179 + $0x298] sm:$0xff]
        %v271 = vld [vmem:[%s179 + $0x2a0] sm:$0xff]
        %v272 = vld [vmem:[%s179 + $0x2a8] sm:$0xff]
        %v273 = vld [vmem:[%s179 + $0x2b0] sm:$0xff]
        %v274 = vld [vmem:[%s179 + $0x2b8] sm:$0xff]
        %v275 = vld [vmem:[%s179 + $0x2c0] sm:$0xff]
        %v276 = vld [vmem:[%s179 + $0x2c8] sm:$0xff]
        %v277 = vld [vmem:[%s179 + $0x2d0] sm:$0xff]
        %v278 = vld [vmem:[%s179 + $0x2d8] sm:$0xff]
        %v279 = vld [vmem:[%s179 + $0x2e0] sm:$0xff]
        %v280 = vld [vmem:[%s179 + $0x2e8] sm:$0xff]
        %v281 = vld [vmem:[%s179 + $0x2f0] sm:$0xff]
        %v282 = vld [vmem:[%s179 + $0x2f8] sm:$0xff]
        %v283 = vld [vmem:[%s179 + $0x300] sm:$0xff]
        %v284 = vld [vmem:[%s179 + $0x308] sm:$0xff]
        %v285 = vld [vmem:[%s179 + $0x310] sm:$0xff]
        %v286 = vld [vmem:[%s179 + $0x318] sm:$0xff]
        %v287 = vld [vmem:[%s179 + $0x320] sm:$0xff]
        %v288 = vld [vmem:[%s179 + $0x328] sm:$0xff]
        %v289 = vld [vmem:[%s179 + $0x330] sm:$0xff]
        %v290 = vld [vmem:[%s179 + $0x338] sm:$0xff]
        %v291 = vld [vmem:[%s179 + $0x340] sm:$0xff]
        %v292 = vld [vmem:[%s179 + $0x348] sm:$0xff]
        %v293 = vld [vmem:[%s179 + $0x350] sm:$0xff]
        %v294 = vld [vmem:[%s179 + $0x358] sm:$0xff]
        %v295 = vld [vmem:[%s179 + $0x360] sm:$0xff]
        %v296 = vld [vmem:[%s179 + $0x368] sm:$0xff]
        %v297 = vld [vmem:[%s179 + $0x370] sm:$0xff]
        %v298 = vld [vmem:[%s179 + $0x378] sm:$0xff]
        %v299 = vld [vmem:[%s179 + $0x380] sm:$0xff]
        %v300 = vld [vmem:[%s179 + $0x388] sm:$0xff]
        %v301 = vld [vmem:[%s179 + $0x390] sm:$0xff]
        %v302 = vld [vmem:[%s179 + $0x398] sm:$0xff]
        %v303 = vld [vmem:[%s179 + $0x3a0] sm:$0xff]
        %v304 = vld [vmem:[%s179 + $0x3a8] sm:$0xff]
        %v305 = vld [vmem:[%s179 + $0x3b0] sm:$0xff]
        %v306 = vld [vmem:[%s179 + $0x3b8] sm:$0xff]
        %v307 = vld [vmem:[%s179 + $0x3c0] sm:$0xff]
        %v308 = vld [vmem:[%s179 + $0x3c8] sm:$0xff]
        %v309 = vld [vmem:[%s179 + $0x3d0] sm:$0xff]
        %v310 = vld [vmem:[%s179 + $0x3d8] sm:$0xff]
        %v311 = vld [vmem:[%s179 + $0x3e0] sm:$0xff]
        %v312 = vld [vmem:[%s179 + $0x3e8] sm:$0xff]
        %v313 = vld [vmem:[%s179 + $0x3f0] sm:$0xff]
        %v314 = vld [vmem:[%s179 + $0x3f8] sm:$0xff]
        %v315 = vld [vmem:[%s1] sm:$0xff]
        %v316 = vld [vmem:[%s1 + $0x8] sm:$0x1]
        %v317 = vld [vmem:[#allocation2] sm:$0x1]
        %v319 = vlaneseq
        %v320 = vshrl.u32 %v319, 7
        %v321 = vsub.s32 0, %v320
        %v322 = vrot.slane %v317, %v321
        %vm324 = vcmask 72704
        %v326 = vsel %vm324, %v187, 0
        %v329 = vsel %vm324, %v188, 0
        %v332 = vsel %vm324, %v189, 0
        %v335 = vsel %vm324, %v190, 0
        %v338 = vsel %vm324, %v191, 0
        %v341 = vsel %vm324, %v192, 0
        %v344 = vsel %vm324, %v193, 0
        %v347 = vsel %vm324, %v194, 0
        %v350 = vsel %vm324, %v195, 0
        %v353 = vsel %vm324, %v196, 0
        %v356 = vsel %vm324, %v197, 0
        %v359 = vsel %vm324, %v198, 0
        %v362 = vsel %vm324, %v199, 0
        %v365 = vsel %vm324, %v200, 0
        %v368 = vsel %vm324, %v201, 0
        %v371 = vsel %vm324, %v202, 0
        %v374 = vsel %vm324, %v203, 0
        %v377 = vsel %vm324, %v204, 0
        %v380 = vsel %vm324, %v205, 0
        %v383 = vsel %vm324, %v206, 0
        %v386 = vsel %vm324, %v207, 0
        %v389 = vsel %vm324, %v208, 0
        %v392 = vsel %vm324, %v209, 0
        %v395 = vsel %vm324, %v210, 0
        %v398 = vsel %vm324, %v211, 0
        %v401 = vsel %vm324, %v212, 0
        %v404 = vsel %vm324, %v213, 0
        %v407 = vsel %vm324, %v214, 0
        %v410 = vsel %vm324, %v215, 0
        %v413 = vsel %vm324, %v216, 0
        %v416 = vsel %vm324, %v217, 0
        %v419 = vsel %vm324, %v218, 0
        %v422 = vsel %vm324, %v219, 0
        %v425 = vsel %vm324, %v220, 0
        %v428 = vsel %vm324, %v221, 0
        %v431 = vsel %vm324, %v222, 0
        %v434 = vsel %vm324, %v223, 0
        %v437 = vsel %vm324, %v224, 0
        %v440 = vsel %vm324, %v225, 0
        %v443 = vsel %vm324, %v226, 0
        %v446 = vsel %vm324, %v227, 0
        %v449 = vsel %vm324, %v228, 0
        %v452 = vsel %vm324, %v229, 0
        %v455 = vsel %vm324, %v230, 0
        %v458 = vsel %vm324, %v231, 0
        %v461 = vsel %vm324, %v232, 0
        %v464 = vsel %vm324, %v233, 0
        %v467 = vsel %vm324, %v234, 0
        %v470 = vsel %vm324, %v235, 0
        %v473 = vsel %vm324, %v236, 0
        %v476 = vsel %vm324, %v237, 0
        %v479 = vsel %vm324, %v238, 0
        %v482 = vsel %vm324, %v239, 0
        %v485 = vsel %vm324, %v240, 0
        %v488 = vsel %vm324, %v241, 0
        %v491 = vsel %vm324, %v242, 0
        %v494 = vsel %vm324, %v243, 0
        %v497 = vsel %vm324, %v244, 0
        %v500 = vsel %vm324, %v245, 0
        %v503 = vsel %vm324, %v246, 0
        %v506 = vsel %vm324, %v247, 0
        %v509 = vsel %vm324, %v248, 0
        %v512 = vsel %vm324, %v249, 0
        %v515 = vsel %vm324, %v250, 0
        %v518 = vsel %vm324, %v251, 0
        %v521 = vsel %vm324, %v252, 0
        %v524 = vsel %vm324, %v253, 0
        %v527 = vsel %vm324, %v254, 0
        %v530 = vsel %vm324, %v255, 0
        %v533 = vsel %vm324, %v256, 0
        %v536 = vsel %vm324, %v257, 0
        %v539 = vsel %vm324, %v258, 0
        %v542 = vsel %vm324, %v259, 0
        %v545 = vsel %vm324, %v260, 0
        %v548 = vsel %vm324, %v261, 0
        %v551 = vsel %vm324, %v262, 0
        %v554 = vsel %vm324, %v263, 0
        %v557 = vsel %vm324, %v264, 0
        %v560 = vsel %vm324, %v265, 0
        %v563 = vsel %vm324, %v266, 0
        %v566 = vsel %vm324, %v267, 0
        %v569 = vsel %vm324, %v268, 0
        %v572 = vsel %vm324, %v269, 0
        %v575 = vsel %vm324, %v270, 0
        %v578 = vsel %vm324, %v271, 0
        %v581 = vsel %vm324, %v272, 0
        %v584 = vsel %vm324, %v273, 0
        %v587 = vsel %vm324, %v274, 0
        %v590 = vsel %vm324, %v275, 0
        %v593 = vsel %vm324, %v276, 0
        %v596 = vsel %vm324, %v277, 0
        %v599 = vsel %vm324, %v278, 0
        %v602 = vsel %vm324, %v279, 0
        %v605 = vsel %vm324, %v280, 0
        %v608 = vsel %vm324, %v281, 0
        %v611 = vsel %vm324, %v282, 0
        %v614 = vsel %vm324, %v283, 0
        %v617 = vsel %vm324, %v284, 0
        %v620 = vsel %vm324, %v285, 0
        %v623 = vsel %vm324, %v286, 0
        %v626 = vsel %vm324, %v287, 0
        %v629 = vsel %vm324, %v288, 0
        %v632 = vsel %vm324, %v289, 0
        %v635 = vsel %vm324, %v290, 0
        %v638 = vsel %vm324, %v291, 0
        %v641 = vsel %vm324, %v292, 0
        %v644 = vsel %vm324, %v293, 0
        %v647 = vsel %vm324, %v294, 0
        %v650 = vsel %vm324, %v295, 0
        %v653 = vsel %vm324, %v296, 0
        %v656 = vsel %vm324, %v297, 0
        %v659 = vsel %vm324, %v298, 0
        %v662 = vsel %vm324, %v299, 0
        %v665 = vsel %vm324, %v300, 0
        %v668 = vsel %vm324, %v301, 0
        %v671 = vsel %vm324, %v302, 0
        %v674 = vsel %vm324, %v303, 0
        %v677 = vsel %vm324, %v304, 0
        %v680 = vsel %vm324, %v305, 0
        %v683 = vsel %vm324, %v306, 0
        %v686 = vsel %vm324, %v307, 0
        %v689 = vsel %vm324, %v308, 0
        %v692 = vsel %vm324, %v309, 0
        %v695 = vsel %vm324, %v310, 0
        %v698 = vsel %vm324, %v311, 0
        %v701 = vsel %vm324, %v312, 0
        %v704 = vsel %vm324, %v313, 0
        %v707 = vsel %vm324, %v314, 0
        %vm709 = vcmask 1040384
        %v711 = vsel %vm709, %v316, 0
        %713 = vmatprep.subr.mxu0 0.0
        %714 = vmatpush1.msra.mxu0 0.0
        %715 = vmatprep.subr.mxu0 0.0
        %716 = vmatpush1.msra.mxu0 0.0
        %717 = vmatprep.subr.mxu0 0.0
        %718 = vmatpush1.msra.mxu0 0.0
        %719 = vmatprep.subr.mxu0 0.0
        %720 = vmatpush1.msra.mxu0 0.0
        %721 = vmatprep.subr.mxu0 0.0
        %722 = vmatpush1.msra.mxu0 0.0
        %723 = vmatprep.subr.mxu0 0.0
        %724 = vmatpush1.msra.mxu0 0.0
        %725 = vmatprep.subr.mxu0 0.0
        %726 = vmatpush1.msra.mxu0 0.0
        %727 = vmatprep.subr.mxu0 0.0
        %728 = vmatpush1.msra.mxu0 0.0
        %729 = vmatprep.subr.mxu0 0.0
        %730 = vmatpush1.msra.mxu0 0.0
        %731 = vmatprep.subr.mxu0 0.0
        %732 = vmatpush1.msra.mxu0 0.0
        %733 = vmatprep.subr.mxu0 0.0
        %734 = vmatpush1.msra.mxu0 0.0
        %735 = vmatprep.subr.mxu0 0.0
        %736 = vmatpush1.msra.mxu0 0.0
        %737 = vmatprep.subr.mxu0 0.0
        %738 = vmatpush1.msra.mxu0 0.0
        %739 = vmatprep.subr.mxu0 0.0
        %740 = vmatpush1.msra.mxu0 0.0
        %741 = vmatprep.subr.mxu0 0.0
        %742 = vmatpush1.msra.mxu0 %v711
        %743 = vmatprep.subr.mxu0 0.0
        %744 = vmatpush1.msra.mxu0 %v315
        %745 = vmatprep.subr.mxu0 0.0
        %746 = vmatpush2.msra.mxu0 0.0
        %747 = vmatprep.subr.mxu0 0.0
        %748 = vmatpush2.msra.mxu0 0.0
        %749 = vmatprep.subr.mxu0 0.0
        %750 = vmatpush2.msra.mxu0 0.0
        %751 = vmatprep.subr.mxu0 0.0
        %752 = vmatpush2.msra.mxu0 0.0
        %753 = vmatprep.subr.mxu0 0.0
        %754 = vmatpush2.msra.mxu0 0.0
        %755 = vmatprep.subr.mxu0 0.0
        %756 = vmatpush2.msra.mxu0 0.0
        %757 = vmatprep.subr.mxu0 0.0
        %758 = vmatpush2.msra.mxu0 0.0
        %759 = vmatprep.subr.mxu0 0.0
        %760 = vmatpush2.msra.mxu0 0.0
        %761 = vmatprep.subr.mxu0 0.0
        %762 = vmatpush2.msra.mxu0 0.0
        %763 = vmatprep.subr.mxu0 0.0
        %764 = vmatpush2.msra.mxu0 0.0
        %765 = vmatprep.subr.mxu0 0.0
        %766 = vmatpush2.msra.mxu0 0.0
        %767 = vmatprep.subr.mxu0 0.0
        %768 = vmatpush2.msra.mxu0 0.0
        %769 = vmatprep.subr.mxu0 0.0
        %770 = vmatpush2.msra.mxu0 0.0
        %771 = vmatprep.subr.mxu0 0.0
        %772 = vmatpush2.msra.mxu0 0.0
        %773 = vmatprep.subr.mxu0 0.0
        %774 = vmatpush2.msra.mxu0 0.0
        %775 = vmatprep.subr.mxu0 0.0
        %776 = vmatpush2.msra.mxu0 0.0
        %777 = vmatprep.mubr.f32.mxu0 0.0
        %778 = vmatmul.mubr.f32.gmra.mxu0 %v326
        %v779 = vpop.f32.mrf.mxu0
        %v780 = vadd.f32 %v322, %v779
        %v781 = vpop.f32.mrf.mxu0
        %782 = vmatprep.mubr.f32.mxu0 0.0
        %783 = vmatmul.mubr.f32.gmra.mxu0 %v329
        %v784 = vpop.f32.mrf.mxu0
        %v785 = vadd.f32 %v322, %v784
        %v786 = vpop.f32.mrf.mxu0
        %787 = vmatprep.mubr.f32.mxu0 0.0
        %788 = vmatmul.mubr.f32.gmra.mxu0 %v332
        %v789 = vpop.f32.mrf.mxu0
        %v790 = vadd.f32 %v322, %v789
        %v791 = vpop.f32.mrf.mxu0
        %792 = vmatprep.mubr.f32.mxu0 0.0
        %793 = vmatmul.mubr.f32.gmra.mxu0 %v335
        %v794 = vpop.f32.mrf.mxu0
        %v795 = vadd.f32 %v322, %v794
        %v796 = vpop.f32.mrf.mxu0
        %797 = vmatprep.mubr.f32.mxu0 0.0
        %798 = vmatmul.mubr.f32.gmra.mxu0 %v338
        %v799 = vpop.f32.mrf.mxu0
        %v800 = vadd.f32 %v322, %v799
        %v801 = vpop.f32.mrf.mxu0
        %802 = vmatprep.mubr.f32.mxu0 0.0
        %803 = vmatmul.mubr.f32.gmra.mxu0 %v341
        %v804 = vpop.f32.mrf.mxu0
        %v805 = vadd.f32 %v322, %v804
        %v806 = vpop.f32.mrf.mxu0
        %807 = vmatprep.mubr.f32.mxu0 0.0
        %808 = vmatmul.mubr.f32.gmra.mxu0 %v344
        %v809 = vpop.f32.mrf.mxu0
        %v810 = vadd.f32 %v322, %v809
        %v811 = vpop.f32.mrf.mxu0
        %812 = vmatprep.mubr.f32.mxu0 0.0
        %813 = vmatmul.mubr.f32.gmra.mxu0 %v347
        %v814 = vpop.f32.mrf.mxu0
        %v815 = vadd.f32 %v322, %v814
        %v816 = vpop.f32.mrf.mxu0
        %817 = vmatprep.mubr.f32.mxu0 0.0
        %818 = vmatmul.mubr.f32.gmra.mxu0 %v350
        %v819 = vpop.f32.mrf.mxu0
        %v820 = vadd.f32 %v322, %v819
        %v821 = vpop.f32.mrf.mxu0
        %822 = vmatprep.mubr.f32.mxu0 0.0
        %823 = vmatmul.mubr.f32.gmra.mxu0 %v353
        %v824 = vpop.f32.mrf.mxu0
        %v825 = vadd.f32 %v322, %v824
        %v826 = vpop.f32.mrf.mxu0
        %827 = vmatprep.mubr.f32.mxu0 0.0
        %828 = vmatmul.mubr.f32.gmra.mxu0 %v356
        %v829 = vpop.f32.mrf.mxu0
        %v830 = vadd.f32 %v322, %v829
        %v831 = vpop.f32.mrf.mxu0
        %832 = vmatprep.mubr.f32.mxu0 0.0
        %833 = vmatmul.mubr.f32.gmra.mxu0 %v359
        %v834 = vpop.f32.mrf.mxu0
        %v835 = vadd.f32 %v322, %v834
        %v836 = vpop.f32.mrf.mxu0
        %837 = vmatprep.mubr.f32.mxu0 0.0
        %838 = vmatmul.mubr.f32.gmra.mxu0 %v362
        %v839 = vpop.f32.mrf.mxu0
        %v840 = vadd.f32 %v322, %v839
        %v841 = vpop.f32.mrf.mxu0
        %842 = vmatprep.mubr.f32.mxu0 0.0
        %843 = vmatmul.mubr.f32.gmra.mxu0 %v365
        %v844 = vpop.f32.mrf.mxu0
        %v845 = vadd.f32 %v322, %v844
        %v846 = vpop.f32.mrf.mxu0
        %847 = vmatprep.mubr.f32.mxu0 0.0
        %848 = vmatmul.mubr.f32.gmra.mxu0 %v368
        %v849 = vpop.f32.mrf.mxu0
        %v850 = vadd.f32 %v322, %v849
        %v851 = vpop.f32.mrf.mxu0
        %852 = vmatprep.mubr.f32.mxu0 0.0
        %853 = vmatmul.mubr.f32.gmra.mxu0 %v371
        %v854 = vpop.f32.mrf.mxu0
        %v855 = vadd.f32 %v322, %v854
        %v856 = vpop.f32.mrf.mxu0
        %857 = vmatprep.mubr.f32.mxu0 0.0
        %858 = vmatmul.mubr.f32.gmra.mxu0 %v374
        %v859 = vpop.f32.mrf.mxu0
        %v860 = vadd.f32 %v322, %v859
        %v861 = vpop.f32.mrf.mxu0
        %862 = vmatprep.mubr.f32.mxu0 0.0
        %863 = vmatmul.mubr.f32.gmra.mxu0 %v377
        %v864 = vpop.f32.mrf.mxu0
        %v865 = vadd.f32 %v322, %v864
        %v866 = vpop.f32.mrf.mxu0
        %867 = vmatprep.mubr.f32.mxu0 0.0
        %868 = vmatmul.mubr.f32.gmra.mxu0 %v380
        %v869 = vpop.f32.mrf.mxu0
        %v870 = vadd.f32 %v322, %v869
        %v871 = vpop.f32.mrf.mxu0
        %872 = vmatprep.mubr.f32.mxu0 0.0
        %873 = vmatmul.mubr.f32.gmra.mxu0 %v383
        %v874 = vpop.f32.mrf.mxu0
        %v875 = vadd.f32 %v322, %v874
        %v876 = vpop.f32.mrf.mxu0
        %877 = vmatprep.mubr.f32.mxu0 0.0
        %878 = vmatmul.mubr.f32.gmra.mxu0 %v386
        %v879 = vpop.f32.mrf.mxu0
        %v880 = vadd.f32 %v322, %v879
        %v881 = vpop.f32.mrf.mxu0
        %882 = vmatprep.mubr.f32.mxu0 0.0
        %883 = vmatmul.mubr.f32.gmra.mxu0 %v389
        %v884 = vpop.f32.mrf.mxu0
        %v885 = vadd.f32 %v322, %v884
        %v886 = vpop.f32.mrf.mxu0
        %887 = vmatprep.mubr.f32.mxu0 0.0
        %888 = vmatmul.mubr.f32.gmra.mxu0 %v392
        %v889 = vpop.f32.mrf.mxu0
        %v890 = vadd.f32 %v322, %v889
        %v891 = vpop.f32.mrf.mxu0
        %892 = vmatprep.mubr.f32.mxu0 0.0
        %893 = vmatmul.mubr.f32.gmra.mxu0 %v395
        %v894 = vpop.f32.mrf.mxu0
        %v895 = vadd.f32 %v322, %v894
        %v896 = vpop.f32.mrf.mxu0
        %897 = vmatprep.mubr.f32.mxu0 0.0
        %898 = vmatmul.mubr.f32.gmra.mxu0 %v398
        %v899 = vpop.f32.mrf.mxu0
        %v900 = vadd.f32 %v322, %v899
        %v901 = vpop.f32.mrf.mxu0
        %902 = vmatprep.mubr.f32.mxu0 0.0
        %903 = vmatmul.mubr.f32.gmra.mxu0 %v401
        %v904 = vpop.f32.mrf.mxu0
        %v905 = vadd.f32 %v322, %v904
        %v906 = vpop.f32.mrf.mxu0
        %907 = vmatprep.mubr.f32.mxu0 0.0
        %908 = vmatmul.mubr.f32.gmra.mxu0 %v404
        %v909 = vpop.f32.mrf.mxu0
        %v910 = vadd.f32 %v322, %v909
        %v911 = vpop.f32.mrf.mxu0
        %912 = vmatprep.mubr.f32.mxu0 0.0
        %913 = vmatmul.mubr.f32.gmra.mxu0 %v407
        %v914 = vpop.f32.mrf.mxu0
        %v915 = vadd.f32 %v322, %v914
        %v916 = vpop.f32.mrf.mxu0
        %917 = vmatprep.mubr.f32.mxu0 0.0
        %918 = vmatmul.mubr.f32.gmra.mxu0 %v410
        %v919 = vpop.f32.mrf.mxu0
        %v920 = vadd.f32 %v322, %v919
        %v921 = vpop.f32.mrf.mxu0
        %922 = vmatprep.mubr.f32.mxu0 0.0
        %923 = vmatmul.mubr.f32.gmra.mxu0 %v413
        %v924 = vpop.f32.mrf.mxu0
        %v925 = vadd.f32 %v322, %v924
        %v926 = vpop.f32.mrf.mxu0
        %927 = vmatprep.mubr.f32.mxu0 0.0
        %928 = vmatmul.mubr.f32.gmra.mxu0 %v416
        %v929 = vpop.f32.mrf.mxu0
        %v930 = vadd.f32 %v322, %v929
        %v931 = vpop.f32.mrf.mxu0
        %932 = vmatprep.mubr.f32.mxu0 0.0
        %933 = vmatmul.mubr.f32.gmra.mxu0 %v419
        %v934 = vpop.f32.mrf.mxu0
        %v935 = vadd.f32 %v322, %v934
        %v936 = vpop.f32.mrf.mxu0
        %937 = vmatprep.mubr.f32.mxu0 0.0
        %938 = vmatmul.mubr.f32.gmra.mxu0 %v422
        %v939 = vpop.f32.mrf.mxu0
        %v940 = vadd.f32 %v322, %v939
        %v941 = vpop.f32.mrf.mxu0
        %942 = vmatprep.mubr.f32.mxu0 0.0
        %943 = vmatmul.mubr.f32.gmra.mxu0 %v425
        %v944 = vpop.f32.mrf.mxu0
        %v945 = vadd.f32 %v322, %v944
        %v946 = vpop.f32.mrf.mxu0
        %947 = vmatprep.mubr.f32.mxu0 0.0
        %948 = vmatmul.mubr.f32.gmra.mxu0 %v428
        %v949 = vpop.f32.mrf.mxu0
        %v950 = vadd.f32 %v322, %v949
        %v951 = vpop.f32.mrf.mxu0
        %952 = vmatprep.mubr.f32.mxu0 0.0
        %953 = vmatmul.mubr.f32.gmra.mxu0 %v431
        %v954 = vpop.f32.mrf.mxu0
        %v955 = vadd.f32 %v322, %v954
        %v956 = vpop.f32.mrf.mxu0
        %957 = vmatprep.mubr.f32.mxu0 0.0
        %958 = vmatmul.mubr.f32.gmra.mxu0 %v434
        %v959 = vpop.f32.mrf.mxu0
        %v960 = vadd.f32 %v322, %v959
        %v961 = vpop.f32.mrf.mxu0
        %962 = vmatprep.mubr.f32.mxu0 0.0
        %963 = vmatmul.mubr.f32.gmra.mxu0 %v437
        %v964 = vpop.f32.mrf.mxu0
        %v965 = vadd.f32 %v322, %v964
        %v966 = vpop.f32.mrf.mxu0
        %967 = vmatprep.mubr.f32.mxu0 0.0
        %968 = vmatmul.mubr.f32.gmra.mxu0 %v440
        %v969 = vpop.f32.mrf.mxu0
        %v970 = vadd.f32 %v322, %v969
        %v971 = vpop.f32.mrf.mxu0
        %972 = vmatprep.mubr.f32.mxu0 0.0
        %973 = vmatmul.mubr.f32.gmra.mxu0 %v443
        %v974 = vpop.f32.mrf.mxu0
        %v975 = vadd.f32 %v322, %v974
        %v976 = vpop.f32.mrf.mxu0
        %977 = vmatprep.mubr.f32.mxu0 0.0
        %978 = vmatmul.mubr.f32.gmra.mxu0 %v446
        %v979 = vpop.f32.mrf.mxu0
        %v980 = vadd.f32 %v322, %v979
        %v981 = vpop.f32.mrf.mxu0
        %982 = vmatprep.mubr.f32.mxu0 0.0
        %983 = vmatmul.mubr.f32.gmra.mxu0 %v449
        %v984 = vpop.f32.mrf.mxu0
        %v985 = vadd.f32 %v322, %v984
        %v986 = vpop.f32.mrf.mxu0
        %987 = vmatprep.mubr.f32.mxu0 0.0
        %988 = vmatmul.mubr.f32.gmra.mxu0 %v452
        %v989 = vpop.f32.mrf.mxu0
        %v990 = vadd.f32 %v322, %v989
        %v991 = vpop.f32.mrf.mxu0
        %992 = vmatprep.mubr.f32.mxu0 0.0
        %993 = vmatmul.mubr.f32.gmra.mxu0 %v455
        %v994 = vpop.f32.mrf.mxu0
        %v995 = vadd.f32 %v322, %v994
        %v996 = vpop.f32.mrf.mxu0
        %997 = vmatprep.mubr.f32.mxu0 0.0
        %998 = vmatmul.mubr.f32.gmra.mxu0 %v458
        %v999 = vpop.f32.mrf.mxu0
        %v1000 = vadd.f32 %v322, %v999
        %v1001 = vpop.f32.mrf.mxu0
        %1002 = vmatprep.mubr.f32.mxu0 0.0
        %1003 = vmatmul.mubr.f32.gmra.mxu0 %v461
        %v1004 = vpop.f32.mrf.mxu0
        %v1005 = vadd.f32 %v322, %v1004
        %v1006 = vpop.f32.mrf.mxu0
        %1007 = vmatprep.mubr.f32.mxu0 0.0
        %1008 = vmatmul.mubr.f32.gmra.mxu0 %v464
        %v1009 = vpop.f32.mrf.mxu0
        %v1010 = vadd.f32 %v322, %v1009
        %v1011 = vpop.f32.mrf.mxu0
        %1012 = vmatprep.mubr.f32.mxu0 0.0
        %1013 = vmatmul.mubr.f32.gmra.mxu0 %v467
        %v1014 = vpop.f32.mrf.mxu0
        %v1015 = vadd.f32 %v322, %v1014
        %v1016 = vpop.f32.mrf.mxu0
        %1017 = vmatprep.mubr.f32.mxu0 0.0
        %1018 = vmatmul.mubr.f32.gmra.mxu0 %v470
        %v1019 = vpop.f32.mrf.mxu0
        %v1020 = vadd.f32 %v322, %v1019
        %v1021 = vpop.f32.mrf.mxu0
        %1022 = vmatprep.mubr.f32.mxu0 0.0
        %1023 = vmatmul.mubr.f32.gmra.mxu0 %v473
        %v1024 = vpop.f32.mrf.mxu0
        %v1025 = vadd.f32 %v322, %v1024
        %v1026 = vpop.f32.mrf.mxu0
        %1027 = vmatprep.mubr.f32.mxu0 0.0
        %1028 = vmatmul.mubr.f32.gmra.mxu0 %v476
        %v1029 = vpop.f32.mrf.mxu0
        %v1030 = vadd.f32 %v322, %v1029
        %v1031 = vpop.f32.mrf.mxu0
        %1032 = vmatprep.mubr.f32.mxu0 0.0
        %1033 = vmatmul.mubr.f32.gmra.mxu0 %v479
        %v1034 = vpop.f32.mrf.mxu0
        %v1035 = vadd.f32 %v322, %v1034
        %v1036 = vpop.f32.mrf.mxu0
        %1037 = vmatprep.mubr.f32.mxu0 0.0
        %1038 = vmatmul.mubr.f32.gmra.mxu0 %v482
        %v1039 = vpop.f32.mrf.mxu0
        %v1040 = vadd.f32 %v322, %v1039
        %v1041 = vpop.f32.mrf.mxu0
        %1042 = vmatprep.mubr.f32.mxu0 0.0
        %1043 = vmatmul.mubr.f32.gmra.mxu0 %v485
        %v1044 = vpop.f32.mrf.mxu0
        %v1045 = vadd.f32 %v322, %v1044
        %v1046 = vpop.f32.mrf.mxu0
        %1047 = vmatprep.mubr.f32.mxu0 0.0
        %1048 = vmatmul.mubr.f32.gmra.mxu0 %v488
        %v1049 = vpop.f32.mrf.mxu0
        %v1050 = vadd.f32 %v322, %v1049
        %v1051 = vpop.f32.mrf.mxu0
        %1052 = vmatprep.mubr.f32.mxu0 0.0
        %1053 = vmatmul.mubr.f32.gmra.mxu0 %v491
        %v1054 = vpop.f32.mrf.mxu0
        %v1055 = vadd.f32 %v322, %v1054
        %v1056 = vpop.f32.mrf.mxu0
        %1057 = vmatprep.mubr.f32.mxu0 0.0
        %1058 = vmatmul.mubr.f32.gmra.mxu0 %v494
        %v1059 = vpop.f32.mrf.mxu0
        %v1060 = vadd.f32 %v322, %v1059
        %v1061 = vpop.f32.mrf.mxu0
        %1062 = vmatprep.mubr.f32.mxu0 0.0
        %1063 = vmatmul.mubr.f32.gmra.mxu0 %v497
        %v1064 = vpop.f32.mrf.mxu0
        %v1065 = vadd.f32 %v322, %v1064
        %v1066 = vpop.f32.mrf.mxu0
        %1067 = vmatprep.mubr.f32.mxu0 0.0
        %1068 = vmatmul.mubr.f32.gmra.mxu0 %v500
        %v1069 = vpop.f32.mrf.mxu0
        %v1070 = vadd.f32 %v322, %v1069
        %v1071 = vpop.f32.mrf.mxu0
        %1072 = vmatprep.mubr.f32.mxu0 0.0
        %1073 = vmatmul.mubr.f32.gmra.mxu0 %v503
        %v1074 = vpop.f32.mrf.mxu0
        %v1075 = vadd.f32 %v322, %v1074
        %v1076 = vpop.f32.mrf.mxu0
        %1077 = vmatprep.mubr.f32.mxu0 0.0
        %1078 = vmatmul.mubr.f32.gmra.mxu0 %v506
        %v1079 = vpop.f32.mrf.mxu0
        %v1080 = vadd.f32 %v322, %v1079
        %v1081 = vpop.f32.mrf.mxu0
        %1082 = vmatprep.mubr.f32.mxu0 0.0
        %1083 = vmatmul.mubr.f32.gmra.mxu0 %v509
        %v1084 = vpop.f32.mrf.mxu0
        %v1085 = vadd.f32 %v322, %v1084
        %v1086 = vpop.f32.mrf.mxu0
        %1087 = vmatprep.mubr.f32.mxu0 0.0
        %1088 = vmatmul.mubr.f32.gmra.mxu0 %v512
        %v1089 = vpop.f32.mrf.mxu0
        %v1090 = vadd.f32 %v322, %v1089
        %v1091 = vpop.f32.mrf.mxu0
        %1092 = vmatprep.mubr.f32.mxu0 0.0
        %1093 = vmatmul.mubr.f32.gmra.mxu0 %v515
        %v1094 = vpop.f32.mrf.mxu0
        %v1095 = vadd.f32 %v322, %v1094
        %v1096 = vpop.f32.mrf.mxu0
        %1097 = vmatprep.mubr.f32.mxu0 0.0
        %1098 = vmatmul.mubr.f32.gmra.mxu0 %v518
        %v1099 = vpop.f32.mrf.mxu0
        %v1100 = vadd.f32 %v322, %v1099
        %v1101 = vpop.f32.mrf.mxu0
        %1102 = vmatprep.mubr.f32.mxu0 0.0
        %1103 = vmatmul.mubr.f32.gmra.mxu0 %v521
        %v1104 = vpop.f32.mrf.mxu0
        %v1105 = vadd.f32 %v322, %v1104
        %v1106 = vpop.f32.mrf.mxu0
        %1107 = vmatprep.mubr.f32.mxu0 0.0
        %1108 = vmatmul.mubr.f32.gmra.mxu0 %v524
        %v1109 = vpop.f32.mrf.mxu0
        %v1110 = vadd.f32 %v322, %v1109
        %v1111 = vpop.f32.mrf.mxu0
        %1112 = vmatprep.mubr.f32.mxu0 0.0
        %1113 = vmatmul.mubr.f32.gmra.mxu0 %v527
        %v1114 = vpop.f32.mrf.mxu0
        %v1115 = vadd.f32 %v322, %v1114
        %v1116 = vpop.f32.mrf.mxu0
        %1117 = vmatprep.mubr.f32.mxu0 0.0
        %1118 = vmatmul.mubr.f32.gmra.mxu0 %v530
        %v1119 = vpop.f32.mrf.mxu0
        %v1120 = vadd.f32 %v322, %v1119
        %v1121 = vpop.f32.mrf.mxu0
        %1122 = vmatprep.mubr.f32.mxu0 0.0
        %1123 = vmatmul.mubr.f32.gmra.mxu0 %v533
        %v1124 = vpop.f32.mrf.mxu0
        %v1125 = vadd.f32 %v322, %v1124
        %v1126 = vpop.f32.mrf.mxu0
        %1127 = vmatprep.mubr.f32.mxu0 0.0
        %1128 = vmatmul.mubr.f32.gmra.mxu0 %v536
        %v1129 = vpop.f32.mrf.mxu0
        %v1130 = vadd.f32 %v322, %v1129
        %v1131 = vpop.f32.mrf.mxu0
        %1132 = vmatprep.mubr.f32.mxu0 0.0
        %1133 = vmatmul.mubr.f32.gmra.mxu0 %v539
        %v1134 = vpop.f32.mrf.mxu0
        %v1135 = vadd.f32 %v322, %v1134
        %v1136 = vpop.f32.mrf.mxu0
        %1137 = vmatprep.mubr.f32.mxu0 0.0
        %1138 = vmatmul.mubr.f32.gmra.mxu0 %v542
        %v1139 = vpop.f32.mrf.mxu0
        %v1140 = vadd.f32 %v322, %v1139
        %v1141 = vpop.f32.mrf.mxu0
        %1142 = vmatprep.mubr.f32.mxu0 0.0
        %1143 = vmatmul.mubr.f32.gmra.mxu0 %v545
        %v1144 = vpop.f32.mrf.mxu0
        %v1145 = vadd.f32 %v322, %v1144
        %v1146 = vpop.f32.mrf.mxu0
        %1147 = vmatprep.mubr.f32.mxu0 0.0
        %1148 = vmatmul.mubr.f32.gmra.mxu0 %v548
        %v1149 = vpop.f32.mrf.mxu0
        %v1150 = vadd.f32 %v322, %v1149
        %v1151 = vpop.f32.mrf.mxu0
        %1152 = vmatprep.mubr.f32.mxu0 0.0
        %1153 = vmatmul.mubr.f32.gmra.mxu0 %v551
        %v1154 = vpop.f32.mrf.mxu0
        %v1155 = vadd.f32 %v322, %v1154
        %v1156 = vpop.f32.mrf.mxu0
        %1157 = vmatprep.mubr.f32.mxu0 0.0
        %1158 = vmatmul.mubr.f32.gmra.mxu0 %v554
        %v1159 = vpop.f32.mrf.mxu0
        %v1160 = vadd.f32 %v322, %v1159
        %v1161 = vpop.f32.mrf.mxu0
        %1162 = vmatprep.mubr.f32.mxu0 0.0
        %1163 = vmatmul.mubr.f32.gmra.mxu0 %v557
        %v1164 = vpop.f32.mrf.mxu0
        %v1165 = vadd.f32 %v322, %v1164
        %v1166 = vpop.f32.mrf.mxu0
        %1167 = vmatprep.mubr.f32.mxu0 0.0
        %1168 = vmatmul.mubr.f32.gmra.mxu0 %v560
        %v1169 = vpop.f32.mrf.mxu0
        %v1170 = vadd.f32 %v322, %v1169
        %v1171 = vpop.f32.mrf.mxu0
        %1172 = vmatprep.mubr.f32.mxu0 0.0
        %1173 = vmatmul.mubr.f32.gmra.mxu0 %v563
        %v1174 = vpop.f32.mrf.mxu0
        %v1175 = vadd.f32 %v322, %v1174
        %v1176 = vpop.f32.mrf.mxu0
        %1177 = vmatprep.mubr.f32.mxu0 0.0
        %1178 = vmatmul.mubr.f32.gmra.mxu0 %v566
        %v1179 = vpop.f32.mrf.mxu0
        %v1180 = vadd.f32 %v322, %v1179
        %v1181 = vpop.f32.mrf.mxu0
        %1182 = vmatprep.mubr.f32.mxu0 0.0
        %1183 = vmatmul.mubr.f32.gmra.mxu0 %v569
        %v1184 = vpop.f32.mrf.mxu0
        %v1185 = vadd.f32 %v322, %v1184
        %v1186 = vpop.f32.mrf.mxu0
        %1187 = vmatprep.mubr.f32.mxu0 0.0
        %1188 = vmatmul.mubr.f32.gmra.mxu0 %v572
        %v1189 = vpop.f32.mrf.mxu0
        %v1190 = vadd.f32 %v322, %v1189
        %v1191 = vpop.f32.mrf.mxu0
        %1192 = vmatprep.mubr.f32.mxu0 0.0
        %1193 = vmatmul.mubr.f32.gmra.mxu0 %v575
        %v1194 = vpop.f32.mrf.mxu0
        %v1195 = vadd.f32 %v322, %v1194
        %v1196 = vpop.f32.mrf.mxu0
        %1197 = vmatprep.mubr.f32.mxu0 0.0
        %1198 = vmatmul.mubr.f32.gmra.mxu0 %v578
        %v1199 = vpop.f32.mrf.mxu0
        %v1200 = vadd.f32 %v322, %v1199
        %v1201 = vpop.f32.mrf.mxu0
        %1202 = vmatprep.mubr.f32.mxu0 0.0
        %1203 = vmatmul.mubr.f32.gmra.mxu0 %v581
        %v1204 = vpop.f32.mrf.mxu0
        %v1205 = vadd.f32 %v322, %v1204
        %v1206 = vpop.f32.mrf.mxu0
        %1207 = vmatprep.mubr.f32.mxu0 0.0
        %1208 = vmatmul.mubr.f32.gmra.mxu0 %v584
        %v1209 = vpop.f32.mrf.mxu0
        %v1210 = vadd.f32 %v322, %v1209
        %v1211 = vpop.f32.mrf.mxu0
        %1212 = vmatprep.mubr.f32.mxu0 0.0
        %1213 = vmatmul.mubr.f32.gmra.mxu0 %v587
        %v1214 = vpop.f32.mrf.mxu0
        %v1215 = vadd.f32 %v322, %v1214
        %v1216 = vpop.f32.mrf.mxu0
        %1217 = vmatprep.mubr.f32.mxu0 0.0
        %1218 = vmatmul.mubr.f32.gmra.mxu0 %v590
        %v1219 = vpop.f32.mrf.mxu0
        %v1220 = vadd.f32 %v322, %v1219
        %v1221 = vpop.f32.mrf.mxu0
        %1222 = vmatprep.mubr.f32.mxu0 0.0
        %1223 = vmatmul.mubr.f32.gmra.mxu0 %v593
        %v1224 = vpop.f32.mrf.mxu0
        %v1225 = vadd.f32 %v322, %v1224
        %v1226 = vpop.f32.mrf.mxu0
        %1227 = vmatprep.mubr.f32.mxu0 0.0
        %1228 = vmatmul.mubr.f32.gmra.mxu0 %v596
        %v1229 = vpop.f32.mrf.mxu0
        %v1230 = vadd.f32 %v322, %v1229
        %v1231 = vpop.f32.mrf.mxu0
        %1232 = vmatprep.mubr.f32.mxu0 0.0
        %1233 = vmatmul.mubr.f32.gmra.mxu0 %v599
        %v1234 = vpop.f32.mrf.mxu0
        %v1235 = vadd.f32 %v322, %v1234
        %v1236 = vpop.f32.mrf.mxu0
        %1237 = vmatprep.mubr.f32.mxu0 0.0
        %1238 = vmatmul.mubr.f32.gmra.mxu0 %v602
        %v1239 = vpop.f32.mrf.mxu0
        %v1240 = vadd.f32 %v322, %v1239
        %v1241 = vpop.f32.mrf.mxu0
        %1242 = vmatprep.mubr.f32.mxu0 0.0
        %1243 = vmatmul.mubr.f32.gmra.mxu0 %v605
        %v1244 = vpop.f32.mrf.mxu0
        %v1245 = vadd.f32 %v322, %v1244
        %v1246 = vpop.f32.mrf.mxu0
        %1247 = vmatprep.mubr.f32.mxu0 0.0
        %1248 = vmatmul.mubr.f32.gmra.mxu0 %v608
        %v1249 = vpop.f32.mrf.mxu0
        %v1250 = vadd.f32 %v322, %v1249
        %v1251 = vpop.f32.mrf.mxu0
        %1252 = vmatprep.mubr.f32.mxu0 0.0
        %1253 = vmatmul.mubr.f32.gmra.mxu0 %v611
        %v1254 = vpop.f32.mrf.mxu0
        %v1255 = vadd.f32 %v322, %v1254
        %v1256 = vpop.f32.mrf.mxu0
        %1257 = vmatprep.mubr.f32.mxu0 0.0
        %1258 = vmatmul.mubr.f32.gmra.mxu0 %v614
        %v1259 = vpop.f32.mrf.mxu0
        %v1260 = vadd.f32 %v322, %v1259
        %v1261 = vpop.f32.mrf.mxu0
        %1262 = vmatprep.mubr.f32.mxu0 0.0
        %1263 = vmatmul.mubr.f32.gmra.mxu0 %v617
        %v1264 = vpop.f32.mrf.mxu0
        %v1265 = vadd.f32 %v322, %v1264
        %v1266 = vpop.f32.mrf.mxu0
        %1267 = vmatprep.mubr.f32.mxu0 0.0
        %1268 = vmatmul.mubr.f32.gmra.mxu0 %v620
        %v1269 = vpop.f32.mrf.mxu0
        %v1270 = vadd.f32 %v322, %v1269
        %v1271 = vpop.f32.mrf.mxu0
        %1272 = vmatprep.mubr.f32.mxu0 0.0
        %1273 = vmatmul.mubr.f32.gmra.mxu0 %v623
        %v1274 = vpop.f32.mrf.mxu0
        %v1275 = vadd.f32 %v322, %v1274
        %v1276 = vpop.f32.mrf.mxu0
        %1277 = vmatprep.mubr.f32.mxu0 0.0
        %1278 = vmatmul.mubr.f32.gmra.mxu0 %v626
        %v1279 = vpop.f32.mrf.mxu0
        %v1280 = vadd.f32 %v322, %v1279
        %v1281 = vpop.f32.mrf.mxu0
        %1282 = vmatprep.mubr.f32.mxu0 0.0
        %1283 = vmatmul.mubr.f32.gmra.mxu0 %v629
        %v1284 = vpop.f32.mrf.mxu0
        %v1285 = vadd.f32 %v322, %v1284
        %v1286 = vpop.f32.mrf.mxu0
        %1287 = vmatprep.mubr.f32.mxu0 0.0
        %1288 = vmatmul.mubr.f32.gmra.mxu0 %v632
        %v1289 = vpop.f32.mrf.mxu0
        %v1290 = vadd.f32 %v322, %v1289
        %v1291 = vpop.f32.mrf.mxu0
        %1292 = vmatprep.mubr.f32.mxu0 0.0
        %1293 = vmatmul.mubr.f32.gmra.mxu0 %v635
        %v1294 = vpop.f32.mrf.mxu0
        %v1295 = vadd.f32 %v322, %v1294
        %v1296 = vpop.f32.mrf.mxu0
        %1297 = vmatprep.mubr.f32.mxu0 0.0
        %1298 = vmatmul.mubr.f32.gmra.mxu0 %v638
        %v1299 = vpop.f32.mrf.mxu0
        %v1300 = vadd.f32 %v322, %v1299
        %v1301 = vpop.f32.mrf.mxu0
        %1302 = vmatprep.mubr.f32.mxu0 0.0
        %1303 = vmatmul.mubr.f32.gmra.mxu0 %v641
        %v1304 = vpop.f32.mrf.mxu0
        %v1305 = vadd.f32 %v322, %v1304
        %v1306 = vpop.f32.mrf.mxu0
        %1307 = vmatprep.mubr.f32.mxu0 0.0
        %1308 = vmatmul.mubr.f32.gmra.mxu0 %v644
        %v1309 = vpop.f32.mrf.mxu0
        %v1310 = vadd.f32 %v322, %v1309
        %v1311 = vpop.f32.mrf.mxu0
        %1312 = vmatprep.mubr.f32.mxu0 0.0
        %1313 = vmatmul.mubr.f32.gmra.mxu0 %v647
        %v1314 = vpop.f32.mrf.mxu0
        %v1315 = vadd.f32 %v322, %v1314
        %v1316 = vpop.f32.mrf.mxu0
        %1317 = vmatprep.mubr.f32.mxu0 0.0
        %1318 = vmatmul.mubr.f32.gmra.mxu0 %v650
        %v1319 = vpop.f32.mrf.mxu0
        %v1320 = vadd.f32 %v322, %v1319
        %v1321 = vpop.f32.mrf.mxu0
        %1322 = vmatprep.mubr.f32.mxu0 0.0
        %1323 = vmatmul.mubr.f32.gmra.mxu0 %v653
        %v1324 = vpop.f32.mrf.mxu0
        %v1325 = vadd.f32 %v322, %v1324
        %v1326 = vpop.f32.mrf.mxu0
        %1327 = vmatprep.mubr.f32.mxu0 0.0
        %1328 = vmatmul.mubr.f32.gmra.mxu0 %v656
        %v1329 = vpop.f32.mrf.mxu0
        %v1330 = vadd.f32 %v322, %v1329
        %v1331 = vpop.f32.mrf.mxu0
        %1332 = vmatprep.mubr.f32.mxu0 0.0
        %1333 = vmatmul.mubr.f32.gmra.mxu0 %v659
        %v1334 = vpop.f32.mrf.mxu0
        %v1335 = vadd.f32 %v322, %v1334
        %v1336 = vpop.f32.mrf.mxu0
        %1337 = vmatprep.mubr.f32.mxu0 0.0
        %1338 = vmatmul.mubr.f32.gmra.mxu0 %v662
        %v1339 = vpop.f32.mrf.mxu0
        %v1340 = vadd.f32 %v322, %v1339
        %v1341 = vpop.f32.mrf.mxu0
        %1342 = vmatprep.mubr.f32.mxu0 0.0
        %1343 = vmatmul.mubr.f32.gmra.mxu0 %v665
        %v1344 = vpop.f32.mrf.mxu0
        %v1345 = vadd.f32 %v322, %v1344
        %v1346 = vpop.f32.mrf.mxu0
        %1347 = vmatprep.mubr.f32.mxu0 0.0
        %1348 = vmatmul.mubr.f32.gmra.mxu0 %v668
        %v1349 = vpop.f32.mrf.mxu0
        %v1350 = vadd.f32 %v322, %v1349
        %v1351 = vpop.f32.mrf.mxu0
        %1352 = vmatprep.mubr.f32.mxu0 0.0
        %1353 = vmatmul.mubr.f32.gmra.mxu0 %v671
        %v1354 = vpop.f32.mrf.mxu0
        %v1355 = vadd.f32 %v322, %v1354
        %v1356 = vpop.f32.mrf.mxu0
        %1357 = vmatprep.mubr.f32.mxu0 0.0
        %1358 = vmatmul.mubr.f32.gmra.mxu0 %v674
        %v1359 = vpop.f32.mrf.mxu0
        %v1360 = vadd.f32 %v322, %v1359
        %v1361 = vpop.f32.mrf.mxu0
        %1362 = vmatprep.mubr.f32.mxu0 0.0
        %1363 = vmatmul.mubr.f32.gmra.mxu0 %v677
        %v1364 = vpop.f32.mrf.mxu0
        %v1365 = vadd.f32 %v322, %v1364
        %v1366 = vpop.f32.mrf.mxu0
        %1367 = vmatprep.mubr.f32.mxu0 0.0
        %1368 = vmatmul.mubr.f32.gmra.mxu0 %v680
        %v1369 = vpop.f32.mrf.mxu0
        %v1370 = vadd.f32 %v322, %v1369
        %v1371 = vpop.f32.mrf.mxu0
        %1372 = vmatprep.mubr.f32.mxu0 0.0
        %1373 = vmatmul.mubr.f32.gmra.mxu0 %v683
        %v1374 = vpop.f32.mrf.mxu0
        %v1375 = vadd.f32 %v322, %v1374
        %v1376 = vpop.f32.mrf.mxu0
        %1377 = vmatprep.mubr.f32.mxu0 0.0
        %1378 = vmatmul.mubr.f32.gmra.mxu0 %v686
        %v1379 = vpop.f32.mrf.mxu0
        %v1380 = vadd.f32 %v322, %v1379
        %v1381 = vpop.f32.mrf.mxu0
        %1382 = vmatprep.mubr.f32.mxu0 0.0
        %1383 = vmatmul.mubr.f32.gmra.mxu0 %v689
        %v1384 = vpop.f32.mrf.mxu0
        %v1385 = vadd.f32 %v322, %v1384
        %v1386 = vpop.f32.mrf.mxu0
        %1387 = vmatprep.mubr.f32.mxu0 0.0
        %1388 = vmatmul.mubr.f32.gmra.mxu0 %v692
        %v1389 = vpop.f32.mrf.mxu0
        %v1390 = vadd.f32 %v322, %v1389
        %v1391 = vpop.f32.mrf.mxu0
        %1392 = vmatprep.mubr.f32.mxu0 0.0
        %1393 = vmatmul.mubr.f32.gmra.mxu0 %v695
        %v1394 = vpop.f32.mrf.mxu0
        %v1395 = vadd.f32 %v322, %v1394
        %v1396 = vpop.f32.mrf.mxu0
        %1397 = vmatprep.mubr.f32.mxu0 0.0
        %1398 = vmatmul.mubr.f32.gmra.mxu0 %v698
        %v1399 = vpop.f32.mrf.mxu0
        %v1400 = vadd.f32 %v322, %v1399
        %v1401 = vpop.f32.mrf.mxu0
        %1402 = vmatprep.mubr.f32.mxu0 0.0
        %1403 = vmatmul.mubr.f32.gmra.mxu0 %v701
        %v1404 = vpop.f32.mrf.mxu0
        %v1405 = vadd.f32 %v322, %v1404
        %v1406 = vpop.f32.mrf.mxu0
        %1407 = vmatprep.mubr.f32.mxu0 0.0
        %1408 = vmatmul.mubr.f32.gmra.mxu0 %v704
        %v1409 = vpop.f32.mrf.mxu0
        %v1410 = vadd.f32 %v322, %v1409
        %v1411 = vpop.f32.mrf.mxu0
        %1412 = vmatprep.mubr.f32.mxu0 0.0
        %1413 = vmatmul.mubr.f32.gmra.mxu0 %v707
        %v1414 = vpop.f32.mrf.mxu0
        %v1415 = vadd.f32 %v322, %v1414
        %v1416 = vpop.f32.mrf.mxu0
        %1417 = vdwg.mxu0
        %v1418 = vmax.f32 %v780, 0.0
        %v1419 = vmax.f32 %v785, 0.0
        %v1420 = vmax.f32 %v790, 0.0
        %v1421 = vmax.f32 %v795, 0.0
        %v1422 = vmax.f32 %v800, 0.0
        %v1423 = vmax.f32 %v805, 0.0
        %v1424 = vmax.f32 %v810, 0.0
        %v1425 = vmax.f32 %v815, 0.0
        %v1426 = vmax.f32 %v820, 0.0
        %v1427 = vmax.f32 %v825, 0.0
        %v1428 = vmax.f32 %v830, 0.0
        %v1429 = vmax.f32 %v835, 0.0
        %v1430 = vmax.f32 %v840, 0.0
        %v1431 = vmax.f32 %v845, 0.0
        %v1432 = vmax.f32 %v850, 0.0
        %v1433 = vmax.f32 %v855, 0.0
        %v1434 = vmax.f32 %v860, 0.0
        %v1435 = vmax.f32 %v865, 0.0
        %v1436 = vmax.f32 %v870, 0.0
        %v1437 = vmax.f32 %v875, 0.0
        %v1438 = vmax.f32 %v880, 0.0
        %v1439 = vmax.f32 %v885, 0.0
        %v1440 = vmax.f32 %v890, 0.0
        %v1441 = vmax.f32 %v895, 0.0
        %v1442 = vmax.f32 %v900, 0.0
        %v1443 = vmax.f32 %v905, 0.0
        %v1444 = vmax.f32 %v910, 0.0
        %v1445 = vmax.f32 %v915, 0.0
        %v1446 = vmax.f32 %v920, 0.0
        %v1447 = vmax.f32 %v925, 0.0
        %v1448 = vmax.f32 %v930, 0.0
        %v1449 = vmax.f32 %v935, 0.0
        %v1450 = vmax.f32 %v940, 0.0
        %v1451 = vmax.f32 %v945, 0.0
        %v1452 = vmax.f32 %v950, 0.0
        %v1453 = vmax.f32 %v955, 0.0
        %v1454 = vmax.f32 %v960, 0.0
        %v1455 = vmax.f32 %v965, 0.0
        %v1456 = vmax.f32 %v970, 0.0
        %v1457 = vmax.f32 %v975, 0.0
        %v1458 = vmax.f32 %v980, 0.0
        %v1459 = vmax.f32 %v985, 0.0
        %v1460 = vmax.f32 %v990, 0.0
        %v1461 = vmax.f32 %v995, 0.0
        %v1462 = vmax.f32 %v1000, 0.0
        %v1463 = vmax.f32 %v1005, 0.0
        %v1464 = vmax.f32 %v1010, 0.0
        %v1465 = vmax.f32 %v1015, 0.0
        %v1466 = vmax.f32 %v1020, 0.0
        %v1467 = vmax.f32 %v1025, 0.0
        %v1468 = vmax.f32 %v1030, 0.0
        %v1469 = vmax.f32 %v1035, 0.0
        %v1470 = vmax.f32 %v1040, 0.0
        %v1471 = vmax.f32 %v1045, 0.0
        %v1472 = vmax.f32 %v1050, 0.0
        %v1473 = vmax.f32 %v1055, 0.0
        %v1474 = vmax.f32 %v1060, 0.0
        %v1475 = vmax.f32 %v1065, 0.0
        %v1476 = vmax.f32 %v1070, 0.0
        %v1477 = vmax.f32 %v1075, 0.0
        %v1478 = vmax.f32 %v1080, 0.0
        %v1479 = vmax.f32 %v1085, 0.0
        %v1480 = vmax.f32 %v1090, 0.0
        %v1481 = vmax.f32 %v1095, 0.0
        %v1482 = vmax.f32 %v1100, 0.0
        %v1483 = vmax.f32 %v1105, 0.0
        %v1484 = vmax.f32 %v1110, 0.0
        %v1485 = vmax.f32 %v1115, 0.0
        %v1486 = vmax.f32 %v1120, 0.0
        %v1487 = vmax.f32 %v1125, 0.0
        %v1488 = vmax.f32 %v1130, 0.0
        %v1489 = vmax.f32 %v1135, 0.0
        %v1490 = vmax.f32 %v1140, 0.0
        %v1491 = vmax.f32 %v1145, 0.0
        %v1492 = vmax.f32 %v1150, 0.0
        %v1493 = vmax.f32 %v1155, 0.0
        %v1494 = vmax.f32 %v1160, 0.0
        %v1495 = vmax.f32 %v1165, 0.0
        %v1496 = vmax.f32 %v1170, 0.0
        %v1497 = vmax.f32 %v1175, 0.0
        %v1498 = vmax.f32 %v1180, 0.0
        %v1499 = vmax.f32 %v1185, 0.0
        %v1500 = vmax.f32 %v1190, 0.0
        %v1501 = vmax.f32 %v1195, 0.0
        %v1502 = vmax.f32 %v1200, 0.0
        %v1503 = vmax.f32 %v1205, 0.0
        %v1504 = vmax.f32 %v1210, 0.0
        %v1505 = vmax.f32 %v1215, 0.0
        %v1506 = vmax.f32 %v1220, 0.0
        %v1507 = vmax.f32 %v1225, 0.0
        %v1508 = vmax.f32 %v1230, 0.0
        %v1509 = vmax.f32 %v1235, 0.0
        %v1510 = vmax.f32 %v1240, 0.0
        %v1511 = vmax.f32 %v1245, 0.0
        %v1512 = vmax.f32 %v1250, 0.0
        %v1513 = vmax.f32 %v1255, 0.0
        %v1514 = vmax.f32 %v1260, 0.0
        %v1515 = vmax.f32 %v1265, 0.0
        %v1516 = vmax.f32 %v1270, 0.0
        %v1517 = vmax.f32 %v1275, 0.0
        %v1518 = vmax.f32 %v1280, 0.0
        %v1519 = vmax.f32 %v1285, 0.0
        %v1520 = vmax.f32 %v1290, 0.0
        %v1521 = vmax.f32 %v1295, 0.0
        %v1522 = vmax.f32 %v1300, 0.0
        %v1523 = vmax.f32 %v1305, 0.0
        %v1524 = vmax.f32 %v1310, 0.0
        %v1525 = vmax.f32 %v1315, 0.0
        %v1526 = vmax.f32 %v1320, 0.0
        %v1527 = vmax.f32 %v1325, 0.0
        %v1528 = vmax.f32 %v1330, 0.0
        %v1529 = vmax.f32 %v1335, 0.0
        %v1530 = vmax.f32 %v1340, 0.0
        %v1531 = vmax.f32 %v1345, 0.0
        %v1532 = vmax.f32 %v1350, 0.0
        %v1533 = vmax.f32 %v1355, 0.0
        %v1534 = vmax.f32 %v1360, 0.0
        %v1535 = vmax.f32 %v1365, 0.0
        %v1536 = vmax.f32 %v1370, 0.0
        %v1537 = vmax.f32 %v1375, 0.0
        %v1538 = vmax.f32 %v1380, 0.0
        %v1539 = vmax.f32 %v1385, 0.0
        %v1540 = vmax.f32 %v1390, 0.0
        %v1541 = vmax.f32 %v1395, 0.0
        %v1542 = vmax.f32 %v1400, 0.0
        %v1543 = vmax.f32 %v1405, 0.0
        %v1544 = vmax.f32 %v1410, 0.0
        %v1545 = vmax.f32 %v1415, 0.0
        %vm1546 = vcmask 130048
        %1547 = vst.msk [vmem:[%s185] sm:$0xff] %vm1546, %v1418
        %1548 = vst.msk [vmem:[%s185 + $0x8] sm:$0xff] %vm1546, %v1419
        %1549 = vst.msk [vmem:[%s185 + $0x10] sm:$0xff] %vm1546, %v1420
        %1550 = vst.msk [vmem:[%s185 + $0x18] sm:$0xff] %vm1546, %v1421
        %1551 = vst.msk [vmem:[%s185 + $0x20] sm:$0xff] %vm1546, %v1422
        %1552 = vst.msk [vmem:[%s185 + $0x28] sm:$0xff] %vm1546, %v1423
        %1553 = vst.msk [vmem:[%s185 + $0x30] sm:$0xff] %vm1546, %v1424
        %1554 = vst.msk [vmem:[%s185 + $0x38] sm:$0xff] %vm1546, %v1425
        %1555 = vst.msk [vmem:[%s185 + $0x40] sm:$0xff] %vm1546, %v1426
        %1556 = vst.msk [vmem:[%s185 + $0x48] sm:$0xff] %vm1546, %v1427
        %1557 = vst.msk [vmem:[%s185 + $0x50] sm:$0xff] %vm1546, %v1428
        %1558 = vst.msk [vmem:[%s185 + $0x58] sm:$0xff] %vm1546, %v1429
        %1559 = vst.msk [vmem:[%s185 + $0x60] sm:$0xff] %vm1546, %v1430
        %1560 = vst.msk [vmem:[%s185 + $0x68] sm:$0xff] %vm1546, %v1431
        %1561 = vst.msk [vmem:[%s185 + $0x70] sm:$0xff] %vm1546, %v1432
        %1562 = vst.msk [vmem:[%s185 + $0x78] sm:$0xff] %vm1546, %v1433
        %1563 = vst.msk [vmem:[%s185 + $0x80] sm:$0xff] %vm1546, %v1434
        %1564 = vst.msk [vmem:[%s185 + $0x88] sm:$0xff] %vm1546, %v1435
        %1565 = vst.msk [vmem:[%s185 + $0x90] sm:$0xff] %vm1546, %v1436
        %1566 = vst.msk [vmem:[%s185 + $0x98] sm:$0xff] %vm1546, %v1437
        %1567 = vst.msk [vmem:[%s185 + $0xa0] sm:$0xff] %vm1546, %v1438
        %1568 = vst.msk [vmem:[%s185 + $0xa8] sm:$0xff] %vm1546, %v1439
        %1569 = vst.msk [vmem:[%s185 + $0xb0] sm:$0xff] %vm1546, %v1440
        %1570 = vst.msk [vmem:[%s185 + $0xb8] sm:$0xff] %vm1546, %v1441
        %1571 = vst.msk [vmem:[%s185 + $0xc0] sm:$0xff] %vm1546, %v1442
        %1572 = vst.msk [vmem:[%s185 + $0xc8] sm:$0xff] %vm1546, %v1443
        %1573 = vst.msk [vmem:[%s185 + $0xd0] sm:$0xff] %vm1546, %v1444
        %1574 = vst.msk [vmem:[%s185 + $0xd8] sm:$0xff] %vm1546, %v1445
        %1575 = vst.msk [vmem:[%s185 + $0xe0] sm:$0xff] %vm1546, %v1446
        %1576 = vst.msk [vmem:[%s185 + $0xe8] sm:$0xff] %vm1546, %v1447
        %1577 = vst.msk [vmem:[%s185 + $0xf0] sm:$0xff] %vm1546, %v1448
        %1578 = vst.msk [vmem:[%s185 + $0xf8] sm:$0xff] %vm1546, %v1449
        %1579 = vst.msk [vmem:[%s185 + $0x100] sm:$0xff] %vm1546, %v1450
        %1580 = vst.msk [vmem:[%s185 + $0x108] sm:$0xff] %vm1546, %v1451
        %1581 = vst.msk [vmem:[%s185 + $0x110] sm:$0xff] %vm1546, %v1452
        %1582 = vst.msk [vmem:[%s185 + $0x118] sm:$0xff] %vm1546, %v1453
        %1583 = vst.msk [vmem:[%s185 + $0x120] sm:$0xff] %vm1546, %v1454
        %1584 = vst.msk [vmem:[%s185 + $0x128] sm:$0xff] %vm1546, %v1455
        %1585 = vst.msk [vmem:[%s185 + $0x130] sm:$0xff] %vm1546, %v1456
        %1586 = vst.msk [vmem:[%s185 + $0x138] sm:$0xff] %vm1546, %v1457
        %1587 = vst.msk [vmem:[%s185 + $0x140] sm:$0xff] %vm1546, %v1458
        %1588 = vst.msk [vmem:[%s185 + $0x148] sm:$0xff] %vm1546, %v1459
        %1589 = vst.msk [vmem:[%s185 + $0x150] sm:$0xff] %vm1546, %v1460
        %1590 = vst.msk [vmem:[%s185 + $0x158] sm:$0xff] %vm1546, %v1461
        %1591 = vst.msk [vmem:[%s185 + $0x160] sm:$0xff] %vm1546, %v1462
        %1592 = vst.msk [vmem:[%s185 + $0x168] sm:$0xff] %vm1546, %v1463
        %1593 = vst.msk [vmem:[%s185 + $0x170] sm:$0xff] %vm1546, %v1464
        %1594 = vst.msk [vmem:[%s185 + $0x178] sm:$0xff] %vm1546, %v1465
        %1595 = vst.msk [vmem:[%s185 + $0x180] sm:$0xff] %vm1546, %v1466
        %1596 = vst.msk [vmem:[%s185 + $0x188] sm:$0xff] %vm1546, %v1467
        %1597 = vst.msk [vmem:[%s185 + $0x190] sm:$0xff] %vm1546, %v1468
        %1598 = vst.msk [vmem:[%s185 + $0x198] sm:$0xff] %vm1546, %v1469
        %1599 = vst.msk [vmem:[%s185 + $0x1a0] sm:$0xff] %vm1546, %v1470
        %1600 = vst.msk [vmem:[%s185 + $0x1a8] sm:$0xff] %vm1546, %v1471
        %1601 = vst.msk [vmem:[%s185 + $0x1b0] sm:$0xff] %vm1546, %v1472
        %1602 = vst.msk [vmem:[%s185 + $0x1b8] sm:$0xff] %vm1546, %v1473
        %1603 = vst.msk [vmem:[%s185 + $0x1c0] sm:$0xff] %vm1546, %v1474
        %1604 = vst.msk [vmem:[%s185 + $0x1c8] sm:$0xff] %vm1546, %v1475
        %1605 = vst.msk [vmem:[%s185 + $0x1d0] sm:$0xff] %vm1546, %v1476
        %1606 = vst.msk [vmem:[%s185 + $0x1d8] sm:$0xff] %vm1546, %v1477
        %1607 = vst.msk [vmem:[%s185 + $0x1e0] sm:$0xff] %vm1546, %v1478
        %1608 = vst.msk [vmem:[%s185 + $0x1e8] sm:$0xff] %vm1546, %v1479
        %1609 = vst.msk [vmem:[%s185 + $0x1f0] sm:$0xff] %vm1546, %v1480
        %1610 = vst.msk [vmem:[%s185 + $0x1f8] sm:$0xff] %vm1546, %v1481
        %1611 = vst.msk [vmem:[%s185 + $0x200] sm:$0xff] %vm1546, %v1482
        %1612 = vst.msk [vmem:[%s185 + $0x208] sm:$0xff] %vm1546, %v1483
        %1613 = vst.msk [vmem:[%s185 + $0x210] sm:$0xff] %vm1546, %v1484
        %1614 = vst.msk [vmem:[%s185 + $0x218] sm:$0xff] %vm1546, %v1485
        %1615 = vst.msk [vmem:[%s185 + $0x220] sm:$0xff] %vm1546, %v1486
        %1616 = vst.msk [vmem:[%s185 + $0x228] sm:$0xff] %vm1546, %v1487
        %1617 = vst.msk [vmem:[%s185 + $0x230] sm:$0xff] %vm1546, %v1488
        %1618 = vst.msk [vmem:[%s185 + $0x238] sm:$0xff] %vm1546, %v1489
        %1619 = vst.msk [vmem:[%s185 + $0x240] sm:$0xff] %vm1546, %v1490
        %1620 = vst.msk [vmem:[%s185 + $0x248] sm:$0xff] %vm1546, %v1491
        %1621 = vst.msk [vmem:[%s185 + $0x250] sm:$0xff] %vm1546, %v1492
        %1622 = vst.msk [vmem:[%s185 + $0x258] sm:$0xff] %vm1546, %v1493
        %1623 = vst.msk [vmem:[%s185 + $0x260] sm:$0xff] %vm1546, %v1494
        %1624 = vst.msk [vmem:[%s185 + $0x268] sm:$0xff] %vm1546, %v1495
        %1625 = vst.msk [vmem:[%s185 + $0x270] sm:$0xff] %vm1546, %v1496
        %1626 = vst.msk [vmem:[%s185 + $0x278] sm:$0xff] %vm1546, %v1497
        %1627 = vst.msk [vmem:[%s185 + $0x280] sm:$0xff] %vm1546, %v1498
        %1628 = vst.msk [vmem:[%s185 + $0x288] sm:$0xff] %vm1546, %v1499
        %1629 = vst.msk [vmem:[%s185 + $0x290] sm:$0xff] %vm1546, %v1500
        %1630 = vst.msk [vmem:[%s185 + $0x298] sm:$0xff] %vm1546, %v1501
        %1631 = vst.msk [vmem:[%s185 + $0x2a0] sm:$0xff] %vm1546, %v1502
        %1632 = vst.msk [vmem:[%s185 + $0x2a8] sm:$0xff] %vm1546, %v1503
        %1633 = vst.msk [vmem:[%s185 + $0x2b0] sm:$0xff] %vm1546, %v1504
        %1634 = vst.msk [vmem:[%s185 + $0x2b8] sm:$0xff] %vm1546, %v1505
        %1635 = vst.msk [vmem:[%s185 + $0x2c0] sm:$0xff] %vm1546, %v1506
        %1636 = vst.msk [vmem:[%s185 + $0x2c8] sm:$0xff] %vm1546, %v1507
        %1637 = vst.msk [vmem:[%s185 + $0x2d0] sm:$0xff] %vm1546, %v1508
        %1638 = vst.msk [vmem:[%s185 + $0x2d8] sm:$0xff] %vm1546, %v1509
        %1639 = vst.msk [vmem:[%s185 + $0x2e0] sm:$0xff] %vm1546, %v1510
        %1640 = vst.msk [vmem:[%s185 + $0x2e8] sm:$0xff] %vm1546, %v1511
        %1641 = vst.msk [vmem:[%s185 + $0x2f0] sm:$0xff] %vm1546, %v1512
        %1642 = vst.msk [vmem:[%s185 + $0x2f8] sm:$0xff] %vm1546, %v1513
        %1643 = vst.msk [vmem:[%s185 + $0x300] sm:$0xff] %vm1546, %v1514
        %1644 = vst.msk [vmem:[%s185 + $0x308] sm:$0xff] %vm1546, %v1515
        %1645 = vst.msk [vmem:[%s185 + $0x310] sm:$0xff] %vm1546, %v1516
        %1646 = vst.msk [vmem:[%s185 + $0x318] sm:$0xff] %vm1546, %v1517
        %1647 = vst.msk [vmem:[%s185 + $0x320] sm:$0xff] %vm1546, %v1518
        %1648 = vst.msk [vmem:[%s185 + $0x328] sm:$0xff] %vm1546, %v1519
        %1649 = vst.msk [vmem:[%s185 + $0x330] sm:$0xff] %vm1546, %v1520
        %1650 = vst.msk [vmem:[%s185 + $0x338] sm:$0xff] %vm1546, %v1521
        %1651 = vst.msk [vmem:[%s185 + $0x340] sm:$0xff] %vm1546, %v1522
        %1652 = vst.msk [vmem:[%s185 + $0x348] sm:$0xff] %vm1546, %v1523
        %1653 = vst.msk [vmem:[%s185 + $0x350] sm:$0xff] %vm1546, %v1524
        %1654 = vst.msk [vmem:[%s185 + $0x358] sm:$0xff] %vm1546, %v1525
        %1655 = vst.msk [vmem:[%s185 + $0x360] sm:$0xff] %vm1546, %v1526
        %1656 = vst.msk [vmem:[%s185 + $0x368] sm:$0xff] %vm1546, %v1527
        %1657 = vst.msk [vmem:[%s185 + $0x370] sm:$0xff] %vm1546, %v1528
        %1658 = vst.msk [vmem:[%s185 + $0x378] sm:$0xff] %vm1546, %v1529
        %1659 = vst.msk [vmem:[%s185 + $0x380] sm:$0xff] %vm1546, %v1530
        %1660 = vst.msk [vmem:[%s185 + $0x388] sm:$0xff] %vm1546, %v1531
        %1661 = vst.msk [vmem:[%s185 + $0x390] sm:$0xff] %vm1546, %v1532
        %1662 = vst.msk [vmem:[%s185 + $0x398] sm:$0xff] %vm1546, %v1533
        %1663 = vst.msk [vmem:[%s185 + $0x3a0] sm:$0xff] %vm1546, %v1534
        %1664 = vst.msk [vmem:[%s185 + $0x3a8] sm:$0xff] %vm1546, %v1535
        %1665 = vst.msk [vmem:[%s185 + $0x3b0] sm:$0xff] %vm1546, %v1536
        %1666 = vst.msk [vmem:[%s185 + $0x3b8] sm:$0xff] %vm1546, %v1537
        %1667 = vst.msk [vmem:[%s185 + $0x3c0] sm:$0xff] %vm1546, %v1538
        %1668 = vst.msk [vmem:[%s185 + $0x3c8] sm:$0xff] %vm1546, %v1539
        %1669 = vst.msk [vmem:[%s185 + $0x3d0] sm:$0xff] %vm1546, %v1540
        %1670 = vst.msk [vmem:[%s185 + $0x3d8] sm:$0xff] %vm1546, %v1541
        %1671 = vst.msk [vmem:[%s185 + $0x3e0] sm:$0xff] %vm1546, %v1542
        %1672 = vst.msk [vmem:[%s185 + $0x3e8] sm:$0xff] %vm1546, %v1543
        %1673 = vst.msk [vmem:[%s185 + $0x3f0] sm:$0xff] %vm1546, %v1544
        %1674 = vst.msk [vmem:[%s185 + $0x3f8] sm:$0xff] %vm1546, %v1545
        %s1675 = smul.u32 128, %s15
        %p1676 = scmp.lt.s32.totalorder %s1675, 255
        %s1677 = scalar_select %p1676, %s1675, 255
        %s1678 = smul.addr %s1677, 8
        %s1679 = scalar_lea.vmem %s3, %s1678
        // Predicated region
        $region37: #{forward.10} parent=31 // pred_check
          %p1680 = pneg %p101
        $region38: #{forward.10} parent=31 // pred_check_branch
          %1682 = sbr.rel (%p1680) target = $region40
        $region39: #{forward.10} parent=31 // pred_region
          %s1683 = smul.u32 128, %s15
        $region40: #{forward.10} parent=31 // pred_fallthru
          _
      $region32: #{forward.10} parent=5 // pred_fallthru
        _
      %p1684 = scmp.le.s32.totalorder 2, %s10
      // Predicated region
      $region41: #{forward.10} parent=5 // pred_check
        %p1685 = pneg %p1684
      $region42: #{forward.10} parent=5 // pred_check_branch
        %1687 = sbr.rel (%p1685) target = $region44
      $region43: #{forward.10} parent=5 // pred_region
        %s1688 = ssub.s32 %s10, 2
        // Predicated region
        $region45: #{forward.10} parent=43 // pred_check
          %p1689 = pneg %p107
        $region46: #{forward.10} parent=43 // pred_check_branch
          %1691 = sbr.rel (%p1689) target = $region48
        $region47: #{forward.10} parent=43 // pred_region
          %s1692 = smul.u32 128, %s16
          %p1693 = scmp.lt.s32.totalorder %s1692, 255
          %s1694 = scalar_select %p1693, %s1692, 255
          %s1695 = smul.addr %s1694, 8
          %s1696 = scalar_lea.vmem %s3, %s1695
        $region48: #{forward.10} parent=43 // pred_fallthru
          _
      $region44: #{forward.10} parent=5 // pred_fallthru
        _
    $region6: #{forward.10} parent=1 // loop_footer
      %s14 = sadd.s32 1, %s10
    $region7: #{forward.10} parent=1 // loop_footer_branch
      %9 = sbr.rel target = $region3
    $region8: #{forward.10} parent=1 // loop_exit
      _
    %1697 = vsyncpa [#allocation3], 1
    %s1698 = scalar_lea.sflag [#allocation3], 1
    %1699 = vsyncpa %s1698, 1

// kernel: forward.13
$region0: #{forward.13}
  #allocation0 [shape = 'u32[]', space=smem, size = 0x4, offset = 0x4, fixed_abs, tag = 'smem constant byte address 0x4 - core index']
  #allocation1 [shape = 'u32[144,128]{1,0:T(1,128)}', space=vmem, size = 0x12000, scoped, tag = 'internal scratch']
  %s0 = inlined_call_operand.vmem [shape: f32[16,256], index: 0, kind: input, shape index: {}]
  %s1 = inlined_call_operand.vmem [shape: f32[16,256], index: 1, kind: input, shape index: {}]
  %s2 = inlined_call_operand.vmem [shape: f32[16,256], index: 2, kind: input, shape index: {}]
  %s3 = inlined_call_operand.vmem [shape: f32[16,256], index: 3, kind: input, shape index: {}]
  %s4 = inlined_call_operand.vmem [shape: f32[16,256], index: 4, kind: output, shape index: {}]
  %s5 = sld [smem:[#allocation0]]
  $region26: #{forward.13} parent=0
    _
  %s7 = ssub.s32 1, %s5
  %s8 = scalar_select 0, %s7, %s5
  // Predicated region
  $region2: #{forward.13} parent=0 // pred_check
    _
  $region3: #{forward.13} parent=0 // pred_check_branch
    %10 = sbr.rel (0) target = $region5
  $region4: #{forward.13} parent=0 // pred_region
    _
  $region5: #{forward.13} parent=0 // pred_fallthru
    _
  // Predicated region
  $region6: #{forward.13} parent=0 // pred_check
    _
  $region7: #{forward.13} parent=0 // pred_check_branch
    %12 = sbr.rel (0) target = $region9
  $region8: #{forward.13} parent=0 // pred_region
    _
  $region9: #{forward.13} parent=0 // pred_fallthru
    _
  // Predicated region
  $region10: #{forward.13} parent=0 // pred_check
    _
  $region11: #{forward.13} parent=0 // pred_check_branch
    %14 = sbr.rel (0) target = $region13
  $region12: #{forward.13} parent=0 // pred_region
    _
  $region13: #{forward.13} parent=0 // pred_fallthru
    _
  // Predicated region
  $region14: #{forward.13} parent=0 // pred_check
    _
  $region15: #{forward.13} parent=0 // pred_check_branch
    %16 = sbr.rel (0) target = $region17
  $region16: #{forward.13} parent=0 // pred_region
    _
  $region17: #{forward.13} parent=0 // pred_fallthru
    _
  %v17 = vld [vmem:[%s0] sm:$0xff]
  %v18 = vld [vmem:[%s0 + $0x8] sm:$0xff]
  %v19 = vld [vmem:[%s0 + $0x10] sm:$0xff]
  %v20 = vld [vmem:[%s0 + $0x18] sm:$0xff]
  %v21 = vld [vmem:[%s1] sm:$0xff]
  %v22 = vld [vmem:[%s1 + $0x8] sm:$0xff]
  %v23 = vld [vmem:[%s1 + $0x10] sm:$0xff]
  %v24 = vld [vmem:[%s1 + $0x18] sm:$0xff]
  %v25 = vmax.f32 %v17, %v21
  %v26 = vmax.f32 %v18, %v22
  %v27 = vmax.f32 %v19, %v23
  %v28 = vmax.f32 %v20, %v24
  %v29 = vld [vmem:[%s2] sm:$0xff]
  %v30 = vld [vmem:[%s2 + $0x8] sm:$0xff]
  %v31 = vld [vmem:[%s2 + $0x10] sm:$0xff]
  %v32 = vld [vmem:[%s2 + $0x18] sm:$0xff]
  %v33 = vld [vmem:[%s3] sm:$0xff]
  %v34 = vld [vmem:[%s3 + $0x8] sm:$0xff]
  %v35 = vld [vmem:[%s3 + $0x10] sm:$0xff]
  %v36 = vld [vmem:[%s3 + $0x18] sm:$0xff]
  %v37 = vmax.f32 %v29, %v33
  %v38 = vmax.f32 %v30, %v34
  %v39 = vmax.f32 %v31, %v35
  %v40 = vmax.f32 %v32, %v36
  %v41 = vmax.f32 %v25, %v37
  %v42 = vmax.f32 %v26, %v38
  %v43 = vmax.f32 %v27, %v39
  %v44 = vmax.f32 %v28, %v40
  %45 = vst [vmem:[%s4] sm:$0xff] %v41
  %46 = vst [vmem:[%s4 + $0x8] sm:$0xff] %v42
  %47 = vst [vmem:[%s4 + $0x10] sm:$0xff] %v43
  %48 = vst [vmem:[%s4 + $0x18] sm:$0xff] %v44
  // Predicated region
  $region18: #{forward.13} parent=0 // pred_check
    _
  $region19: #{forward.13} parent=0 // pred_check_branch
    %50 = sbr.rel (0) target = $region21
  $region20: #{forward.13} parent=0 // pred_region
    _
  $region21: #{forward.13} parent=0 // pred_fallthru
    _
  // Predicated region
  $region22: #{forward.13} parent=0 // pred_check
    _
  $region23: #{forward.13} parent=0 // pred_check_branch
    %52 = sbr.rel (0) target = $region25
  $region24: #{forward.13} parent=0 // pred_region
    _
  $region25: #{forward.13} parent=0 // pred_fallthru
    _

// kernel: forward.12
$region0: #{forward.12}
  #allocation0 [shape = 'u32[]', space=smem, size = 0x4, offset = 0x4, fixed_abs, tag = 'smem constant byte address 0x4 - core index']
  #allocation1 [shape = 'u32[144,128]{1,0:T(1,128)}', space=vmem, size = 0x12000, scoped, tag = 'internal scratch']
  %s0 = inlined_call_operand.vmem [shape: f32[512,144], index: 0, kind: input, shape index: {}]
  %s1 = inlined_call_operand.vmem [shape: f32[144,32], index: 1, kind: input, shape index: {}]
  %s2 = inlined_call_operand.vmem [shape: f32[1,32], index: 2, kind: input, shape index: {}]
  %s3 = inlined_call_operand.vmem [shape: f32[512,32], index: 3, kind: output, shape index: {}]
  %s4 = sld [smem:[#allocation0]]
  $region22: #{forward.12} parent=0
    _
  %s6 = ssub.s32 1, %s4
  %s7 = scalar_select 0, %s6, %s4
  // Predicated region
  $region2: #{forward.12} parent=0 // pred_check
    _
  $region3: #{forward.12} parent=0 // pred_check_branch
    %9 = sbr.rel (0) target = $region5
  $region4: #{forward.12} parent=0 // pred_region
    _
  $region5: #{forward.12} parent=0 // pred_fallthru
    _
  // Predicated region
  $region6: #{forward.12} parent=0 // pred_check
    _
  $region7: #{forward.12} parent=0 // pred_check_branch
    %11 = sbr.rel (0) target = $region9
  $region8: #{forward.12} parent=0 // pred_region
    _
  $region9: #{forward.12} parent=0 // pred_fallthru
    _
  // Predicated region
  $region10: #{forward.12} parent=0 // pred_check
    _
  $region11: #{forward.12} parent=0 // pred_check_branch
    %13 = sbr.rel (0) target = $region13
  $region12: #{forward.12} parent=0 // pred_region
    _
  $region13: #{forward.12} parent=0 // pred_fallthru
    _
  %v14 = vld [vmem:[%s0] sm:$0xff]
  %v15 = vld [vmem:[%s0 + $0x8] sm:$0xff]
  %v16 = vld [vmem:[%s0 + $0x10] sm:$0xff]
  %v17 = vld [vmem:[%s0 + $0x18] sm:$0xff]
  %v18 = vld [vmem:[%s0 + $0x20] sm:$0xff]
  %v19 = vld [vmem:[%s0 + $0x28] sm:$0xff]
  %v20 = vld [vmem:[%s0 + $0x30] sm:$0xff]
  %v21 = vld [vmem:[%s0 + $0x38] sm:$0xff]
  %v22 = vld [vmem:[%s0 + $0x40] sm:$0xff]
  %v23 = vld [vmem:[%s0 + $0x48] sm:$0xff]
  %v24 = vld [vmem:[%s0 + $0x50] sm:$0xff]
  %v25 = vld [vmem:[%s0 + $0x58] sm:$0xff]
  %v26 = vld [vmem:[%s0 + $0x60] sm:$0xff]
  %v27 = vld [vmem:[%s0 + $0x68] sm:$0xff]
  %v28 = vld [vmem:[%s0 + $0x70] sm:$0xff]
  %v29 = vld [vmem:[%s0 + $0x78] sm:$0xff]
  %v30 = vld [vmem:[%s0 + $0x80] sm:$0xff]
  %v31 = vld [vmem:[%s0 + $0x88] sm:$0xff]
  %v32 = vld [vmem:[%s0 + $0x90] sm:$0xff]
  %v33 = vld [vmem:[%s0 + $0x98] sm:$0xff]
  %v34 = vld [vmem:[%s0 + $0xa0] sm:$0xff]
  %v35 = vld [vmem:[%s0 + $0xa8] sm:$0xff]
  %v36 = vld [vmem:[%s0 + $0xb0] sm:$0xff]
  %v37 = vld [vmem:[%s0 + $0xb8] sm:$0xff]
  %v38 = vld [vmem:[%s0 + $0xc0] sm:$0xff]
  %v39 = vld [vmem:[%s0 + $0xc8] sm:$0xff]
  %v40 = vld [vmem:[%s0 + $0xd0] sm:$0xff]
  %v41 = vld [vmem:[%s0 + $0xd8] sm:$0xff]
  %v42 = vld [vmem:[%s0 + $0xe0] sm:$0xff]
  %v43 = vld [vmem:[%s0 + $0xe8] sm:$0xff]
  %v44 = vld [vmem:[%s0 + $0xf0] sm:$0xff]
  %v45 = vld [vmem:[%s0 + $0xf8] sm:$0xff]
  %v46 = vld [vmem:[%s0 + $0x100] sm:$0xff]
  %v47 = vld [vmem:[%s0 + $0x108] sm:$0xff]
  %v48 = vld [vmem:[%s0 + $0x110] sm:$0xff]
  %v49 = vld [vmem:[%s0 + $0x118] sm:$0xff]
  %v50 = vld [vmem:[%s0 + $0x120] sm:$0xff]
  %v51 = vld [vmem:[%s0 + $0x128] sm:$0xff]
  %v52 = vld [vmem:[%s0 + $0x130] sm:$0xff]
  %v53 = vld [vmem:[%s0 + $0x138] sm:$0xff]
  %v54 = vld [vmem:[%s0 + $0x140] sm:$0xff]
  %v55 = vld [vmem:[%s0 + $0x148] sm:$0xff]
  %v56 = vld [vmem:[%s0 + $0x150] sm:$0xff]
  %v57 = vld [vmem:[%s0 + $0x158] sm:$0xff]
  %v58 = vld [vmem:[%s0 + $0x160] sm:$0xff]
  %v59 = vld [vmem:[%s0 + $0x168] sm:$0xff]
  %v60 = vld [vmem:[%s0 + $0x170] sm:$0xff]
  %v61 = vld [vmem:[%s0 + $0x178] sm:$0xff]
  %v62 = vld [vmem:[%s0 + $0x180] sm:$0xff]
  %v63 = vld [vmem:[%s0 + $0x188] sm:$0xff]
  %v64 = vld [vmem:[%s0 + $0x190] sm:$0xff]
  %v65 = vld [vmem:[%s0 + $0x198] sm:$0xff]
  %v66 = vld [vmem:[%s0 + $0x1a0] sm:$0xff]
  %v67 = vld [vmem:[%s0 + $0x1a8] sm:$0xff]
  %v68 = vld [vmem:[%s0 + $0x1b0] sm:$0xff]
  %v69 = vld [vmem:[%s0 + $0x1b8] sm:$0xff]
  %v70 = vld [vmem:[%s0 + $0x1c0] sm:$0xff]
  %v71 = vld [vmem:[%s0 + $0x1c8] sm:$0xff]
  %v72 = vld [vmem:[%s0 + $0x1d0] sm:$0xff]
  %v73 = vld [vmem:[%s0 + $0x1d8] sm:$0xff]
  %v74 = vld [vmem:[%s0 + $0x1e0] sm:$0xff]
  %v75 = vld [vmem:[%s0 + $0x1e8] sm:$0xff]
  %v76 = vld [vmem:[%s0 + $0x1f0] sm:$0xff]
  %v77 = vld [vmem:[%s0 + $0x1f8] sm:$0xff]
  %v78 = vld [vmem:[%s0 + $0x200] sm:$0xff]
  %v79 = vld [vmem:[%s0 + $0x208] sm:$0xff]
  %v80 = vld [vmem:[%s0 + $0x210] sm:$0xff]
  %v81 = vld [vmem:[%s0 + $0x218] sm:$0xff]
  %v82 = vld [vmem:[%s0 + $0x220] sm:$0xff]
  %v83 = vld [vmem:[%s0 + $0x228] sm:$0xff]
  %v84 = vld [vmem:[%s0 + $0x230] sm:$0xff]
  %v85 = vld [vmem:[%s0 + $0x238] sm:$0xff]
  %v86 = vld [vmem:[%s0 + $0x240] sm:$0xff]
  %v87 = vld [vmem:[%s0 + $0x248] sm:$0xff]
  %v88 = vld [vmem:[%s0 + $0x250] sm:$0xff]
  %v89 = vld [vmem:[%s0 + $0x258] sm:$0xff]
  %v90 = vld [vmem:[%s0 + $0x260] sm:$0xff]
  %v91 = vld [vmem:[%s0 + $0x268] sm:$0xff]
  %v92 = vld [vmem:[%s0 + $0x270] sm:$0xff]
  %v93 = vld [vmem:[%s0 + $0x278] sm:$0xff]
  %v94 = vld [vmem:[%s0 + $0x280] sm:$0xff]
  %v95 = vld [vmem:[%s0 + $0x288] sm:$0xff]
  %v96 = vld [vmem:[%s0 + $0x290] sm:$0xff]
  %v97 = vld [vmem:[%s0 + $0x298] sm:$0xff]
  %v98 = vld [vmem:[%s0 + $0x2a0] sm:$0xff]
  %v99 = vld [vmem:[%s0 + $0x2a8] sm:$0xff]
  %v100 = vld [vmem:[%s0 + $0x2b0] sm:$0xff]
  %v101 = vld [vmem:[%s0 + $0x2b8] sm:$0xff]
  %v102 = vld [vmem:[%s0 + $0x2c0] sm:$0xff]
  %v103 = vld [vmem:[%s0 + $0x2c8] sm:$0xff]
  %v104 = vld [vmem:[%s0 + $0x2d0] sm:$0xff]
  %v105 = vld [vmem:[%s0 + $0x2d8] sm:$0xff]
  %v106 = vld [vmem:[%s0 + $0x2e0] sm:$0xff]
  %v107 = vld [vmem:[%s0 + $0x2e8] sm:$0xff]
  %v108 = vld [vmem:[%s0 + $0x2f0] sm:$0xff]
  %v109 = vld [vmem:[%s0 + $0x2f8] sm:$0xff]
  %v110 = vld [vmem:[%s0 + $0x300] sm:$0xff]
  %v111 = vld [vmem:[%s0 + $0x308] sm:$0xff]
  %v112 = vld [vmem:[%s0 + $0x310] sm:$0xff]
  %v113 = vld [vmem:[%s0 + $0x318] sm:$0xff]
  %v114 = vld [vmem:[%s0 + $0x320] sm:$0xff]
  %v115 = vld [vmem:[%s0 + $0x328] sm:$0xff]
  %v116 = vld [vmem:[%s0 + $0x330] sm:$0xff]
  %v117 = vld [vmem:[%s0 + $0x338] sm:$0xff]
  %v118 = vld [vmem:[%s0 + $0x340] sm:$0xff]
  %v119 = vld [vmem:[%s0 + $0x348] sm:$0xff]
  %v120 = vld [vmem:[%s0 + $0x350] sm:$0xff]
  %v121 = vld [vmem:[%s0 + $0x358] sm:$0xff]
  %v122 = vld [vmem:[%s0 + $0x360] sm:$0xff]
  %v123 = vld [vmem:[%s0 + $0x368] sm:$0xff]
  %v124 = vld [vmem:[%s0 + $0x370] sm:$0xff]
  %v125 = vld [vmem:[%s0 + $0x378] sm:$0xff]
  %v126 = vld [vmem:[%s0 + $0x380] sm:$0xff]
  %v127 = vld [vmem:[%s0 + $0x388] sm:$0xff]
  %v128 = vld [vmem:[%s0 + $0x390] sm:$0xff]
  %v129 = vld [vmem:[%s0 + $0x398] sm:$0xff]
  %v130 = vld [vmem:[%s0 + $0x3a0] sm:$0xff]
  %v131 = vld [vmem:[%s0 + $0x3a8] sm:$0xff]
  %v132 = vld [vmem:[%s0 + $0x3b0] sm:$0xff]
  %v133 = vld [vmem:[%s0 + $0x3b8] sm:$0xff]
  %v134 = vld [vmem:[%s0 + $0x3c0] sm:$0xff]
  %v135 = vld [vmem:[%s0 + $0x3c8] sm:$0xff]
  %v136 = vld [vmem:[%s0 + $0x3d0] sm:$0xff]
  %v137 = vld [vmem:[%s0 + $0x3d8] sm:$0xff]
  %v138 = vld [vmem:[%s0 + $0x3e0] sm:$0xff]
  %v139 = vld [vmem:[%s0 + $0x3e8] sm:$0xff]
  %v140 = vld [vmem:[%s0 + $0x3f0] sm:$0xff]
  %v141 = vld [vmem:[%s0 + $0x3f8] sm:$0xff]
  %v142 = vld [vmem:[%s1] sm:$0xff]
  %v143 = vld [vmem:[%s1 + $0x8] sm:$0xff]
  %v144 = vld [vmem:[%s1 + $0x10] sm:$0xff]
  %v145 = vld [vmem:[%s1 + $0x18] sm:$0xff]
  %v146 = vld [vmem:[%s1 + $0x20] sm:$0xff]
  %v147 = vld [vmem:[%s1 + $0x28] sm:$0xff]
  %v148 = vld [vmem:[%s1 + $0x30] sm:$0xff]
  %v149 = vld [vmem:[%s1 + $0x38] sm:$0xff]
  %v150 = vld [vmem:[%s1 + $0x40] sm:$0xff]
  %v151 = vld [vmem:[%s1 + $0x48] sm:$0xff]
  %v152 = vld [vmem:[%s1 + $0x50] sm:$0xff]
  %v153 = vld [vmem:[%s1 + $0x58] sm:$0xff]
  %v154 = vld [vmem:[%s1 + $0x60] sm:$0xff]
  %v155 = vld [vmem:[%s1 + $0x68] sm:$0xff]
  %v156 = vld [vmem:[%s1 + $0x70] sm:$0xff]
  %v157 = vld [vmem:[%s1 + $0x78] sm:$0xff]
  %v158 = vld [vmem:[%s1 + $0x80] sm:$0xff]
  %v159 = vld [vmem:[%s1 + $0x88] sm:$0xff]
  %v160 = vld [vmem:[%s2] sm:$0x1]
  %v162 = vlaneseq
  %v163 = vshrl.u32 %v162, 7
  %v164 = vsub.s32 0, %v163
  %v165 = vrot.slane %v160, %v164
  %vm167 = vcmask 130048
  %v169 = vsel %vm167, %v15, 0
  %v172 = vsel %vm167, %v17, 0
  %v175 = vsel %vm167, %v19, 0
  %v178 = vsel %vm167, %v21, 0
  %v181 = vsel %vm167, %v23, 0
  %v184 = vsel %vm167, %v25, 0
  %v187 = vsel %vm167, %v27, 0
  %v190 = vsel %vm167, %v29, 0
  %v193 = vsel %vm167, %v31, 0
  %v196 = vsel %vm167, %v33, 0
  %v199 = vsel %vm167, %v35, 0
  %v202 = vsel %vm167, %v37, 0
  %v205 = vsel %vm167, %v39, 0
  %v208 = vsel %vm167, %v41, 0
  %v211 = vsel %vm167, %v43, 0
  %v214 = vsel %vm167, %v45, 0
  %v217 = vsel %vm167, %v47, 0
  %v220 = vsel %vm167, %v49, 0
  %v223 = vsel %vm167, %v51, 0
  %v226 = vsel %vm167, %v53, 0
  %v229 = vsel %vm167, %v55, 0
  %v232 = vsel %vm167, %v57, 0
  %v235 = vsel %vm167, %v59, 0
  %v238 = vsel %vm167, %v61, 0
  %v241 = vsel %vm167, %v63, 0
  %v244 = vsel %vm167, %v65, 0
  %v247 = vsel %vm167, %v67, 0
  %v250 = vsel %vm167, %v69, 0
  %v253 = vsel %vm167, %v71, 0
  %v256 = vsel %vm167, %v73, 0
  %v259 = vsel %vm167, %v75, 0
  %v262 = vsel %vm167, %v77, 0
  %v265 = vsel %vm167, %v79, 0
  %v268 = vsel %vm167, %v81, 0
  %v271 = vsel %vm167, %v83, 0
  %v274 = vsel %vm167, %v85, 0
  %v277 = vsel %vm167, %v87, 0
  %v280 = vsel %vm167, %v89, 0
  %v283 = vsel %vm167, %v91, 0
  %v286 = vsel %vm167, %v93, 0
  %v289 = vsel %vm167, %v95, 0
  %v292 = vsel %vm167, %v97, 0
  %v295 = vsel %vm167, %v99, 0
  %v298 = vsel %vm167, %v101, 0
  %v301 = vsel %vm167, %v103, 0
  %v304 = vsel %vm167, %v105, 0
  %v307 = vsel %vm167, %v107, 0
  %v310 = vsel %vm167, %v109, 0
  %v313 = vsel %vm167, %v111, 0
  %v316 = vsel %vm167, %v113, 0
  %v319 = vsel %vm167, %v115, 0
  %v322 = vsel %vm167, %v117, 0
  %v325 = vsel %vm167, %v119, 0
  %v328 = vsel %vm167, %v121, 0
  %v331 = vsel %vm167, %v123, 0
  %v334 = vsel %vm167, %v125, 0
  %v337 = vsel %vm167, %v127, 0
  %v340 = vsel %vm167, %v129, 0
  %v343 = vsel %vm167, %v131, 0
  %v346 = vsel %vm167, %v133, 0
  %v349 = vsel %vm167, %v135, 0
  %v352 = vsel %vm167, %v137, 0
  %v355 = vsel %vm167, %v139, 0
  %v358 = vsel %vm167, %v141, 0
  %360 = vmatprep.subr.mxu0 0.0
  %361 = vmatpush1.msra.mxu0 %v157
  %362 = vmatprep.subr.mxu0 0.0
  %363 = vmatpush1.msra.mxu0 %v156
  %364 = vmatprep.subr.mxu0 0.0
  %365 = vmatpush1.msra.mxu0 %v155
  %366 = vmatprep.subr.mxu0 0.0
  %367 = vmatpush1.msra.mxu0 %v154
  %368 = vmatprep.subr.mxu0 0.0
  %369 = vmatpush1.msra.mxu0 %v153
  %370 = vmatprep.subr.mxu0 0.0
  %371 = vmatpush1.msra.mxu0 %v152
  %372 = vmatprep.subr.mxu0 0.0
  %373 = vmatpush1.msra.mxu0 %v151
  %374 = vmatprep.subr.mxu0 0.0
  %375 = vmatpush1.msra.mxu0 %v150
  %376 = vmatprep.subr.mxu0 0.0
  %377 = vmatpush1.msra.mxu0 %v149
  %378 = vmatprep.subr.mxu0 0.0
  %379 = vmatpush1.msra.mxu0 %v148
  %380 = vmatprep.subr.mxu0 0.0
  %381 = vmatpush1.msra.mxu0 %v147
  %382 = vmatprep.subr.mxu0 0.0
  %383 = vmatpush1.msra.mxu0 %v146
  %384 = vmatprep.subr.mxu0 0.0
  %385 = vmatpush1.msra.mxu0 %v145
  %386 = vmatprep.subr.mxu0 0.0
  %387 = vmatpush1.msra.mxu0 %v144
  %388 = vmatprep.subr.mxu0 0.0
  %389 = vmatpush1.msra.mxu0 %v143
  %390 = vmatprep.subr.mxu0 0.0
  %391 = vmatpush1.msra.mxu0 %v142
  %392 = vmatprep.subr.mxu0 0.0
  %393 = vmatpush2.msra.mxu0 0.0
  %394 = vmatprep.subr.mxu0 0.0
  %395 = vmatpush2.msra.mxu0 0.0
  %396 = vmatprep.subr.mxu0 0.0
  %397 = vmatpush2.msra.mxu0 0.0
  %398 = vmatprep.subr.mxu0 0.0
  %399 = vmatpush2.msra.mxu0 0.0
  %400 = vmatprep.subr.mxu0 0.0
  %401 = vmatpush2.msra.mxu0 0.0
  %402 = vmatprep.subr.mxu0 0.0
  %403 = vmatpush2.msra.mxu0 0.0
  %404 = vmatprep.subr.mxu0 0.0
  %405 = vmatpush2.msra.mxu0 0.0
  %406 = vmatprep.subr.mxu0 0.0
  %407 = vmatpush2.msra.mxu0 0.0
  %408 = vmatprep.subr.mxu0 0.0
  %409 = vmatpush2.msra.mxu0 0.0
  %410 = vmatprep.subr.mxu0 0.0
  %411 = vmatpush2.msra.mxu0 0.0
  %412 = vmatprep.subr.mxu0 0.0
  %413 = vmatpush2.msra.mxu0 0.0
  %414 = vmatprep.subr.mxu0 0.0
  %415 = vmatpush2.msra.mxu0 0.0
  %416 = vmatprep.subr.mxu0 0.0
  %417 = vmatpush2.msra.mxu0 0.0
  %418 = vmatprep.subr.mxu0 0.0
  %419 = vmatpush2.msra.mxu0 0.0
  %420 = vmatprep.subr.mxu0 0.0
  %421 = vmatpush2.msra.mxu0 %v159
  %422 = vmatprep.subr.mxu0 0.0
  %423 = vmatpush2.msra.mxu0 %v158
  %424 = vmatprep.mubr.f32.mxu0 %v169
  %425 = vmatmul.mubr.f32.gmra.mxu0 %v14
  %v426 = vpop.f32.mrf.mxu0
  %v427 = vadd.f32 %v165, %v426
  %v428 = vpop.f32.mrf.mxu0
  %429 = vmatprep.mubr.f32.mxu0 %v172
  %430 = vmatmul.mubr.f32.gmra.mxu0 %v16
  %v431 = vpop.f32.mrf.mxu0
  %v432 = vadd.f32 %v165, %v431
  %v433 = vpop.f32.mrf.mxu0
  %434 = vmatprep.mubr.f32.mxu0 %v175
  %435 = vmatmul.mubr.f32.gmra.mxu0 %v18
  %v436 = vpop.f32.mrf.mxu0
  %v437 = vadd.f32 %v165, %v436
  %v438 = vpop.f32.mrf.mxu0
  %439 = vmatprep.mubr.f32.mxu0 %v178
  %440 = vmatmul.mubr.f32.gmra.mxu0 %v20
  %v441 = vpop.f32.mrf.mxu0
  %v442 = vadd.f32 %v165, %v441
  %v443 = vpop.f32.mrf.mxu0
  %444 = vmatprep.mubr.f32.mxu0 %v181
  %445 = vmatmul.mubr.f32.gmra.mxu0 %v22
  %v446 = vpop.f32.mrf.mxu0
  %v447 = vadd.f32 %v165, %v446
  %v448 = vpop.f32.mrf.mxu0
  %449 = vmatprep.mubr.f32.mxu0 %v184
  %450 = vmatmul.mubr.f32.gmra.mxu0 %v24
  %v451 = vpop.f32.mrf.mxu0
  %v452 = vadd.f32 %v165, %v451
  %v453 = vpop.f32.mrf.mxu0
  %454 = vmatprep.mubr.f32.mxu0 %v187
  %455 = vmatmul.mubr.f32.gmra.mxu0 %v26
  %v456 = vpop.f32.mrf.mxu0
  %v457 = vadd.f32 %v165, %v456
  %v458 = vpop.f32.mrf.mxu0
  %459 = vmatprep.mubr.f32.mxu0 %v190
  %460 = vmatmul.mubr.f32.gmra.mxu0 %v28
  %v461 = vpop.f32.mrf.mxu0
  %v462 = vadd.f32 %v165, %v461
  %v463 = vpop.f32.mrf.mxu0
  %464 = vmatprep.mubr.f32.mxu0 %v193
  %465 = vmatmul.mubr.f32.gmra.mxu0 %v30
  %v466 = vpop.f32.mrf.mxu0
  %v467 = vadd.f32 %v165, %v466
  %v468 = vpop.f32.mrf.mxu0
  %469 = vmatprep.mubr.f32.mxu0 %v196
  %470 = vmatmul.mubr.f32.gmra.mxu0 %v32
  %v471 = vpop.f32.mrf.mxu0
  %v472 = vadd.f32 %v165, %v471
  %v473 = vpop.f32.mrf.mxu0
  %474 = vmatprep.mubr.f32.mxu0 %v199
  %475 = vmatmul.mubr.f32.gmra.mxu0 %v34
  %v476 = vpop.f32.mrf.mxu0
  %v477 = vadd.f32 %v165, %v476
  %v478 = vpop.f32.mrf.mxu0
  %479 = vmatprep.mubr.f32.mxu0 %v202
  %480 = vmatmul.mubr.f32.gmra.mxu0 %v36
  %v481 = vpop.f32.mrf.mxu0
  %v482 = vadd.f32 %v165, %v481
  %v483 = vpop.f32.mrf.mxu0
  %484 = vmatprep.mubr.f32.mxu0 %v205
  %485 = vmatmul.mubr.f32.gmra.mxu0 %v38
  %v486 = vpop.f32.mrf.mxu0
  %v487 = vadd.f32 %v165, %v486
  %v488 = vpop.f32.mrf.mxu0
  %489 = vmatprep.mubr.f32.mxu0 %v208
  %490 = vmatmul.mubr.f32.gmra.mxu0 %v40
  %v491 = vpop.f32.mrf.mxu0
  %v492 = vadd.f32 %v165, %v491
  %v493 = vpop.f32.mrf.mxu0
  %494 = vmatprep.mubr.f32.mxu0 %v211
  %495 = vmatmul.mubr.f32.gmra.mxu0 %v42
  %v496 = vpop.f32.mrf.mxu0
  %v497 = vadd.f32 %v165, %v496
  %v498 = vpop.f32.mrf.mxu0
  %499 = vmatprep.mubr.f32.mxu0 %v214
  %500 = vmatmul.mubr.f32.gmra.mxu0 %v44
  %v501 = vpop.f32.mrf.mxu0
  %v502 = vadd.f32 %v165, %v501
  %v503 = vpop.f32.mrf.mxu0
  %504 = vmatprep.mubr.f32.mxu0 %v217
  %505 = vmatmul.mubr.f32.gmra.mxu0 %v46
  %v506 = vpop.f32.mrf.mxu0
  %v507 = vadd.f32 %v165, %v506
  %v508 = vpop.f32.mrf.mxu0
  %509 = vmatprep.mubr.f32.mxu0 %v220
  %510 = vmatmul.mubr.f32.gmra.mxu0 %v48
  %v511 = vpop.f32.mrf.mxu0
  %v512 = vadd.f32 %v165, %v511
  %v513 = vpop.f32.mrf.mxu0
  %514 = vmatprep.mubr.f32.mxu0 %v223
  %515 = vmatmul.mubr.f32.gmra.mxu0 %v50
  %v516 = vpop.f32.mrf.mxu0
  %v517 = vadd.f32 %v165, %v516
  %v518 = vpop.f32.mrf.mxu0
  %519 = vmatprep.mubr.f32.mxu0 %v226
  %520 = vmatmul.mubr.f32.gmra.mxu0 %v52
  %v521 = vpop.f32.mrf.mxu0
  %v522 = vadd.f32 %v165, %v521
  %v523 = vpop.f32.mrf.mxu0
  %524 = vmatprep.mubr.f32.mxu0 %v229
  %525 = vmatmul.mubr.f32.gmra.mxu0 %v54
  %v526 = vpop.f32.mrf.mxu0
  %v527 = vadd.f32 %v165, %v526
  %v528 = vpop.f32.mrf.mxu0
  %529 = vmatprep.mubr.f32.mxu0 %v232
  %530 = vmatmul.mubr.f32.gmra.mxu0 %v56
  %v531 = vpop.f32.mrf.mxu0
  %v532 = vadd.f32 %v165, %v531
  %v533 = vpop.f32.mrf.mxu0
  %534 = vmatprep.mubr.f32.mxu0 %v235
  %535 = vmatmul.mubr.f32.gmra.mxu0 %v58
  %v536 = vpop.f32.mrf.mxu0
  %v537 = vadd.f32 %v165, %v536
  %v538 = vpop.f32.mrf.mxu0
  %539 = vmatprep.mubr.f32.mxu0 %v238
  %540 = vmatmul.mubr.f32.gmra.mxu0 %v60
  %v541 = vpop.f32.mrf.mxu0
  %v542 = vadd.f32 %v165, %v541
  %v543 = vpop.f32.mrf.mxu0
  %544 = vmatprep.mubr.f32.mxu0 %v241
  %545 = vmatmul.mubr.f32.gmra.mxu0 %v62
  %v546 = vpop.f32.mrf.mxu0
  %v547 = vadd.f32 %v165, %v546
  %v548 = vpop.f32.mrf.mxu0
  %549 = vmatprep.mubr.f32.mxu0 %v244
  %550 = vmatmul.mubr.f32.gmra.mxu0 %v64
  %v551 = vpop.f32.mrf.mxu0
  %v552 = vadd.f32 %v165, %v551
  %v553 = vpop.f32.mrf.mxu0
  %554 = vmatprep.mubr.f32.mxu0 %v247
  %555 = vmatmul.mubr.f32.gmra.mxu0 %v66
  %v556 = vpop.f32.mrf.mxu0
  %v557 = vadd.f32 %v165, %v556
  %v558 = vpop.f32.mrf.mxu0
  %559 = vmatprep.mubr.f32.mxu0 %v250
  %560 = vmatmul.mubr.f32.gmra.mxu0 %v68
  %v561 = vpop.f32.mrf.mxu0
  %v562 = vadd.f32 %v165, %v561
  %v563 = vpop.f32.mrf.mxu0
  %564 = vmatprep.mubr.f32.mxu0 %v253
  %565 = vmatmul.mubr.f32.gmra.mxu0 %v70
  %v566 = vpop.f32.mrf.mxu0
  %v567 = vadd.f32 %v165, %v566
  %v568 = vpop.f32.mrf.mxu0
  %569 = vmatprep.mubr.f32.mxu0 %v256
  %570 = vmatmul.mubr.f32.gmra.mxu0 %v72
  %v571 = vpop.f32.mrf.mxu0
  %v572 = vadd.f32 %v165, %v571
  %v573 = vpop.f32.mrf.mxu0
  %574 = vmatprep.mubr.f32.mxu0 %v259
  %575 = vmatmul.mubr.f32.gmra.mxu0 %v74
  %v576 = vpop.f32.mrf.mxu0
  %v577 = vadd.f32 %v165, %v576
  %v578 = vpop.f32.mrf.mxu0
  %579 = vmatprep.mubr.f32.mxu0 %v262
  %580 = vmatmul.mubr.f32.gmra.mxu0 %v76
  %v581 = vpop.f32.mrf.mxu0
  %v582 = vadd.f32 %v165, %v581
  %v583 = vpop.f32.mrf.mxu0
  %584 = vmatprep.mubr.f32.mxu0 %v265
  %585 = vmatmul.mubr.f32.gmra.mxu0 %v78
  %v586 = vpop.f32.mrf.mxu0
  %v587 = vadd.f32 %v165, %v586
  %v588 = vpop.f32.mrf.mxu0
  %589 = vmatprep.mubr.f32.mxu0 %v268
  %590 = vmatmul.mubr.f32.gmra.mxu0 %v80
  %v591 = vpop.f32.mrf.mxu0
  %v592 = vadd.f32 %v165, %v591
  %v593 = vpop.f32.mrf.mxu0
  %594 = vmatprep.mubr.f32.mxu0 %v271
  %595 = vmatmul.mubr.f32.gmra.mxu0 %v82
  %v596 = vpop.f32.mrf.mxu0
  %v597 = vadd.f32 %v165, %v596
  %v598 = vpop.f32.mrf.mxu0
  %599 = vmatprep.mubr.f32.mxu0 %v274
  %600 = vmatmul.mubr.f32.gmra.mxu0 %v84
  %v601 = vpop.f32.mrf.mxu0
  %v602 = vadd.f32 %v165, %v601
  %v603 = vpop.f32.mrf.mxu0
  %604 = vmatprep.mubr.f32.mxu0 %v277
  %605 = vmatmul.mubr.f32.gmra.mxu0 %v86
  %v606 = vpop.f32.mrf.mxu0
  %v607 = vadd.f32 %v165, %v606
  %v608 = vpop.f32.mrf.mxu0
  %609 = vmatprep.mubr.f32.mxu0 %v280
  %610 = vmatmul.mubr.f32.gmra.mxu0 %v88
  %v611 = vpop.f32.mrf.mxu0
  %v612 = vadd.f32 %v165, %v611
  %v613 = vpop.f32.mrf.mxu0
  %614 = vmatprep.mubr.f32.mxu0 %v283
  %615 = vmatmul.mubr.f32.gmra.mxu0 %v90
  %v616 = vpop.f32.mrf.mxu0
  %v617 = vadd.f32 %v165, %v616
  %v618 = vpop.f32.mrf.mxu0
  %619 = vmatprep.mubr.f32.mxu0 %v286
  %620 = vmatmul.mubr.f32.gmra.mxu0 %v92
  %v621 = vpop.f32.mrf.mxu0
  %v622 = vadd.f32 %v165, %v621
  %v623 = vpop.f32.mrf.mxu0
  %624 = vmatprep.mubr.f32.mxu0 %v289
  %625 = vmatmul.mubr.f32.gmra.mxu0 %v94
  %v626 = vpop.f32.mrf.mxu0
  %v627 = vadd.f32 %v165, %v626
  %v628 = vpop.f32.mrf.mxu0
  %629 = vmatprep.mubr.f32.mxu0 %v292
  %630 = vmatmul.mubr.f32.gmra.mxu0 %v96
  %v631 = vpop.f32.mrf.mxu0
  %v632 = vadd.f32 %v165, %v631
  %v633 = vpop.f32.mrf.mxu0
  %634 = vmatprep.mubr.f32.mxu0 %v295
  %635 = vmatmul.mubr.f32.gmra.mxu0 %v98
  %v636 = vpop.f32.mrf.mxu0
  %v637 = vadd.f32 %v165, %v636
  %v638 = vpop.f32.mrf.mxu0
  %639 = vmatprep.mubr.f32.mxu0 %v298
  %640 = vmatmul.mubr.f32.gmra.mxu0 %v100
  %v641 = vpop.f32.mrf.mxu0
  %v642 = vadd.f32 %v165, %v641
  %v643 = vpop.f32.mrf.mxu0
  %644 = vmatprep.mubr.f32.mxu0 %v301
  %645 = vmatmul.mubr.f32.gmra.mxu0 %v102
  %v646 = vpop.f32.mrf.mxu0
  %v647 = vadd.f32 %v165, %v646
  %v648 = vpop.f32.mrf.mxu0
  %649 = vmatprep.mubr.f32.mxu0 %v304
  %650 = vmatmul.mubr.f32.gmra.mxu0 %v104
  %v651 = vpop.f32.mrf.mxu0
  %v652 = vadd.f32 %v165, %v651
  %v653 = vpop.f32.mrf.mxu0
  %654 = vmatprep.mubr.f32.mxu0 %v307
  %655 = vmatmul.mubr.f32.gmra.mxu0 %v106
  %v656 = vpop.f32.mrf.mxu0
  %v657 = vadd.f32 %v165, %v656
  %v658 = vpop.f32.mrf.mxu0
  %659 = vmatprep.mubr.f32.mxu0 %v310
  %660 = vmatmul.mubr.f32.gmra.mxu0 %v108
  %v661 = vpop.f32.mrf.mxu0
  %v662 = vadd.f32 %v165, %v661
  %v663 = vpop.f32.mrf.mxu0
  %664 = vmatprep.mubr.f32.mxu0 %v313
  %665 = vmatmul.mubr.f32.gmra.mxu0 %v110
  %v666 = vpop.f32.mrf.mxu0
  %v667 = vadd.f32 %v165, %v666
  %v668 = vpop.f32.mrf.mxu0
  %669 = vmatprep.mubr.f32.mxu0 %v316
  %670 = vmatmul.mubr.f32.gmra.mxu0 %v112
  %v671 = vpop.f32.mrf.mxu0
  %v672 = vadd.f32 %v165, %v671
  %v673 = vpop.f32.mrf.mxu0
  %674 = vmatprep.mubr.f32.mxu0 %v319
  %675 = vmatmul.mubr.f32.gmra.mxu0 %v114
  %v676 = vpop.f32.mrf.mxu0
  %v677 = vadd.f32 %v165, %v676
  %v678 = vpop.f32.mrf.mxu0
  %679 = vmatprep.mubr.f32.mxu0 %v322
  %680 = vmatmul.mubr.f32.gmra.mxu0 %v116
  %v681 = vpop.f32.mrf.mxu0
  %v682 = vadd.f32 %v165, %v681
  %v683 = vpop.f32.mrf.mxu0
  %684 = vmatprep.mubr.f32.mxu0 %v325
  %685 = vmatmul.mubr.f32.gmra.mxu0 %v118
  %v686 = vpop.f32.mrf.mxu0
  %v687 = vadd.f32 %v165, %v686
  %v688 = vpop.f32.mrf.mxu0
  %689 = vmatprep.mubr.f32.mxu0 %v328
  %690 = vmatmul.mubr.f32.gmra.mxu0 %v120
  %v691 = vpop.f32.mrf.mxu0
  %v692 = vadd.f32 %v165, %v691
  %v693 = vpop.f32.mrf.mxu0
  %694 = vmatprep.mubr.f32.mxu0 %v331
  %695 = vmatmul.mubr.f32.gmra.mxu0 %v122
  %v696 = vpop.f32.mrf.mxu0
  %v697 = vadd.f32 %v165, %v696
  %v698 = vpop.f32.mrf.mxu0
  %699 = vmatprep.mubr.f32.mxu0 %v334
  %700 = vmatmul.mubr.f32.gmra.mxu0 %v124
  %v701 = vpop.f32.mrf.mxu0
  %v702 = vadd.f32 %v165, %v701
  %v703 = vpop.f32.mrf.mxu0
  %704 = vmatprep.mubr.f32.mxu0 %v337
  %705 = vmatmul.mubr.f32.gmra.mxu0 %v126
  %v706 = vpop.f32.mrf.mxu0
  %v707 = vadd.f32 %v165, %v706
  %v708 = vpop.f32.mrf.mxu0
  %709 = vmatprep.mubr.f32.mxu0 %v340
  %710 = vmatmul.mubr.f32.gmra.mxu0 %v128
  %v711 = vpop.f32.mrf.mxu0
  %v712 = vadd.f32 %v165, %v711
  %v713 = vpop.f32.mrf.mxu0
  %714 = vmatprep.mubr.f32.mxu0 %v343
  %715 = vmatmul.mubr.f32.gmra.mxu0 %v130
  %v716 = vpop.f32.mrf.mxu0
  %v717 = vadd.f32 %v165, %v716
  %v718 = vpop.f32.mrf.mxu0
  %719 = vmatprep.mubr.f32.mxu0 %v346
  %720 = vmatmul.mubr.f32.gmra.mxu0 %v132
  %v721 = vpop.f32.mrf.mxu0
  %v722 = vadd.f32 %v165, %v721
  %v723 = vpop.f32.mrf.mxu0
  %724 = vmatprep.mubr.f32.mxu0 %v349
  %725 = vmatmul.mubr.f32.gmra.mxu0 %v134
  %v726 = vpop.f32.mrf.mxu0
  %v727 = vadd.f32 %v165, %v726
  %v728 = vpop.f32.mrf.mxu0
  %729 = vmatprep.mubr.f32.mxu0 %v352
  %730 = vmatmul.mubr.f32.gmra.mxu0 %v136
  %v731 = vpop.f32.mrf.mxu0
  %v732 = vadd.f32 %v165, %v731
  %v733 = vpop.f32.mrf.mxu0
  %734 = vmatprep.mubr.f32.mxu0 %v355
  %735 = vmatmul.mubr.f32.gmra.mxu0 %v138
  %v736 = vpop.f32.mrf.mxu0
  %v737 = vadd.f32 %v165, %v736
  %v738 = vpop.f32.mrf.mxu0
  %739 = vmatprep.mubr.f32.mxu0 %v358
  %740 = vmatmul.mubr.f32.gmra.mxu0 %v140
  %v741 = vpop.f32.mrf.mxu0
  %v742 = vadd.f32 %v165, %v741
  %v743 = vpop.f32.mrf.mxu0
  %744 = vdwg.mxu0
  %v745 = vmax.f32 %v427, 0.0
  %v746 = vmax.f32 %v432, 0.0
  %v747 = vmax.f32 %v437, 0.0
  %v748 = vmax.f32 %v442, 0.0
  %v749 = vmax.f32 %v447, 0.0
  %v750 = vmax.f32 %v452, 0.0
  %v751 = vmax.f32 %v457, 0.0
  %v752 = vmax.f32 %v462, 0.0
  %v753 = vmax.f32 %v467, 0.0
  %v754 = vmax.f32 %v472, 0.0
  %v755 = vmax.f32 %v477, 0.0
  %v756 = vmax.f32 %v482, 0.0
  %v757 = vmax.f32 %v487, 0.0
  %v758 = vmax.f32 %v492, 0.0
  %v759 = vmax.f32 %v497, 0.0
  %v760 = vmax.f32 %v502, 0.0
  %v761 = vmax.f32 %v507, 0.0
  %v762 = vmax.f32 %v512, 0.0
  %v763 = vmax.f32 %v517, 0.0
  %v764 = vmax.f32 %v522, 0.0
  %v765 = vmax.f32 %v527, 0.0
  %v766 = vmax.f32 %v532, 0.0
  %v767 = vmax.f32 %v537, 0.0
  %v768 = vmax.f32 %v542, 0.0
  %v769 = vmax.f32 %v547, 0.0
  %v770 = vmax.f32 %v552, 0.0
  %v771 = vmax.f32 %v557, 0.0
  %v772 = vmax.f32 %v562, 0.0
  %v773 = vmax.f32 %v567, 0.0
  %v774 = vmax.f32 %v572, 0.0
  %v775 = vmax.f32 %v577, 0.0
  %v776 = vmax.f32 %v582, 0.0
  %v777 = vmax.f32 %v587, 0.0
  %v778 = vmax.f32 %v592, 0.0
  %v779 = vmax.f32 %v597, 0.0
  %v780 = vmax.f32 %v602, 0.0
  %v781 = vmax.f32 %v607, 0.0
  %v782 = vmax.f32 %v612, 0.0
  %v783 = vmax.f32 %v617, 0.0
  %v784 = vmax.f32 %v622, 0.0
  %v785 = vmax.f32 %v627, 0.0
  %v786 = vmax.f32 %v632, 0.0
  %v787 = vmax.f32 %v637, 0.0
  %v788 = vmax.f32 %v642, 0.0
  %v789 = vmax.f32 %v647, 0.0
  %v790 = vmax.f32 %v652, 0.0
  %v791 = vmax.f32 %v657, 0.0
  %v792 = vmax.f32 %v662, 0.0
  %v793 = vmax.f32 %v667, 0.0
  %v794 = vmax.f32 %v672, 0.0
  %v795 = vmax.f32 %v677, 0.0
  %v796 = vmax.f32 %v682, 0.0
  %v797 = vmax.f32 %v687, 0.0
  %v798 = vmax.f32 %v692, 0.0
  %v799 = vmax.f32 %v697, 0.0
  %v800 = vmax.f32 %v702, 0.0
  %v801 = vmax.f32 %v707, 0.0
  %v802 = vmax.f32 %v712, 0.0
  %v803 = vmax.f32 %v717, 0.0
  %v804 = vmax.f32 %v722, 0.0
  %v805 = vmax.f32 %v727, 0.0
  %v806 = vmax.f32 %v732, 0.0
  %v807 = vmax.f32 %v737, 0.0
  %v808 = vmax.f32 %v742, 0.0
  %vm809 = vcmask 261120
  %810 = vst.msk [vmem:[%s3] sm:$0xff] %vm809, %v745
  %811 = vst.msk [vmem:[%s3 + $0x8] sm:$0xff] %vm809, %v746
  %812 = vst.msk [vmem:[%s3 + $0x10] sm:$0xff] %vm809, %v747
  %813 = vst.msk [vmem:[%s3 + $0x18] sm:$0xff] %vm809, %v748
  %814 = vst.msk [vmem:[%s3 + $0x20] sm:$0xff] %vm809, %v749
  %815 = vst.msk [vmem:[%s3 + $0x28] sm:$0xff] %vm809, %v750
  %816 = vst.msk [vmem:[%s3 + $0x30] sm:$0xff] %vm809, %v751
  %817 = vst.msk [vmem:[%s3 + $0x38] sm:$0xff] %vm809, %v752
  %818 = vst.msk [vmem:[%s3 + $0x40] sm:$0xff] %vm809, %v753
  %819 = vst.msk [vmem:[%s3 + $0x48] sm:$0xff] %vm809, %v754
  %820 = vst.msk [vmem:[%s3 + $0x50] sm:$0xff] %vm809, %v755
  %821 = vst.msk [vmem:[%s3 + $0x58] sm:$0xff] %vm809, %v756
  %822 = vst.msk [vmem:[%s3 + $0x60] sm:$0xff] %vm809, %v757
  %823 = vst.msk [vmem:[%s3 + $0x68] sm:$0xff] %vm809, %v758
  %824 = vst.msk [vmem:[%s3 + $0x70] sm:$0xff] %vm809, %v759
  %825 = vst.msk [vmem:[%s3 + $0x78] sm:$0xff] %vm809, %v760
  %826 = vst.msk [vmem:[%s3 + $0x80] sm:$0xff] %vm809, %v761
  %827 = vst.msk [vmem:[%s3 + $0x88] sm:$0xff] %vm809, %v762
  %828 = vst.msk [vmem:[%s3 + $0x90] sm:$0xff] %vm809, %v763
  %829 = vst.msk [vmem:[%s3 + $0x98] sm:$0xff] %vm809, %v764
  %830 = vst.msk [vmem:[%s3 + $0xa0] sm:$0xff] %vm809, %v765
  %831 = vst.msk [vmem:[%s3 + $0xa8] sm:$0xff] %vm809, %v766
  %832 = vst.msk [vmem:[%s3 + $0xb0] sm:$0xff] %vm809, %v767
  %833 = vst.msk [vmem:[%s3 + $0xb8] sm:$0xff] %vm809, %v768
  %834 = vst.msk [vmem:[%s3 + $0xc0] sm:$0xff] %vm809, %v769
  %835 = vst.msk [vmem:[%s3 + $0xc8] sm:$0xff] %vm809, %v770
  %836 = vst.msk [vmem:[%s3 + $0xd0] sm:$0xff] %vm809, %v771
  %837 = vst.msk [vmem:[%s3 + $0xd8] sm:$0xff] %vm809, %v772
  %838 = vst.msk [vmem:[%s3 + $0xe0] sm:$0xff] %vm809, %v773
  %839 = vst.msk [vmem:[%s3 + $0xe8] sm:$0xff] %vm809, %v774
  %840 = vst.msk [vmem:[%s3 + $0xf0] sm:$0xff] %vm809, %v775
  %841 = vst.msk [vmem:[%s3 + $0xf8] sm:$0xff] %vm809, %v776
  %842 = vst.msk [vmem:[%s3 + $0x100] sm:$0xff] %vm809, %v777
  %843 = vst.msk [vmem:[%s3 + $0x108] sm:$0xff] %vm809, %v778
  %844 = vst.msk [vmem:[%s3 + $0x110] sm:$0xff] %vm809, %v779
  %845 = vst.msk [vmem:[%s3 + $0x118] sm:$0xff] %vm809, %v780
  %846 = vst.msk [vmem:[%s3 + $0x120] sm:$0xff] %vm809, %v781
  %847 = vst.msk [vmem:[%s3 + $0x128] sm:$0xff] %vm809, %v782
  %848 = vst.msk [vmem:[%s3 + $0x130] sm:$0xff] %vm809, %v783
  %849 = vst.msk [vmem:[%s3 + $0x138] sm:$0xff] %vm809, %v784
  %850 = vst.msk [vmem:[%s3 + $0x140] sm:$0xff] %vm809, %v785
  %851 = vst.msk [vmem:[%s3 + $0x148] sm:$0xff] %vm809, %v786
  %852 = vst.msk [vmem:[%s3 + $0x150] sm:$0xff] %vm809, %v787
  %853 = vst.msk [vmem:[%s3 + $0x158] sm:$0xff] %vm809, %v788
  %854 = vst.msk [vmem:[%s3 + $0x160] sm:$0xff] %vm809, %v789
  %855 = vst.msk [vmem:[%s3 + $0x168] sm:$0xff] %vm809, %v790
  %856 = vst.msk [vmem:[%s3 + $0x170] sm:$0xff] %vm809, %v791
  %857 = vst.msk [vmem:[%s3 + $0x178] sm:$0xff] %vm809, %v792
  %858 = vst.msk [vmem:[%s3 + $0x180] sm:$0xff] %vm809, %v793
  %859 = vst.msk [vmem:[%s3 + $0x188] sm:$0xff] %vm809, %v794
  %860 = vst.msk [vmem:[%s3 + $0x190] sm:$0xff] %vm809, %v795
  %861 = vst.msk [vmem:[%s3 + $0x198] sm:$0xff] %vm809, %v796
  %862 = vst.msk [vmem:[%s3 + $0x1a0] sm:$0xff] %vm809, %v797
  %863 = vst.msk [vmem:[%s3 + $0x1a8] sm:$0xff] %vm809, %v798
  %864 = vst.msk [vmem:[%s3 + $0x1b0] sm:$0xff] %vm809, %v799
  %865 = vst.msk [vmem:[%s3 + $0x1b8] sm:$0xff] %vm809, %v800
  %866 = vst.msk [vmem:[%s3 + $0x1c0] sm:$0xff] %vm809, %v801
  %867 = vst.msk [vmem:[%s3 + $0x1c8] sm:$0xff] %vm809, %v802
  %868 = vst.msk [vmem:[%s3 + $0x1d0] sm:$0xff] %vm809, %v803
  %869 = vst.msk [vmem:[%s3 + $0x1d8] sm:$0xff] %vm809, %v804
  %870 = vst.msk [vmem:[%s3 + $0x1e0] sm:$0xff] %vm809, %v805
  %871 = vst.msk [vmem:[%s3 + $0x1e8] sm:$0xff] %vm809, %v806
  %872 = vst.msk [vmem:[%s3 + $0x1f0] sm:$0xff] %vm809, %v807
  %873 = vst.msk [vmem:[%s3 + $0x1f8] sm:$0xff] %vm809, %v808
  // Predicated region
  $region14: #{forward.12} parent=0 // pred_check
    _
  $region15: #{forward.12} parent=0 // pred_check_branch
    %875 = sbr.rel (0) target = $region17
  $region16: #{forward.12} parent=0 // pred_region
    _
  $region17: #{forward.12} parent=0 // pred_fallthru
    _
  // Predicated region
  $region18: #{forward.12} parent=0 // pred_check
    _
  $region19: #{forward.12} parent=0 // pred_check_branch
    %877 = sbr.rel (0) target = $region21
  $region20: #{forward.12} parent=0 // pred_region
    _
  $region21: #{forward.12} parent=0 // pred_fallthru
    _

// kernel: forward.14
$region0: #{forward.14}
  #allocation0 [shape = 'u32[]', space=smem, size = 0x4, offset = 0x4, fixed_abs, tag = 'smem constant byte address 0x4 - core index']
  #allocation1 [shape = 'u32[144,128]{1,0:T(1,128)}', space=vmem, size = 0x12000, scoped, tag = 'internal scratch']
  #allocation2 [shape = 'f32[2,32]{1,0:T(2,128)}', space=vmem, size = 0x400, scoped, tag = 'scratch operand']
  %s0 = inlined_call_operand.vmem [shape: f32[2,2], index: 0, kind: input, shape index: {}]
  %s1 = inlined_call_operand.vmem [shape: f32[2,32], index: 1, kind: input, shape index: {}]
  %s2 = inlined_call_operand.vmem [shape: f32[1,32], index: 2, kind: input, shape index: {}]
  %s3 = inlined_call_operand.vmem [shape: f32[2,32], index: 3, kind: output, shape index: {}]
  %s4 = sld [smem:[#allocation0]]
  $region30: #{forward.14} parent=0
    _
  %s6 = ssub.s32 1, %s4
  %s7 = scalar_select 0, %s6, %s4
  // Predicated region
  $region2: #{forward.14} parent=0 // pred_check
    _
  $region3: #{forward.14} parent=0 // pred_check_branch
    %9 = sbr.rel (0) target = $region5
  $region4: #{forward.14} parent=0 // pred_region
    _
  $region5: #{forward.14} parent=0 // pred_fallthru
    _
  // Predicated region
  $region6: #{forward.14} parent=0 // pred_check
    _
  $region7: #{forward.14} parent=0 // pred_check_branch
    %11 = sbr.rel (0) target = $region9
  $region8: #{forward.14} parent=0 // pred_region
    _
  $region9: #{forward.14} parent=0 // pred_fallthru
    _
  // Predicated region
  $region10: #{forward.14} parent=0 // pred_check
    _
  $region11: #{forward.14} parent=0 // pred_check_branch
    %13 = sbr.rel (0) target = $region13
  $region12: #{forward.14} parent=0 // pred_region
    _
  $region13: #{forward.14} parent=0 // pred_fallthru
    _
  %p14 = scmp.eq.s32.totalorder 0, 0
  // Predicated region
  $region14: #{forward.14} parent=0 // pred_check
    %p15 = pneg %p14
  $region15: #{forward.14} parent=0 // pred_check_branch
    %17 = sbr.rel (%p15) target = $region17
  $region16: #{forward.14} parent=0 // pred_region
    %vm18 = vcmask 254976
    %19 = vst.msk [vmem:[#allocation2] sm:$0x3] %vm18, 0.0
  $region17: #{forward.14} parent=0 // pred_fallthru
    _
  %v20 = vld [vmem:[#allocation2] sm:$0x3]
  %v21 = vld [vmem:[%s0] sm:$0x3]
  %v22 = vld [vmem:[%s1] sm:$0x3]
  %vm23 = vcmask 15360
  %v25 = vsel %vm23, %v21, 0
  %vm27 = vcmask 1041408
  %v29 = vsel %vm27, %v22, 0
  %31 = vmatprep.subr.mxu0 0.0
  %32 = vmatpush1.msra.mxu0 0.0
  %33 = vmatprep.subr.mxu0 0.0
  %34 = vmatpush1.msra.mxu0 0.0
  %35 = vmatprep.subr.mxu0 0.0
  %36 = vmatpush1.msra.mxu0 0.0
  %37 = vmatprep.subr.mxu0 0.0
  %38 = vmatpush1.msra.mxu0 0.0
  %39 = vmatprep.subr.mxu0 0.0
  %40 = vmatpush1.msra.mxu0 0.0
  %41 = vmatprep.subr.mxu0 0.0
  %42 = vmatpush1.msra.mxu0 0.0
  %43 = vmatprep.subr.mxu0 0.0
  %44 = vmatpush1.msra.mxu0 0.0
  %45 = vmatprep.subr.mxu0 0.0
  %46 = vmatpush1.msra.mxu0 0.0
  %47 = vmatprep.subr.mxu0 0.0
  %48 = vmatpush1.msra.mxu0 0.0
  %49 = vmatprep.subr.mxu0 0.0
  %50 = vmatpush1.msra.mxu0 0.0
  %51 = vmatprep.subr.mxu0 0.0
  %52 = vmatpush1.msra.mxu0 0.0
  %53 = vmatprep.subr.mxu0 0.0
  %54 = vmatpush1.msra.mxu0 0.0
  %55 = vmatprep.subr.mxu0 0.0
  %56 = vmatpush1.msra.mxu0 0.0
  %57 = vmatprep.subr.mxu0 0.0
  %58 = vmatpush1.msra.mxu0 0.0
  %59 = vmatprep.subr.mxu0 0.0
  %60 = vmatpush1.msra.mxu0 0.0
  %61 = vmatprep.subr.mxu0 0.0
  %62 = vmatpush1.msra.mxu0 %v29
  %63 = vmatprep.subr.mxu0 0.0
  %64 = vmatpush2.msra.mxu0 0.0
  %65 = vmatprep.subr.mxu0 0.0
  %66 = vmatpush2.msra.mxu0 0.0
  %67 = vmatprep.subr.mxu0 0.0
  %68 = vmatpush2.msra.mxu0 0.0
  %69 = vmatprep.subr.mxu0 0.0
  %70 = vmatpush2.msra.mxu0 0.0
  %71 = vmatprep.subr.mxu0 0.0
  %72 = vmatpush2.msra.mxu0 0.0
  %73 = vmatprep.subr.mxu0 0.0
  %74 = vmatpush2.msra.mxu0 0.0
  %75 = vmatprep.subr.mxu0 0.0
  %76 = vmatpush2.msra.mxu0 0.0
  %77 = vmatprep.subr.mxu0 0.0
  %78 = vmatpush2.msra.mxu0 0.0
  %79 = vmatprep.subr.mxu0 0.0
  %80 = vmatpush2.msra.mxu0 0.0
  %81 = vmatprep.subr.mxu0 0.0
  %82 = vmatpush2.msra.mxu0 0.0
  %83 = vmatprep.subr.mxu0 0.0
  %84 = vmatpush2.msra.mxu0 0.0
  %85 = vmatprep.subr.mxu0 0.0
  %86 = vmatpush2.msra.mxu0 0.0
  %87 = vmatprep.subr.mxu0 0.0
  %88 = vmatpush2.msra.mxu0 0.0
  %89 = vmatprep.subr.mxu0 0.0
  %90 = vmatpush2.msra.mxu0 0.0
  %91 = vmatprep.subr.mxu0 0.0
  %92 = vmatpush2.msra.mxu0 0.0
  %93 = vmatprep.subr.mxu0 0.0
  %94 = vmatpush2.msra.mxu0 0.0
  %95 = vmatprep.mubr.f32.mxu0 0.0
  %96 = vmatmul.mubr.f32.gmra.mxu0 %v25
  %v97 = vpop.f32.mrf.mxu0
  %v98 = vadd.f32 0.0, %v97
  %v99 = vpop.f32.mrf.mxu0
  %100 = vdwg.mxu0
  %v101 = vadd.f32 %v20, %v98
  %vm102 = vcmask 254976
  %103 = vst.msk [vmem:[#allocation2] sm:$0x3] %vm102, %v101
  // Predicated region
  $region18: #{forward.14} parent=0 // pred_check
    %p104 = pneg %p14
  $region19: #{forward.14} parent=0 // pred_check_branch
    %106 = sbr.rel (%p104) target = $region21
  $region20: #{forward.14} parent=0 // pred_region
    %v107 = vld [vmem:[#allocation2] sm:$0x3]
    %v108 = vld [vmem:[%s2] sm:$0x1]
    %v110 = vlaneseq
    %v111 = vshrl.u32 %v110, 7
    %v112 = vsub.s32 0, %v111
    %v113 = vrot.slane %v108, %v112
    %v115 = vadd.f32 %v107, %v113
    %v116 = vmax.f32 %v115, 0.0
    %117 = vst.msk [vmem:[%s3] sm:$0x3] %vm102, %v116
  $region21: #{forward.14} parent=0 // pred_fallthru
    _
  // Predicated region
  $region22: #{forward.14} parent=0 // pred_check
    _
  $region23: #{forward.14} parent=0 // pred_check_branch
    %119 = sbr.rel (0) target = $region25
  $region24: #{forward.14} parent=0 // pred_region
    _
  $region25: #{forward.14} parent=0 // pred_fallthru
    _
  // Predicated region
  $region26: #{forward.14} parent=0 // pred_check
    _
  $region27: #{forward.14} parent=0 // pred_check_branch
    %121 = sbr.rel (0) target = $region29
  $region28: #{forward.14} parent=0 // pred_region
    _
  $region29: #{forward.14} parent=0 // pred_fallthru
    _

// kernel: forward.9
$region0: #{forward.9}
  #allocation0 [shape = 'u32[]', space=smem, size = 0x4, offset = 0x4, fixed_abs, tag = 'smem constant byte address 0x4 - core index']
  #allocation1 [shape = 'u32[144,128]{1,0:T(1,128)}', space=vmem, size = 0x12000, scoped, tag = 'internal scratch']
  #allocation2 [shape = 'f32[1,512]{1,0:T(1,128)}', space=vmem, size = 0x800, scoped, tag = 'scratch operand']
  %s0 = inlined_call_operand.vmem [shape: f32[2,1024,3], index: 0, kind: input, shape index: {}]
  %s1 = inlined_call_operand.vmem [shape: f32[3,512], index: 1, kind: input, shape index: {}]
  %s2 = inlined_call_operand.vmem [shape: f32[1,512], index: 2, kind: input, shape index: {}]
  %s3 = inlined_call_operand.vmem [shape: f32[2,1,512], index: 3, kind: output, shape index: {}]
  %s4 = sld [smem:[#allocation0]]
  $region53: #{forward.9} parent=0
    _
  %s6 = ssub.s32 1, %s4
  %s7 = scalar_select 0, %s6, %s4
  loop: start=0, step=1, limit=6
  $region2: #{forward.9} parent=0 // loop_pre_header
    _
  $region3: #{forward.9} parent=0 // loop_header
    %s9 = sphi 0, %s13
    %p10 = scmp.ge.s32.totalorder %s9, 6
    %s16 = sphi 0, %s28
    %s17 = sphi 0, %s24
    %s18 = sphi 0, %s16
    %s19 = sphi 0, %s17
    %s20 = sphi 0, %s18
    %s21 = sphi 0, %s19
    %s33 = sphi 0, %s35
    %s36 = sphi 0, %s33
    %s37 = sphi 0, %s36
    %s53 = sphi 0, %s37
    %s57 = sphi 0, %s57
    %s59 = sphi 0, %s57
    %s60 = sphi 0, %s59
    %s74 = sphi 0, %s60
    %s78 = sphi 0, %s78
    %s80 = sphi 0, %s78
    %s81 = sphi 0, %s80
    %s95 = sphi 0, %s81
    %s101 = sphi 0, %s103
    %s104 = sphi 0, %s101
    %s105 = sphi 0, %s104
    %s121 = sphi 0, %s105
  $region4: #{forward.9} parent=0 // loop_header_branch
    %12 = sbr.rel (%p10) target = $region8
  $region5: #{forward.9} parent=0 // loop_body
    %s14 = ssub.s32 %s9, 1
    %s15 = ssub.s32 %s9, 2
    %s22 = sadd.s32 1, %s17
    %p23 = scmp.ge.s32.totalorder %s22, 2
    %s24 = scalar_select %p23, 0, %s22
    %s25 = sadd.s32 1, %s16
    %s26 = scalar_select %p23, %s25, %s16
    %p27 = scmp.ge.s32.totalorder %s26, 2
    %s28 = scalar_select %p27, 0, %s26
    %s29 = ssub.s32 %s16, %s28
    %s30 = ssub.s32 %s17, %s24
    %s31 = sor.u32 %s29, %s30
    %p32 = scmp.eq.s32.totalorder %s31, 0
    %s34 = sadd.s32 %s33, 1
    %s35 = scalar_select %p32, %s33, %s34
    %p38 = pneg %p32
    %p39 = scmp.eq.s32.totalorder %s9, 3
    %p40 = por %p38, %p39
    %p41 = scmp.ne.s32.totalorder %s33, %s36
    %p42 = scmp.eq.s32.totalorder %s9, 0
    %p43 = por %p41, %p42
    %p44 = scmp.ne.s32.totalorder %s33, %s36
    %p45 = scmp.eq.s32.totalorder %s14, 3
    %p46 = por %p44, %p45
    %p47 = scmp.ne.s32.totalorder %s36, %s37
    %p48 = scmp.eq.s32.totalorder %s14, 0
    %p49 = por %p47, %p48
    %p50 = scmp.ne.s32.totalorder %s36, %s37
    %p51 = scmp.eq.s32.totalorder %s15, 3
    %p52 = por %p50, %p51
    %p54 = scmp.ne.s32.totalorder %s37, %s53
    %p55 = scmp.eq.s32.totalorder %s15, 0
    %p56 = por %p54, %p55
    %s58 = sadd.s32 %s57, 1
    %p61 = scmp.eq.s32.totalorder %s9, 3
    %p62 = scmp.ne.s32.totalorder %s57, %s59
    %p63 = scmp.eq.s32.totalorder %s9, 0
    %p64 = por %p62, %p63
    %p65 = scmp.ne.s32.totalorder %s57, %s59
    %p66 = scmp.eq.s32.totalorder %s14, 3
    %p67 = por %p65, %p66
    %p68 = scmp.ne.s32.totalorder %s59, %s60
    %p69 = scmp.eq.s32.totalorder %s14, 0
    %p70 = por %p68, %p69
    %p71 = scmp.ne.s32.totalorder %s59, %s60
    %p72 = scmp.eq.s32.totalorder %s15, 3
    %p73 = por %p71, %p72
    %p75 = scmp.ne.s32.totalorder %s60, %s74
    %p76 = scmp.eq.s32.totalorder %s15, 0
    %p77 = por %p75, %p76
    %s79 = sadd.s32 %s78, 1
    %p82 = scmp.eq.s32.totalorder %s9, 3
    %p83 = scmp.ne.s32.totalorder %s78, %s80
    %p84 = scmp.eq.s32.totalorder %s9, 0
    %p85 = por %p83, %p84
    %p86 = scmp.ne.s32.totalorder %s78, %s80
    %p87 = scmp.eq.s32.totalorder %s14, 3
    %p88 = por %p86, %p87
    %p89 = scmp.ne.s32.totalorder %s80, %s81
    %p90 = scmp.eq.s32.totalorder %s14, 0
    %p91 = por %p89, %p90
    %p92 = scmp.ne.s32.totalorder %s80, %s81
    %p93 = scmp.eq.s32.totalorder %s15, 3
    %p94 = por %p92, %p93
    %p96 = scmp.ne.s32.totalorder %s81, %s95
    %p97 = scmp.eq.s32.totalorder %s15, 0
    %p98 = por %p96, %p97
    %s99 = ssub.s32 %s16, %s28
    %p100 = scmp.eq.s32.totalorder %s99, 0
    %s102 = sadd.s32 %s101, 1
    %s103 = scalar_select %p100, %s101, %s102
    %p106 = pneg %p100
    %p107 = scmp.eq.s32.totalorder %s9, 3
    %p108 = por %p106, %p107
    %p109 = scmp.ne.s32.totalorder %s101, %s104
    %p110 = scmp.eq.s32.totalorder %s9, 0
    %p111 = por %p109, %p110
    %p112 = scmp.ne.s32.totalorder %s101, %s104
    %p113 = scmp.eq.s32.totalorder %s14, 3
    %p114 = por %p112, %p113
    %p115 = scmp.ne.s32.totalorder %s104, %s105
    %p116 = scmp.eq.s32.totalorder %s14, 0
    %p117 = por %p115, %p116
    %p118 = scmp.ne.s32.totalorder %s104, %s105
    %p119 = scmp.eq.s32.totalorder %s15, 3
    %p120 = por %p118, %p119
    %p122 = scmp.ne.s32.totalorder %s105, %s121
    %p123 = scmp.eq.s32.totalorder %s15, 0
    %p124 = por %p122, %p123
    %p125 = scmp.le.s32.totalorder 1, %s9
    %p126 = scmp.lt.s32.totalorder %s9, 5
    %p127 = pnand %p125, %p126
    %p128 = pneg %p127
    // Predicated region
    $region9: #{forward.9} parent=5 // pred_check
      _
    $region10: #{forward.9} parent=5 // pred_check_branch
      %130 = sbr.rel (%p127) target = $region12
    $region11: #{forward.9} parent=5 // pred_region
      %s131 = ssub.s32 %s9, 1
      // Predicated region
      $region13: #{forward.9} parent=11 // pred_check
        %p132 = pneg %p70
      $region14: #{forward.9} parent=11 // pred_check_branch
        %134 = sbr.rel (%p132) target = $region16
      $region15: #{forward.9} parent=11 // pred_region
        _
      $region16: #{forward.9} parent=11 // pred_fallthru
        _
      // Predicated region
      $region17: #{forward.9} parent=11 // pred_check
        %p135 = pneg %p91
      $region18: #{forward.9} parent=11 // pred_check_branch
        %137 = sbr.rel (%p135) target = $region20
      $region19: #{forward.9} parent=11 // pred_region
        _
      $region20: #{forward.9} parent=11 // pred_fallthru
        _
    $region12: #{forward.9} parent=5 // pred_fallthru
      _
    %p138 = scmp.lt.s32.totalorder %s9, 4
    // Predicated region
    $region21: #{forward.9} parent=5 // pred_check
      %p139 = pneg %p138
    $region22: #{forward.9} parent=5 // pred_check_branch
      %141 = sbr.rel (%p139) target = $region24
    $region23: #{forward.9} parent=5 // pred_region
      // Predicated region
      $region25: #{forward.9} parent=23 // pred_check
        %p142 = pneg %p43
      $region26: #{forward.9} parent=23 // pred_check_branch
        %144 = sbr.rel (%p142) target = $region28
      $region27: #{forward.9} parent=23 // pred_region
        %s145 = smul.u32 64, %s17
        %p146 = scmp.lt.s32.totalorder %s16, 1
        %s147 = scalar_select %p146, %s16, 1
        %p148 = scmp.lt.s32.totalorder %s145, 127
        %s149 = scalar_select %p148, %s145, 127
        %s150 = smul.addr %s147, 128
        %s151 = sadd.s32 %s149, %s150
        %s152 = smul.addr %s151, 8
        %s153 = scalar_lea.vmem %s0, %s152
        %s154 = smul.u32 64, %s17
      $region28: #{forward.9} parent=23 // pred_fallthru
        _
    $region24: #{forward.9} parent=5 // pred_fallthru
      _
    %p155 = scmp.le.s32.totalorder 1, %s9
    %p156 = scmp.lt.s32.totalorder %s9, 5
    %p157 = pnand %p155, %p156
    %p158 = pneg %p157
    // Predicated region
    $region29: #{forward.9} parent=5 // pred_check
      _
    $region30: #{forward.9} parent=5 // pred_check_branch
      %160 = sbr.rel (%p157) target = $region32
    $region31: #{forward.9} parent=5 // pred_region
      %s161 = ssub.s32 %s9, 1
      %s162 = smul.u32 64, %s19
      %p163 = scmp.lt.s32.totalorder %s18, 1
      %s164 = scalar_select %p163, %s18, 1
      %p165 = scmp.lt.s32.totalorder %s162, 127
      %s166 = scalar_select %p165, %s162, 127
      %s167 = smul.addr %s164, 128
      %s168 = sadd.s32 %s166, %s167
      %s169 = smul.addr %s168, 8
      %s170 = scalar_lea.vmem %s0, %s169
      %p171 = pneg %p49
      %p172 = pneg %p46
      %p173 = pneg %p70
      %p174 = pneg %p67
      %p175 = pneg %p91
      %p176 = pneg %p88
      %p177 = pneg %p117
      %p178 = pneg %p114
      %p179 = scmp.lt.s32.totalorder %s18, 1
      %s180 = scalar_select %p179, %s18, 1
      %s181 = smul.addr %s180, 4
      %s182 = scalar_lea.vmem %s3, %s181
      %s183 = smul.u32 64, %s19
      %p184 = scmp.lt.s32.totalorder %s18, 1
      %s185 = scalar_select %p184, %s18, 1
      %p186 = scmp.lt.s32.totalorder %s183, 127
      %s187 = scalar_select %p186, %s183, 127
      %s188 = smul.addr %s185, 128
      %s189 = sadd.s32 %s187, %s188
      %s190 = smul.addr %s189, 8
      %s191 = scalar_lea.vmem %s0, %s190
      %s192 = smul.u32 64, %s19
      %p193 = scmp.lt.s32.totalorder %s18, 1
      %s194 = scalar_select %p193, %s18, 1
      %s195 = smul.addr %s194, 4
      %s196 = scalar_lea.vmem %s3, %s195
      %p197 = scmp.eq.s32.totalorder %s19, 0
      // Predicated region
      $region33: #{forward.9} parent=31 // pred_check
        %p198 = pneg %p197
      $region34: #{forward.9} parent=31 // pred_check_branch
        %200 = sbr.rel (%p198) target = $region36
      $region35: #{forward.9} parent=31 // pred_region
        %v201 = vlaneseq
        %vm202 = vcmp.ge.s32.totalorder %v201, 0
        %vm203 = vcmp.lt.s32.totalorder %v201, 512
        %vm204 = vmand %vm202, %vm203
        %205 = vst.msk [vmem:[#allocation2] sm:$0xf] %vm204, 0.0
      $region36: #{forward.9} parent=31 // pred_fallthru
        _
      %v206 = vld [vmem:[%s191] sm:$0xff]
      %v207 = vld [vmem:[%s191 + $0x8] sm:$0xff]
      %v208 = vld [vmem:[%s191 + $0x10] sm:$0xff]
      %v209 = vld [vmem:[%s191 + $0x18] sm:$0xff]
      %v210 = vld [vmem:[%s191 + $0x20] sm:$0xff]
      %v211 = vld [vmem:[%s191 + $0x28] sm:$0xff]
      %v212 = vld [vmem:[%s191 + $0x30] sm:$0xff]
      %v213 = vld [vmem:[%s191 + $0x38] sm:$0xff]
      %v214 = vld [vmem:[%s191 + $0x40] sm:$0xff]
      %v215 = vld [vmem:[%s191 + $0x48] sm:$0xff]
      %v216 = vld [vmem:[%s191 + $0x50] sm:$0xff]
      %v217 = vld [vmem:[%s191 + $0x58] sm:$0xff]
      %v218 = vld [vmem:[%s191 + $0x60] sm:$0xff]
      %v219 = vld [vmem:[%s191 + $0x68] sm:$0xff]
      %v220 = vld [vmem:[%s191 + $0x70] sm:$0xff]
      %v221 = vld [vmem:[%s191 + $0x78] sm:$0xff]
      %v222 = vld [vmem:[%s191 + $0x80] sm:$0xff]
      %v223 = vld [vmem:[%s191 + $0x88] sm:$0xff]
      %v224 = vld [vmem:[%s191 + $0x90] sm:$0xff]
      %v225 = vld [vmem:[%s191 + $0x98] sm:$0xff]
      %v226 = vld [vmem:[%s191 + $0xa0] sm:$0xff]
      %v227 = vld [vmem:[%s191 + $0xa8] sm:$0xff]
      %v228 = vld [vmem:[%s191 + $0xb0] sm:$0xff]
      %v229 = vld [vmem:[%s191 + $0xb8] sm:$0xff]
      %v230 = vld [vmem:[%s191 + $0xc0] sm:$0xff]
      %v231 = vld [vmem:[%s191 + $0xc8] sm:$0xff]
      %v232 = vld [vmem:[%s191 + $0xd0] sm:$0xff]
      %v233 = vld [vmem:[%s191 + $0xd8] sm:$0xff]
      %v234 = vld [vmem:[%s191 + $0xe0] sm:$0xff]
      %v235 = vld [vmem:[%s191 + $0xe8] sm:$0xff]
      %v236 = vld [vmem:[%s191 + $0xf0] sm:$0xff]
      %v237 = vld [vmem:[%s191 + $0xf8] sm:$0xff]
      %v238 = vld [vmem:[%s191 + $0x100] sm:$0xff]
      %v239 = vld [vmem:[%s191 + $0x108] sm:$0xff]
      %v240 = vld [vmem:[%s191 + $0x110] sm:$0xff]
      %v241 = vld [vmem:[%s191 + $0x118] sm:$0xff]
      %v242 = vld [vmem:[%s191 + $0x120] sm:$0xff]
      %v243 = vld [vmem:[%s191 + $0x128] sm:$0xff]
      %v244 = vld [vmem:[%s191 + $0x130] sm:$0xff]
      %v245 = vld [vmem:[%s191 + $0x138] sm:$0xff]
      %v246 = vld [vmem:[%s191 + $0x140] sm:$0xff]
      %v247 = vld [vmem:[%s191 + $0x148] sm:$0xff]
      %v248 = vld [vmem:[%s191 + $0x150] sm:$0xff]
      %v249 = vld [vmem:[%s191 + $0x158] sm:$0xff]
      %v250 = vld [vmem:[%s191 + $0x160] sm:$0xff]
      %v251 = vld [vmem:[%s191 + $0x168] sm:$0xff]
      %v252 = vld [vmem:[%s191 + $0x170] sm:$0xff]
      %v253 = vld [vmem:[%s191 + $0x178] sm:$0xff]
      %v254 = vld [vmem:[%s191 + $0x180] sm:$0xff]
      %v255 = vld [vmem:[%s191 + $0x188] sm:$0xff]
      %v256 = vld [vmem:[%s191 + $0x190] sm:$0xff]
      %v257 = vld [vmem:[%s191 + $0x198] sm:$0xff]
      %v258 = vld [vmem:[%s191 + $0x1a0] sm:$0xff]
      %v259 = vld [vmem:[%s191 + $0x1a8] sm:$0xff]
      %v260 = vld [vmem:[%s191 + $0x1b0] sm:$0xff]
      %v261 = vld [vmem:[%s191 + $0x1b8] sm:$0xff]
      %v262 = vld [vmem:[%s191 + $0x1c0] sm:$0xff]
      %v263 = vld [vmem:[%s191 + $0x1c8] sm:$0xff]
      %v264 = vld [vmem:[%s191 + $0x1d0] sm:$0xff]
      %v265 = vld [vmem:[%s191 + $0x1d8] sm:$0xff]
      %v266 = vld [vmem:[%s191 + $0x1e0] sm:$0xff]
      %v267 = vld [vmem:[%s191 + $0x1e8] sm:$0xff]
      %v268 = vld [vmem:[%s191 + $0x1f0] sm:$0xff]
      %v269 = vld [vmem:[%s191 + $0x1f8] sm:$0xff]
      %v270 = vld [vmem:[%s1] sm:$0x77]
      %v271 = vld [vmem:[%s1 + $0x8] sm:$0x77]
      %v272 = vld [vmem:[%s2] sm:$0xf]
      %v274 = vlaneseq
      %v275 = vshrl.u32 %v274, 7
      %v276 = vsub.s32 0, %v275
      %v277 = vrot.slane %v272, %v276
      %v278 = vlaneseq
      %v279 = vshrl.u32 %v278, 7
      %v280 = vsub.s32 1, %v279
      %v281 = vrot.slane %v272, %v280
      %v282 = vlaneseq
      %v283 = vshrl.u32 %v282, 7
      %v284 = vsub.s32 2, %v283
      %v285 = vrot.slane %v272, %v284
      %v286 = vlaneseq
      %v287 = vshrl.u32 %v286, 7
      %v288 = vsub.s32 3, %v287
      %v289 = vrot.slane %v272, %v288
      %v296 = vcombine.high %v270, %v270
      %v297 = vcombine.high %v271, %v271
      %vm298 = vcmask 23552
      %v300 = vsel %vm298, %v206, 0
      %v303 = vsel %vm298, %v207, 0
      %v306 = vsel %vm298, %v208, 0
      %v309 = vsel %vm298, %v209, 0
      %v312 = vsel %vm298, %v210, 0
      %v315 = vsel %vm298, %v211, 0
      %v318 = vsel %vm298, %v212, 0
      %v321 = vsel %vm298, %v213, 0
      %v324 = vsel %vm298, %v214, 0
      %v327 = vsel %vm298, %v215, 0
      %v330 = vsel %vm298, %v216, 0
      %v333 = vsel %vm298, %v217, 0
      %v336 = vsel %vm298, %v218, 0
      %v339 = vsel %vm298, %v219, 0
      %v342 = vsel %vm298, %v220, 0
      %v345 = vsel %vm298, %v221, 0
      %v348 = vsel %vm298, %v222, 0
      %v351 = vsel %vm298, %v223, 0
      %v354 = vsel %vm298, %v224, 0
      %v357 = vsel %vm298, %v225, 0
      %v360 = vsel %vm298, %v226, 0
      %v363 = vsel %vm298, %v227, 0
      %v366 = vsel %vm298, %v228, 0
      %v369 = vsel %vm298, %v229, 0
      %v372 = vsel %vm298, %v230, 0
      %v375 = vsel %vm298, %v231, 0
      %v378 = vsel %vm298, %v232, 0
      %v381 = vsel %vm298, %v233, 0
      %v384 = vsel %vm298, %v234, 0
      %v387 = vsel %vm298, %v235, 0
      %v390 = vsel %vm298, %v236, 0
      %v393 = vsel %vm298, %v237, 0
      %v396 = vsel %vm298, %v238, 0
      %v399 = vsel %vm298, %v239, 0
      %v402 = vsel %vm298, %v240, 0
      %v405 = vsel %vm298, %v241, 0
      %v408 = vsel %vm298, %v242, 0
      %v411 = vsel %vm298, %v243, 0
      %v414 = vsel %vm298, %v244, 0
      %v417 = vsel %vm298, %v245, 0
      %v420 = vsel %vm298, %v246, 0
      %v423 = vsel %vm298, %v247, 0
      %v426 = vsel %vm298, %v248, 0
      %v429 = vsel %vm298, %v249, 0
      %v432 = vsel %vm298, %v250, 0
      %v435 = vsel %vm298, %v251, 0
      %v438 = vsel %vm298, %v252, 0
      %v441 = vsel %vm298, %v253, 0
      %v444 = vsel %vm298, %v254, 0
      %v447 = vsel %vm298, %v255, 0
      %v450 = vsel %vm298, %v256, 0
      %v453 = vsel %vm298, %v257, 0
      %v456 = vsel %vm298, %v258, 0
      %v459 = vsel %vm298, %v259, 0
      %v462 = vsel %vm298, %v260, 0
      %v465 = vsel %vm298, %v261, 0
      %v468 = vsel %vm298, %v262, 0
      %v471 = vsel %vm298, %v263, 0
      %v474 = vsel %vm298, %v264, 0
      %v477 = vsel %vm298, %v265, 0
      %v480 = vsel %vm298, %v266, 0
      %v483 = vsel %vm298, %v267, 0
      %v486 = vsel %vm298, %v268, 0
      %v489 = vsel %vm298, %v269, 0
      %vm491 = vcmask 1042432
      %v492 = vsel %vm491, %v270, 0
      %v494 = vsel %vm491, %v296, 0
      %v496 = vsel %vm491, %v271, 0
      %v498 = vsel %vm491, %v297, 0
      %500 = vmatprep.subr.mxu0 0.0
      %501 = vmatpush1.msra.mxu0 0.0
      %502 = vmatprep.subr.mxu0 0.0
      %503 = vmatpush1.msra.mxu0 0.0
      %504 = vmatprep.subr.mxu0 0.0
      %505 = vmatpush1.msra.mxu0 0.0
      %506 = vmatprep.subr.mxu0 0.0
      %507 = vmatpush1.msra.mxu0 0.0
      %508 = vmatprep.subr.mxu0 0.0
      %509 = vmatpush1.msra.mxu0 0.0
      %510 = vmatprep.subr.mxu0 0.0
      %511 = vmatpush1.msra.mxu0 0.0
      %512 = vmatprep.subr.mxu0 0.0
      %513 = vmatpush1.msra.mxu0 0.0
      %514 = vmatprep.subr.mxu0 0.0
      %515 = vmatpush1.msra.mxu0 0.0
      %516 = vmatprep.subr.mxu0 0.0
      %517 = vmatpush1.msra.mxu0 0.0
      %518 = vmatprep.subr.mxu0 0.0
      %519 = vmatpush1.msra.mxu0 0.0
      %520 = vmatprep.subr.mxu0 0.0
      %521 = vmatpush1.msra.mxu0 0.0
      %522 = vmatprep.subr.mxu0 0.0
      %523 = vmatpush1.msra.mxu0 0.0
      %524 = vmatprep.subr.mxu0 0.0
      %525 = vmatpush1.msra.mxu0 0.0
      %526 = vmatprep.subr.mxu0 0.0
      %527 = vmatpush1.msra.mxu0 0.0
      %528 = vmatprep.subr.mxu0 0.0
      %529 = vmatpush1.msra.mxu0 0.0
      %530 = vmatprep.subr.mxu0 %v494
      %531 = vmatpush1.msra.mxu0 %v492
      %532 = vmatprep.subr.mxu0 0.0
      %533 = vmatpush2.msra.mxu0 0.0
      %534 = vmatprep.subr.mxu0 0.0
      %535 = vmatpush2.msra.mxu0 0.0
      %536 = vmatprep.subr.mxu0 0.0
      %537 = vmatpush2.msra.mxu0 0.0
      %538 = vmatprep.subr.mxu0 0.0
      %539 = vmatpush2.msra.mxu0 0.0
      %540 = vmatprep.subr.mxu0 0.0
      %541 = vmatpush2.msra.mxu0 0.0
      %542 = vmatprep.subr.mxu0 0.0
      %543 = vmatpush2.msra.mxu0 0.0
      %544 = vmatprep.subr.mxu0 0.0
      %545 = vmatpush2.msra.mxu0 0.0
      %546 = vmatprep.subr.mxu0 0.0
      %547 = vmatpush2.msra.mxu0 0.0
      %548 = vmatprep.subr.mxu0 0.0
      %549 = vmatpush2.msra.mxu0 0.0
      %550 = vmatprep.subr.mxu0 0.0
      %551 = vmatpush2.msra.mxu0 0.0
      %552 = vmatprep.subr.mxu0 0.0
      %553 = vmatpush2.msra.mxu0 0.0
      %554 = vmatprep.subr.mxu0 0.0
      %555 = vmatpush2.msra.mxu0 0.0
      %556 = vmatprep.subr.mxu0 0.0
      %557 = vmatpush2.msra.mxu0 0.0
      %558 = vmatprep.subr.mxu0 0.0
      %559 = vmatpush2.msra.mxu0 0.0
      %560 = vmatprep.subr.mxu0 0.0
      %561 = vmatpush2.msra.mxu0 0.0
      %562 = vmatprep.subr.mxu0 0.0
      %563 = vmatpush2.msra.mxu0 0.0
      %564 = vmatprep.mubr.f32.mxu0 0.0
      %565 = vmatmul.mubr.f32.gmra.mxu0 %v300
      %v566 = vpop.f32.mrf.mxu0
      %v567 = vadd.f32 %v277, %v566
      %v568 = vpop.f32.mrf.mxu0
      %v569 = vadd.f32 %v281, %v568
      %570 = vmatprep.mubr.f32.mxu0 0.0
      %571 = vmatmul.mubr.f32.gmra.mxu0 %v303
      %v572 = vpop.f32.mrf.mxu0
      %v573 = vadd.f32 %v277, %v572
      %v574 = vpop.f32.mrf.mxu0
      %v575 = vadd.f32 %v281, %v574
      %576 = vmatprep.mubr.f32.mxu0 0.0
      %577 = vmatmul.mubr.f32.gmra.mxu0 %v306
      %v578 = vpop.f32.mrf.mxu0
      %v579 = vadd.f32 %v277, %v578
      %v580 = vpop.f32.mrf.mxu0
      %v581 = vadd.f32 %v281, %v580
      %582 = vmatprep.mubr.f32.mxu0 0.0
      %583 = vmatmul.mubr.f32.gmra.mxu0 %v309
      %v584 = vpop.f32.mrf.mxu0
      %v585 = vadd.f32 %v277, %v584
      %v586 = vpop.f32.mrf.mxu0
      %v587 = vadd.f32 %v281, %v586
      %588 = vmatprep.mubr.f32.mxu0 0.0
      %589 = vmatmul.mubr.f32.gmra.mxu0 %v312
      %v590 = vpop.f32.mrf.mxu0
      %v591 = vadd.f32 %v277, %v590
      %v592 = vpop.f32.mrf.mxu0
      %v593 = vadd.f32 %v281, %v592
      %594 = vmatprep.mubr.f32.mxu0 0.0
      %595 = vmatmul.mubr.f32.gmra.mxu0 %v315
      %v596 = vpop.f32.mrf.mxu0
      %v597 = vadd.f32 %v277, %v596
      %v598 = vpop.f32.mrf.mxu0
      %v599 = vadd.f32 %v281, %v598
      %600 = vmatprep.mubr.f32.mxu0 0.0
      %601 = vmatmul.mubr.f32.gmra.mxu0 %v318
      %v602 = vpop.f32.mrf.mxu0
      %v603 = vadd.f32 %v277, %v602
      %v604 = vpop.f32.mrf.mxu0
      %v605 = vadd.f32 %v281, %v604
      %606 = vmatprep.mubr.f32.mxu0 0.0
      %607 = vmatmul.mubr.f32.gmra.mxu0 %v321
      %v608 = vpop.f32.mrf.mxu0
      %v609 = vadd.f32 %v277, %v608
      %v610 = vpop.f32.mrf.mxu0
      %v611 = vadd.f32 %v281, %v610
      %612 = vmatprep.mubr.f32.mxu0 0.0
      %613 = vmatmul.mubr.f32.gmra.mxu0 %v324
      %v614 = vpop.f32.mrf.mxu0
      %v615 = vadd.f32 %v277, %v614
      %v616 = vpop.f32.mrf.mxu0
      %v617 = vadd.f32 %v281, %v616
      %618 = vmatprep.mubr.f32.mxu0 0.0
      %619 = vmatmul.mubr.f32.gmra.mxu0 %v327
      %v620 = vpop.f32.mrf.mxu0
      %v621 = vadd.f32 %v277, %v620
      %v622 = vpop.f32.mrf.mxu0
      %v623 = vadd.f32 %v281, %v622
      %624 = vmatprep.mubr.f32.mxu0 0.0
      %625 = vmatmul.mubr.f32.gmra.mxu0 %v330
      %v626 = vpop.f32.mrf.mxu0
      %v627 = vadd.f32 %v277, %v626
      %v628 = vpop.f32.mrf.mxu0
      %v629 = vadd.f32 %v281, %v628
      %630 = vmatprep.mubr.f32.mxu0 0.0
      %631 = vmatmul.mubr.f32.gmra.mxu0 %v333
      %v632 = vpop.f32.mrf.mxu0
      %v633 = vadd.f32 %v277, %v632
      %v634 = vpop.f32.mrf.mxu0
      %v635 = vadd.f32 %v281, %v634
      %636 = vmatprep.mubr.f32.mxu0 0.0
      %637 = vmatmul.mubr.f32.gmra.mxu0 %v336
      %v638 = vpop.f32.mrf.mxu0
      %v639 = vadd.f32 %v277, %v638
      %v640 = vpop.f32.mrf.mxu0
      %v641 = vadd.f32 %v281, %v640
      %642 = vmatprep.mubr.f32.mxu0 0.0
      %643 = vmatmul.mubr.f32.gmra.mxu0 %v339
      %v644 = vpop.f32.mrf.mxu0
      %v645 = vadd.f32 %v277, %v644
      %v646 = vpop.f32.mrf.mxu0
      %v647 = vadd.f32 %v281, %v646
      %648 = vmatprep.mubr.f32.mxu0 0.0
      %649 = vmatmul.mubr.f32.gmra.mxu0 %v342
      %v650 = vpop.f32.mrf.mxu0
      %v651 = vadd.f32 %v277, %v650
      %v652 = vpop.f32.mrf.mxu0
      %v653 = vadd.f32 %v281, %v652
      %654 = vmatprep.mubr.f32.mxu0 0.0
      %655 = vmatmul.mubr.f32.gmra.mxu0 %v345
      %v656 = vpop.f32.mrf.mxu0
      %v657 = vadd.f32 %v277, %v656
      %v658 = vpop.f32.mrf.mxu0
      %v659 = vadd.f32 %v281, %v658
      %660 = vmatprep.mubr.f32.mxu0 0.0
      %661 = vmatmul.mubr.f32.gmra.mxu0 %v348
      %v662 = vpop.f32.mrf.mxu0
      %v663 = vadd.f32 %v277, %v662
      %v664 = vpop.f32.mrf.mxu0
      %v665 = vadd.f32 %v281, %v664
      %666 = vmatprep.mubr.f32.mxu0 0.0
      %667 = vmatmul.mubr.f32.gmra.mxu0 %v351
      %v668 = vpop.f32.mrf.mxu0
      %v669 = vadd.f32 %v277, %v668
      %v670 = vpop.f32.mrf.mxu0
      %v671 = vadd.f32 %v281, %v670
      %672 = vmatprep.mubr.f32.mxu0 0.0
      %673 = vmatmul.mubr.f32.gmra.mxu0 %v354
      %v674 = vpop.f32.mrf.mxu0
      %v675 = vadd.f32 %v277, %v674
      %v676 = vpop.f32.mrf.mxu0
      %v677 = vadd.f32 %v281, %v676
      %678 = vmatprep.mubr.f32.mxu0 0.0
      %679 = vmatmul.mubr.f32.gmra.mxu0 %v357
      %v680 = vpop.f32.mrf.mxu0
      %v681 = vadd.f32 %v277, %v680
      %v682 = vpop.f32.mrf.mxu0
      %v683 = vadd.f32 %v281, %v682
      %684 = vmatprep.mubr.f32.mxu0 0.0
      %685 = vmatmul.mubr.f32.gmra.mxu0 %v360
      %v686 = vpop.f32.mrf.mxu0
      %v687 = vadd.f32 %v277, %v686
      %v688 = vpop.f32.mrf.mxu0
      %v689 = vadd.f32 %v281, %v688
      %690 = vmatprep.mubr.f32.mxu0 0.0
      %691 = vmatmul.mubr.f32.gmra.mxu0 %v363
      %v692 = vpop.f32.mrf.mxu0
      %v693 = vadd.f32 %v277, %v692
      %v694 = vpop.f32.mrf.mxu0
      %v695 = vadd.f32 %v281, %v694
      %696 = vmatprep.mubr.f32.mxu0 0.0
      %697 = vmatmul.mubr.f32.gmra.mxu0 %v366
      %v698 = vpop.f32.mrf.mxu0
      %v699 = vadd.f32 %v277, %v698
      %v700 = vpop.f32.mrf.mxu0
      %v701 = vadd.f32 %v281, %v700
      %702 = vmatprep.mubr.f32.mxu0 0.0
      %703 = vmatmul.mubr.f32.gmra.mxu0 %v369
      %v704 = vpop.f32.mrf.mxu0
      %v705 = vadd.f32 %v277, %v704
      %v706 = vpop.f32.mrf.mxu0
      %v707 = vadd.f32 %v281, %v706
      %708 = vmatprep.mubr.f32.mxu0 0.0
      %709 = vmatmul.mubr.f32.gmra.mxu0 %v372
      %v710 = vpop.f32.mrf.mxu0
      %v711 = vadd.f32 %v277, %v710
      %v712 = vpop.f32.mrf.mxu0
      %v713 = vadd.f32 %v281, %v712
      %714 = vmatprep.mubr.f32.mxu0 0.0
      %715 = vmatmul.mubr.f32.gmra.mxu0 %v375
      %v716 = vpop.f32.mrf.mxu0
      %v717 = vadd.f32 %v277, %v716
      %v718 = vpop.f32.mrf.mxu0
      %v719 = vadd.f32 %v281, %v718
      %720 = vmatprep.mubr.f32.mxu0 0.0
      %721 = vmatmul.mubr.f32.gmra.mxu0 %v378
      %v722 = vpop.f32.mrf.mxu0
      %v723 = vadd.f32 %v277, %v722
      %v724 = vpop.f32.mrf.mxu0
      %v725 = vadd.f32 %v281, %v724
      %726 = vmatprep.mubr.f32.mxu0 0.0
      %727 = vmatmul.mubr.f32.gmra.mxu0 %v381
      %v728 = vpop.f32.mrf.mxu0
      %v729 = vadd.f32 %v277, %v728
      %v730 = vpop.f32.mrf.mxu0
      %v731 = vadd.f32 %v281, %v730
      %732 = vmatprep.mubr.f32.mxu0 0.0
      %733 = vmatmul.mubr.f32.gmra.mxu0 %v384
      %v734 = vpop.f32.mrf.mxu0
      %v735 = vadd.f32 %v277, %v734
      %v736 = vpop.f32.mrf.mxu0
      %v737 = vadd.f32 %v281, %v736
      %738 = vmatprep.mubr.f32.mxu0 0.0
      %739 = vmatmul.mubr.f32.gmra.mxu0 %v387
      %v740 = vpop.f32.mrf.mxu0
      %v741 = vadd.f32 %v277, %v740
      %v742 = vpop.f32.mrf.mxu0
      %v743 = vadd.f32 %v281, %v742
      %744 = vmatprep.mubr.f32.mxu0 0.0
      %745 = vmatmul.mubr.f32.gmra.mxu0 %v390
      %v746 = vpop.f32.mrf.mxu0
      %v747 = vadd.f32 %v277, %v746
      %v748 = vpop.f32.mrf.mxu0
      %v749 = vadd.f32 %v281, %v748
      %750 = vmatprep.mubr.f32.mxu0 0.0
      %751 = vmatmul.mubr.f32.gmra.mxu0 %v393
      %v752 = vpop.f32.mrf.mxu0
      %v753 = vadd.f32 %v277, %v752
      %v754 = vpop.f32.mrf.mxu0
      %v755 = vadd.f32 %v281, %v754
      %756 = vmatprep.mubr.f32.mxu0 0.0
      %757 = vmatmul.mubr.f32.gmra.mxu0 %v396
      %v758 = vpop.f32.mrf.mxu0
      %v759 = vadd.f32 %v277, %v758
      %v760 = vpop.f32.mrf.mxu0
      %v761 = vadd.f32 %v281, %v760
      %762 = vmatprep.mubr.f32.mxu0 0.0
      %763 = vmatmul.mubr.f32.gmra.mxu0 %v399
      %v764 = vpop.f32.mrf.mxu0
      %v765 = vadd.f32 %v277, %v764
      %v766 = vpop.f32.mrf.mxu0
      %v767 = vadd.f32 %v281, %v766
      %768 = vmatprep.mubr.f32.mxu0 0.0
      %769 = vmatmul.mubr.f32.gmra.mxu0 %v402
      %v770 = vpop.f32.mrf.mxu0
      %v771 = vadd.f32 %v277, %v770
      %v772 = vpop.f32.mrf.mxu0
      %v773 = vadd.f32 %v281, %v772
      %774 = vmatprep.mubr.f32.mxu0 0.0
      %775 = vmatmul.mubr.f32.gmra.mxu0 %v405
      %v776 = vpop.f32.mrf.mxu0
      %v777 = vadd.f32 %v277, %v776
      %v778 = vpop.f32.mrf.mxu0
      %v779 = vadd.f32 %v281, %v778
      %780 = vmatprep.mubr.f32.mxu0 0.0
      %781 = vmatmul.mubr.f32.gmra.mxu0 %v408
      %v782 = vpop.f32.mrf.mxu0
      %v783 = vadd.f32 %v277, %v782
      %v784 = vpop.f32.mrf.mxu0
      %v785 = vadd.f32 %v281, %v784
      %786 = vmatprep.mubr.f32.mxu0 0.0
      %787 = vmatmul.mubr.f32.gmra.mxu0 %v411
      %v788 = vpop.f32.mrf.mxu0
      %v789 = vadd.f32 %v277, %v788
      %v790 = vpop.f32.mrf.mxu0
      %v791 = vadd.f32 %v281, %v790
      %792 = vmatprep.mubr.f32.mxu0 0.0
      %793 = vmatmul.mubr.f32.gmra.mxu0 %v414
      %v794 = vpop.f32.mrf.mxu0
      %v795 = vadd.f32 %v277, %v794
      %v796 = vpop.f32.mrf.mxu0
      %v797 = vadd.f32 %v281, %v796
      %798 = vmatprep.mubr.f32.mxu0 0.0
      %799 = vmatmul.mubr.f32.gmra.mxu0 %v417
      %v800 = vpop.f32.mrf.mxu0
      %v801 = vadd.f32 %v277, %v800
      %v802 = vpop.f32.mrf.mxu0
      %v803 = vadd.f32 %v281, %v802
      %804 = vmatprep.mubr.f32.mxu0 0.0
      %805 = vmatmul.mubr.f32.gmra.mxu0 %v420
      %v806 = vpop.f32.mrf.mxu0
      %v807 = vadd.f32 %v277, %v806
      %v808 = vpop.f32.mrf.mxu0
      %v809 = vadd.f32 %v281, %v808
      %810 = vmatprep.mubr.f32.mxu0 0.0
      %811 = vmatmul.mubr.f32.gmra.mxu0 %v423
      %v812 = vpop.f32.mrf.mxu0
      %v813 = vadd.f32 %v277, %v812
      %v814 = vpop.f32.mrf.mxu0
      %v815 = vadd.f32 %v281, %v814
      %816 = vmatprep.mubr.f32.mxu0 0.0
      %817 = vmatmul.mubr.f32.gmra.mxu0 %v426
      %v818 = vpop.f32.mrf.mxu0
      %v819 = vadd.f32 %v277, %v818
      %v820 = vpop.f32.mrf.mxu0
      %v821 = vadd.f32 %v281, %v820
      %822 = vmatprep.mubr.f32.mxu0 0.0
      %823 = vmatmul.mubr.f32.gmra.mxu0 %v429
      %v824 = vpop.f32.mrf.mxu0
      %v825 = vadd.f32 %v277, %v824
      %v826 = vpop.f32.mrf.mxu0
      %v827 = vadd.f32 %v281, %v826
      %828 = vmatprep.mubr.f32.mxu0 0.0
      %829 = vmatmul.mubr.f32.gmra.mxu0 %v432
      %v830 = vpop.f32.mrf.mxu0
      %v831 = vadd.f32 %v277, %v830
      %v832 = vpop.f32.mrf.mxu0
      %v833 = vadd.f32 %v281, %v832
      %834 = vmatprep.mubr.f32.mxu0 0.0
      %835 = vmatmul.mubr.f32.gmra.mxu0 %v435
      %v836 = vpop.f32.mrf.mxu0
      %v837 = vadd.f32 %v277, %v836
      %v838 = vpop.f32.mrf.mxu0
      %v839 = vadd.f32 %v281, %v838
      %840 = vmatprep.mubr.f32.mxu0 0.0
      %841 = vmatmul.mubr.f32.gmra.mxu0 %v438
      %v842 = vpop.f32.mrf.mxu0
      %v843 = vadd.f32 %v277, %v842
      %v844 = vpop.f32.mrf.mxu0
      %v845 = vadd.f32 %v281, %v844
      %846 = vmatprep.mubr.f32.mxu0 0.0
      %847 = vmatmul.mubr.f32.gmra.mxu0 %v441
      %v848 = vpop.f32.mrf.mxu0
      %v849 = vadd.f32 %v277, %v848
      %v850 = vpop.f32.mrf.mxu0
      %v851 = vadd.f32 %v281, %v850
      %852 = vmatprep.mubr.f32.mxu0 0.0
      %853 = vmatmul.mubr.f32.gmra.mxu0 %v444
      %v854 = vpop.f32.mrf.mxu0
      %v855 = vadd.f32 %v277, %v854
      %v856 = vpop.f32.mrf.mxu0
      %v857 = vadd.f32 %v281, %v856
      %858 = vmatprep.mubr.f32.mxu0 0.0
      %859 = vmatmul.mubr.f32.gmra.mxu0 %v447
      %v860 = vpop.f32.mrf.mxu0
      %v861 = vadd.f32 %v277, %v860
      %v862 = vpop.f32.mrf.mxu0
      %v863 = vadd.f32 %v281, %v862
      %864 = vmatprep.mubr.f32.mxu0 0.0
      %865 = vmatmul.mubr.f32.gmra.mxu0 %v450
      %v866 = vpop.f32.mrf.mxu0
      %v867 = vadd.f32 %v277, %v866
      %v868 = vpop.f32.mrf.mxu0
      %v869 = vadd.f32 %v281, %v868
      %870 = vmatprep.mubr.f32.mxu0 0.0
      %871 = vmatmul.mubr.f32.gmra.mxu0 %v453
      %v872 = vpop.f32.mrf.mxu0
      %v873 = vadd.f32 %v277, %v872
      %v874 = vpop.f32.mrf.mxu0
      %v875 = vadd.f32 %v281, %v874
      %876 = vmatprep.mubr.f32.mxu0 0.0
      %877 = vmatmul.mubr.f32.gmra.mxu0 %v456
      %v878 = vpop.f32.mrf.mxu0
      %v879 = vadd.f32 %v277, %v878
      %v880 = vpop.f32.mrf.mxu0
      %v881 = vadd.f32 %v281, %v880
      %882 = vmatprep.mubr.f32.mxu0 0.0
      %883 = vmatmul.mubr.f32.gmra.mxu0 %v459
      %v884 = vpop.f32.mrf.mxu0
      %v885 = vadd.f32 %v277, %v884
      %v886 = vpop.f32.mrf.mxu0
      %v887 = vadd.f32 %v281, %v886
      %888 = vmatprep.mubr.f32.mxu0 0.0
      %889 = vmatmul.mubr.f32.gmra.mxu0 %v462
      %v890 = vpop.f32.mrf.mxu0
      %v891 = vadd.f32 %v277, %v890
      %v892 = vpop.f32.mrf.mxu0
      %v893 = vadd.f32 %v281, %v892
      %894 = vmatprep.mubr.f32.mxu0 0.0
      %895 = vmatmul.mubr.f32.gmra.mxu0 %v465
      %v896 = vpop.f32.mrf.mxu0
      %v897 = vadd.f32 %v277, %v896
      %v898 = vpop.f32.mrf.mxu0
      %v899 = vadd.f32 %v281, %v898
      %900 = vmatprep.mubr.f32.mxu0 0.0
      %901 = vmatmul.mubr.f32.gmra.mxu0 %v468
      %v902 = vpop.f32.mrf.mxu0
      %v903 = vadd.f32 %v277, %v902
      %v904 = vpop.f32.mrf.mxu0
      %v905 = vadd.f32 %v281, %v904
      %906 = vmatprep.mubr.f32.mxu0 0.0
      %907 = vmatmul.mubr.f32.gmra.mxu0 %v471
      %v908 = vpop.f32.mrf.mxu0
      %v909 = vadd.f32 %v277, %v908
      %v910 = vpop.f32.mrf.mxu0
      %v911 = vadd.f32 %v281, %v910
      %912 = vmatprep.mubr.f32.mxu0 0.0
      %913 = vmatmul.mubr.f32.gmra.mxu0 %v474
      %v914 = vpop.f32.mrf.mxu0
      %v915 = vadd.f32 %v277, %v914
      %v916 = vpop.f32.mrf.mxu0
      %v917 = vadd.f32 %v281, %v916
      %918 = vmatprep.mubr.f32.mxu0 0.0
      %919 = vmatmul.mubr.f32.gmra.mxu0 %v477
      %v920 = vpop.f32.mrf.mxu0
      %v921 = vadd.f32 %v277, %v920
      %v922 = vpop.f32.mrf.mxu0
      %v923 = vadd.f32 %v281, %v922
      %924 = vmatprep.mubr.f32.mxu0 0.0
      %925 = vmatmul.mubr.f32.gmra.mxu0 %v480
      %v926 = vpop.f32.mrf.mxu0
      %v927 = vadd.f32 %v277, %v926
      %v928 = vpop.f32.mrf.mxu0
      %v929 = vadd.f32 %v281, %v928
      %930 = vmatprep.mubr.f32.mxu0 0.0
      %931 = vmatmul.mubr.f32.gmra.mxu0 %v483
      %v932 = vpop.f32.mrf.mxu0
      %v933 = vadd.f32 %v277, %v932
      %v934 = vpop.f32.mrf.mxu0
      %v935 = vadd.f32 %v281, %v934
      %936 = vmatprep.mubr.f32.mxu0 0.0
      %937 = vmatmul.mubr.f32.gmra.mxu0 %v486
      %v938 = vpop.f32.mrf.mxu0
      %v939 = vadd.f32 %v277, %v938
      %v940 = vpop.f32.mrf.mxu0
      %v941 = vadd.f32 %v281, %v940
      %942 = vmatprep.mubr.f32.mxu0 0.0
      %943 = vmatmul.mubr.f32.gmra.mxu0 %v489
      %v944 = vpop.f32.mrf.mxu0
      %v945 = vadd.f32 %v277, %v944
      %v946 = vpop.f32.mrf.mxu0
      %v947 = vadd.f32 %v281, %v946
      %948 = vdwg.mxu0
      %949 = vmatprep.subr.mxu0 0.0
      %950 = vmatpush1.msra.mxu0 0.0
      %951 = vmatprep.subr.mxu0 0.0
      %952 = vmatpush1.msra.mxu0 0.0
      %953 = vmatprep.subr.mxu0 0.0
      %954 = vmatpush1.msra.mxu0 0.0
      %955 = vmatprep.subr.mxu0 0.0
      %956 = vmatpush1.msra.mxu0 0.0
      %957 = vmatprep.subr.mxu0 0.0
      %958 = vmatpush1.msra.mxu0 0.0
      %959 = vmatprep.subr.mxu0 0.0
      %960 = vmatpush1.msra.mxu0 0.0
      %961 = vmatprep.subr.mxu0 0.0
      %962 = vmatpush1.msra.mxu0 0.0
      %963 = vmatprep.subr.mxu0 0.0
      %964 = vmatpush1.msra.mxu0 0.0
      %965 = vmatprep.subr.mxu0 0.0
      %966 = vmatpush1.msra.mxu0 0.0
      %967 = vmatprep.subr.mxu0 0.0
      %968 = vmatpush1.msra.mxu0 0.0
      %969 = vmatprep.subr.mxu0 0.0
      %970 = vmatpush1.msra.mxu0 0.0
      %971 = vmatprep.subr.mxu0 0.0
      %972 = vmatpush1.msra.mxu0 0.0
      %973 = vmatprep.subr.mxu0 0.0
      %974 = vmatpush1.msra.mxu0 0.0
      %975 = vmatprep.subr.mxu0 0.0
      %976 = vmatpush1.msra.mxu0 0.0
      %977 = vmatprep.subr.mxu0 0.0
      %978 = vmatpush1.msra.mxu0 0.0
      %979 = vmatprep.subr.mxu0 %v498
      %980 = vmatpush1.msra.mxu0 %v496
      %981 = vmatprep.subr.mxu0 0.0
      %982 = vmatpush2.msra.mxu0 0.0
      %983 = vmatprep.subr.mxu0 0.0
      %984 = vmatpush2.msra.mxu0 0.0
      %985 = vmatprep.subr.mxu0 0.0
      %986 = vmatpush2.msra.mxu0 0.0
      %987 = vmatprep.subr.mxu0 0.0
      %988 = vmatpush2.msra.mxu0 0.0
      %989 = vmatprep.subr.mxu0 0.0
      %990 = vmatpush2.msra.mxu0 0.0
      %991 = vmatprep.subr.mxu0 0.0
      %992 = vmatpush2.msra.mxu0 0.0
      %993 = vmatprep.subr.mxu0 0.0
      %994 = vmatpush2.msra.mxu0 0.0
      %995 = vmatprep.subr.mxu0 0.0
      %996 = vmatpush2.msra.mxu0 0.0
      %997 = vmatprep.subr.mxu0 0.0
      %998 = vmatpush2.msra.mxu0 0.0
      %999 = vmatprep.subr.mxu0 0.0
      %1000 = vmatpush2.msra.mxu0 0.0
      %1001 = vmatprep.subr.mxu0 0.0
      %1002 = vmatpush2.msra.mxu0 0.0
      %1003 = vmatprep.subr.mxu0 0.0
      %1004 = vmatpush2.msra.mxu0 0.0
      %1005 = vmatprep.subr.mxu0 0.0
      %1006 = vmatpush2.msra.mxu0 0.0
      %1007 = vmatprep.subr.mxu0 0.0
      %1008 = vmatpush2.msra.mxu0 0.0
      %1009 = vmatprep.subr.mxu0 0.0
      %1010 = vmatpush2.msra.mxu0 0.0
      %1011 = vmatprep.subr.mxu0 0.0
      %1012 = vmatpush2.msra.mxu0 0.0
      %1013 = vmatprep.mubr.f32.mxu0 0.0
      %1014 = vmatmul.mubr.f32.gmra.mxu0 %v300
      %v1015 = vpop.f32.mrf.mxu0
      %v1016 = vadd.f32 %v285, %v1015
      %v1017 = vpop.f32.mrf.mxu0
      %v1018 = vadd.f32 %v289, %v1017
      %1019 = vmatprep.mubr.f32.mxu0 0.0
      %1020 = vmatmul.mubr.f32.gmra.mxu0 %v303
      %v1021 = vpop.f32.mrf.mxu0
      %v1022 = vadd.f32 %v285, %v1021
      %v1023 = vpop.f32.mrf.mxu0
      %v1024 = vadd.f32 %v289, %v1023
      %1025 = vmatprep.mubr.f32.mxu0 0.0
      %1026 = vmatmul.mubr.f32.gmra.mxu0 %v306
      %v1027 = vpop.f32.mrf.mxu0
      %v1028 = vadd.f32 %v285, %v1027
      %v1029 = vpop.f32.mrf.mxu0
      %v1030 = vadd.f32 %v289, %v1029
      %1031 = vmatprep.mubr.f32.mxu0 0.0
      %1032 = vmatmul.mubr.f32.gmra.mxu0 %v309
      %v1033 = vpop.f32.mrf.mxu0
      %v1034 = vadd.f32 %v285, %v1033
      %v1035 = vpop.f32.mrf.mxu0
      %v1036 = vadd.f32 %v289, %v1035
      %1037 = vmatprep.mubr.f32.mxu0 0.0
      %1038 = vmatmul.mubr.f32.gmra.mxu0 %v312
      %v1039 = vpop.f32.mrf.mxu0
      %v1040 = vadd.f32 %v285, %v1039
      %v1041 = vpop.f32.mrf.mxu0
      %v1042 = vadd.f32 %v289, %v1041
      %1043 = vmatprep.mubr.f32.mxu0 0.0
      %1044 = vmatmul.mubr.f32.gmra.mxu0 %v315
      %v1045 = vpop.f32.mrf.mxu0
      %v1046 = vadd.f32 %v285, %v1045
      %v1047 = vpop.f32.mrf.mxu0
      %v1048 = vadd.f32 %v289, %v1047
      %1049 = vmatprep.mubr.f32.mxu0 0.0
      %1050 = vmatmul.mubr.f32.gmra.mxu0 %v318
      %v1051 = vpop.f32.mrf.mxu0
      %v1052 = vadd.f32 %v285, %v1051
      %v1053 = vpop.f32.mrf.mxu0
      %v1054 = vadd.f32 %v289, %v1053
      %1055 = vmatprep.mubr.f32.mxu0 0.0
      %1056 = vmatmul.mubr.f32.gmra.mxu0 %v321
      %v1057 = vpop.f32.mrf.mxu0
      %v1058 = vadd.f32 %v285, %v1057
      %v1059 = vpop.f32.mrf.mxu0
      %v1060 = vadd.f32 %v289, %v1059
      %1061 = vmatprep.mubr.f32.mxu0 0.0
      %1062 = vmatmul.mubr.f32.gmra.mxu0 %v324
      %v1063 = vpop.f32.mrf.mxu0
      %v1064 = vadd.f32 %v285, %v1063
      %v1065 = vpop.f32.mrf.mxu0
      %v1066 = vadd.f32 %v289, %v1065
      %1067 = vmatprep.mubr.f32.mxu0 0.0
      %1068 = vmatmul.mubr.f32.gmra.mxu0 %v327
      %v1069 = vpop.f32.mrf.mxu0
      %v1070 = vadd.f32 %v285, %v1069
      %v1071 = vpop.f32.mrf.mxu0
      %v1072 = vadd.f32 %v289, %v1071
      %1073 = vmatprep.mubr.f32.mxu0 0.0
      %1074 = vmatmul.mubr.f32.gmra.mxu0 %v330
      %v1075 = vpop.f32.mrf.mxu0
      %v1076 = vadd.f32 %v285, %v1075
      %v1077 = vpop.f32.mrf.mxu0
      %v1078 = vadd.f32 %v289, %v1077
      %1079 = vmatprep.mubr.f32.mxu0 0.0
      %1080 = vmatmul.mubr.f32.gmra.mxu0 %v333
      %v1081 = vpop.f32.mrf.mxu0
      %v1082 = vadd.f32 %v285, %v1081
      %v1083 = vpop.f32.mrf.mxu0
      %v1084 = vadd.f32 %v289, %v1083
      %1085 = vmatprep.mubr.f32.mxu0 0.0
      %1086 = vmatmul.mubr.f32.gmra.mxu0 %v336
      %v1087 = vpop.f32.mrf.mxu0
      %v1088 = vadd.f32 %v285, %v1087
      %v1089 = vpop.f32.mrf.mxu0
      %v1090 = vadd.f32 %v289, %v1089
      %1091 = vmatprep.mubr.f32.mxu0 0.0
      %1092 = vmatmul.mubr.f32.gmra.mxu0 %v339
      %v1093 = vpop.f32.mrf.mxu0
      %v1094 = vadd.f32 %v285, %v1093
      %v1095 = vpop.f32.mrf.mxu0
      %v1096 = vadd.f32 %v289, %v1095
      %1097 = vmatprep.mubr.f32.mxu0 0.0
      %1098 = vmatmul.mubr.f32.gmra.mxu0 %v342
      %v1099 = vpop.f32.mrf.mxu0
      %v1100 = vadd.f32 %v285, %v1099
      %v1101 = vpop.f32.mrf.mxu0
      %v1102 = vadd.f32 %v289, %v1101
      %1103 = vmatprep.mubr.f32.mxu0 0.0
      %1104 = vmatmul.mubr.f32.gmra.mxu0 %v345
      %v1105 = vpop.f32.mrf.mxu0
      %v1106 = vadd.f32 %v285, %v1105
      %v1107 = vpop.f32.mrf.mxu0
      %v1108 = vadd.f32 %v289, %v1107
      %1109 = vmatprep.mubr.f32.mxu0 0.0
      %1110 = vmatmul.mubr.f32.gmra.mxu0 %v348
      %v1111 = vpop.f32.mrf.mxu0
      %v1112 = vadd.f32 %v285, %v1111
      %v1113 = vpop.f32.mrf.mxu0
      %v1114 = vadd.f32 %v289, %v1113
      %1115 = vmatprep.mubr.f32.mxu0 0.0
      %1116 = vmatmul.mubr.f32.gmra.mxu0 %v351
      %v1117 = vpop.f32.mrf.mxu0
      %v1118 = vadd.f32 %v285, %v1117
      %v1119 = vpop.f32.mrf.mxu0
      %v1120 = vadd.f32 %v289, %v1119
      %1121 = vmatprep.mubr.f32.mxu0 0.0
      %1122 = vmatmul.mubr.f32.gmra.mxu0 %v354
      %v1123 = vpop.f32.mrf.mxu0
      %v1124 = vadd.f32 %v285, %v1123
      %v1125 = vpop.f32.mrf.mxu0
      %v1126 = vadd.f32 %v289, %v1125
      %1127 = vmatprep.mubr.f32.mxu0 0.0
      %1128 = vmatmul.mubr.f32.gmra.mxu0 %v357
      %v1129 = vpop.f32.mrf.mxu0
      %v1130 = vadd.f32 %v285, %v1129
      %v1131 = vpop.f32.mrf.mxu0
      %v1132 = vadd.f32 %v289, %v1131
      %1133 = vmatprep.mubr.f32.mxu0 0.0
      %1134 = vmatmul.mubr.f32.gmra.mxu0 %v360
      %v1135 = vpop.f32.mrf.mxu0
      %v1136 = vadd.f32 %v285, %v1135
      %v1137 = vpop.f32.mrf.mxu0
      %v1138 = vadd.f32 %v289, %v1137
      %1139 = vmatprep.mubr.f32.mxu0 0.0
      %1140 = vmatmul.mubr.f32.gmra.mxu0 %v363
      %v1141 = vpop.f32.mrf.mxu0
      %v1142 = vadd.f32 %v285, %v1141
      %v1143 = vpop.f32.mrf.mxu0
      %v1144 = vadd.f32 %v289, %v1143
      %1145 = vmatprep.mubr.f32.mxu0 0.0
      %1146 = vmatmul.mubr.f32.gmra.mxu0 %v366
      %v1147 = vpop.f32.mrf.mxu0
      %v1148 = vadd.f32 %v285, %v1147
      %v1149 = vpop.f32.mrf.mxu0
      %v1150 = vadd.f32 %v289, %v1149
      %1151 = vmatprep.mubr.f32.mxu0 0.0
      %1152 = vmatmul.mubr.f32.gmra.mxu0 %v369
      %v1153 = vpop.f32.mrf.mxu0
      %v1154 = vadd.f32 %v285, %v1153
      %v1155 = vpop.f32.mrf.mxu0
      %v1156 = vadd.f32 %v289, %v1155
      %1157 = vmatprep.mubr.f32.mxu0 0.0
      %1158 = vmatmul.mubr.f32.gmra.mxu0 %v372
      %v1159 = vpop.f32.mrf.mxu0
      %v1160 = vadd.f32 %v285, %v1159
      %v1161 = vpop.f32.mrf.mxu0
      %v1162 = vadd.f32 %v289, %v1161
      %1163 = vmatprep.mubr.f32.mxu0 0.0
      %1164 = vmatmul.mubr.f32.gmra.mxu0 %v375
      %v1165 = vpop.f32.mrf.mxu0
      %v1166 = vadd.f32 %v285, %v1165
      %v1167 = vpop.f32.mrf.mxu0
      %v1168 = vadd.f32 %v289, %v1167
      %1169 = vmatprep.mubr.f32.mxu0 0.0
      %1170 = vmatmul.mubr.f32.gmra.mxu0 %v378
      %v1171 = vpop.f32.mrf.mxu0
      %v1172 = vadd.f32 %v285, %v1171
      %v1173 = vpop.f32.mrf.mxu0
      %v1174 = vadd.f32 %v289, %v1173
      %1175 = vmatprep.mubr.f32.mxu0 0.0
      %1176 = vmatmul.mubr.f32.gmra.mxu0 %v381
      %v1177 = vpop.f32.mrf.mxu0
      %v1178 = vadd.f32 %v285, %v1177
      %v1179 = vpop.f32.mrf.mxu0
      %v1180 = vadd.f32 %v289, %v1179
      %1181 = vmatprep.mubr.f32.mxu0 0.0
      %1182 = vmatmul.mubr.f32.gmra.mxu0 %v384
      %v1183 = vpop.f32.mrf.mxu0
      %v1184 = vadd.f32 %v285, %v1183
      %v1185 = vpop.f32.mrf.mxu0
      %v1186 = vadd.f32 %v289, %v1185
      %1187 = vmatprep.mubr.f32.mxu0 0.0
      %1188 = vmatmul.mubr.f32.gmra.mxu0 %v387
      %v1189 = vpop.f32.mrf.mxu0
      %v1190 = vadd.f32 %v285, %v1189
      %v1191 = vpop.f32.mrf.mxu0
      %v1192 = vadd.f32 %v289, %v1191
      %1193 = vmatprep.mubr.f32.mxu0 0.0
      %1194 = vmatmul.mubr.f32.gmra.mxu0 %v390
      %v1195 = vpop.f32.mrf.mxu0
      %v1196 = vadd.f32 %v285, %v1195
      %v1197 = vpop.f32.mrf.mxu0
      %v1198 = vadd.f32 %v289, %v1197
      %1199 = vmatprep.mubr.f32.mxu0 0.0
      %1200 = vmatmul.mubr.f32.gmra.mxu0 %v393
      %v1201 = vpop.f32.mrf.mxu0
      %v1202 = vadd.f32 %v285, %v1201
      %v1203 = vpop.f32.mrf.mxu0
      %v1204 = vadd.f32 %v289, %v1203
      %1205 = vmatprep.mubr.f32.mxu0 0.0
      %1206 = vmatmul.mubr.f32.gmra.mxu0 %v396
      %v1207 = vpop.f32.mrf.mxu0
      %v1208 = vadd.f32 %v285, %v1207
      %v1209 = vpop.f32.mrf.mxu0
      %v1210 = vadd.f32 %v289, %v1209
      %1211 = vmatprep.mubr.f32.mxu0 0.0
      %1212 = vmatmul.mubr.f32.gmra.mxu0 %v399
      %v1213 = vpop.f32.mrf.mxu0
      %v1214 = vadd.f32 %v285, %v1213
      %v1215 = vpop.f32.mrf.mxu0
      %v1216 = vadd.f32 %v289, %v1215
      %1217 = vmatprep.mubr.f32.mxu0 0.0
      %1218 = vmatmul.mubr.f32.gmra.mxu0 %v402
      %v1219 = vpop.f32.mrf.mxu0
      %v1220 = vadd.f32 %v285, %v1219
      %v1221 = vpop.f32.mrf.mxu0
      %v1222 = vadd.f32 %v289, %v1221
      %1223 = vmatprep.mubr.f32.mxu0 0.0
      %1224 = vmatmul.mubr.f32.gmra.mxu0 %v405
      %v1225 = vpop.f32.mrf.mxu0
      %v1226 = vadd.f32 %v285, %v1225
      %v1227 = vpop.f32.mrf.mxu0
      %v1228 = vadd.f32 %v289, %v1227
      %1229 = vmatprep.mubr.f32.mxu0 0.0
      %1230 = vmatmul.mubr.f32.gmra.mxu0 %v408
      %v1231 = vpop.f32.mrf.mxu0
      %v1232 = vadd.f32 %v285, %v1231
      %v1233 = vpop.f32.mrf.mxu0
      %v1234 = vadd.f32 %v289, %v1233
      %1235 = vmatprep.mubr.f32.mxu0 0.0
      %1236 = vmatmul.mubr.f32.gmra.mxu0 %v411
      %v1237 = vpop.f32.mrf.mxu0
      %v1238 = vadd.f32 %v285, %v1237
      %v1239 = vpop.f32.mrf.mxu0
      %v1240 = vadd.f32 %v289, %v1239
      %1241 = vmatprep.mubr.f32.mxu0 0.0
      %1242 = vmatmul.mubr.f32.gmra.mxu0 %v414
      %v1243 = vpop.f32.mrf.mxu0
      %v1244 = vadd.f32 %v285, %v1243
      %v1245 = vpop.f32.mrf.mxu0
      %v1246 = vadd.f32 %v289, %v1245
      %1247 = vmatprep.mubr.f32.mxu0 0.0
      %1248 = vmatmul.mubr.f32.gmra.mxu0 %v417
      %v1249 = vpop.f32.mrf.mxu0
      %v1250 = vadd.f32 %v285, %v1249
      %v1251 = vpop.f32.mrf.mxu0
      %v1252 = vadd.f32 %v289, %v1251
      %1253 = vmatprep.mubr.f32.mxu0 0.0
      %1254 = vmatmul.mubr.f32.gmra.mxu0 %v420
      %v1255 = vpop.f32.mrf.mxu0
      %v1256 = vadd.f32 %v285, %v1255
      %v1257 = vpop.f32.mrf.mxu0
      %v1258 = vadd.f32 %v289, %v1257
      %1259 = vmatprep.mubr.f32.mxu0 0.0
      %1260 = vmatmul.mubr.f32.gmra.mxu0 %v423
      %v1261 = vpop.f32.mrf.mxu0
      %v1262 = vadd.f32 %v285, %v1261
      %v1263 = vpop.f32.mrf.mxu0
      %v1264 = vadd.f32 %v289, %v1263
      %1265 = vmatprep.mubr.f32.mxu0 0.0
      %1266 = vmatmul.mubr.f32.gmra.mxu0 %v426
      %v1267 = vpop.f32.mrf.mxu0
      %v1268 = vadd.f32 %v285, %v1267
      %v1269 = vpop.f32.mrf.mxu0
      %v1270 = vadd.f32 %v289, %v1269
      %1271 = vmatprep.mubr.f32.mxu0 0.0
      %1272 = vmatmul.mubr.f32.gmra.mxu0 %v429
      %v1273 = vpop.f32.mrf.mxu0
      %v1274 = vadd.f32 %v285, %v1273
      %v1275 = vpop.f32.mrf.mxu0
      %v1276 = vadd.f32 %v289, %v1275
      %1277 = vmatprep.mubr.f32.mxu0 0.0
      %1278 = vmatmul.mubr.f32.gmra.mxu0 %v432
      %v1279 = vpop.f32.mrf.mxu0
      %v1280 = vadd.f32 %v285, %v1279
      %v1281 = vpop.f32.mrf.mxu0
      %v1282 = vadd.f32 %v289, %v1281
      %1283 = vmatprep.mubr.f32.mxu0 0.0
      %1284 = vmatmul.mubr.f32.gmra.mxu0 %v435
      %v1285 = vpop.f32.mrf.mxu0
      %v1286 = vadd.f32 %v285, %v1285
      %v1287 = vpop.f32.mrf.mxu0
      %v1288 = vadd.f32 %v289, %v1287
      %1289 = vmatprep.mubr.f32.mxu0 0.0
      %1290 = vmatmul.mubr.f32.gmra.mxu0 %v438
      %v1291 = vpop.f32.mrf.mxu0
      %v1292 = vadd.f32 %v285, %v1291
      %v1293 = vpop.f32.mrf.mxu0
      %v1294 = vadd.f32 %v289, %v1293
      %1295 = vmatprep.mubr.f32.mxu0 0.0
      %1296 = vmatmul.mubr.f32.gmra.mxu0 %v441
      %v1297 = vpop.f32.mrf.mxu0
      %v1298 = vadd.f32 %v285, %v1297
      %v1299 = vpop.f32.mrf.mxu0
      %v1300 = vadd.f32 %v289, %v1299
      %1301 = vmatprep.mubr.f32.mxu0 0.0
      %1302 = vmatmul.mubr.f32.gmra.mxu0 %v444
      %v1303 = vpop.f32.mrf.mxu0
      %v1304 = vadd.f32 %v285, %v1303
      %v1305 = vpop.f32.mrf.mxu0
      %v1306 = vadd.f32 %v289, %v1305
      %1307 = vmatprep.mubr.f32.mxu0 0.0
      %1308 = vmatmul.mubr.f32.gmra.mxu0 %v447
      %v1309 = vpop.f32.mrf.mxu0
      %v1310 = vadd.f32 %v285, %v1309
      %v1311 = vpop.f32.mrf.mxu0
      %v1312 = vadd.f32 %v289, %v1311
      %1313 = vmatprep.mubr.f32.mxu0 0.0
      %1314 = vmatmul.mubr.f32.gmra.mxu0 %v450
      %v1315 = vpop.f32.mrf.mxu0
      %v1316 = vadd.f32 %v285, %v1315
      %v1317 = vpop.f32.mrf.mxu0
      %v1318 = vadd.f32 %v289, %v1317
      %1319 = vmatprep.mubr.f32.mxu0 0.0
      %1320 = vmatmul.mubr.f32.gmra.mxu0 %v453
      %v1321 = vpop.f32.mrf.mxu0
      %v1322 = vadd.f32 %v285, %v1321
      %v1323 = vpop.f32.mrf.mxu0
      %v1324 = vadd.f32 %v289, %v1323
      %1325 = vmatprep.mubr.f32.mxu0 0.0
      %1326 = vmatmul.mubr.f32.gmra.mxu0 %v456
      %v1327 = vpop.f32.mrf.mxu0
      %v1328 = vadd.f32 %v285, %v1327
      %v1329 = vpop.f32.mrf.mxu0
      %v1330 = vadd.f32 %v289, %v1329
      %1331 = vmatprep.mubr.f32.mxu0 0.0
      %1332 = vmatmul.mubr.f32.gmra.mxu0 %v459
      %v1333 = vpop.f32.mrf.mxu0
      %v1334 = vadd.f32 %v285, %v1333
      %v1335 = vpop.f32.mrf.mxu0
      %v1336 = vadd.f32 %v289, %v1335
      %1337 = vmatprep.mubr.f32.mxu0 0.0
      %1338 = vmatmul.mubr.f32.gmra.mxu0 %v462
      %v1339 = vpop.f32.mrf.mxu0
      %v1340 = vadd.f32 %v285, %v1339
      %v1341 = vpop.f32.mrf.mxu0
      %v1342 = vadd.f32 %v289, %v1341
      %1343 = vmatprep.mubr.f32.mxu0 0.0
      %1344 = vmatmul.mubr.f32.gmra.mxu0 %v465
      %v1345 = vpop.f32.mrf.mxu0
      %v1346 = vadd.f32 %v285, %v1345
      %v1347 = vpop.f32.mrf.mxu0
      %v1348 = vadd.f32 %v289, %v1347
      %1349 = vmatprep.mubr.f32.mxu0 0.0
      %1350 = vmatmul.mubr.f32.gmra.mxu0 %v468
      %v1351 = vpop.f32.mrf.mxu0
      %v1352 = vadd.f32 %v285, %v1351
      %v1353 = vpop.f32.mrf.mxu0
      %v1354 = vadd.f32 %v289, %v1353
      %1355 = vmatprep.mubr.f32.mxu0 0.0
      %1356 = vmatmul.mubr.f32.gmra.mxu0 %v471
      %v1357 = vpop.f32.mrf.mxu0
      %v1358 = vadd.f32 %v285, %v1357
      %v1359 = vpop.f32.mrf.mxu0
      %v1360 = vadd.f32 %v289, %v1359
      %1361 = vmatprep.mubr.f32.mxu0 0.0
      %1362 = vmatmul.mubr.f32.gmra.mxu0 %v474
      %v1363 = vpop.f32.mrf.mxu0
      %v1364 = vadd.f32 %v285, %v1363
      %v1365 = vpop.f32.mrf.mxu0
      %v1366 = vadd.f32 %v289, %v1365
      %1367 = vmatprep.mubr.f32.mxu0 0.0
      %1368 = vmatmul.mubr.f32.gmra.mxu0 %v477
      %v1369 = vpop.f32.mrf.mxu0
      %v1370 = vadd.f32 %v285, %v1369
      %v1371 = vpop.f32.mrf.mxu0
      %v1372 = vadd.f32 %v289, %v1371
      %1373 = vmatprep.mubr.f32.mxu0 0.0
      %1374 = vmatmul.mubr.f32.gmra.mxu0 %v480
      %v1375 = vpop.f32.mrf.mxu0
      %v1376 = vadd.f32 %v285, %v1375
      %v1377 = vpop.f32.mrf.mxu0
      %v1378 = vadd.f32 %v289, %v1377
      %1379 = vmatprep.mubr.f32.mxu0 0.0
      %1380 = vmatmul.mubr.f32.gmra.mxu0 %v483
      %v1381 = vpop.f32.mrf.mxu0
      %v1382 = vadd.f32 %v285, %v1381
      %v1383 = vpop.f32.mrf.mxu0
      %v1384 = vadd.f32 %v289, %v1383
      %1385 = vmatprep.mubr.f32.mxu0 0.0
      %1386 = vmatmul.mubr.f32.gmra.mxu0 %v486
      %v1387 = vpop.f32.mrf.mxu0
      %v1388 = vadd.f32 %v285, %v1387
      %v1389 = vpop.f32.mrf.mxu0
      %v1390 = vadd.f32 %v289, %v1389
      %1391 = vmatprep.mubr.f32.mxu0 0.0
      %1392 = vmatmul.mubr.f32.gmra.mxu0 %v489
      %v1393 = vpop.f32.mrf.mxu0
      %v1394 = vadd.f32 %v285, %v1393
      %v1395 = vpop.f32.mrf.mxu0
      %v1396 = vadd.f32 %v289, %v1395
      %1397 = vdwg.mxu0
      %v1398 = vmax.f32 %v567, 0.0
      %v1399 = vmax.f32 %v569, 0.0
      %v1400 = vmax.f32 %v1016, 0.0
      %v1401 = vmax.f32 %v1018, 0.0
      %v1402 = vmax.f32 %v573, 0.0
      %v1403 = vmax.f32 %v575, 0.0
      %v1404 = vmax.f32 %v1022, 0.0
      %v1405 = vmax.f32 %v1024, 0.0
      %v1406 = vmax.f32 %v579, 0.0
      %v1407 = vmax.f32 %v581, 0.0
      %v1408 = vmax.f32 %v1028, 0.0
      %v1409 = vmax.f32 %v1030, 0.0
      %v1410 = vmax.f32 %v585, 0.0
      %v1411 = vmax.f32 %v587, 0.0
      %v1412 = vmax.f32 %v1034, 0.0
      %v1413 = vmax.f32 %v1036, 0.0
      %v1414 = vmax.f32 %v591, 0.0
      %v1415 = vmax.f32 %v593, 0.0
      %v1416 = vmax.f32 %v1040, 0.0
      %v1417 = vmax.f32 %v1042, 0.0
      %v1418 = vmax.f32 %v597, 0.0
      %v1419 = vmax.f32 %v599, 0.0
      %v1420 = vmax.f32 %v1046, 0.0
      %v1421 = vmax.f32 %v1048, 0.0
      %v1422 = vmax.f32 %v603, 0.0
      %v1423 = vmax.f32 %v605, 0.0
      %v1424 = vmax.f32 %v1052, 0.0
      %v1425 = vmax.f32 %v1054, 0.0
      %v1426 = vmax.f32 %v609, 0.0
      %v1427 = vmax.f32 %v611, 0.0
      %v1428 = vmax.f32 %v1058, 0.0
      %v1429 = vmax.f32 %v1060, 0.0
      %v1430 = vmax.f32 %v615, 0.0
      %v1431 = vmax.f32 %v617, 0.0
      %v1432 = vmax.f32 %v1064, 0.0
      %v1433 = vmax.f32 %v1066, 0.0
      %v1434 = vmax.f32 %v621, 0.0
      %v1435 = vmax.f32 %v623, 0.0
      %v1436 = vmax.f32 %v1070, 0.0
      %v1437 = vmax.f32 %v1072, 0.0
      %v1438 = vmax.f32 %v627, 0.0
      %v1439 = vmax.f32 %v629, 0.0
      %v1440 = vmax.f32 %v1076, 0.0
      %v1441 = vmax.f32 %v1078, 0.0
      %v1442 = vmax.f32 %v633, 0.0
      %v1443 = vmax.f32 %v635, 0.0
      %v1444 = vmax.f32 %v1082, 0.0
      %v1445 = vmax.f32 %v1084, 0.0
      %v1446 = vmax.f32 %v639, 0.0
      %v1447 = vmax.f32 %v641, 0.0
      %v1448 = vmax.f32 %v1088, 0.0
      %v1449 = vmax.f32 %v1090, 0.0
      %v1450 = vmax.f32 %v645, 0.0
      %v1451 = vmax.f32 %v647, 0.0
      %v1452 = vmax.f32 %v1094, 0.0
      %v1453 = vmax.f32 %v1096, 0.0
      %v1454 = vmax.f32 %v651, 0.0
      %v1455 = vmax.f32 %v653, 0.0
      %v1456 = vmax.f32 %v1100, 0.0
      %v1457 = vmax.f32 %v1102, 0.0
      %v1458 = vmax.f32 %v657, 0.0
      %v1459 = vmax.f32 %v659, 0.0
      %v1460 = vmax.f32 %v1106, 0.0
      %v1461 = vmax.f32 %v1108, 0.0
      %v1462 = vmax.f32 %v663, 0.0
      %v1463 = vmax.f32 %v665, 0.0
      %v1464 = vmax.f32 %v1112, 0.0
      %v1465 = vmax.f32 %v1114, 0.0
      %v1466 = vmax.f32 %v669, 0.0
      %v1467 = vmax.f32 %v671, 0.0
      %v1468 = vmax.f32 %v1118, 0.0
      %v1469 = vmax.f32 %v1120, 0.0
      %v1470 = vmax.f32 %v675, 0.0
      %v1471 = vmax.f32 %v677, 0.0
      %v1472 = vmax.f32 %v1124, 0.0
      %v1473 = vmax.f32 %v1126, 0.0
      %v1474 = vmax.f32 %v681, 0.0
      %v1475 = vmax.f32 %v683, 0.0
      %v1476 = vmax.f32 %v1130, 0.0
      %v1477 = vmax.f32 %v1132, 0.0
      %v1478 = vmax.f32 %v687, 0.0
      %v1479 = vmax.f32 %v689, 0.0
      %v1480 = vmax.f32 %v1136, 0.0
      %v1481 = vmax.f32 %v1138, 0.0
      %v1482 = vmax.f32 %v693, 0.0
      %v1483 = vmax.f32 %v695, 0.0
      %v1484 = vmax.f32 %v1142, 0.0
      %v1485 = vmax.f32 %v1144, 0.0
      %v1486 = vmax.f32 %v699, 0.0
      %v1487 = vmax.f32 %v701, 0.0
      %v1488 = vmax.f32 %v1148, 0.0
      %v1489 = vmax.f32 %v1150, 0.0
      %v1490 = vmax.f32 %v705, 0.0
      %v1491 = vmax.f32 %v707, 0.0
      %v1492 = vmax.f32 %v1154, 0.0
      %v1493 = vmax.f32 %v1156, 0.0
      %v1494 = vmax.f32 %v711, 0.0
      %v1495 = vmax.f32 %v713, 0.0
      %v1496 = vmax.f32 %v1160, 0.0
      %v1497 = vmax.f32 %v1162, 0.0
      %v1498 = vmax.f32 %v717, 0.0
      %v1499 = vmax.f32 %v719, 0.0
      %v1500 = vmax.f32 %v1166, 0.0
      %v1501 = vmax.f32 %v1168, 0.0
      %v1502 = vmax.f32 %v723, 0.0
      %v1503 = vmax.f32 %v725, 0.0
      %v1504 = vmax.f32 %v1172, 0.0
      %v1505 = vmax.f32 %v1174, 0.0
      %v1506 = vmax.f32 %v729, 0.0
      %v1507 = vmax.f32 %v731, 0.0
      %v1508 = vmax.f32 %v1178, 0.0
      %v1509 = vmax.f32 %v1180, 0.0
      %v1510 = vmax.f32 %v735, 0.0
      %v1511 = vmax.f32 %v737, 0.0
      %v1512 = vmax.f32 %v1184, 0.0
      %v1513 = vmax.f32 %v1186, 0.0
      %v1514 = vmax.f32 %v741, 0.0
      %v1515 = vmax.f32 %v743, 0.0
      %v1516 = vmax.f32 %v1190, 0.0
      %v1517 = vmax.f32 %v1192, 0.0
      %v1518 = vmax.f32 %v747, 0.0
      %v1519 = vmax.f32 %v749, 0.0
      %v1520 = vmax.f32 %v1196, 0.0
      %v1521 = vmax.f32 %v1198, 0.0
      %v1522 = vmax.f32 %v753, 0.0
      %v1523 = vmax.f32 %v755, 0.0
      %v1524 = vmax.f32 %v1202, 0.0
      %v1525 = vmax.f32 %v1204, 0.0
      %v1526 = vmax.f32 %v759, 0.0
      %v1527 = vmax.f32 %v761, 0.0
      %v1528 = vmax.f32 %v1208, 0.0
      %v1529 = vmax.f32 %v1210, 0.0
      %v1530 = vmax.f32 %v765, 0.0
      %v1531 = vmax.f32 %v767, 0.0
      %v1532 = vmax.f32 %v1214, 0.0
      %v1533 = vmax.f32 %v1216, 0.0
      %v1534 = vmax.f32 %v771, 0.0
      %v1535 = vmax.f32 %v773, 0.0
      %v1536 = vmax.f32 %v1220, 0.0
      %v1537 = vmax.f32 %v1222, 0.0
      %v1538 = vmax.f32 %v777, 0.0
      %v1539 = vmax.f32 %v779, 0.0
      %v1540 = vmax.f32 %v1226, 0.0
      %v1541 = vmax.f32 %v1228, 0.0
      %v1542 = vmax.f32 %v783, 0.0
      %v1543 = vmax.f32 %v785, 0.0
      %v1544 = vmax.f32 %v1232, 0.0
      %v1545 = vmax.f32 %v1234, 0.0
      %v1546 = vmax.f32 %v789, 0.0
      %v1547 = vmax.f32 %v791, 0.0
      %v1548 = vmax.f32 %v1238, 0.0
      %v1549 = vmax.f32 %v1240, 0.0
      %v1550 = vmax.f32 %v795, 0.0
      %v1551 = vmax.f32 %v797, 0.0
      %v1552 = vmax.f32 %v1244, 0.0
      %v1553 = vmax.f32 %v1246, 0.0
      %v1554 = vmax.f32 %v801, 0.0
      %v1555 = vmax.f32 %v803, 0.0
      %v1556 = vmax.f32 %v1250, 0.0
      %v1557 = vmax.f32 %v1252, 0.0
      %v1558 = vmax.f32 %v807, 0.0
      %v1559 = vmax.f32 %v809, 0.0
      %v1560 = vmax.f32 %v1256, 0.0
      %v1561 = vmax.f32 %v1258, 0.0
      %v1562 = vmax.f32 %v813, 0.0
      %v1563 = vmax.f32 %v815, 0.0
      %v1564 = vmax.f32 %v1262, 0.0
      %v1565 = vmax.f32 %v1264, 0.0
      %v1566 = vmax.f32 %v819, 0.0
      %v1567 = vmax.f32 %v821, 0.0
      %v1568 = vmax.f32 %v1268, 0.0
      %v1569 = vmax.f32 %v1270, 0.0
      %v1570 = vmax.f32 %v825, 0.0
      %v1571 = vmax.f32 %v827, 0.0
      %v1572 = vmax.f32 %v1274, 0.0
      %v1573 = vmax.f32 %v1276, 0.0
      %v1574 = vmax.f32 %v831, 0.0
      %v1575 = vmax.f32 %v833, 0.0
      %v1576 = vmax.f32 %v1280, 0.0
      %v1577 = vmax.f32 %v1282, 0.0
      %v1578 = vmax.f32 %v837, 0.0
      %v1579 = vmax.f32 %v839, 0.0
      %v1580 = vmax.f32 %v1286, 0.0
      %v1581 = vmax.f32 %v1288, 0.0
      %v1582 = vmax.f32 %v843, 0.0
      %v1583 = vmax.f32 %v845, 0.0
      %v1584 = vmax.f32 %v1292, 0.0
      %v1585 = vmax.f32 %v1294, 0.0
      %v1586 = vmax.f32 %v849, 0.0
      %v1587 = vmax.f32 %v851, 0.0
      %v1588 = vmax.f32 %v1298, 0.0
      %v1589 = vmax.f32 %v1300, 0.0
      %v1590 = vmax.f32 %v855, 0.0
      %v1591 = vmax.f32 %v857, 0.0
      %v1592 = vmax.f32 %v1304, 0.0
      %v1593 = vmax.f32 %v1306, 0.0
      %v1594 = vmax.f32 %v861, 0.0
      %v1595 = vmax.f32 %v863, 0.0
      %v1596 = vmax.f32 %v1310, 0.0
      %v1597 = vmax.f32 %v1312, 0.0
      %v1598 = vmax.f32 %v867, 0.0
      %v1599 = vmax.f32 %v869, 0.0
      %v1600 = vmax.f32 %v1316, 0.0
      %v1601 = vmax.f32 %v1318, 0.0
      %v1602 = vmax.f32 %v873, 0.0
      %v1603 = vmax.f32 %v875, 0.0
      %v1604 = vmax.f32 %v1322, 0.0
      %v1605 = vmax.f32 %v1324, 0.0
      %v1606 = vmax.f32 %v879, 0.0
      %v1607 = vmax.f32 %v881, 0.0
      %v1608 = vmax.f32 %v1328, 0.0
      %v1609 = vmax.f32 %v1330, 0.0
      %v1610 = vmax.f32 %v885, 0.0
      %v1611 = vmax.f32 %v887, 0.0
      %v1612 = vmax.f32 %v1334, 0.0
      %v1613 = vmax.f32 %v1336, 0.0
      %v1614 = vmax.f32 %v891, 0.0
      %v1615 = vmax.f32 %v893, 0.0
      %v1616 = vmax.f32 %v1340, 0.0
      %v1617 = vmax.f32 %v1342, 0.0
      %v1618 = vmax.f32 %v897, 0.0
      %v1619 = vmax.f32 %v899, 0.0
      %v1620 = vmax.f32 %v1346, 0.0
      %v1621 = vmax.f32 %v1348, 0.0
      %v1622 = vmax.f32 %v903, 0.0
      %v1623 = vmax.f32 %v905, 0.0
      %v1624 = vmax.f32 %v1352, 0.0
      %v1625 = vmax.f32 %v1354, 0.0
      %v1626 = vmax.f32 %v909, 0.0
      %v1627 = vmax.f32 %v911, 0.0
      %v1628 = vmax.f32 %v1358, 0.0
      %v1629 = vmax.f32 %v1360, 0.0
      %v1630 = vmax.f32 %v915, 0.0
      %v1631 = vmax.f32 %v917, 0.0
      %v1632 = vmax.f32 %v1364, 0.0
      %v1633 = vmax.f32 %v1366, 0.0
      %v1634 = vmax.f32 %v921, 0.0
      %v1635 = vmax.f32 %v923, 0.0
      %v1636 = vmax.f32 %v1370, 0.0
      %v1637 = vmax.f32 %v1372, 0.0
      %v1638 = vmax.f32 %v927, 0.0
      %v1639 = vmax.f32 %v929, 0.0
      %v1640 = vmax.f32 %v1376, 0.0
      %v1641 = vmax.f32 %v1378, 0.0
      %v1642 = vmax.f32 %v933, 0.0
      %v1643 = vmax.f32 %v935, 0.0
      %v1644 = vmax.f32 %v1382, 0.0
      %v1645 = vmax.f32 %v1384, 0.0
      %v1646 = vmax.f32 %v939, 0.0
      %v1647 = vmax.f32 %v941, 0.0
      %v1648 = vmax.f32 %v1388, 0.0
      %v1649 = vmax.f32 %v1390, 0.0
      %v1650 = vmax.f32 %v945, 0.0
      %v1651 = vmax.f32 %v947, 0.0
      %v1652 = vmax.f32 %v1394, 0.0
      %v1653 = vmax.f32 %v1396, 0.0
      %v1654 = vld [vmem:[#allocation2] sm:$0xf]
      %v1655 = vadd.f32 %v1398, %v1402
      %v1656 = vadd.f32 %v1655, %v1406
      %v1657 = vadd.f32 %v1656, %v1410
      %v1658 = vadd.f32 %v1657, %v1414
      %v1659 = vadd.f32 %v1658, %v1418
      %v1660 = vadd.f32 %v1659, %v1422
      %v1661 = vadd.f32 %v1660, %v1426
      %v1662 = vadd.f32 %v1661, %v1430
      %v1663 = vadd.f32 %v1662, %v1434
      %v1664 = vadd.f32 %v1663, %v1438
      %v1665 = vadd.f32 %v1664, %v1442
      %v1666 = vadd.f32 %v1665, %v1446
      %v1667 = vadd.f32 %v1666, %v1450
      %v1668 = vadd.f32 %v1667, %v1454
      %v1669 = vadd.f32 %v1668, %v1458
      %v1670 = vadd.f32 %v1669, %v1462
      %v1671 = vadd.f32 %v1670, %v1466
      %v1672 = vadd.f32 %v1671, %v1470
      %v1673 = vadd.f32 %v1672, %v1474
      %v1674 = vadd.f32 %v1673, %v1478
      %v1675 = vadd.f32 %v1674, %v1482
      %v1676 = vadd.f32 %v1675, %v1486
      %v1677 = vadd.f32 %v1676, %v1490
      %v1678 = vadd.f32 %v1677, %v1494
      %v1679 = vadd.f32 %v1678, %v1498
      %v1680 = vadd.f32 %v1679, %v1502
      %v1681 = vadd.f32 %v1680, %v1506
      %v1682 = vadd.f32 %v1681, %v1510
      %v1683 = vadd.f32 %v1682, %v1514
      %v1684 = vadd.f32 %v1683, %v1518
      %v1685 = vadd.f32 %v1684, %v1522
      %v1686 = vadd.f32 %v1685, %v1526
      %v1687 = vadd.f32 %v1686, %v1530
      %v1688 = vadd.f32 %v1687, %v1534
      %v1689 = vadd.f32 %v1688, %v1538
      %v1690 = vadd.f32 %v1689, %v1542
      %v1691 = vadd.f32 %v1690, %v1546
      %v1692 = vadd.f32 %v1691, %v1550
      %v1693 = vadd.f32 %v1692, %v1554
      %v1694 = vadd.f32 %v1693, %v1558
      %v1695 = vadd.f32 %v1694, %v1562
      %v1696 = vadd.f32 %v1695, %v1566
      %v1697 = vadd.f32 %v1696, %v1570
      %v1698 = vadd.f32 %v1697, %v1574
      %v1699 = vadd.f32 %v1698, %v1578
      %v1700 = vadd.f32 %v1699, %v1582
      %v1701 = vadd.f32 %v1700, %v1586
      %v1702 = vadd.f32 %v1701, %v1590
      %v1703 = vadd.f32 %v1702, %v1594
      %v1704 = vadd.f32 %v1703, %v1598
      %v1705 = vadd.f32 %v1704, %v1602
      %v1706 = vadd.f32 %v1705, %v1606
      %v1707 = vadd.f32 %v1706, %v1610
      %v1708 = vadd.f32 %v1707, %v1614
      %v1709 = vadd.f32 %v1708, %v1618
      %v1710 = vadd.f32 %v1709, %v1622
      %v1711 = vadd.f32 %v1710, %v1626
      %v1712 = vadd.f32 %v1711, %v1630
      %v1713 = vadd.f32 %v1712, %v1634
      %v1714 = vadd.f32 %v1713, %v1638
      %v1715 = vadd.f32 %v1714, %v1642
      %v1716 = vadd.f32 %v1715, %v1646
      %v1717 = vadd.f32 %v1716, %v1650
      %v1718 = vrot.slane %v1717, 4
      %v1719 = vadd.f32 %v1717, %v1718
      %v1720 = vrot.slane %v1719, 2
      %v1721 = vadd.f32 %v1719, %v1720
      %v1722 = vrot.slane %v1721, 1
      %v1723 = vadd.f32 %v1721, %v1722
      %v1724 = vadd.f32 %v1399, %v1403
      %v1725 = vadd.f32 %v1724, %v1407
      %v1726 = vadd.f32 %v1725, %v1411
      %v1727 = vadd.f32 %v1726, %v1415
      %v1728 = vadd.f32 %v1727, %v1419
      %v1729 = vadd.f32 %v1728, %v1423
      %v1730 = vadd.f32 %v1729, %v1427
      %v1731 = vadd.f32 %v1730, %v1431
      %v1732 = vadd.f32 %v1731, %v1435
      %v1733 = vadd.f32 %v1732, %v1439
      %v1734 = vadd.f32 %v1733, %v1443
      %v1735 = vadd.f32 %v1734, %v1447
      %v1736 = vadd.f32 %v1735, %v1451
      %v1737 = vadd.f32 %v1736, %v1455
      %v1738 = vadd.f32 %v1737, %v1459
      %v1739 = vadd.f32 %v1738, %v1463
      %v1740 = vadd.f32 %v1739, %v1467
      %v1741 = vadd.f32 %v1740, %v1471
      %v1742 = vadd.f32 %v1741, %v1475
      %v1743 = vadd.f32 %v1742, %v1479
      %v1744 = vadd.f32 %v1743, %v1483
      %v1745 = vadd.f32 %v1744, %v1487
      %v1746 = vadd.f32 %v1745, %v1491
      %v1747 = vadd.f32 %v1746, %v1495
      %v1748 = vadd.f32 %v1747, %v1499
      %v1749 = vadd.f32 %v1748, %v1503
      %v1750 = vadd.f32 %v1749, %v1507
      %v1751 = vadd.f32 %v1750, %v1511
      %v1752 = vadd.f32 %v1751, %v1515
      %v1753 = vadd.f32 %v1752, %v1519
      %v1754 = vadd.f32 %v1753, %v1523
      %v1755 = vadd.f32 %v1754, %v1527
      %v1756 = vadd.f32 %v1755, %v1531
      %v1757 = vadd.f32 %v1756, %v1535
      %v1758 = vadd.f32 %v1757, %v1539
      %v1759 = vadd.f32 %v1758, %v1543
      %v1760 = vadd.f32 %v1759, %v1547
      %v1761 = vadd.f32 %v1760, %v1551
      %v1762 = vadd.f32 %v1761, %v1555
      %v1763 = vadd.f32 %v1762, %v1559
      %v1764 = vadd.f32 %v1763, %v1563
      %v1765 = vadd.f32 %v1764, %v1567
      %v1766 = vadd.f32 %v1765, %v1571
      %v1767 = vadd.f32 %v1766, %v1575
      %v1768 = vadd.f32 %v1767, %v1579
      %v1769 = vadd.f32 %v1768, %v1583
      %v1770 = vadd.f32 %v1769, %v1587
      %v1771 = vadd.f32 %v1770, %v1591
      %v1772 = vadd.f32 %v1771, %v1595
      %v1773 = vadd.f32 %v1772, %v1599
      %v1774 = vadd.f32 %v1773, %v1603
      %v1775 = vadd.f32 %v1774, %v1607
      %v1776 = vadd.f32 %v1775, %v1611
      %v1777 = vadd.f32 %v1776, %v1615
      %v1778 = vadd.f32 %v1777, %v1619
      %v1779 = vadd.f32 %v1778, %v1623
      %v1780 = vadd.f32 %v1779, %v1627
      %v1781 = vadd.f32 %v1780, %v1631
      %v1782 = vadd.f32 %v1781, %v1635
      %v1783 = vadd.f32 %v1782, %v1639
      %v1784 = vadd.f32 %v1783, %v1643
      %v1785 = vadd.f32 %v1784, %v1647
      %v1786 = vadd.f32 %v1785, %v1651
      %v1787 = vrot.slane %v1786, 4
      %v1788 = vadd.f32 %v1786, %v1787
      %v1789 = vrot.slane %v1788, 2
      %v1790 = vadd.f32 %v1788, %v1789
      %v1791 = vrot.slane %v1790, 1
      %v1792 = vadd.f32 %v1790, %v1791
      %v1793 = vadd.f32 %v1400, %v1404
      %v1794 = vadd.f32 %v1793, %v1408
      %v1795 = vadd.f32 %v1794, %v1412
      %v1796 = vadd.f32 %v1795, %v1416
      %v1797 = vadd.f32 %v1796, %v1420
      %v1798 = vadd.f32 %v1797, %v1424
      %v1799 = vadd.f32 %v1798, %v1428
      %v1800 = vadd.f32 %v1799, %v1432
      %v1801 = vadd.f32 %v1800, %v1436
      %v1802 = vadd.f32 %v1801, %v1440
      %v1803 = vadd.f32 %v1802, %v1444
      %v1804 = vadd.f32 %v1803, %v1448
      %v1805 = vadd.f32 %v1804, %v1452
      %v1806 = vadd.f32 %v1805, %v1456
      %v1807 = vadd.f32 %v1806, %v1460
      %v1808 = vadd.f32 %v1807, %v1464
      %v1809 = vadd.f32 %v1808, %v1468
      %v1810 = vadd.f32 %v1809, %v1472
      %v1811 = vadd.f32 %v1810, %v1476
      %v1812 = vadd.f32 %v1811, %v1480
      %v1813 = vadd.f32 %v1812, %v1484
      %v1814 = vadd.f32 %v1813, %v1488
      %v1815 = vadd.f32 %v1814, %v1492
      %v1816 = vadd.f32 %v1815, %v1496
      %v1817 = vadd.f32 %v1816, %v1500
      %v1818 = vadd.f32 %v1817, %v1504
      %v1819 = vadd.f32 %v1818, %v1508
      %v1820 = vadd.f32 %v1819, %v1512
      %v1821 = vadd.f32 %v1820, %v1516
      %v1822 = vadd.f32 %v1821, %v1520
      %v1823 = vadd.f32 %v1822, %v1524
      %v1824 = vadd.f32 %v1823, %v1528
      %v1825 = vadd.f32 %v1824, %v1532
      %v1826 = vadd.f32 %v1825, %v1536
      %v1827 = vadd.f32 %v1826, %v1540
      %v1828 = vadd.f32 %v1827, %v1544
      %v1829 = vadd.f32 %v1828, %v1548
      %v1830 = vadd.f32 %v1829, %v1552
      %v1831 = vadd.f32 %v1830, %v1556
      %v1832 = vadd.f32 %v1831, %v1560
      %v1833 = vadd.f32 %v1832, %v1564
      %v1834 = vadd.f32 %v1833, %v1568
      %v1835 = vadd.f32 %v1834, %v1572
      %v1836 = vadd.f32 %v1835, %v1576
      %v1837 = vadd.f32 %v1836, %v1580
      %v1838 = vadd.f32 %v1837, %v1584
      %v1839 = vadd.f32 %v1838, %v1588
      %v1840 = vadd.f32 %v1839, %v1592
      %v1841 = vadd.f32 %v1840, %v1596
      %v1842 = vadd.f32 %v1841, %v1600
      %v1843 = vadd.f32 %v1842, %v1604
      %v1844 = vadd.f32 %v1843, %v1608
      %v1845 = vadd.f32 %v1844, %v1612
      %v1846 = vadd.f32 %v1845, %v1616
      %v1847 = vadd.f32 %v1846, %v1620
      %v1848 = vadd.f32 %v1847, %v1624
      %v1849 = vadd.f32 %v1848, %v1628
      %v1850 = vadd.f32 %v1849, %v1632
      %v1851 = vadd.f32 %v1850, %v1636
      %v1852 = vadd.f32 %v1851, %v1640
      %v1853 = vadd.f32 %v1852, %v1644
      %v1854 = vadd.f32 %v1853, %v1648
      %v1855 = vadd.f32 %v1854, %v1652
      %v1856 = vrot.slane %v1855, 4
      %v1857 = vadd.f32 %v1855, %v1856
      %v1858 = vrot.slane %v1857, 2
      %v1859 = vadd.f32 %v1857, %v1858
      %v1860 = vrot.slane %v1859, 1
      %v1861 = vadd.f32 %v1859, %v1860
      %v1862 = vadd.f32 %v1401, %v1405
      %v1863 = vadd.f32 %v1862, %v1409
      %v1864 = vadd.f32 %v1863, %v1413
      %v1865 = vadd.f32 %v1864, %v1417
      %v1866 = vadd.f32 %v1865, %v1421
      %v1867 = vadd.f32 %v1866, %v1425
      %v1868 = vadd.f32 %v1867, %v1429
      %v1869 = vadd.f32 %v1868, %v1433
      %v1870 = vadd.f32 %v1869, %v1437
      %v1871 = vadd.f32 %v1870, %v1441
      %v1872 = vadd.f32 %v1871, %v1445
      %v1873 = vadd.f32 %v1872, %v1449
      %v1874 = vadd.f32 %v1873, %v1453
      %v1875 = vadd.f32 %v1874, %v1457
      %v1876 = vadd.f32 %v1875, %v1461
      %v1877 = vadd.f32 %v1876, %v1465
      %v1878 = vadd.f32 %v1877, %v1469
      %v1879 = vadd.f32 %v1878, %v1473
      %v1880 = vadd.f32 %v1879, %v1477
      %v1881 = vadd.f32 %v1880, %v1481
      %v1882 = vadd.f32 %v1881, %v1485
      %v1883 = vadd.f32 %v1882, %v1489
      %v1884 = vadd.f32 %v1883, %v1493
      %v1885 = vadd.f32 %v1884, %v1497
      %v1886 = vadd.f32 %v1885, %v1501
      %v1887 = vadd.f32 %v1886, %v1505
      %v1888 = vadd.f32 %v1887, %v1509
      %v1889 = vadd.f32 %v1888, %v1513
      %v1890 = vadd.f32 %v1889, %v1517
      %v1891 = vadd.f32 %v1890, %v1521
      %v1892 = vadd.f32 %v1891, %v1525
      %v1893 = vadd.f32 %v1892, %v1529
      %v1894 = vadd.f32 %v1893, %v1533
      %v1895 = vadd.f32 %v1894, %v1537
      %v1896 = vadd.f32 %v1895, %v1541
      %v1897 = vadd.f32 %v1896, %v1545
      %v1898 = vadd.f32 %v1897, %v1549
      %v1899 = vadd.f32 %v1898, %v1553
      %v1900 = vadd.f32 %v1899, %v1557
      %v1901 = vadd.f32 %v1900, %v1561
      %v1902 = vadd.f32 %v1901, %v1565
      %v1903 = vadd.f32 %v1902, %v1569
      %v1904 = vadd.f32 %v1903, %v1573
      %v1905 = vadd.f32 %v1904, %v1577
      %v1906 = vadd.f32 %v1905, %v1581
      %v1907 = vadd.f32 %v1906, %v1585
      %v1908 = vadd.f32 %v1907, %v1589
      %v1909 = vadd.f32 %v1908, %v1593
      %v1910 = vadd.f32 %v1909, %v1597
      %v1911 = vadd.f32 %v1910, %v1601
      %v1912 = vadd.f32 %v1911, %v1605
      %v1913 = vadd.f32 %v1912, %v1609
      %v1914 = vadd.f32 %v1913, %v1613
      %v1915 = vadd.f32 %v1914, %v1617
      %v1916 = vadd.f32 %v1915, %v1621
      %v1917 = vadd.f32 %v1916, %v1625
      %v1918 = vadd.f32 %v1917, %v1629
      %v1919 = vadd.f32 %v1918, %v1633
      %v1920 = vadd.f32 %v1919, %v1637
      %v1921 = vadd.f32 %v1920, %v1641
      %v1922 = vadd.f32 %v1921, %v1645
      %v1923 = vadd.f32 %v1922, %v1649
      %v1924 = vadd.f32 %v1923, %v1653
      %v1925 = vrot.slane %v1924, 4
      %v1926 = vadd.f32 %v1924, %v1925
      %v1927 = vrot.slane %v1926, 2
      %v1928 = vadd.f32 %v1926, %v1927
      %v1929 = vrot.slane %v1928, 1
      %v1930 = vadd.f32 %v1928, %v1929
      %v1935 = vcombine.low %v1723, %v1792
      %v1936 = vcombine.low %v1861, %v1930
      %v1938 = vunpack.c.l.s4 1966171168
      %v1939 = vunpack.c.0.s8 %v1938
      %v1940 = vlaneseq
      %v1941 = vshrl.u32 %v1940, 7
      %v1942 = vsub.s32 %v1939, %v1941
      %v1943 = vrot.slane %v1935, %v1942
      %v1945 = vunpack.c.l.s4 1966171168
      %v1946 = vunpack.c.0.s8 %v1945
      %v1947 = vlaneseq
      %v1948 = vshrl.u32 %v1947, 7
      %v1949 = vsub.s32 %v1946, %v1948
      %v1950 = vrot.slane %v1936, %v1949
      %v1951 = vcombine.low %v1943, %v1950
      %v1953 = vunpack.c.l.s4 1966171168
      %v1954 = vunpack.c.0.s8 %v1953
      %v1955 = vlaneseq
      %v1956 = vshrl.u32 %v1955, 7
      %v1957 = vsub.s32 %v1954, %v1956
      %v1958 = vrot.slane %v1951, %v1957
      %v1960 = vadd.f32 %v1654, %v1958
      %v1961 = vlaneseq
      %vm1962 = vcmp.ge.s32.totalorder %v1961, 0
      %vm1963 = vcmp.lt.s32.totalorder %v1961, 512
      %vm1964 = vmand %vm1962, %vm1963
      %1965 = vst.msk [vmem:[#allocation2] sm:$0xf] %vm1964, %v1960
      %p1966 = scmp.eq.s32.totalorder %s19, 1
      // Predicated region
      $region37: #{forward.9} parent=31 // pred_check
        %p1967 = pneg %p1966
      $region38: #{forward.9} parent=31 // pred_check_branch
        %1969 = sbr.rel (%p1967) target = $region40
      $region39: #{forward.9} parent=31 // pred_region
        %v1970 = vld [vmem:[#allocation2] sm:$0xf]
        %v1971 = vmul.f32 %v1970, 0.0009765625
        %1972 = vst.msk [vmem:[%s196] sm:$0xf] %vm1964, %v1971
      $region40: #{forward.9} parent=31 // pred_fallthru
        _
      %p1973 = scmp.lt.s32.totalorder %s18, 1
      %s1974 = scalar_select %p1973, %s18, 1
      %s1975 = smul.addr %s1974, 4
      %s1976 = scalar_lea.vmem %s3, %s1975
      // Predicated region
      $region41: #{forward.9} parent=31 // pred_check
        %p1977 = pneg %p114
      $region42: #{forward.9} parent=31 // pred_check_branch
        %1979 = sbr.rel (%p1977) target = $region44
      $region43: #{forward.9} parent=31 // pred_region
        _
      $region44: #{forward.9} parent=31 // pred_fallthru
        _
    $region32: #{forward.9} parent=5 // pred_fallthru
      _
    %p1980 = scmp.le.s32.totalorder 2, %s9
    // Predicated region
    $region45: #{forward.9} parent=5 // pred_check
      %p1981 = pneg %p1980
    $region46: #{forward.9} parent=5 // pred_check_branch
      %1983 = sbr.rel (%p1981) target = $region48
    $region47: #{forward.9} parent=5 // pred_region
      %s1984 = ssub.s32 %s9, 2
      // Predicated region
      $region49: #{forward.9} parent=47 // pred_check
        %p1985 = pneg %p120
      $region50: #{forward.9} parent=47 // pred_check_branch
        %1987 = sbr.rel (%p1985) target = $region52
      $region51: #{forward.9} parent=47 // pred_region
        %p1988 = scmp.lt.s32.totalorder %s20, 1
        %s1989 = scalar_select %p1988, %s20, 1
        %s1990 = smul.addr %s1989, 4
        %s1991 = scalar_lea.vmem %s3, %s1990
      $region52: #{forward.9} parent=47 // pred_fallthru
        _
    $region48: #{forward.9} parent=5 // pred_fallthru
      _
  $region6: #{forward.9} parent=0 // loop_footer
    %s13 = sadd.s32 1, %s9
  $region7: #{forward.9} parent=0 // loop_footer_branch
    %8 = sbr.rel target = $region3
  $region8: #{forward.9} parent=0 // loop_exit
    _

// kernel: forward.15
$region0: #{forward.15}
  #allocation0 [shape = 'u32[]', space=smem, size = 0x4, offset = 0x4, fixed_abs, tag = 'smem constant byte address 0x4 - core index']
  #allocation1 [shape = 'u32[144,128]{1,0:T(1,128)}', space=vmem, size = 0x12000, scoped, tag = 'internal scratch']
  #allocation2 [shape = 'f32[2,512]{1,0:T(2,128)}', space=vmem, size = 0x1000, scoped, tag = 'scratch operand']
  %s0 = inlined_call_operand.vmem [shape: f32[2,3072], index: 0, kind: input, shape index: {}]
  %s1 = inlined_call_operand.vmem [shape: f32[3072,512], index: 1, kind: input, shape index: {}]
  %s2 = inlined_call_operand.vmem [shape: f32[1,512], index: 2, kind: input, shape index: {}]
  %s3 = inlined_call_operand.vmem [shape: f32[2,512], index: 3, kind: output, shape index: {}]
  %s4 = sld [smem:[#allocation0]]
  $region53: #{forward.15} parent=0
    _
  %s6 = ssub.s32 1, %s4
  %s7 = scalar_select 0, %s6, %s4
  loop: start=0, step=1, limit=8
  $region2: #{forward.15} parent=0 // loop_pre_header
    _
  $region3: #{forward.15} parent=0 // loop_header
    %s9 = sphi 0, %s13
    %p10 = scmp.ge.s32.totalorder %s9, 8
    %s19 = sphi 0, %s21
    %s22 = sphi 0, %s19
    %s23 = sphi 0, %s22
    %s39 = sphi 0, %s23
    %s45 = sphi 0, %s47
    %s48 = sphi 0, %s45
    %s49 = sphi 0, %s48
    %s65 = sphi 0, %s49
    %s69 = sphi 0, %s69
    %s71 = sphi 0, %s69
    %s72 = sphi 0, %s71
    %s86 = sphi 0, %s72
    %s90 = sphi 0, %s90
    %s92 = sphi 0, %s90
    %s93 = sphi 0, %s92
    %s107 = sphi 0, %s93
  $region4: #{forward.15} parent=0 // loop_header_branch
    %12 = sbr.rel (%p10) target = $region8
  $region5: #{forward.15} parent=0 // loop_body
    %s14 = ssub.s32 %s9, 1
    %s15 = ssub.s32 %s9, 2
    %s16 = sadd.s32 %s9, 1
    %s17 = ssub.s32 %s9, %s16
    %p18 = scmp.eq.s32.totalorder %s17, 0
    %s20 = sadd.s32 %s19, 1
    %s21 = scalar_select %p18, %s19, %s20
    %p24 = pneg %p18
    %p25 = scmp.eq.s32.totalorder %s9, 5
    %p26 = por %p24, %p25
    %p27 = scmp.ne.s32.totalorder %s19, %s22
    %p28 = scmp.eq.s32.totalorder %s9, 0
    %p29 = por %p27, %p28
    %p30 = scmp.ne.s32.totalorder %s19, %s22
    %p31 = scmp.eq.s32.totalorder %s14, 5
    %p32 = por %p30, %p31
    %p33 = scmp.ne.s32.totalorder %s22, %s23
    %p34 = scmp.eq.s32.totalorder %s14, 0
    %p35 = por %p33, %p34
    %p36 = scmp.ne.s32.totalorder %s22, %s23
    %p37 = scmp.eq.s32.totalorder %s15, 5
    %p38 = por %p36, %p37
    %p40 = scmp.ne.s32.totalorder %s23, %s39
    %p41 = scmp.eq.s32.totalorder %s15, 0
    %p42 = por %p40, %p41
    %s43 = ssub.s32 %s9, %s16
    %p44 = scmp.eq.s32.totalorder %s43, 0
    %s46 = sadd.s32 %s45, 1
    %s47 = scalar_select %p44, %s45, %s46
    %p50 = pneg %p44
    %p51 = scmp.eq.s32.totalorder %s9, 5
    %p52 = por %p50, %p51
    %p53 = scmp.ne.s32.totalorder %s45, %s48
    %p54 = scmp.eq.s32.totalorder %s9, 0
    %p55 = por %p53, %p54
    %p56 = scmp.ne.s32.totalorder %s45, %s48
    %p57 = scmp.eq.s32.totalorder %s14, 5
    %p58 = por %p56, %p57
    %p59 = scmp.ne.s32.totalorder %s48, %s49
    %p60 = scmp.eq.s32.totalorder %s14, 0
    %p61 = por %p59, %p60
    %p62 = scmp.ne.s32.totalorder %s48, %s49
    %p63 = scmp.eq.s32.totalorder %s15, 5
    %p64 = por %p62, %p63
    %p66 = scmp.ne.s32.totalorder %s49, %s65
    %p67 = scmp.eq.s32.totalorder %s15, 0
    %p68 = por %p66, %p67
    %s70 = sadd.s32 %s69, 1
    %p73 = scmp.eq.s32.totalorder %s9, 5
    %p74 = scmp.ne.s32.totalorder %s69, %s71
    %p75 = scmp.eq.s32.totalorder %s9, 0
    %p76 = por %p74, %p75
    %p77 = scmp.ne.s32.totalorder %s69, %s71
    %p78 = scmp.eq.s32.totalorder %s14, 5
    %p79 = por %p77, %p78
    %p80 = scmp.ne.s32.totalorder %s71, %s72
    %p81 = scmp.eq.s32.totalorder %s14, 0
    %p82 = por %p80, %p81
    %p83 = scmp.ne.s32.totalorder %s71, %s72
    %p84 = scmp.eq.s32.totalorder %s15, 5
    %p85 = por %p83, %p84
    %p87 = scmp.ne.s32.totalorder %s72, %s86
    %p88 = scmp.eq.s32.totalorder %s15, 0
    %p89 = por %p87, %p88
    %s91 = sadd.s32 %s90, 1
    %p94 = scmp.eq.s32.totalorder %s9, 5
    %p95 = scmp.ne.s32.totalorder %s90, %s92
    %p96 = scmp.eq.s32.totalorder %s9, 0
    %p97 = por %p95, %p96
    %p98 = scmp.ne.s32.totalorder %s90, %s92
    %p99 = scmp.eq.s32.totalorder %s14, 5
    %p100 = por %p98, %p99
    %p101 = scmp.ne.s32.totalorder %s92, %s93
    %p102 = scmp.eq.s32.totalorder %s14, 0
    %p103 = por %p101, %p102
    %p104 = scmp.ne.s32.totalorder %s92, %s93
    %p105 = scmp.eq.s32.totalorder %s15, 5
    %p106 = por %p104, %p105
    %p108 = scmp.ne.s32.totalorder %s93, %s107
    %p109 = scmp.eq.s32.totalorder %s15, 0
    %p110 = por %p108, %p109
    %p111 = scmp.le.s32.totalorder 1, %s9
    %p112 = scmp.lt.s32.totalorder %s9, 7
    %p113 = pnand %p111, %p112
    %p114 = pneg %p113
    // Predicated region
    $region9: #{forward.15} parent=5 // pred_check
      _
    $region10: #{forward.15} parent=5 // pred_check_branch
      %116 = sbr.rel (%p113) target = $region12
    $region11: #{forward.15} parent=5 // pred_region
      %s117 = ssub.s32 %s9, 1
      // Predicated region
      $region13: #{forward.15} parent=11 // pred_check
        %p118 = pneg %p82
      $region14: #{forward.15} parent=11 // pred_check_branch
        %120 = sbr.rel (%p118) target = $region16
      $region15: #{forward.15} parent=11 // pred_region
        _
      $region16: #{forward.15} parent=11 // pred_fallthru
        _
    $region12: #{forward.15} parent=5 // pred_fallthru
      _
    %p121 = scmp.lt.s32.totalorder %s9, 6
    // Predicated region
    $region17: #{forward.15} parent=5 // pred_check
      %p122 = pneg %p121
    $region18: #{forward.15} parent=5 // pred_check_branch
      %124 = sbr.rel (%p122) target = $region20
    $region19: #{forward.15} parent=5 // pred_region
      // Predicated region
      $region21: #{forward.15} parent=19 // pred_check
        %p125 = pneg %p29
      $region22: #{forward.15} parent=19 // pred_check_branch
        %127 = sbr.rel (%p125) target = $region24
      $region23: #{forward.15} parent=19 // pred_region
        %s128 = smul.u32 4, %s9
        %p129 = scmp.lt.s32.totalorder %s128, 23
        %s130 = scalar_select %p129, %s128, 23
        %s131 = smul.addr %s130, 2
        %s132 = scalar_lea.vmem %s0, %s131
        %s133 = smul.u32 4, %s9
      $region24: #{forward.15} parent=19 // pred_fallthru
        _
      // Predicated region
      $region25: #{forward.15} parent=19 // pred_check
        %p134 = pneg %p55
      $region26: #{forward.15} parent=19 // pred_check_branch
        %136 = sbr.rel (%p134) target = $region28
      $region27: #{forward.15} parent=19 // pred_region
        %s137 = smul.u32 64, %s9
        %p138 = scmp.lt.s32.totalorder %s137, 383
        %s139 = scalar_select %p138, %s137, 383
        %s140 = smul.addr %s139, 4
        %s141 = smul.addr %s140, 8
        %s142 = scalar_lea.vmem %s1, %s141
        %s143 = smul.u32 64, %s9
      $region28: #{forward.15} parent=19 // pred_fallthru
        _
    $region20: #{forward.15} parent=5 // pred_fallthru
      _
    %p144 = scmp.le.s32.totalorder 1, %s9
    %p145 = scmp.lt.s32.totalorder %s9, 7
    %p146 = pnand %p144, %p145
    %p147 = pneg %p146
    // Predicated region
    $region29: #{forward.15} parent=5 // pred_check
      _
    $region30: #{forward.15} parent=5 // pred_check_branch
      %149 = sbr.rel (%p146) target = $region32
    $region31: #{forward.15} parent=5 // pred_region
      %s150 = ssub.s32 %s9, 1
      %s151 = smul.u32 4, %s14
      %p152 = scmp.lt.s32.totalorder %s151, 23
      %s153 = scalar_select %p152, %s151, 23
      %s154 = smul.addr %s153, 2
      %s155 = scalar_lea.vmem %s0, %s154
      %p156 = pneg %p35
      %p157 = pneg %p32
      %s158 = smul.u32 64, %s14
      %p159 = scmp.lt.s32.totalorder %s158, 383
      %s160 = scalar_select %p159, %s158, 383
      %s161 = smul.addr %s160, 4
      %s162 = smul.addr %s161, 8
      %s163 = scalar_lea.vmem %s1, %s162
      %p164 = pneg %p61
      %p165 = pneg %p58
      %p166 = pneg %p82
      %p167 = pneg %p79
      %p168 = pneg %p103
      %p169 = pneg %p100
      %s170 = smul.u32 4, %s14
      %p171 = scmp.lt.s32.totalorder %s170, 23
      %s172 = scalar_select %p171, %s170, 23
      %s173 = smul.addr %s172, 2
      %s174 = scalar_lea.vmem %s0, %s173
      %s175 = smul.u32 4, %s14
      %s176 = smul.u32 64, %s14
      %p177 = scmp.lt.s32.totalorder %s176, 383
      %s178 = scalar_select %p177, %s176, 383
      %s179 = smul.addr %s178, 4
      %s180 = smul.addr %s179, 8
      %s181 = scalar_lea.vmem %s1, %s180
      %s182 = smul.u32 64, %s14
      %p183 = scmp.eq.s32.totalorder %s14, 0
      // Predicated region
      $region33: #{forward.15} parent=31 // pred_check
        %p184 = pneg %p183
      $region34: #{forward.15} parent=31 // pred_check_branch
        %186 = sbr.rel (%p184) target = $region36
      $region35: #{forward.15} parent=31 // pred_region
        %187 = vst [vmem:[#allocation2] sm:$0xff] 0.0
      $region36: #{forward.15} parent=31 // pred_fallthru
        _
      %v188 = vld [vmem:[#allocation2] sm:$0xff]
      %v189 = vld [vmem:[%s174] sm:$0xff]
      %v190 = vld [vmem:[%s181] sm:$0xff]
      %v191 = vld [vmem:[%s181 + $0x8] sm:$0xff]
      %v192 = vld [vmem:[%s181 + $0x10] sm:$0xff]
      %v193 = vld [vmem:[%s181 + $0x18] sm:$0xff]
      %v194 = vld [vmem:[%s181 + $0x20] sm:$0xff]
      %v195 = vld [vmem:[%s181 + $0x28] sm:$0xff]
      %v196 = vld [vmem:[%s181 + $0x30] sm:$0xff]
      %v197 = vld [vmem:[%s181 + $0x38] sm:$0xff]
      %v198 = vld [vmem:[%s181 + $0x40] sm:$0xff]
      %v199 = vld [vmem:[%s181 + $0x48] sm:$0xff]
      %v200 = vld [vmem:[%s181 + $0x50] sm:$0xff]
      %v201 = vld [vmem:[%s181 + $0x58] sm:$0xff]
      %v202 = vld [vmem:[%s181 + $0x60] sm:$0xff]
      %v203 = vld [vmem:[%s181 + $0x68] sm:$0xff]
      %v204 = vld [vmem:[%s181 + $0x70] sm:$0xff]
      %v205 = vld [vmem:[%s181 + $0x78] sm:$0xff]
      %v206 = vld [vmem:[%s181 + $0x80] sm:$0xff]
      %v207 = vld [vmem:[%s181 + $0x88] sm:$0xff]
      %v208 = vld [vmem:[%s181 + $0x90] sm:$0xff]
      %v209 = vld [vmem:[%s181 + $0x98] sm:$0xff]
      %v210 = vld [vmem:[%s181 + $0xa0] sm:$0xff]
      %v211 = vld [vmem:[%s181 + $0xa8] sm:$0xff]
      %v212 = vld [vmem:[%s181 + $0xb0] sm:$0xff]
      %v213 = vld [vmem:[%s181 + $0xb8] sm:$0xff]
      %v214 = vld [vmem:[%s181 + $0xc0] sm:$0xff]
      %v215 = vld [vmem:[%s181 + $0xc8] sm:$0xff]
      %v216 = vld [vmem:[%s181 + $0xd0] sm:$0xff]
      %v217 = vld [vmem:[%s181 + $0xd8] sm:$0xff]
      %v218 = vld [vmem:[%s181 + $0xe0] sm:$0xff]
      %v219 = vld [vmem:[%s181 + $0xe8] sm:$0xff]
      %v220 = vld [vmem:[%s181 + $0xf0] sm:$0xff]
      %v221 = vld [vmem:[%s181 + $0xf8] sm:$0xff]
      %v222 = vld [vmem:[%s181 + $0x100] sm:$0xff]
      %v223 = vld [vmem:[%s181 + $0x108] sm:$0xff]
      %v224 = vld [vmem:[%s181 + $0x110] sm:$0xff]
      %v225 = vld [vmem:[%s181 + $0x118] sm:$0xff]
      %v226 = vld [vmem:[%s181 + $0x120] sm:$0xff]
      %v227 = vld [vmem:[%s181 + $0x128] sm:$0xff]
      %v228 = vld [vmem:[%s181 + $0x130] sm:$0xff]
      %v229 = vld [vmem:[%s181 + $0x138] sm:$0xff]
      %v230 = vld [vmem:[%s181 + $0x140] sm:$0xff]
      %v231 = vld [vmem:[%s181 + $0x148] sm:$0xff]
      %v232 = vld [vmem:[%s181 + $0x150] sm:$0xff]
      %v233 = vld [vmem:[%s181 + $0x158] sm:$0xff]
      %v234 = vld [vmem:[%s181 + $0x160] sm:$0xff]
      %v235 = vld [vmem:[%s181 + $0x168] sm:$0xff]
      %v236 = vld [vmem:[%s181 + $0x170] sm:$0xff]
      %v237 = vld [vmem:[%s181 + $0x178] sm:$0xff]
      %v238 = vld [vmem:[%s181 + $0x180] sm:$0xff]
      %v239 = vld [vmem:[%s181 + $0x188] sm:$0xff]
      %v240 = vld [vmem:[%s181 + $0x190] sm:$0xff]
      %v241 = vld [vmem:[%s181 + $0x198] sm:$0xff]
      %v242 = vld [vmem:[%s181 + $0x1a0] sm:$0xff]
      %v243 = vld [vmem:[%s181 + $0x1a8] sm:$0xff]
      %v244 = vld [vmem:[%s181 + $0x1b0] sm:$0xff]
      %v245 = vld [vmem:[%s181 + $0x1b8] sm:$0xff]
      %v246 = vld [vmem:[%s181 + $0x1c0] sm:$0xff]
      %v247 = vld [vmem:[%s181 + $0x1c8] sm:$0xff]
      %v248 = vld [vmem:[%s181 + $0x1d0] sm:$0xff]
      %v249 = vld [vmem:[%s181 + $0x1d8] sm:$0xff]
      %v250 = vld [vmem:[%s181 + $0x1e0] sm:$0xff]
      %v251 = vld [vmem:[%s181 + $0x1e8] sm:$0xff]
      %v252 = vld [vmem:[%s181 + $0x1f0] sm:$0xff]
      %v253 = vld [vmem:[%s181 + $0x1f8] sm:$0xff]
      %v254 = vld [vmem:[%s181 + $0x200] sm:$0xff]
      %v255 = vld [vmem:[%s181 + $0x208] sm:$0xff]
      %v256 = vld [vmem:[%s181 + $0x210] sm:$0xff]
      %v257 = vld [vmem:[%s181 + $0x218] sm:$0xff]
      %v258 = vld [vmem:[%s181 + $0x220] sm:$0xff]
      %v259 = vld [vmem:[%s181 + $0x228] sm:$0xff]
      %v260 = vld [vmem:[%s181 + $0x230] sm:$0xff]
      %v261 = vld [vmem:[%s181 + $0x238] sm:$0xff]
      %v262 = vld [vmem:[%s181 + $0x240] sm:$0xff]
      %v263 = vld [vmem:[%s181 + $0x248] sm:$0xff]
      %v264 = vld [vmem:[%s181 + $0x250] sm:$0xff]
      %v265 = vld [vmem:[%s181 + $0x258] sm:$0xff]
      %v266 = vld [vmem:[%s181 + $0x260] sm:$0xff]
      %v267 = vld [vmem:[%s181 + $0x268] sm:$0xff]
      %v268 = vld [vmem:[%s181 + $0x270] sm:$0xff]
      %v269 = vld [vmem:[%s181 + $0x278] sm:$0xff]
      %v270 = vld [vmem:[%s181 + $0x280] sm:$0xff]
      %v271 = vld [vmem:[%s181 + $0x288] sm:$0xff]
      %v272 = vld [vmem:[%s181 + $0x290] sm:$0xff]
      %v273 = vld [vmem:[%s181 + $0x298] sm:$0xff]
      %v274 = vld [vmem:[%s181 + $0x2a0] sm:$0xff]
      %v275 = vld [vmem:[%s181 + $0x2a8] sm:$0xff]
      %v276 = vld [vmem:[%s181 + $0x2b0] sm:$0xff]
      %v277 = vld [vmem:[%s181 + $0x2b8] sm:$0xff]
      %v278 = vld [vmem:[%s181 + $0x2c0] sm:$0xff]
      %v279 = vld [vmem:[%s181 + $0x2c8] sm:$0xff]
      %v280 = vld [vmem:[%s181 + $0x2d0] sm:$0xff]
      %v281 = vld [vmem:[%s181 + $0x2d8] sm:$0xff]
      %v282 = vld [vmem:[%s181 + $0x2e0] sm:$0xff]
      %v283 = vld [vmem:[%s181 + $0x2e8] sm:$0xff]
      %v284 = vld [vmem:[%s181 + $0x2f0] sm:$0xff]
      %v285 = vld [vmem:[%s181 + $0x2f8] sm:$0xff]
      %v286 = vld [vmem:[%s181 + $0x300] sm:$0xff]
      %v287 = vld [vmem:[%s181 + $0x308] sm:$0xff]
      %v288 = vld [vmem:[%s181 + $0x310] sm:$0xff]
      %v289 = vld [vmem:[%s181 + $0x318] sm:$0xff]
      %v290 = vld [vmem:[%s181 + $0x320] sm:$0xff]
      %v291 = vld [vmem:[%s181 + $0x328] sm:$0xff]
      %v292 = vld [vmem:[%s181 + $0x330] sm:$0xff]
      %v293 = vld [vmem:[%s181 + $0x338] sm:$0xff]
      %v294 = vld [vmem:[%s181 + $0x340] sm:$0xff]
      %v295 = vld [vmem:[%s181 + $0x348] sm:$0xff]
      %v296 = vld [vmem:[%s181 + $0x350] sm:$0xff]
      %v297 = vld [vmem:[%s181 + $0x358] sm:$0xff]
      %v298 = vld [vmem:[%s181 + $0x360] sm:$0xff]
      %v299 = vld [vmem:[%s181 + $0x368] sm:$0xff]
      %v300 = vld [vmem:[%s181 + $0x370] sm:$0xff]
      %v301 = vld [vmem:[%s181 + $0x378] sm:$0xff]
      %v302 = vld [vmem:[%s181 + $0x380] sm:$0xff]
      %v303 = vld [vmem:[%s181 + $0x388] sm:$0xff]
      %v304 = vld [vmem:[%s181 + $0x390] sm:$0xff]
      %v305 = vld [vmem:[%s181 + $0x398] sm:$0xff]
      %v306 = vld [vmem:[%s181 + $0x3a0] sm:$0xff]
      %v307 = vld [vmem:[%s181 + $0x3a8] sm:$0xff]
      %v308 = vld [vmem:[%s181 + $0x3b0] sm:$0xff]
      %v309 = vld [vmem:[%s181 + $0x3b8] sm:$0xff]
      %v310 = vld [vmem:[%s181 + $0x3c0] sm:$0xff]
      %v311 = vld [vmem:[%s181 + $0x3c8] sm:$0xff]
      %v312 = vld [vmem:[%s181 + $0x3d0] sm:$0xff]
      %v313 = vld [vmem:[%s181 + $0x3d8] sm:$0xff]
      %v314 = vld [vmem:[%s181 + $0x3e0] sm:$0xff]
      %v315 = vld [vmem:[%s181 + $0x3e8] sm:$0xff]
      %v316 = vld [vmem:[%s181 + $0x3f0] sm:$0xff]
      %v317 = vld [vmem:[%s181 + $0x3f8] sm:$0xff]
      %v318 = vld [vmem:[%s181 + $0x400] sm:$0xff]
      %v319 = vld [vmem:[%s181 + $0x408] sm:$0xff]
      %v320 = vld [vmem:[%s181 + $0x410] sm:$0xff]
      %v321 = vld [vmem:[%s181 + $0x418] sm:$0xff]
      %v322 = vld [vmem:[%s181 + $0x420] sm:$0xff]
      %v323 = vld [vmem:[%s181 + $0x428] sm:$0xff]
      %v324 = vld [vmem:[%s181 + $0x430] sm:$0xff]
      %v325 = vld [vmem:[%s181 + $0x438] sm:$0xff]
      %v326 = vld [vmem:[%s181 + $0x440] sm:$0xff]
      %v327 = vld [vmem:[%s181 + $0x448] sm:$0xff]
      %v328 = vld [vmem:[%s181 + $0x450] sm:$0xff]
      %v329 = vld [vmem:[%s181 + $0x458] sm:$0xff]
      %v330 = vld [vmem:[%s181 + $0x460] sm:$0xff]
      %v331 = vld [vmem:[%s181 + $0x468] sm:$0xff]
      %v332 = vld [vmem:[%s181 + $0x470] sm:$0xff]
      %v333 = vld [vmem:[%s181 + $0x478] sm:$0xff]
      %v334 = vld [vmem:[%s181 + $0x480] sm:$0xff]
      %v335 = vld [vmem:[%s181 + $0x488] sm:$0xff]
      %v336 = vld [vmem:[%s181 + $0x490] sm:$0xff]
      %v337 = vld [vmem:[%s181 + $0x498] sm:$0xff]
      %v338 = vld [vmem:[%s181 + $0x4a0] sm:$0xff]
      %v339 = vld [vmem:[%s181 + $0x4a8] sm:$0xff]
      %v340 = vld [vmem:[%s181 + $0x4b0] sm:$0xff]
      %v341 = vld [vmem:[%s181 + $0x4b8] sm:$0xff]
      %v342 = vld [vmem:[%s181 + $0x4c0] sm:$0xff]
      %v343 = vld [vmem:[%s181 + $0x4c8] sm:$0xff]
      %v344 = vld [vmem:[%s181 + $0x4d0] sm:$0xff]
      %v345 = vld [vmem:[%s181 + $0x4d8] sm:$0xff]
      %v346 = vld [vmem:[%s181 + $0x4e0] sm:$0xff]
      %v347 = vld [vmem:[%s181 + $0x4e8] sm:$0xff]
      %v348 = vld [vmem:[%s181 + $0x4f0] sm:$0xff]
      %v349 = vld [vmem:[%s181 + $0x4f8] sm:$0xff]
      %v350 = vld [vmem:[%s181 + $0x500] sm:$0xff]
      %v351 = vld [vmem:[%s181 + $0x508] sm:$0xff]
      %v352 = vld [vmem:[%s181 + $0x510] sm:$0xff]
      %v353 = vld [vmem:[%s181 + $0x518] sm:$0xff]
      %v354 = vld [vmem:[%s181 + $0x520] sm:$0xff]
      %v355 = vld [vmem:[%s181 + $0x528] sm:$0xff]
      %v356 = vld [vmem:[%s181 + $0x530] sm:$0xff]
      %v357 = vld [vmem:[%s181 + $0x538] sm:$0xff]
      %v358 = vld [vmem:[%s181 + $0x540] sm:$0xff]
      %v359 = vld [vmem:[%s181 + $0x548] sm:$0xff]
      %v360 = vld [vmem:[%s181 + $0x550] sm:$0xff]
      %v361 = vld [vmem:[%s181 + $0x558] sm:$0xff]
      %v362 = vld [vmem:[%s181 + $0x560] sm:$0xff]
      %v363 = vld [vmem:[%s181 + $0x568] sm:$0xff]
      %v364 = vld [vmem:[%s181 + $0x570] sm:$0xff]
      %v365 = vld [vmem:[%s181 + $0x578] sm:$0xff]
      %v366 = vld [vmem:[%s181 + $0x580] sm:$0xff]
      %v367 = vld [vmem:[%s181 + $0x588] sm:$0xff]
      %v368 = vld [vmem:[%s181 + $0x590] sm:$0xff]
      %v369 = vld [vmem:[%s181 + $0x598] sm:$0xff]
      %v370 = vld [vmem:[%s181 + $0x5a0] sm:$0xff]
      %v371 = vld [vmem:[%s181 + $0x5a8] sm:$0xff]
      %v372 = vld [vmem:[%s181 + $0x5b0] sm:$0xff]
      %v373 = vld [vmem:[%s181 + $0x5b8] sm:$0xff]
      %v374 = vld [vmem:[%s181 + $0x5c0] sm:$0xff]
      %v375 = vld [vmem:[%s181 + $0x5c8] sm:$0xff]
      %v376 = vld [vmem:[%s181 + $0x5d0] sm:$0xff]
      %v377 = vld [vmem:[%s181 + $0x5d8] sm:$0xff]
      %v378 = vld [vmem:[%s181 + $0x5e0] sm:$0xff]
      %v379 = vld [vmem:[%s181 + $0x5e8] sm:$0xff]
      %v380 = vld [vmem:[%s181 + $0x5f0] sm:$0xff]
      %v381 = vld [vmem:[%s181 + $0x5f8] sm:$0xff]
      %v382 = vld [vmem:[%s181 + $0x600] sm:$0xff]
      %v383 = vld [vmem:[%s181 + $0x608] sm:$0xff]
      %v384 = vld [vmem:[%s181 + $0x610] sm:$0xff]
      %v385 = vld [vmem:[%s181 + $0x618] sm:$0xff]
      %v386 = vld [vmem:[%s181 + $0x620] sm:$0xff]
      %v387 = vld [vmem:[%s181 + $0x628] sm:$0xff]
      %v388 = vld [vmem:[%s181 + $0x630] sm:$0xff]
      %v389 = vld [vmem:[%s181 + $0x638] sm:$0xff]
      %v390 = vld [vmem:[%s181 + $0x640] sm:$0xff]
      %v391 = vld [vmem:[%s181 + $0x648] sm:$0xff]
      %v392 = vld [vmem:[%s181 + $0x650] sm:$0xff]
      %v393 = vld [vmem:[%s181 + $0x658] sm:$0xff]
      %v394 = vld [vmem:[%s181 + $0x660] sm:$0xff]
      %v395 = vld [vmem:[%s181 + $0x668] sm:$0xff]
      %v396 = vld [vmem:[%s181 + $0x670] sm:$0xff]
      %v397 = vld [vmem:[%s181 + $0x678] sm:$0xff]
      %v398 = vld [vmem:[%s181 + $0x680] sm:$0xff]
      %v399 = vld [vmem:[%s181 + $0x688] sm:$0xff]
      %v400 = vld [vmem:[%s181 + $0x690] sm:$0xff]
      %v401 = vld [vmem:[%s181 + $0x698] sm:$0xff]
      %v402 = vld [vmem:[%s181 + $0x6a0] sm:$0xff]
      %v403 = vld [vmem:[%s181 + $0x6a8] sm:$0xff]
      %v404 = vld [vmem:[%s181 + $0x6b0] sm:$0xff]
      %v405 = vld [vmem:[%s181 + $0x6b8] sm:$0xff]
      %v406 = vld [vmem:[%s181 + $0x6c0] sm:$0xff]
      %v407 = vld [vmem:[%s181 + $0x6c8] sm:$0xff]
      %v408 = vld [vmem:[%s181 + $0x6d0] sm:$0xff]
      %v409 = vld [vmem:[%s181 + $0x6d8] sm:$0xff]
      %v410 = vld [vmem:[%s181 + $0x6e0] sm:$0xff]
      %v411 = vld [vmem:[%s181 + $0x6e8] sm:$0xff]
      %v412 = vld [vmem:[%s181 + $0x6f0] sm:$0xff]
      %v413 = vld [vmem:[%s181 + $0x6f8] sm:$0xff]
      %v414 = vld [vmem:[%s181 + $0x700] sm:$0xff]
      %v415 = vld [vmem:[%s181 + $0x708] sm:$0xff]
      %v416 = vld [vmem:[%s181 + $0x710] sm:$0xff]
      %v417 = vld [vmem:[%s181 + $0x718] sm:$0xff]
      %v418 = vld [vmem:[%s181 + $0x720] sm:$0xff]
      %v419 = vld [vmem:[%s181 + $0x728] sm:$0xff]
      %v420 = vld [vmem:[%s181 + $0x730] sm:$0xff]
      %v421 = vld [vmem:[%s181 + $0x738] sm:$0xff]
      %v422 = vld [vmem:[%s181 + $0x740] sm:$0xff]
      %v423 = vld [vmem:[%s181 + $0x748] sm:$0xff]
      %v424 = vld [vmem:[%s181 + $0x750] sm:$0xff]
      %v425 = vld [vmem:[%s181 + $0x758] sm:$0xff]
      %v426 = vld [vmem:[%s181 + $0x760] sm:$0xff]
      %v427 = vld [vmem:[%s181 + $0x768] sm:$0xff]
      %v428 = vld [vmem:[%s181 + $0x770] sm:$0xff]
      %v429 = vld [vmem:[%s181 + $0x778] sm:$0xff]
      %v430 = vld [vmem:[%s181 + $0x780] sm:$0xff]
      %v431 = vld [vmem:[%s181 + $0x788] sm:$0xff]
      %v432 = vld [vmem:[%s181 + $0x790] sm:$0xff]
      %v433 = vld [vmem:[%s181 + $0x798] sm:$0xff]
      %v434 = vld [vmem:[%s181 + $0x7a0] sm:$0xff]
      %v435 = vld [vmem:[%s181 + $0x7a8] sm:$0xff]
      %v436 = vld [vmem:[%s181 + $0x7b0] sm:$0xff]
      %v437 = vld [vmem:[%s181 + $0x7b8] sm:$0xff]
      %v438 = vld [vmem:[%s181 + $0x7c0] sm:$0xff]
      %v439 = vld [vmem:[%s181 + $0x7c8] sm:$0xff]
      %v440 = vld [vmem:[%s181 + $0x7d0] sm:$0xff]
      %v441 = vld [vmem:[%s181 + $0x7d8] sm:$0xff]
      %v442 = vld [vmem:[%s181 + $0x7e0] sm:$0xff]
      %v443 = vld [vmem:[%s181 + $0x7e8] sm:$0xff]
      %v444 = vld [vmem:[%s181 + $0x7f0] sm:$0xff]
      %v445 = vld [vmem:[%s181 + $0x7f8] sm:$0xff]
      %v447 = vcombine.high %v189, %v189
      %v449 = vunpack.c.l.s4 1983009808
      %v450 = vunpack.c.0.s8 %v449
      %v451 = vlaneseq
      %v452 = vshrl.u32 %v451, 7
      %v453 = vsub.s32 %v450, %v452
      %v454 = vrot.slane %v189, %v453
      %v456 = vunpack.c.l.s4 1983009808
      %v457 = vunpack.c.0.s8 %v456
      %v458 = vlaneseq
      %v459 = vshrl.u32 %v458, 7
      %v460 = vsub.s32 %v457, %v459
      %v461 = vrot.slane %v447, %v460
      %v462 = vcombine.high %v454, %v454
      %v463 = vcombine.high %v461, %v461
      %468 = vmatprep.subr.mxu0 %v251
      %469 = vmatpush1.msra.mxu0 %v250
      %470 = vmatprep.subr.mxu0 %v247
      %471 = vmatpush1.msra.mxu0 %v246
      %472 = vmatprep.subr.mxu0 %v243
      %473 = vmatpush1.msra.mxu0 %v242
      %474 = vmatprep.subr.mxu0 %v239
      %475 = vmatpush1.msra.mxu0 %v238
      %476 = vmatprep.subr.mxu0 %v235
      %477 = vmatpush1.msra.mxu0 %v234
      %478 = vmatprep.subr.mxu0 %v231
      %479 = vmatpush1.msra.mxu0 %v230
      %480 = vmatprep.subr.mxu0 %v227
      %481 = vmatpush1.msra.mxu0 %v226
      %482 = vmatprep.subr.mxu0 %v223
      %483 = vmatpush1.msra.mxu0 %v222
      %484 = vmatprep.subr.mxu0 %v219
      %485 = vmatpush1.msra.mxu0 %v218
      %486 = vmatprep.subr.mxu0 %v215
      %487 = vmatpush1.msra.mxu0 %v214
      %488 = vmatprep.subr.mxu0 %v211
      %489 = vmatpush1.msra.mxu0 %v210
      %490 = vmatprep.subr.mxu0 %v207
      %491 = vmatpush1.msra.mxu0 %v206
      %492 = vmatprep.subr.mxu0 %v203
      %493 = vmatpush1.msra.mxu0 %v202
      %494 = vmatprep.subr.mxu0 %v199
      %495 = vmatpush1.msra.mxu0 %v198
      %496 = vmatprep.subr.mxu0 %v195
      %497 = vmatpush1.msra.mxu0 %v194
      %498 = vmatprep.subr.mxu0 %v191
      %499 = vmatpush1.msra.mxu0 %v190
      %500 = vmatprep.subr.mxu0 %v315
      %501 = vmatpush2.msra.mxu0 %v314
      %502 = vmatprep.subr.mxu0 %v311
      %503 = vmatpush2.msra.mxu0 %v310
      %504 = vmatprep.subr.mxu0 %v307
      %505 = vmatpush2.msra.mxu0 %v306
      %506 = vmatprep.subr.mxu0 %v303
      %507 = vmatpush2.msra.mxu0 %v302
      %508 = vmatprep.subr.mxu0 %v299
      %509 = vmatpush2.msra.mxu0 %v298
      %510 = vmatprep.subr.mxu0 %v295
      %511 = vmatpush2.msra.mxu0 %v294
      %512 = vmatprep.subr.mxu0 %v291
      %513 = vmatpush2.msra.mxu0 %v290
      %514 = vmatprep.subr.mxu0 %v287
      %515 = vmatpush2.msra.mxu0 %v286
      %516 = vmatprep.subr.mxu0 %v283
      %517 = vmatpush2.msra.mxu0 %v282
      %518 = vmatprep.subr.mxu0 %v279
      %519 = vmatpush2.msra.mxu0 %v278
      %520 = vmatprep.subr.mxu0 %v275
      %521 = vmatpush2.msra.mxu0 %v274
      %522 = vmatprep.subr.mxu0 %v271
      %523 = vmatpush2.msra.mxu0 %v270
      %524 = vmatprep.subr.mxu0 %v267
      %525 = vmatpush2.msra.mxu0 %v266
      %526 = vmatprep.subr.mxu0 %v263
      %527 = vmatpush2.msra.mxu0 %v262
      %528 = vmatprep.subr.mxu0 %v259
      %529 = vmatpush2.msra.mxu0 %v258
      %530 = vmatprep.subr.mxu0 %v255
      %531 = vmatpush2.msra.mxu0 %v254
      %532 = vmatprep.mubr.f32.mxu0 %v462
      %533 = vmatmul.mubr.f32.gmra.mxu0 %v454
      %v534 = vpop.f32.mrf.mxu0
      %v535 = vadd.f32 0.0, %v534
      %v536 = vpop.f32.mrf.mxu0
      %v537 = vadd.f32 0.0, %v536
      %538 = vdwg.mxu0
      %539 = vmatprep.subr.mxu0 %v379
      %540 = vmatpush1.msra.mxu0 %v378
      %541 = vmatprep.subr.mxu0 %v375
      %542 = vmatpush1.msra.mxu0 %v374
      %543 = vmatprep.subr.mxu0 %v371
      %544 = vmatpush1.msra.mxu0 %v370
      %545 = vmatprep.subr.mxu0 %v367
      %546 = vmatpush1.msra.mxu0 %v366
      %547 = vmatprep.subr.mxu0 %v363
      %548 = vmatpush1.msra.mxu0 %v362
      %549 = vmatprep.subr.mxu0 %v359
      %550 = vmatpush1.msra.mxu0 %v358
      %551 = vmatprep.subr.mxu0 %v355
      %552 = vmatpush1.msra.mxu0 %v354
      %553 = vmatprep.subr.mxu0 %v351
      %554 = vmatpush1.msra.mxu0 %v350
      %555 = vmatprep.subr.mxu0 %v347
      %556 = vmatpush1.msra.mxu0 %v346
      %557 = vmatprep.subr.mxu0 %v343
      %558 = vmatpush1.msra.mxu0 %v342
      %559 = vmatprep.subr.mxu0 %v339
      %560 = vmatpush1.msra.mxu0 %v338
      %561 = vmatprep.subr.mxu0 %v335
      %562 = vmatpush1.msra.mxu0 %v334
      %563 = vmatprep.subr.mxu0 %v331
      %564 = vmatpush1.msra.mxu0 %v330
      %565 = vmatprep.subr.mxu0 %v327
      %566 = vmatpush1.msra.mxu0 %v326
      %567 = vmatprep.subr.mxu0 %v323
      %568 = vmatpush1.msra.mxu0 %v322
      %569 = vmatprep.subr.mxu0 %v319
      %570 = vmatpush1.msra.mxu0 %v318
      %571 = vmatprep.subr.mxu0 %v443
      %572 = vmatpush2.msra.mxu0 %v442
      %573 = vmatprep.subr.mxu0 %v439
      %574 = vmatpush2.msra.mxu0 %v438
      %575 = vmatprep.subr.mxu0 %v435
      %576 = vmatpush2.msra.mxu0 %v434
      %577 = vmatprep.subr.mxu0 %v431
      %578 = vmatpush2.msra.mxu0 %v430
      %579 = vmatprep.subr.mxu0 %v427
      %580 = vmatpush2.msra.mxu0 %v426
      %581 = vmatprep.subr.mxu0 %v423
      %582 = vmatpush2.msra.mxu0 %v422
      %583 = vmatprep.subr.mxu0 %v419
      %584 = vmatpush2.msra.mxu0 %v418
      %585 = vmatprep.subr.mxu0 %v415
      %586 = vmatpush2.msra.mxu0 %v414
      %587 = vmatprep.subr.mxu0 %v411
      %588 = vmatpush2.msra.mxu0 %v410
      %589 = vmatprep.subr.mxu0 %v407
      %590 = vmatpush2.msra.mxu0 %v406
      %591 = vmatprep.subr.mxu0 %v403
      %592 = vmatpush2.msra.mxu0 %v402
      %593 = vmatprep.subr.mxu0 %v399
      %594 = vmatpush2.msra.mxu0 %v398
      %595 = vmatprep.subr.mxu0 %v395
      %596 = vmatpush2.msra.mxu0 %v394
      %597 = vmatprep.subr.mxu0 %v391
      %598 = vmatpush2.msra.mxu0 %v390
      %599 = vmatprep.subr.mxu0 %v387
      %600 = vmatpush2.msra.mxu0 %v386
      %601 = vmatprep.subr.mxu0 %v383
      %602 = vmatpush2.msra.mxu0 %v382
      %603 = vmatprep.mubr.f32.mxu0 %v463
      %604 = vmatmul.mubr.f32.gmra.mxu0 %v461
      %v605 = vpop.f32.mrf.mxu0
      %v606 = vadd.f32 %v535, %v605
      %v607 = vpop.f32.mrf.mxu0
      %v608 = vadd.f32 %v537, %v607
      %609 = vdwg.mxu0
      %610 = vmatprep.subr.mxu0 %v253
      %611 = vmatpush1.msra.mxu0 %v252
      %612 = vmatprep.subr.mxu0 %v249
      %613 = vmatpush1.msra.mxu0 %v248
      %614 = vmatprep.subr.mxu0 %v245
      %615 = vmatpush1.msra.mxu0 %v244
      %616 = vmatprep.subr.mxu0 %v241
      %617 = vmatpush1.msra.mxu0 %v240
      %618 = vmatprep.subr.mxu0 %v237
      %619 = vmatpush1.msra.mxu0 %v236
      %620 = vmatprep.subr.mxu0 %v233
      %621 = vmatpush1.msra.mxu0 %v232
      %622 = vmatprep.subr.mxu0 %v229
      %623 = vmatpush1.msra.mxu0 %v228
      %624 = vmatprep.subr.mxu0 %v225
      %625 = vmatpush1.msra.mxu0 %v224
      %626 = vmatprep.subr.mxu0 %v221
      %627 = vmatpush1.msra.mxu0 %v220
      %628 = vmatprep.subr.mxu0 %v217
      %629 = vmatpush1.msra.mxu0 %v216
      %630 = vmatprep.subr.mxu0 %v213
      %631 = vmatpush1.msra.mxu0 %v212
      %632 = vmatprep.subr.mxu0 %v209
      %633 = vmatpush1.msra.mxu0 %v208
      %634 = vmatprep.subr.mxu0 %v205
      %635 = vmatpush1.msra.mxu0 %v204
      %636 = vmatprep.subr.mxu0 %v201
      %637 = vmatpush1.msra.mxu0 %v200
      %638 = vmatprep.subr.mxu0 %v197
      %639 = vmatpush1.msra.mxu0 %v196
      %640 = vmatprep.subr.mxu0 %v193
      %641 = vmatpush1.msra.mxu0 %v192
      %642 = vmatprep.subr.mxu0 %v317
      %643 = vmatpush2.msra.mxu0 %v316
      %644 = vmatprep.subr.mxu0 %v313
      %645 = vmatpush2.msra.mxu0 %v312
      %646 = vmatprep.subr.mxu0 %v309
      %647 = vmatpush2.msra.mxu0 %v308
      %648 = vmatprep.subr.mxu0 %v305
      %649 = vmatpush2.msra.mxu0 %v304
      %650 = vmatprep.subr.mxu0 %v301
      %651 = vmatpush2.msra.mxu0 %v300
      %652 = vmatprep.subr.mxu0 %v297
      %653 = vmatpush2.msra.mxu0 %v296
      %654 = vmatprep.subr.mxu0 %v293
      %655 = vmatpush2.msra.mxu0 %v292
      %656 = vmatprep.subr.mxu0 %v289
      %657 = vmatpush2.msra.mxu0 %v288
      %658 = vmatprep.subr.mxu0 %v285
      %659 = vmatpush2.msra.mxu0 %v284
      %660 = vmatprep.subr.mxu0 %v281
      %661 = vmatpush2.msra.mxu0 %v280
      %662 = vmatprep.subr.mxu0 %v277
      %663 = vmatpush2.msra.mxu0 %v276
      %664 = vmatprep.subr.mxu0 %v273
      %665 = vmatpush2.msra.mxu0 %v272
      %666 = vmatprep.subr.mxu0 %v269
      %667 = vmatpush2.msra.mxu0 %v268
      %668 = vmatprep.subr.mxu0 %v265
      %669 = vmatpush2.msra.mxu0 %v264
      %670 = vmatprep.subr.mxu0 %v261
      %671 = vmatpush2.msra.mxu0 %v260
      %672 = vmatprep.subr.mxu0 %v257
      %673 = vmatpush2.msra.mxu0 %v256
      %674 = vmatprep.mubr.f32.mxu0 %v462
      %675 = vmatmul.mubr.f32.gmra.mxu0 %v454
      %v676 = vpop.f32.mrf.mxu0
      %v677 = vadd.f32 0.0, %v676
      %v678 = vpop.f32.mrf.mxu0
      %v679 = vadd.f32 0.0, %v678
      %680 = vdwg.mxu0
      %681 = vmatprep.subr.mxu0 %v381
      %682 = vmatpush1.msra.mxu0 %v380
      %683 = vmatprep.subr.mxu0 %v377
      %684 = vmatpush1.msra.mxu0 %v376
      %685 = vmatprep.subr.mxu0 %v373
      %686 = vmatpush1.msra.mxu0 %v372
      %687 = vmatprep.subr.mxu0 %v369
      %688 = vmatpush1.msra.mxu0 %v368
      %689 = vmatprep.subr.mxu0 %v365
      %690 = vmatpush1.msra.mxu0 %v364
      %691 = vmatprep.subr.mxu0 %v361
      %692 = vmatpush1.msra.mxu0 %v360
      %693 = vmatprep.subr.mxu0 %v357
      %694 = vmatpush1.msra.mxu0 %v356
      %695 = vmatprep.subr.mxu0 %v353
      %696 = vmatpush1.msra.mxu0 %v352
      %697 = vmatprep.subr.mxu0 %v349
      %698 = vmatpush1.msra.mxu0 %v348
      %699 = vmatprep.subr.mxu0 %v345
      %700 = vmatpush1.msra.mxu0 %v344
      %701 = vmatprep.subr.mxu0 %v341
      %702 = vmatpush1.msra.mxu0 %v340
      %703 = vmatprep.subr.mxu0 %v337
      %704 = vmatpush1.msra.mxu0 %v336
      %705 = vmatprep.subr.mxu0 %v333
      %706 = vmatpush1.msra.mxu0 %v332
      %707 = vmatprep.subr.mxu0 %v329
      %708 = vmatpush1.msra.mxu0 %v328
      %709 = vmatprep.subr.mxu0 %v325
      %710 = vmatpush1.msra.mxu0 %v324
      %711 = vmatprep.subr.mxu0 %v321
      %712 = vmatpush1.msra.mxu0 %v320
      %713 = vmatprep.subr.mxu0 %v445
      %714 = vmatpush2.msra.mxu0 %v444
      %715 = vmatprep.subr.mxu0 %v441
      %716 = vmatpush2.msra.mxu0 %v440
      %717 = vmatprep.subr.mxu0 %v437
      %718 = vmatpush2.msra.mxu0 %v436
      %719 = vmatprep.subr.mxu0 %v433
      %720 = vmatpush2.msra.mxu0 %v432
      %721 = vmatprep.subr.mxu0 %v429
      %722 = vmatpush2.msra.mxu0 %v428
      %723 = vmatprep.subr.mxu0 %v425
      %724 = vmatpush2.msra.mxu0 %v424
      %725 = vmatprep.subr.mxu0 %v421
      %726 = vmatpush2.msra.mxu0 %v420
      %727 = vmatprep.subr.mxu0 %v417
      %728 = vmatpush2.msra.mxu0 %v416
      %729 = vmatprep.subr.mxu0 %v413
      %730 = vmatpush2.msra.mxu0 %v412
      %731 = vmatprep.subr.mxu0 %v409
      %732 = vmatpush2.msra.mxu0 %v408
      %733 = vmatprep.subr.mxu0 %v405
      %734 = vmatpush2.msra.mxu0 %v404
      %735 = vmatprep.subr.mxu0 %v401
      %736 = vmatpush2.msra.mxu0 %v400
      %737 = vmatprep.subr.mxu0 %v397
      %738 = vmatpush2.msra.mxu0 %v396
      %739 = vmatprep.subr.mxu0 %v393
      %740 = vmatpush2.msra.mxu0 %v392
      %741 = vmatprep.subr.mxu0 %v389
      %742 = vmatpush2.msra.mxu0 %v388
      %743 = vmatprep.subr.mxu0 %v385
      %744 = vmatpush2.msra.mxu0 %v384
      %745 = vmatprep.mubr.f32.mxu0 %v463
      %746 = vmatmul.mubr.f32.gmra.mxu0 %v461
      %v747 = vpop.f32.mrf.mxu0
      %v748 = vadd.f32 %v677, %v747
      %v749 = vpop.f32.mrf.mxu0
      %v750 = vadd.f32 %v679, %v749
      %751 = vdwg.mxu0
      %v756 = vcombine.low %v606, %v608
      %v757 = vcombine.low %v748, %v750
      %v759 = vunpack.c.l.s4 1983009808
      %v760 = vunpack.c.0.s8 %v759
      %v761 = vlaneseq
      %v762 = vshrl.u32 %v761, 7
      %v763 = vsub.s32 %v760, %v762
      %v764 = vrot.slane %v756, %v763
      %v766 = vunpack.c.l.s4 1983009808
      %v767 = vunpack.c.0.s8 %v766
      %v768 = vlaneseq
      %v769 = vshrl.u32 %v768, 7
      %v770 = vsub.s32 %v767, %v769
      %v771 = vrot.slane %v757, %v770
      %v772 = vcombine.low %v764, %v771
      %v774 = vadd.f32 %v188, %v772
      %775 = vst [vmem:[#allocation2] sm:$0xff] %v774
      %p776 = scmp.eq.s32.totalorder %s14, 5
      // Predicated region
      $region37: #{forward.15} parent=31 // pred_check
        %p777 = pneg %p776
      $region38: #{forward.15} parent=31 // pred_check_branch
        %779 = sbr.rel (%p777) target = $region40
      $region39: #{forward.15} parent=31 // pred_region
        %v780 = vld [vmem:[#allocation2] sm:$0xff]
        %v781 = vld [vmem:[%s2] sm:$0xf]
        %v783 = vlaneseq
        %v784 = vshrl.u32 %v783, 7
        %v785 = vsub.s32 0, %v784
        %v786 = vrot.slane %v781, %v785
        %v787 = vlaneseq
        %v788 = vshrl.u32 %v787, 7
        %v789 = vsub.s32 1, %v788
        %v790 = vrot.slane %v781, %v789
        %v791 = vlaneseq
        %v792 = vshrl.u32 %v791, 7
        %v793 = vsub.s32 2, %v792
        %v794 = vrot.slane %v781, %v793
        %v795 = vlaneseq
        %v796 = vshrl.u32 %v795, 7
        %v797 = vsub.s32 3, %v796
        %v798 = vrot.slane %v781, %v797
        %v799 = vcombine.low %v786, %v790
        %v800 = vcombine.low %v794, %v798
        %v802 = vunpack.c.l.s4 1983009808
        %v803 = vunpack.c.0.s8 %v802
        %v804 = vlaneseq
        %v805 = vshrl.u32 %v804, 7
        %v806 = vsub.s32 %v803, %v805
        %v807 = vrot.slane %v799, %v806
        %v809 = vunpack.c.l.s4 1983009808
        %v810 = vunpack.c.0.s8 %v809
        %v811 = vlaneseq
        %v812 = vshrl.u32 %v811, 7
        %v813 = vsub.s32 %v810, %v812
        %v814 = vrot.slane %v800, %v813
        %v815 = vcombine.low %v807, %v814
        %v817 = vadd.f32 %v780, %v815
        %v818 = vmax.f32 %v817, 0.0
        %819 = vst [vmem:[%s3] sm:$0xff] %v818
      $region40: #{forward.15} parent=31 // pred_fallthru
        _
      // Predicated region
      $region41: #{forward.15} parent=31 // pred_check
        %p820 = pneg %p100
      $region42: #{forward.15} parent=31 // pred_check_branch
        %822 = sbr.rel (%p820) target = $region44
      $region43: #{forward.15} parent=31 // pred_region
        _
      $region44: #{forward.15} parent=31 // pred_fallthru
        _
      // Predicated region
      $region45: #{forward.15} parent=31 // pred_check
        %p823 = pneg %p100
      $region46: #{forward.15} parent=31 // pred_check_branch
        %825 = sbr.rel (%p823) target = $region48
      $region47: #{forward.15} parent=31 // pred_region
        _
      $region48: #{forward.15} parent=31 // pred_fallthru
        _
    $region32: #{forward.15} parent=5 // pred_fallthru
      _
    %p826 = scmp.le.s32.totalorder 2, %s9
    // Predicated region
    $region49: #{forward.15} parent=5 // pred_check
      %p827 = pneg %p826
    $region50: #{forward.15} parent=5 // pred_check_branch
      %829 = sbr.rel (%p827) target = $region52
    $region51: #{forward.15} parent=5 // pred_region
      %s830 = ssub.s32 %s9, 2
    $region52: #{forward.15} parent=5 // pred_fallthru
      _
  $region6: #{forward.15} parent=0 // loop_footer
    %s13 = sadd.s32 1, %s9
  $region7: #{forward.15} parent=0 // loop_footer_branch
    %8 = sbr.rel target = $region3
  $region8: #{forward.15} parent=0 // loop_exit
    _

// kernel: forward.16
$region0: #{forward.16}
  #allocation0 [shape = 'u32[]', space=smem, size = 0x4, offset = 0x4, fixed_abs, tag = 'smem constant byte address 0x4 - core index']
  #allocation1 [shape = 'u32[144,128]{1,0:T(1,128)}', space=vmem, size = 0x12000, scoped, tag = 'internal scratch']
  #allocation2 [shape = 'f32[2,256]{1,0:T(2,128)}', space=vmem, size = 0x800, scoped, tag = 'scratch operand']
  %s0 = inlined_call_operand.vmem [shape: f32[2,512], index: 0, kind: input, shape index: {}]
  %s1 = inlined_call_operand.vmem [shape: f32[512,256], index: 1, kind: input, shape index: {}]
  %s2 = inlined_call_operand.vmem [shape: f32[1,256], index: 2, kind: input, shape index: {}]
  %s3 = inlined_call_operand.vmem [shape: f32[2,256], index: 3, kind: output, shape index: {}]
  %s4 = sld [smem:[#allocation0]]
  $region30: #{forward.16} parent=0
    _
  %s6 = ssub.s32 1, %s4
  %s7 = scalar_select 0, %s6, %s4
  // Predicated region
  $region2: #{forward.16} parent=0 // pred_check
    _
  $region3: #{forward.16} parent=0 // pred_check_branch
    %9 = sbr.rel (0) target = $region5
  $region4: #{forward.16} parent=0 // pred_region
    _
  $region5: #{forward.16} parent=0 // pred_fallthru
    _
  // Predicated region
  $region6: #{forward.16} parent=0 // pred_check
    _
  $region7: #{forward.16} parent=0 // pred_check_branch
    %11 = sbr.rel (0) target = $region9
  $region8: #{forward.16} parent=0 // pred_region
    _
  $region9: #{forward.16} parent=0 // pred_fallthru
    _
  // Predicated region
  $region10: #{forward.16} parent=0 // pred_check
    _
  $region11: #{forward.16} parent=0 // pred_check_branch
    %13 = sbr.rel (0) target = $region13
  $region12: #{forward.16} parent=0 // pred_region
    _
  $region13: #{forward.16} parent=0 // pred_fallthru
    _
  %p14 = scmp.eq.s32.totalorder 0, 0
  // Predicated region
  $region14: #{forward.16} parent=0 // pred_check
    %p15 = pneg %p14
  $region15: #{forward.16} parent=0 // pred_check_branch
    %17 = sbr.rel (%p15) target = $region17
  $region16: #{forward.16} parent=0 // pred_region
    %18 = vst [vmem:[#allocation2] sm:$0xf] 0.0
  $region17: #{forward.16} parent=0 // pred_fallthru
    _
  %v19 = vld [vmem:[#allocation2] sm:$0xf]
  %v20 = vld [vmem:[%s0] sm:$0xff]
  %v21 = vld [vmem:[%s1] sm:$0xff]
  %v22 = vld [vmem:[%s1 + $0x8] sm:$0xff]
  %v23 = vld [vmem:[%s1 + $0x10] sm:$0xff]
  %v24 = vld [vmem:[%s1 + $0x18] sm:$0xff]
  %v25 = vld [vmem:[%s1 + $0x20] sm:$0xff]
  %v26 = vld [vmem:[%s1 + $0x28] sm:$0xff]
  %v27 = vld [vmem:[%s1 + $0x30] sm:$0xff]
  %v28 = vld [vmem:[%s1 + $0x38] sm:$0xff]
  %v29 = vld [vmem:[%s1 + $0x40] sm:$0xff]
  %v30 = vld [vmem:[%s1 + $0x48] sm:$0xff]
  %v31 = vld [vmem:[%s1 + $0x50] sm:$0xff]
  %v32 = vld [vmem:[%s1 + $0x58] sm:$0xff]
  %v33 = vld [vmem:[%s1 + $0x60] sm:$0xff]
  %v34 = vld [vmem:[%s1 + $0x68] sm:$0xff]
  %v35 = vld [vmem:[%s1 + $0x70] sm:$0xff]
  %v36 = vld [vmem:[%s1 + $0x78] sm:$0xff]
  %v37 = vld [vmem:[%s1 + $0x80] sm:$0xff]
  %v38 = vld [vmem:[%s1 + $0x88] sm:$0xff]
  %v39 = vld [vmem:[%s1 + $0x90] sm:$0xff]
  %v40 = vld [vmem:[%s1 + $0x98] sm:$0xff]
  %v41 = vld [vmem:[%s1 + $0xa0] sm:$0xff]
  %v42 = vld [vmem:[%s1 + $0xa8] sm:$0xff]
  %v43 = vld [vmem:[%s1 + $0xb0] sm:$0xff]
  %v44 = vld [vmem:[%s1 + $0xb8] sm:$0xff]
  %v45 = vld [vmem:[%s1 + $0xc0] sm:$0xff]
  %v46 = vld [vmem:[%s1 + $0xc8] sm:$0xff]
  %v47 = vld [vmem:[%s1 + $0xd0] sm:$0xff]
  %v48 = vld [vmem:[%s1 + $0xd8] sm:$0xff]
  %v49 = vld [vmem:[%s1 + $0xe0] sm:$0xff]
  %v50 = vld [vmem:[%s1 + $0xe8] sm:$0xff]
  %v51 = vld [vmem:[%s1 + $0xf0] sm:$0xff]
  %v52 = vld [vmem:[%s1 + $0xf8] sm:$0xff]
  %v53 = vld [vmem:[%s1 + $0x100] sm:$0xff]
  %v54 = vld [vmem:[%s1 + $0x108] sm:$0xff]
  %v55 = vld [vmem:[%s1 + $0x110] sm:$0xff]
  %v56 = vld [vmem:[%s1 + $0x118] sm:$0xff]
  %v57 = vld [vmem:[%s1 + $0x120] sm:$0xff]
  %v58 = vld [vmem:[%s1 + $0x128] sm:$0xff]
  %v59 = vld [vmem:[%s1 + $0x130] sm:$0xff]
  %v60 = vld [vmem:[%s1 + $0x138] sm:$0xff]
  %v61 = vld [vmem:[%s1 + $0x140] sm:$0xff]
  %v62 = vld [vmem:[%s1 + $0x148] sm:$0xff]
  %v63 = vld [vmem:[%s1 + $0x150] sm:$0xff]
  %v64 = vld [vmem:[%s1 + $0x158] sm:$0xff]
  %v65 = vld [vmem:[%s1 + $0x160] sm:$0xff]
  %v66 = vld [vmem:[%s1 + $0x168] sm:$0xff]
  %v67 = vld [vmem:[%s1 + $0x170] sm:$0xff]
  %v68 = vld [vmem:[%s1 + $0x178] sm:$0xff]
  %v69 = vld [vmem:[%s1 + $0x180] sm:$0xff]
  %v70 = vld [vmem:[%s1 + $0x188] sm:$0xff]
  %v71 = vld [vmem:[%s1 + $0x190] sm:$0xff]
  %v72 = vld [vmem:[%s1 + $0x198] sm:$0xff]
  %v73 = vld [vmem:[%s1 + $0x1a0] sm:$0xff]
  %v74 = vld [vmem:[%s1 + $0x1a8] sm:$0xff]
  %v75 = vld [vmem:[%s1 + $0x1b0] sm:$0xff]
  %v76 = vld [vmem:[%s1 + $0x1b8] sm:$0xff]
  %v77 = vld [vmem:[%s1 + $0x1c0] sm:$0xff]
  %v78 = vld [vmem:[%s1 + $0x1c8] sm:$0xff]
  %v79 = vld [vmem:[%s1 + $0x1d0] sm:$0xff]
  %v80 = vld [vmem:[%s1 + $0x1d8] sm:$0xff]
  %v81 = vld [vmem:[%s1 + $0x1e0] sm:$0xff]
  %v82 = vld [vmem:[%s1 + $0x1e8] sm:$0xff]
  %v83 = vld [vmem:[%s1 + $0x1f0] sm:$0xff]
  %v84 = vld [vmem:[%s1 + $0x1f8] sm:$0xff]
  %v85 = vld [vmem:[%s1 + $0x200] sm:$0xff]
  %v86 = vld [vmem:[%s1 + $0x208] sm:$0xff]
  %v87 = vld [vmem:[%s1 + $0x210] sm:$0xff]
  %v88 = vld [vmem:[%s1 + $0x218] sm:$0xff]
  %v89 = vld [vmem:[%s1 + $0x220] sm:$0xff]
  %v90 = vld [vmem:[%s1 + $0x228] sm:$0xff]
  %v91 = vld [vmem:[%s1 + $0x230] sm:$0xff]
  %v92 = vld [vmem:[%s1 + $0x238] sm:$0xff]
  %v93 = vld [vmem:[%s1 + $0x240] sm:$0xff]
  %v94 = vld [vmem:[%s1 + $0x248] sm:$0xff]
  %v95 = vld [vmem:[%s1 + $0x250] sm:$0xff]
  %v96 = vld [vmem:[%s1 + $0x258] sm:$0xff]
  %v97 = vld [vmem:[%s1 + $0x260] sm:$0xff]
  %v98 = vld [vmem:[%s1 + $0x268] sm:$0xff]
  %v99 = vld [vmem:[%s1 + $0x270] sm:$0xff]
  %v100 = vld [vmem:[%s1 + $0x278] sm:$0xff]
  %v101 = vld [vmem:[%s1 + $0x280] sm:$0xff]
  %v102 = vld [vmem:[%s1 + $0x288] sm:$0xff]
  %v103 = vld [vmem:[%s1 + $0x290] sm:$0xff]
  %v104 = vld [vmem:[%s1 + $0x298] sm:$0xff]
  %v105 = vld [vmem:[%s1 + $0x2a0] sm:$0xff]
  %v106 = vld [vmem:[%s1 + $0x2a8] sm:$0xff]
  %v107 = vld [vmem:[%s1 + $0x2b0] sm:$0xff]
  %v108 = vld [vmem:[%s1 + $0x2b8] sm:$0xff]
  %v109 = vld [vmem:[%s1 + $0x2c0] sm:$0xff]
  %v110 = vld [vmem:[%s1 + $0x2c8] sm:$0xff]
  %v111 = vld [vmem:[%s1 + $0x2d0] sm:$0xff]
  %v112 = vld [vmem:[%s1 + $0x2d8] sm:$0xff]
  %v113 = vld [vmem:[%s1 + $0x2e0] sm:$0xff]
  %v114 = vld [vmem:[%s1 + $0x2e8] sm:$0xff]
  %v115 = vld [vmem:[%s1 + $0x2f0] sm:$0xff]
  %v116 = vld [vmem:[%s1 + $0x2f8] sm:$0xff]
  %v117 = vld [vmem:[%s1 + $0x300] sm:$0xff]
  %v118 = vld [vmem:[%s1 + $0x308] sm:$0xff]
  %v119 = vld [vmem:[%s1 + $0x310] sm:$0xff]
  %v120 = vld [vmem:[%s1 + $0x318] sm:$0xff]
  %v121 = vld [vmem:[%s1 + $0x320] sm:$0xff]
  %v122 = vld [vmem:[%s1 + $0x328] sm:$0xff]
  %v123 = vld [vmem:[%s1 + $0x330] sm:$0xff]
  %v124 = vld [vmem:[%s1 + $0x338] sm:$0xff]
  %v125 = vld [vmem:[%s1 + $0x340] sm:$0xff]
  %v126 = vld [vmem:[%s1 + $0x348] sm:$0xff]
  %v127 = vld [vmem:[%s1 + $0x350] sm:$0xff]
  %v128 = vld [vmem:[%s1 + $0x358] sm:$0xff]
  %v129 = vld [vmem:[%s1 + $0x360] sm:$0xff]
  %v130 = vld [vmem:[%s1 + $0x368] sm:$0xff]
  %v131 = vld [vmem:[%s1 + $0x370] sm:$0xff]
  %v132 = vld [vmem:[%s1 + $0x378] sm:$0xff]
  %v133 = vld [vmem:[%s1 + $0x380] sm:$0xff]
  %v134 = vld [vmem:[%s1 + $0x388] sm:$0xff]
  %v135 = vld [vmem:[%s1 + $0x390] sm:$0xff]
  %v136 = vld [vmem:[%s1 + $0x398] sm:$0xff]
  %v137 = vld [vmem:[%s1 + $0x3a0] sm:$0xff]
  %v138 = vld [vmem:[%s1 + $0x3a8] sm:$0xff]
  %v139 = vld [vmem:[%s1 + $0x3b0] sm:$0xff]
  %v140 = vld [vmem:[%s1 + $0x3b8] sm:$0xff]
  %v141 = vld [vmem:[%s1 + $0x3c0] sm:$0xff]
  %v142 = vld [vmem:[%s1 + $0x3c8] sm:$0xff]
  %v143 = vld [vmem:[%s1 + $0x3d0] sm:$0xff]
  %v144 = vld [vmem:[%s1 + $0x3d8] sm:$0xff]
  %v145 = vld [vmem:[%s1 + $0x3e0] sm:$0xff]
  %v146 = vld [vmem:[%s1 + $0x3e8] sm:$0xff]
  %v147 = vld [vmem:[%s1 + $0x3f0] sm:$0xff]
  %v148 = vld [vmem:[%s1 + $0x3f8] sm:$0xff]
  %v150 = vcombine.high %v20, %v20
  %v152 = vunpack.c.l.s4 1983009808
  %v153 = vunpack.c.0.s8 %v152
  %v154 = vlaneseq
  %v155 = vshrl.u32 %v154, 7
  %v156 = vsub.s32 %v153, %v155
  %v157 = vrot.slane %v20, %v156
  %v159 = vunpack.c.l.s4 1983009808
  %v160 = vunpack.c.0.s8 %v159
  %v161 = vlaneseq
  %v162 = vshrl.u32 %v161, 7
  %v163 = vsub.s32 %v160, %v162
  %v164 = vrot.slane %v150, %v163
  %v165 = vcombine.high %v157, %v157
  %v166 = vcombine.high %v164, %v164
  %171 = vmatprep.subr.mxu0 %v52
  %172 = vmatpush1.msra.mxu0 %v51
  %173 = vmatprep.subr.mxu0 %v50
  %174 = vmatpush1.msra.mxu0 %v49
  %175 = vmatprep.subr.mxu0 %v48
  %176 = vmatpush1.msra.mxu0 %v47
  %177 = vmatprep.subr.mxu0 %v46
  %178 = vmatpush1.msra.mxu0 %v45
  %179 = vmatprep.subr.mxu0 %v44
  %180 = vmatpush1.msra.mxu0 %v43
  %181 = vmatprep.subr.mxu0 %v42
  %182 = vmatpush1.msra.mxu0 %v41
  %183 = vmatprep.subr.mxu0 %v40
  %184 = vmatpush1.msra.mxu0 %v39
  %185 = vmatprep.subr.mxu0 %v38
  %186 = vmatpush1.msra.mxu0 %v37
  %187 = vmatprep.subr.mxu0 %v36
  %188 = vmatpush1.msra.mxu0 %v35
  %189 = vmatprep.subr.mxu0 %v34
  %190 = vmatpush1.msra.mxu0 %v33
  %191 = vmatprep.subr.mxu0 %v32
  %192 = vmatpush1.msra.mxu0 %v31
  %193 = vmatprep.subr.mxu0 %v30
  %194 = vmatpush1.msra.mxu0 %v29
  %195 = vmatprep.subr.mxu0 %v28
  %196 = vmatpush1.msra.mxu0 %v27
  %197 = vmatprep.subr.mxu0 %v26
  %198 = vmatpush1.msra.mxu0 %v25
  %199 = vmatprep.subr.mxu0 %v24
  %200 = vmatpush1.msra.mxu0 %v23
  %201 = vmatprep.subr.mxu0 %v22
  %202 = vmatpush1.msra.mxu0 %v21
  %203 = vmatprep.subr.mxu0 %v84
  %204 = vmatpush2.msra.mxu0 %v83
  %205 = vmatprep.subr.mxu0 %v82
  %206 = vmatpush2.msra.mxu0 %v81
  %207 = vmatprep.subr.mxu0 %v80
  %208 = vmatpush2.msra.mxu0 %v79
  %209 = vmatprep.subr.mxu0 %v78
  %210 = vmatpush2.msra.mxu0 %v77
  %211 = vmatprep.subr.mxu0 %v76
  %212 = vmatpush2.msra.mxu0 %v75
  %213 = vmatprep.subr.mxu0 %v74
  %214 = vmatpush2.msra.mxu0 %v73
  %215 = vmatprep.subr.mxu0 %v72
  %216 = vmatpush2.msra.mxu0 %v71
  %217 = vmatprep.subr.mxu0 %v70
  %218 = vmatpush2.msra.mxu0 %v69
  %219 = vmatprep.subr.mxu0 %v68
  %220 = vmatpush2.msra.mxu0 %v67
  %221 = vmatprep.subr.mxu0 %v66
  %222 = vmatpush2.msra.mxu0 %v65
  %223 = vmatprep.subr.mxu0 %v64
  %224 = vmatpush2.msra.mxu0 %v63
  %225 = vmatprep.subr.mxu0 %v62
  %226 = vmatpush2.msra.mxu0 %v61
  %227 = vmatprep.subr.mxu0 %v60
  %228 = vmatpush2.msra.mxu0 %v59
  %229 = vmatprep.subr.mxu0 %v58
  %230 = vmatpush2.msra.mxu0 %v57
  %231 = vmatprep.subr.mxu0 %v56
  %232 = vmatpush2.msra.mxu0 %v55
  %233 = vmatprep.subr.mxu0 %v54
  %234 = vmatpush2.msra.mxu0 %v53
  %235 = vmatprep.mubr.f32.mxu0 %v165
  %236 = vmatmul.mubr.f32.gmra.mxu0 %v157
  %v237 = vpop.f32.mrf.mxu0
  %v238 = vadd.f32 0.0, %v237
  %v239 = vpop.f32.mrf.mxu0
  %v240 = vadd.f32 0.0, %v239
  %241 = vdwg.mxu0
  %242 = vmatprep.subr.mxu0 %v116
  %243 = vmatpush1.msra.mxu0 %v115
  %244 = vmatprep.subr.mxu0 %v114
  %245 = vmatpush1.msra.mxu0 %v113
  %246 = vmatprep.subr.mxu0 %v112
  %247 = vmatpush1.msra.mxu0 %v111
  %248 = vmatprep.subr.mxu0 %v110
  %249 = vmatpush1.msra.mxu0 %v109
  %250 = vmatprep.subr.mxu0 %v108
  %251 = vmatpush1.msra.mxu0 %v107
  %252 = vmatprep.subr.mxu0 %v106
  %253 = vmatpush1.msra.mxu0 %v105
  %254 = vmatprep.subr.mxu0 %v104
  %255 = vmatpush1.msra.mxu0 %v103
  %256 = vmatprep.subr.mxu0 %v102
  %257 = vmatpush1.msra.mxu0 %v101
  %258 = vmatprep.subr.mxu0 %v100
  %259 = vmatpush1.msra.mxu0 %v99
  %260 = vmatprep.subr.mxu0 %v98
  %261 = vmatpush1.msra.mxu0 %v97
  %262 = vmatprep.subr.mxu0 %v96
  %263 = vmatpush1.msra.mxu0 %v95
  %264 = vmatprep.subr.mxu0 %v94
  %265 = vmatpush1.msra.mxu0 %v93
  %266 = vmatprep.subr.mxu0 %v92
  %267 = vmatpush1.msra.mxu0 %v91
  %268 = vmatprep.subr.mxu0 %v90
  %269 = vmatpush1.msra.mxu0 %v89
  %270 = vmatprep.subr.mxu0 %v88
  %271 = vmatpush1.msra.mxu0 %v87
  %272 = vmatprep.subr.mxu0 %v86
  %273 = vmatpush1.msra.mxu0 %v85
  %274 = vmatprep.subr.mxu0 %v148
  %275 = vmatpush2.msra.mxu0 %v147
  %276 = vmatprep.subr.mxu0 %v146
  %277 = vmatpush2.msra.mxu0 %v145
  %278 = vmatprep.subr.mxu0 %v144
  %279 = vmatpush2.msra.mxu0 %v143
  %280 = vmatprep.subr.mxu0 %v142
  %281 = vmatpush2.msra.mxu0 %v141
  %282 = vmatprep.subr.mxu0 %v140
  %283 = vmatpush2.msra.mxu0 %v139
  %284 = vmatprep.subr.mxu0 %v138
  %285 = vmatpush2.msra.mxu0 %v137
  %286 = vmatprep.subr.mxu0 %v136
  %287 = vmatpush2.msra.mxu0 %v135
  %288 = vmatprep.subr.mxu0 %v134
  %289 = vmatpush2.msra.mxu0 %v133
  %290 = vmatprep.subr.mxu0 %v132
  %291 = vmatpush2.msra.mxu0 %v131
  %292 = vmatprep.subr.mxu0 %v130
  %293 = vmatpush2.msra.mxu0 %v129
  %294 = vmatprep.subr.mxu0 %v128
  %295 = vmatpush2.msra.mxu0 %v127
  %296 = vmatprep.subr.mxu0 %v126
  %297 = vmatpush2.msra.mxu0 %v125
  %298 = vmatprep.subr.mxu0 %v124
  %299 = vmatpush2.msra.mxu0 %v123
  %300 = vmatprep.subr.mxu0 %v122
  %301 = vmatpush2.msra.mxu0 %v121
  %302 = vmatprep.subr.mxu0 %v120
  %303 = vmatpush2.msra.mxu0 %v119
  %304 = vmatprep.subr.mxu0 %v118
  %305 = vmatpush2.msra.mxu0 %v117
  %306 = vmatprep.mubr.f32.mxu0 %v166
  %307 = vmatmul.mubr.f32.gmra.mxu0 %v164
  %v308 = vpop.f32.mrf.mxu0
  %v309 = vadd.f32 %v238, %v308
  %v310 = vpop.f32.mrf.mxu0
  %v311 = vadd.f32 %v240, %v310
  %312 = vdwg.mxu0
  %v315 = vcombine.low %v309, %v311
  %v317 = vunpack.c.l.s4 1983009808
  %v318 = vunpack.c.0.s8 %v317
  %v319 = vlaneseq
  %v320 = vshrl.u32 %v319, 7
  %v321 = vsub.s32 %v318, %v320
  %v322 = vrot.slane %v315, %v321
  %v324 = vadd.f32 %v19, %v322
  %325 = vst [vmem:[#allocation2] sm:$0xf] %v324
  // Predicated region
  $region18: #{forward.16} parent=0 // pred_check
    %p326 = pneg %p14
  $region19: #{forward.16} parent=0 // pred_check_branch
    %328 = sbr.rel (%p326) target = $region21
  $region20: #{forward.16} parent=0 // pred_region
    %v329 = vld [vmem:[#allocation2] sm:$0xf]
    %v330 = vld [vmem:[%s2] sm:$0x3]
    %v332 = vlaneseq
    %v333 = vshrl.u32 %v332, 7
    %v334 = vsub.s32 0, %v333
    %v335 = vrot.slane %v330, %v334
    %v336 = vlaneseq
    %v337 = vshrl.u32 %v336, 7
    %v338 = vsub.s32 1, %v337
    %v339 = vrot.slane %v330, %v338
    %v340 = vcombine.low %v335, %v339
    %v342 = vunpack.c.l.s4 1983009808
    %v343 = vunpack.c.0.s8 %v342
    %v344 = vlaneseq
    %v345 = vshrl.u32 %v344, 7
    %v346 = vsub.s32 %v343, %v345
    %v347 = vrot.slane %v340, %v346
    %v349 = vadd.f32 %v329, %v347
    %v350 = vmax.f32 %v349, 0.0
    %351 = vst [vmem:[%s3] sm:$0xf] %v350
  $region21: #{forward.16} parent=0 // pred_fallthru
    _
  // Predicated region
  $region22: #{forward.16} parent=0 // pred_check
    _
  $region23: #{forward.16} parent=0 // pred_check_branch
    %353 = sbr.rel (0) target = $region25
  $region24: #{forward.16} parent=0 // pred_region
    _
  $region25: #{forward.16} parent=0 // pred_fallthru
    _
  // Predicated region
  $region26: #{forward.16} parent=0 // pred_check
    _
  $region27: #{forward.16} parent=0 // pred_check_branch
    %355 = sbr.rel (0) target = $region29
  $region28: #{forward.16} parent=0 // pred_region
    _
  $region29: #{forward.16} parent=0 // pred_fallthru
    _

// kernel: forward.17
$region0: #{forward.17}
  #allocation0 [shape = 'u32[]', space=smem, size = 0x4, offset = 0x4, fixed_abs, tag = 'smem constant byte address 0x4 - core index']
  #allocation1 [shape = 'u32[144,128]{1,0:T(1,128)}', space=vmem, size = 0x12000, scoped, tag = 'internal scratch']
  #allocation2 [shape = 'f32[2,2]{1,0:T(2,128)}', space=vmem, size = 0x400, scoped, tag = 'scratch operand']
  %s0 = inlined_call_operand.vmem [shape: f32[2,256], index: 0, kind: input, shape index: {}]
  %s1 = inlined_call_operand.vmem [shape: f32[256,2], index: 1, kind: input, shape index: {}]
  %s2 = inlined_call_operand.vmem [shape: f32[1,2], index: 2, kind: input, shape index: {}]
  %s3 = inlined_call_operand.hbm [shape: f32[2,2], index: 3, kind: output, shape index: {}]
  %s4 = sld [smem:[#allocation0]]
  $region30: #{forward.17} parent=0
    _
  %s6 = ssub.s32 1, %s4
  %s7 = scalar_select 0, %s6, %s4
  $region1: #{forward.17} parent=0
    #allocation3 [shape = 'u8[1024]{0}', space=vmem, size = 0x400, scoped, tag = 'output window, operand 0, single buffered']
    #allocation4 [shape = 's32[1]{0}', space=sflag, size = 0x4, scoped, tag = 'scoped memory for forward.17']
    %8 = vsyncpa [#allocation4], 0
    // Predicated region
    $region2: #{forward.17} parent=1 // pred_check
      _
    $region3: #{forward.17} parent=1 // pred_check_branch
      %10 = sbr.rel (0) target = $region5
    $region4: #{forward.17} parent=1 // pred_region
      _
    $region5: #{forward.17} parent=1 // pred_fallthru
      _
    // Predicated region
    $region6: #{forward.17} parent=1 // pred_check
      _
    $region7: #{forward.17} parent=1 // pred_check_branch
      %12 = sbr.rel (0) target = $region9
    $region8: #{forward.17} parent=1 // pred_region
      _
    $region9: #{forward.17} parent=1 // pred_fallthru
      _
    // Predicated region
    $region10: #{forward.17} parent=1 // pred_check
      _
    $region11: #{forward.17} parent=1 // pred_check_branch
      %14 = sbr.rel (0) target = $region13
    $region12: #{forward.17} parent=1 // pred_region
      _
    $region13: #{forward.17} parent=1 // pred_fallthru
      _
    %p15 = scmp.eq.s32.totalorder 0, 0
    // Predicated region
    $region14: #{forward.17} parent=1 // pred_check
      %p16 = pneg %p15
    $region15: #{forward.17} parent=1 // pred_check_branch
      %18 = sbr.rel (%p16) target = $region17
    $region16: #{forward.17} parent=1 // pred_region
      %vm19 = vcmask 9216
      %20 = vst.msk [vmem:[#allocation2] sm:$0x3] %vm19, 0.0
    $region17: #{forward.17} parent=1 // pred_fallthru
      _
    %v21 = vld [vmem:[#allocation2] sm:$0x3]
    %v22 = vld [vmem:[%s0] sm:$0xf]
    %v23 = vld [vmem:[%s1] sm:$0xff]
    %v24 = vld [vmem:[%s1 + $0x8] sm:$0xff]
    %v25 = vld [vmem:[%s1 + $0x10] sm:$0xff]
    %v26 = vld [vmem:[%s1 + $0x18] sm:$0xff]
    %v27 = vld [vmem:[%s1 + $0x20] sm:$0xff]
    %v28 = vld [vmem:[%s1 + $0x28] sm:$0xff]
    %v29 = vld [vmem:[%s1 + $0x30] sm:$0xff]
    %v30 = vld [vmem:[%s1 + $0x38] sm:$0xff]
    %v31 = vld [vmem:[%s1 + $0x40] sm:$0xff]
    %v32 = vld [vmem:[%s1 + $0x48] sm:$0xff]
    %v33 = vld [vmem:[%s1 + $0x50] sm:$0xff]
    %v34 = vld [vmem:[%s1 + $0x58] sm:$0xff]
    %v35 = vld [vmem:[%s1 + $0x60] sm:$0xff]
    %v36 = vld [vmem:[%s1 + $0x68] sm:$0xff]
    %v37 = vld [vmem:[%s1 + $0x70] sm:$0xff]
    %v38 = vld [vmem:[%s1 + $0x78] sm:$0xff]
    %v39 = vld [vmem:[%s1 + $0x80] sm:$0xff]
    %v40 = vld [vmem:[%s1 + $0x88] sm:$0xff]
    %v41 = vld [vmem:[%s1 + $0x90] sm:$0xff]
    %v42 = vld [vmem:[%s1 + $0x98] sm:$0xff]
    %v43 = vld [vmem:[%s1 + $0xa0] sm:$0xff]
    %v44 = vld [vmem:[%s1 + $0xa8] sm:$0xff]
    %v45 = vld [vmem:[%s1 + $0xb0] sm:$0xff]
    %v46 = vld [vmem:[%s1 + $0xb8] sm:$0xff]
    %v47 = vld [vmem:[%s1 + $0xc0] sm:$0xff]
    %v48 = vld [vmem:[%s1 + $0xc8] sm:$0xff]
    %v49 = vld [vmem:[%s1 + $0xd0] sm:$0xff]
    %v50 = vld [vmem:[%s1 + $0xd8] sm:$0xff]
    %v51 = vld [vmem:[%s1 + $0xe0] sm:$0xff]
    %v52 = vld [vmem:[%s1 + $0xe8] sm:$0xff]
    %v53 = vld [vmem:[%s1 + $0xf0] sm:$0xff]
    %v54 = vld [vmem:[%s1 + $0xf8] sm:$0xff]
    %v57 = vunpack.c.l.s4 1983009808
    %v58 = vunpack.c.0.s8 %v57
    %v59 = vlaneseq
    %v60 = vshrl.u32 %v59, 7
    %v61 = vsub.s32 %v58, %v60
    %v62 = vrot.slane %v22, %v61
    %v63 = vcombine.high %v62, %v62
    %66 = vmatprep.subr.mxu0 0.0
    %67 = vmatpush1.msra.mxu0 %v38
    %68 = vmatprep.subr.mxu0 0.0
    %69 = vmatpush1.msra.mxu0 %v37
    %70 = vmatprep.subr.mxu0 0.0
    %71 = vmatpush1.msra.mxu0 %v36
    %72 = vmatprep.subr.mxu0 0.0
    %73 = vmatpush1.msra.mxu0 %v35
    %74 = vmatprep.subr.mxu0 0.0
    %75 = vmatpush1.msra.mxu0 %v34
    %76 = vmatprep.subr.mxu0 0.0
    %77 = vmatpush1.msra.mxu0 %v33
    %78 = vmatprep.subr.mxu0 0.0
    %79 = vmatpush1.msra.mxu0 %v32
    %80 = vmatprep.subr.mxu0 0.0
    %81 = vmatpush1.msra.mxu0 %v31
    %82 = vmatprep.subr.mxu0 0.0
    %83 = vmatpush1.msra.mxu0 %v30
    %84 = vmatprep.subr.mxu0 0.0
    %85 = vmatpush1.msra.mxu0 %v29
    %86 = vmatprep.subr.mxu0 0.0
    %87 = vmatpush1.msra.mxu0 %v28
    %88 = vmatprep.subr.mxu0 0.0
    %89 = vmatpush1.msra.mxu0 %v27
    %90 = vmatprep.subr.mxu0 0.0
    %91 = vmatpush1.msra.mxu0 %v26
    %92 = vmatprep.subr.mxu0 0.0
    %93 = vmatpush1.msra.mxu0 %v25
    %94 = vmatprep.subr.mxu0 0.0
    %95 = vmatpush1.msra.mxu0 %v24
    %96 = vmatprep.subr.mxu0 0.0
    %97 = vmatpush1.msra.mxu0 %v23
    %98 = vmatprep.subr.mxu0 0.0
    %99 = vmatpush2.msra.mxu0 %v54
    %100 = vmatprep.subr.mxu0 0.0
    %101 = vmatpush2.msra.mxu0 %v53
    %102 = vmatprep.subr.mxu0 0.0
    %103 = vmatpush2.msra.mxu0 %v52
    %104 = vmatprep.subr.mxu0 0.0
    %105 = vmatpush2.msra.mxu0 %v51
    %106 = vmatprep.subr.mxu0 0.0
    %107 = vmatpush2.msra.mxu0 %v50
    %108 = vmatprep.subr.mxu0 0.0
    %109 = vmatpush2.msra.mxu0 %v49
    %110 = vmatprep.subr.mxu0 0.0
    %111 = vmatpush2.msra.mxu0 %v48
    %112 = vmatprep.subr.mxu0 0.0
    %113 = vmatpush2.msra.mxu0 %v47
    %114 = vmatprep.subr.mxu0 0.0
    %115 = vmatpush2.msra.mxu0 %v46
    %116 = vmatprep.subr.mxu0 0.0
    %117 = vmatpush2.msra.mxu0 %v45
    %118 = vmatprep.subr.mxu0 0.0
    %119 = vmatpush2.msra.mxu0 %v44
    %120 = vmatprep.subr.mxu0 0.0
    %121 = vmatpush2.msra.mxu0 %v43
    %122 = vmatprep.subr.mxu0 0.0
    %123 = vmatpush2.msra.mxu0 %v42
    %124 = vmatprep.subr.mxu0 0.0
    %125 = vmatpush2.msra.mxu0 %v41
    %126 = vmatprep.subr.mxu0 0.0
    %127 = vmatpush2.msra.mxu0 %v40
    %128 = vmatprep.subr.mxu0 0.0
    %129 = vmatpush2.msra.mxu0 %v39
    %130 = vmatprep.mubr.f32.mxu0 %v63
    %131 = vmatmul.mubr.f32.gmra.mxu0 %v62
    %v132 = vpop.f32.mrf.mxu0
    %v133 = vadd.f32 0.0, %v132
    %v134 = vpop.f32.mrf.mxu0
    %135 = vdwg.mxu0
    %v136 = vadd.f32 %v21, %v133
    %vm137 = vcmask 9216
    %138 = vst.msk [vmem:[#allocation2] sm:$0x3] %vm137, %v136
    // Predicated region
    $region18: #{forward.17} parent=1 // pred_check
      %p139 = pneg %p15
    $region19: #{forward.17} parent=1 // pred_check_branch
      %141 = sbr.rel (%p139) target = $region21
    $region20: #{forward.17} parent=1 // pred_region
      %v142 = vld [vmem:[#allocation2] sm:$0x3]
      %v143 = vld [vmem:[%s2] sm:$0x1]
      %v145 = vlaneseq
      %v146 = vshrl.u32 %v145, 7
      %v147 = vsub.s32 0, %v146
      %v148 = vrot.slane %v143, %v147
      %v150 = vadd.f32 %v142, %v148
      %151 = vst.msk [vmem:[#allocation3] sm:$0x3] %vm137, %v150
    $region21: #{forward.17} parent=1 // pred_fallthru
      _
    // Predicated region
    $region22: #{forward.17} parent=1 // pred_check
      _
    $region23: #{forward.17} parent=1 // pred_check_branch
      %153 = sbr.rel (0) target = $region25
    $region24: #{forward.17} parent=1 // pred_region
      %s155 = ssub.s32 32, 32
      %156 = vsyncadd [#allocation4], %s155
      %s158 = sshll.u32 [#allocation3], 4
      %s159 = int_to_ptr.vmem [resolvable:$true] %s158
      %161 = dma.vmem_to_hbm [thread:$0]  %s159, 32, %s3, [#allocation4]
    $region25: #{forward.17} parent=1 // pred_fallthru
      _
    // Predicated region
    $region26: #{forward.17} parent=1 // pred_check
      _
    $region27: #{forward.17} parent=1 // pred_check_branch
      %163 = sbr.rel (0) target = $region29
    $region28: #{forward.17} parent=1 // pred_region
      %164 = dma.done [#allocation4], 32
    $region29: #{forward.17} parent=1 // pred_fallthru
      _
    %165 = vsyncpa [#allocation4], 1

</llo_original>
